<compile_context>
chip_gen: v5e
topology: v5e:2x2
jax: 0.10.0
libtpu: 0.0.40
codegen_flags: <defaults>
</compile_context>

<pallas_src>
import functools

import jax
import jax.numpy as jnp
from jax.experimental import pallas as pl
from jax.experimental.pallas import tpu as pltpu

DIM = 2
HID = 512


def _leaky_relu(x, slope=0.01):
    return jnp.where(x > 0, x, slope * x)


def escape_mlp_kernel(x_ref, w1t_ref, b1_ref, w2t_ref, b2_ref,
                      w3t_ref, b3_ref, w4t_ref, b4_ref, o_ref):
    # Feature-major throughout: activations are (512, tm), batch on lanes.
    x = x_ref[...]                                        # (2, tm) f32

    # Layer 1 on the VPU: K=2 contraction as two broadcast FMAs.
    # h[j, m] = w1[0,j]*x[0,m] + w1[1,j]*x[1,m] + b1[j]
    h = (w1t_ref[:, 0:1] * x[0:1, :]
         + w1t_ref[:, 1:2] * x[1:2, :]
         + b1_ref[...])                                   # (512, tm) f32
    h = _leaky_relu(h)

    # Layer 2 (MXU): (512,512) @ (512,tm), bf16 inputs, f32 accumulate.
    h = jnp.dot(w2t_ref[...], h.astype(jnp.bfloat16),
                preferred_element_type=jnp.float32) + b2_ref[...]
    h = _leaky_relu(h)

    # Layer 3 (MXU).
    h = jnp.dot(w3t_ref[...], h.astype(jnp.bfloat16),
                preferred_element_type=jnp.float32) + b3_ref[...]
    h = _leaky_relu(h)

    # Layer 4 (MXU): (1,512) @ (512,tm) -> (1,tm).  Result is produced
    # directly in the lane-dense output layout (unmasked 128-lane stores),
    # with no transpose of the full h tile.
    logits = jnp.dot(w4t_ref[...], h.astype(jnp.bfloat16),
                     preferred_element_type=jnp.float32) + b4_ref[...]
    o_ref[...] = jax.nn.sigmoid(logits)                   # (1, tm) f32


def pack_params(params):
    """One-time weight prep (hoisted out of the per-call jit).

    Transposes weights to the feature-major layouts the kernel consumes and
    casts the MXU-layer weights to bf16.
    """
    w1, b1, w2, b2, w3, b3, w4, b4 = params
    return (
        jnp.transpose(w1),                                # (512, 2)   f32
        jnp.reshape(b1, (HID, 1)),                        # (512, 1)   f32
        jnp.transpose(w2).astype(jnp.bfloat16),           # (512, 512) bf16 = W2^T
        jnp.reshape(b2, (HID, 1)),                        # (512, 1)   f32
        jnp.transpose(w3).astype(jnp.bfloat16),           # (512, 512) bf16 = W3^T
        jnp.reshape(b3, (HID, 1)),                        # (512, 1)   f32
        jnp.transpose(w4).astype(jnp.bfloat16),           # (1, 512)   bf16 = W4^T
        jnp.reshape(b4, (1, 1)),                          # (1, 1)     f32
    )


@functools.partial(jax.jit, static_argnames=("tm",))
def escape_model_2d(x, packed_params, *, tm=1024):
    """x: [N, 2] float32 -> [N, 1] float32 escape probability."""
    assert tm % 256 == 0, "tm must be a multiple of 256 (MXU width / lanes)"
    w1t, b1, w2t, b2, w3t, b3, w4t, b4 = packed_params

    N = x.shape[0]
    # Shrink the tile for small batches so (a) zero-padding waste is bounded
    # and (b) there are >= 2 grid steps to shard across both v7x TensorCores.
    tm_eff = max(256, min(tm, 256 * pl.cdiv(N, 2 * 256)))
    num_tiles = pl.cdiv(N, tm_eff)
    n_pad = num_tiles * tm_eff

    # Lane-dense input slab (2, N_pad): 64x less VMEM than a (tm,2) tile and
    # unmasked 128-lane input DMAs.
    x_t = jnp.transpose(x)                                # (2, N)
    if n_pad != N:
        x_t = jnp.pad(x_t, ((0, 0), (0, n_pad - N)))

    full = lambda shape: pl.BlockSpec(shape, lambda i: (0, 0))

    weight_bytes = (HID * DIM * 4 + HID * 4               # w1t, b1 (f32)
                    + 2 * (HID * HID * 2 + HID * 4)       # w2t/b2, w3t/b3
                    + HID * 2 + 4)                        # w4t (bf16), b4
    cost = pl.CostEstimate(
        flops=2 * n_pad * (DIM * HID + 2 * HID * HID + HID),
        transcendentals=2 * n_pad,                        # sigmoid: exp + recip
        bytes_accessed=n_pad * DIM * 4 + n_pad * 4 + weight_bytes)

    out = pl.pallas_call(
        escape_mlp_kernel,
        out_shape=jax.ShapeDtypeStruct((1, n_pad), jnp.float32),
        grid_spec=pltpu.PrefetchScalarGridSpec(
            num_scalar_prefetch=0,
            grid=(num_tiles,),
            in_specs=[
                pl.BlockSpec((DIM, tm_eff), lambda i: (0, i)),  # x tile
                full((HID, DIM)), full((HID, 1)),               # layer 1 (f32)
                full((HID, HID)), full((HID, 1)),               # layer 2 (bf16 W)
                full((HID, HID)), full((HID, 1)),               # layer 3 (bf16 W)
                full((1, HID)),   full((1, 1)),                 # layer 4
            ],
            out_specs=pl.BlockSpec((1, tm_eff), lambda i: (0, i)),
        ),
        compiler_params=pltpu.CompilerParams(
            dimension_semantics=("parallel",),
            # Headroom for tm sweeps up to ~2048; below v7x's 64 MiB/TC.
            vmem_limit_bytes=40 * 1024 * 1024,
        ),
        cost_estimate=cost,
    )(x_t, w1t, b1, w2t, b2, w3t, b3, w4t, b4)

    return out[0, :N][:, None]                            # (N, 1)


def init_params(key):
    """Deterministic parameter init (PyTorch-style uniform fan-in bounds)."""
    keys = jax.random.split(key, 8)

    def linear(kw, kb, fan_in, fan_out):
        bound = 1.0 / jnp.sqrt(float(fan_in))
        w = jax.random.uniform(kw, (fan_in, fan_out), jnp.float32, -bound, bound)
        b = jax.random.uniform(kb, (1, fan_out), jnp.float32, -bound, bound)
        return w, b

    w1, b1 = linear(keys[0], keys[1], DIM, HID)
    w2, b2 = linear(keys[2], keys[3], HID, HID)
    w3, b3 = linear(keys[4], keys[5], HID, HID)
    w4, b4 = linear(keys[6], keys[7], HID, 1)
    return (w1, b1, w2, b2, w3, b3, w4, b4)


def reference_forward(x, params):
    """Pure-JAX f32 reference (matches the PyTorch eval-mode forward)."""
    w1, b1, w2, b2, w3, b3, w4, b4 = params
    h = _leaky_relu(x @ w1 + b1)
    h = _leaky_relu(h @ w2 + b2)
    h = _leaky_relu(h @ w3 + b3)
    return jax.nn.sigmoid(h @ w4 + b4)


def reference_forward_bf16(x, params):
    """Reference matching the kernel's bf16-input / f32-accumulate matmuls."""
    w1, b1, w2, b2, w3, b3, w4, b4 = params
    bf = jnp.bfloat16
    h = _leaky_relu(x[:, 0:1] * w1[0:1, :] + x[:, 1:2] * w1[1:2, :] + b1)
    h = _leaky_relu(jnp.dot(h.astype(bf), w2.astype(bf),
                            preferred_element_type=jnp.float32) + b2)
    h = _leaky_relu(jnp.dot(h.astype(bf), w3.astype(bf),
                            preferred_element_type=jnp.float32) + b3)
    logits = jnp.dot(h.astype(bf), w4.astype(bf),
                     preferred_element_type=jnp.float32) + b4
    return jax.nn.sigmoid(logits)


if __name__ == "__main__":
    key = jax.random.PRNGKey(0)
    kx, kp = jax.random.split(key)

    N = 300  # small batch: exercises padding and a 2-step (2-TensorCore) grid
    x = jax.random.normal(kx, (N, DIM), jnp.float32)
    params = init_params(kp)
    packed = pack_params(params)   # one-time weight prep, outside the jit

    out = escape_model_2d(x, packed, tm=1024)
    out = jax.block_until_ready(out)
    assert out.shape == (N, 1), out.shape

    # Tight check vs a precision-matched (bf16 matmul, f32 accumulate) reference.
    ref_bf16 = reference_forward_bf16(x, params)
    assert jnp.allclose(out, ref_bf16, atol=1e-3, rtol=1e-3), (
        float(jnp.max(jnp.abs(out - ref_bf16))))

    # Loose sanity check vs the full-f32 reference (bf16 rounding only).
    ref_f32 = reference_forward(x, params)
    assert jnp.allclose(out, ref_f32, atol=5e-2, rtol=5e-2), (
        float(jnp.max(jnp.abs(out - ref_f32))))

    print("KERNEL_OK")
</pallas_src>

<mosaic_0001>
module attributes {stable_mosaic.version = 11 : i64} {
  func.func @escape_mlp_kernel(%arg0: i32, %arg1: memref<2x256xf32, #tpu.memory_space<vmem>>, %arg2: memref<512x2xf32, #tpu.memory_space<vmem>>, %arg3: memref<512x1xf32, #tpu.memory_space<vmem>>, %arg4: memref<512x512xbf16, #tpu.memory_space<vmem>>, %arg5: memref<512x1xf32, #tpu.memory_space<vmem>>, %arg6: memref<512x512xbf16, #tpu.memory_space<vmem>>, %arg7: memref<512x1xf32, #tpu.memory_space<vmem>>, %arg8: memref<1x512xbf16, #tpu.memory_space<vmem>>, %arg9: memref<1x1xf32, #tpu.memory_space<vmem>>, %arg10: memref<1x256xf32, #tpu.memory_space<vmem>>) attributes {dimension_semantics = [#tpu.dimension_semantics<parallel>], iteration_bounds = array<i64: 2>, scalar_prefetch = 0 : i64, scratch_operands = 0 : i64, tpu.core_type = #tpu.core_type<tc>, window_params = [{transform_indices = @transform_0, window_bounds = array<i64: 2, 256>}, {pipeline_mode = #tpu.pipeline_mode<synchronous>, transform_indices = @transform_1, window_bounds = array<i64: 512, 2>}, {pipeline_mode = #tpu.pipeline_mode<synchronous>, transform_indices = @transform_2, window_bounds = array<i64: 512, 1>}, {pipeline_mode = #tpu.pipeline_mode<synchronous>, transform_indices = @transform_3, window_bounds = array<i64: 512, 512>}, {pipeline_mode = #tpu.pipeline_mode<synchronous>, transform_indices = @transform_4, window_bounds = array<i64: 512, 1>}, {pipeline_mode = #tpu.pipeline_mode<synchronous>, transform_indices = @transform_5, window_bounds = array<i64: 512, 512>}, {pipeline_mode = #tpu.pipeline_mode<synchronous>, transform_indices = @transform_6, window_bounds = array<i64: 512, 1>}, {pipeline_mode = #tpu.pipeline_mode<synchronous>, transform_indices = @transform_7, window_bounds = array<i64: 1, 512>}, {pipeline_mode = #tpu.pipeline_mode<synchronous>, transform_indices = @transform_8, window_bounds = array<i64: 1, 1>}, {transform_indices = @transform_9, window_bounds = array<i64: 1, 256>}]} {
    %c0 = arith.constant 0 : index
    %c0_0 = arith.constant 0 : index
    %0 = vector.load %arg1[%c0, %c0_0] : memref<2x256xf32, #tpu.memory_space<vmem>>, vector<2x256xf32>
    %c0_1 = arith.constant 0 : index
    %c0_2 = arith.constant 0 : index
    %1 = vector.load %arg2[%c0_1, %c0_2] : memref<512x2xf32, #tpu.memory_space<vmem>>, vector<512x1xf32>
    %2 = vector.extract_strided_slice %0 {offsets = [0, 0], sizes = [1, 256], strides = [1, 1]} : vector<2x256xf32> to vector<1x256xf32>
    %3 = vector.broadcast %1 : vector<512x1xf32> to vector<512x256xf32>
    %4 = vector.broadcast %2 : vector<1x256xf32> to vector<512x256xf32>
    %5 = arith.mulf %3, %4 : vector<512x256xf32>
    %c0_3 = arith.constant 0 : index
    %c1 = arith.constant 1 : index
    %6 = vector.load %arg2[%c0_3, %c1] : memref<512x2xf32, #tpu.memory_space<vmem>>, vector<512x1xf32>
    %7 = vector.extract_strided_slice %0 {offsets = [1, 0], sizes = [1, 256], strides = [1, 1]} : vector<2x256xf32> to vector<1x256xf32>
    %8 = vector.broadcast %6 : vector<512x1xf32> to vector<512x256xf32>
    %9 = vector.broadcast %7 : vector<1x256xf32> to vector<512x256xf32>
    %10 = arith.mulf %8, %9 : vector<512x256xf32>
    %11 = arith.addf %5, %10 : vector<512x256xf32>
    %c0_4 = arith.constant 0 : index
    %c0_5 = arith.constant 0 : index
    %12 = vector.load %arg3[%c0_4, %c0_5] : memref<512x1xf32, #tpu.memory_space<vmem>>, vector<512x1xf32>
    %13 = vector.broadcast %12 : vector<512x1xf32> to vector<512x256xf32>
    %14 = arith.addf %11, %13 : vector<512x256xf32>
    %cst = arith.constant 0.000000e+00 : f32
    %15 = vector.broadcast %cst : f32 to vector<512x256xf32>
    %16 = arith.cmpf ogt, %14, %15 : vector<512x256xf32>
    %cst_6 = arith.constant 0.00999999977 : f32
    %17 = vector.broadcast %cst_6 : f32 to vector<512x256xf32>
    %18 = arith.mulf %17, %14 : vector<512x256xf32>
    %19 = arith.select %16, %14, %18 : vector<512x256xi1>, vector<512x256xf32>
    %c0_7 = arith.constant 0 : index
    %c0_8 = arith.constant 0 : index
    %20 = vector.load %arg4[%c0_7, %c0_8] : memref<512x512xbf16, #tpu.memory_space<vmem>>, vector<512x512xbf16>
    %21 = arith.truncf %19 : vector<512x256xf32> to vector<512x256xbf16>
    %cst_9 = arith.constant dense<0.000000e+00> : vector<512x256xf32>
    %22 = tpu.matmul %20, %21, %cst_9 {dimension_numbers = #tpu.dot_dimension_numbers<[1], [0], [0], [1], [0, 0, 1, 1], [], []>} : vector<512x512xbf16>, vector<512x256xbf16>, vector<512x256xf32> -> vector<512x256xf32>
    %c0_10 = arith.constant 0 : index
    %c0_11 = arith.constant 0 : index
    %23 = vector.load %arg5[%c0_10, %c0_11] : memref<512x1xf32, #tpu.memory_space<vmem>>, vector<512x1xf32>
    %24 = vector.broadcast %23 : vector<512x1xf32> to vector<512x256xf32>
    %25 = arith.addf %22, %24 : vector<512x256xf32>
    %cst_12 = arith.constant 0.000000e+00 : f32
    %26 = vector.broadcast %cst_12 : f32 to vector<512x256xf32>
    %27 = arith.cmpf ogt, %25, %26 : vector<512x256xf32>
    %cst_13 = arith.constant 0.00999999977 : f32
    %28 = vector.broadcast %cst_13 : f32 to vector<512x256xf32>
    %29 = arith.mulf %28, %25 : vector<512x256xf32>
    %30 = arith.select %27, %25, %29 : vector<512x256xi1>, vector<512x256xf32>
    %c0_14 = arith.constant 0 : index
    %c0_15 = arith.constant 0 : index
    %31 = vector.load %arg6[%c0_14, %c0_15] : memref<512x512xbf16, #tpu.memory_space<vmem>>, vector<512x512xbf16>
    %32 = arith.truncf %30 : vector<512x256xf32> to vector<512x256xbf16>
    %cst_16 = arith.constant dense<0.000000e+00> : vector<512x256xf32>
    %33 = tpu.matmul %31, %32, %cst_16 {dimension_numbers = #tpu.dot_dimension_numbers<[1], [0], [0], [1], [0, 0, 1, 1], [], []>} : vector<512x512xbf16>, vector<512x256xbf16>, vector<512x256xf32> -> vector<512x256xf32>
    %c0_17 = arith.constant 0 : index
    %c0_18 = arith.constant 0 : index
    %34 = vector.load %arg7[%c0_17, %c0_18] : memref<512x1xf32, #tpu.memory_space<vmem>>, vector<512x1xf32>
    %35 = vector.broadcast %34 : vector<512x1xf32> to vector<512x256xf32>
    %36 = arith.addf %33, %35 : vector<512x256xf32>
    %cst_19 = arith.constant 0.000000e+00 : f32
    %37 = vector.broadcast %cst_19 : f32 to vector<512x256xf32>
    %38 = arith.cmpf ogt, %36, %37 : vector<512x256xf32>
    %cst_20 = arith.constant 0.00999999977 : f32
    %39 = vector.broadcast %cst_20 : f32 to vector<512x256xf32>
    %40 = arith.mulf %39, %36 : vector<512x256xf32>
    %41 = arith.select %38, %36, %40 : vector<512x256xi1>, vector<512x256xf32>
    %c0_21 = arith.constant 0 : index
    %c0_22 = arith.constant 0 : index
    %42 = vector.load %arg8[%c0_21, %c0_22] : memref<1x512xbf16, #tpu.memory_space<vmem>>, vector<1x512xbf16>
    %43 = arith.truncf %41 : vector<512x256xf32> to vector<512x256xbf16>
    %cst_23 = arith.constant dense<0.000000e+00> : vector<1x256xf32>
    %44 = tpu.matmul %42, %43, %cst_23 {dimension_numbers = #tpu.dot_dimension_numbers<[1], [0], [0], [1], [0, 0, 1, 1], [], []>} : vector<1x512xbf16>, vector<512x256xbf16>, vector<1x256xf32> -> vector<1x256xf32>
    %c0_24 = arith.constant 0 : index
    %c0_25 = arith.constant 0 : index
    %45 = vector.load %arg9[%c0_24, %c0_25] : memref<1x1xf32, #tpu.memory_space<vmem>>, vector<1x1xf32>
    %46 = vector.broadcast %45 : vector<1x1xf32> to vector<1x256xf32>
    %47 = arith.addf %44, %46 : vector<1x256xf32>
    %48 = arith.negf %47 : vector<1x256xf32>
    %49 = math.exp %48 : vector<1x256xf32>
    %cst_26 = arith.constant 1.000000e+00 : f32
    %50 = vector.broadcast %cst_26 : f32 to vector<1x256xf32>
    %51 = arith.addf %50, %49 : vector<1x256xf32>
    %52 = arith.divf %50, %51 : vector<1x256xf32>
    %c0_27 = arith.constant 0 : index
    %c0_28 = arith.constant 0 : index
    %53 = vector.load %arg10[%c0_27, %c0_28] : memref<1x256xf32, #tpu.memory_space<vmem>>, vector<1x256xf32>
    tpu.vector_store %arg10[%c0_27, %c0_28], %52 {strides = array<i32>} : memref<1x256xf32, #tpu.memory_space<vmem>>, vector<1x256xf32>,
    return
  }
  func.func @transform_0(%arg0: i32) -> (i32, i32) {
    %c0_i32 = arith.constant 0 : i32
    %c0_i32_0 = arith.constant 0 : i32
    return %c0_i32, %arg0 : i32, i32
  }
  func.func @transform_1(%arg0: i32) -> (i32, i32) {
    %c0_i32 = arith.constant 0 : i32
    %c0_i32_0 = arith.constant 0 : i32
    %c0_i32_1 = arith.constant 0 : i32
    return %c0_i32, %c0_i32_0 : i32, i32
  }
  func.func @transform_2(%arg0: i32) -> (i32, i32) {
    %c0_i32 = arith.constant 0 : i32
    %c0_i32_0 = arith.constant 0 : i32
    %c0_i32_1 = arith.constant 0 : i32
    return %c0_i32, %c0_i32_0 : i32, i32
  }
  func.func @transform_3(%arg0: i32) -> (i32, i32) {
    %c0_i32 = arith.constant 0 : i32
    %c0_i32_0 = arith.constant 0 : i32
    %c0_i32_1 = arith.constant 0 : i32
    return %c0_i32, %c0_i32_0 : i32, i32
  }
  func.func @transform_4(%arg0: i32) -> (i32, i32) {
    %c0_i32 = arith.constant 0 : i32
    %c0_i32_0 = arith.constant 0 : i32
    %c0_i32_1 = arith.constant 0 : i32
    return %c0_i32, %c0_i32_0 : i32, i32
  }
  func.func @transform_5(%arg0: i32) -> (i32, i32) {
    %c0_i32 = arith.constant 0 : i32
    %c0_i32_0 = arith.constant 0 : i32
    %c0_i32_1 = arith.constant 0 : i32
    return %c0_i32, %c0_i32_0 : i32, i32
  }
  func.func @transform_6(%arg0: i32) -> (i32, i32) {
    %c0_i32 = arith.constant 0 : i32
    %c0_i32_0 = arith.constant 0 : i32
    %c0_i32_1 = arith.constant 0 : i32
    return %c0_i32, %c0_i32_0 : i32, i32
  }
  func.func @transform_7(%arg0: i32) -> (i32, i32) {
    %c0_i32 = arith.constant 0 : i32
    %c0_i32_0 = arith.constant 0 : i32
    %c0_i32_1 = arith.constant 0 : i32
    return %c0_i32, %c0_i32_0 : i32, i32
  }
  func.func @transform_8(%arg0: i32) -> (i32, i32) {
    %c0_i32 = arith.constant 0 : i32
    %c0_i32_0 = arith.constant 0 : i32
    %c0_i32_1 = arith.constant 0 : i32
    return %c0_i32, %c0_i32_0 : i32, i32
  }
  func.func @transform_9(%arg0: i32) -> (i32, i32) {
    %c0_i32 = arith.constant 0 : i32
    %c0_i32_0 = arith.constant 0 : i32
    return %c0_i32, %arg0 : i32, i32
  }
}

</mosaic_0001>

<llo_original>
// kernel: escape_model_2d.1
$region0: #{escape_model_2d.1}
  #allocation0 [shape = 'u32[]', space=smem, size = 0x4, offset = 0x4, fixed_abs, tag = 'smem constant byte address 0x4 - core index']
  #allocation1 [shape = 'u32[72,128]{1,0:T(1,128)}', space=vmem, size = 0x9000, scoped, tag = 'internal scratch']
  #allocation2 [shape = 'f32[1,1]{1,0:T(1,128)S(1)}', space=vmem, size = 0x200, scoped, tag = 'scoped memory for escape_model_2d.1']
  %s0 = inlined_call_operand.vmem [shape: f32[2,512], index: 0, kind: input, shape index: {}]
  %s1 = inlined_call_operand.vmem [shape: f32[512,2], index: 1, kind: input, shape index: {}]
  %s2 = inlined_call_operand.vmem [shape: f32[512,1], index: 2, kind: input, shape index: {}]
  %s3 = inlined_call_operand.vmem [shape: bf16[512,512], index: 3, kind: input, shape index: {}]
  %s4 = inlined_call_operand.vmem [shape: f32[512,1], index: 4, kind: input, shape index: {}]
  %s5 = inlined_call_operand.vmem [shape: bf16[512,512], index: 5, kind: input, shape index: {}]
  %s6 = inlined_call_operand.vmem [shape: f32[512,1], index: 6, kind: input, shape index: {}]
  %s7 = inlined_call_operand.vmem [shape: bf16[1,512], index: 7, kind: input, shape index: {}]
  %s8 = inlined_call_operand.<no memory space> [shape: f32[1,1], index: 8, kind: input, shape index: {}]
  %s9 = inlined_call_operand.vmem [shape: f32[1,512], index: 9, kind: output, shape index: {}]
  %s10 = sld [smem:[#allocation0]]
  $region69: #{escape_model_2d.1} parent=0
    _
  %s12 = ssub.s32 1, %s10
  %s13 = scalar_select 0, %s12, %s10
  %v14 = vstv %s8
  %15 = vst [vmem:[#allocation2] sm:$0x1] %v14
  loop: start=0, step=1, limit=4
  $region2: #{escape_model_2d.1} parent=0 // loop_pre_header
    _
  $region3: #{escape_model_2d.1} parent=0 // loop_header
    %s17 = sphi 0, %s21
    %p18 = scmp.ge.s32.totalorder %s17, 4
    %s27 = sphi 0, %s29
    %s30 = sphi 0, %s27
    %s31 = sphi 0, %s30
    %s47 = sphi 0, %s31
    %s51 = sphi 0, %s51
    %s53 = sphi 0, %s51
    %s54 = sphi 0, %s53
    %s68 = sphi 0, %s54
    %s72 = sphi 0, %s72
    %s74 = sphi 0, %s72
    %s75 = sphi 0, %s74
    %s89 = sphi 0, %s75
    %s93 = sphi 0, %s93
    %s95 = sphi 0, %s93
    %s96 = sphi 0, %s95
    %s110 = sphi 0, %s96
    %s114 = sphi 0, %s114
    %s116 = sphi 0, %s114
    %s117 = sphi 0, %s116
    %s131 = sphi 0, %s117
    %s135 = sphi 0, %s135
    %s137 = sphi 0, %s135
    %s138 = sphi 0, %s137
    %s152 = sphi 0, %s138
    %s156 = sphi 0, %s156
    %s158 = sphi 0, %s156
    %s159 = sphi 0, %s158
    %s173 = sphi 0, %s159
    %s177 = sphi 0, %s177
    %s179 = sphi 0, %s177
    %s180 = sphi 0, %s179
    %s194 = sphi 0, %s180
    %s198 = sphi 0, %s198
    %s200 = sphi 0, %s198
    %s201 = sphi 0, %s200
    %s215 = sphi 0, %s201
    %s221 = sphi 0, %s223
    %s224 = sphi 0, %s221
    %s225 = sphi 0, %s224
    %s241 = sphi 0, %s225
  $region4: #{escape_model_2d.1} parent=0 // loop_header_branch
    %20 = sbr.rel (%p18) target = $region8
  $region5: #{escape_model_2d.1} parent=0 // loop_body
    %s22 = ssub.s32 %s17, 1
    %s23 = ssub.s32 %s17, 2
    %s24 = sadd.s32 %s17, 1
    %s25 = ssub.s32 %s17, %s24
    %p26 = scmp.eq.s32.totalorder %s25, 0
    %s28 = sadd.s32 %s27, 1
    %s29 = scalar_select %p26, %s27, %s28
    %p32 = pneg %p26
    %p33 = scmp.eq.s32.totalorder %s17, 1
    %p34 = por %p32, %p33
    %p35 = scmp.ne.s32.totalorder %s27, %s30
    %p36 = scmp.eq.s32.totalorder %s17, 0
    %p37 = por %p35, %p36
    %p38 = scmp.ne.s32.totalorder %s27, %s30
    %p39 = scmp.eq.s32.totalorder %s22, 1
    %p40 = por %p38, %p39
    %p41 = scmp.ne.s32.totalorder %s30, %s31
    %p42 = scmp.eq.s32.totalorder %s22, 0
    %p43 = por %p41, %p42
    %p44 = scmp.ne.s32.totalorder %s30, %s31
    %p45 = scmp.eq.s32.totalorder %s23, 1
    %p46 = por %p44, %p45
    %p48 = scmp.ne.s32.totalorder %s31, %s47
    %p49 = scmp.eq.s32.totalorder %s23, 0
    %p50 = por %p48, %p49
    %s52 = sadd.s32 %s51, 1
    %p55 = scmp.eq.s32.totalorder %s17, 1
    %p56 = scmp.ne.s32.totalorder %s51, %s53
    %p57 = scmp.eq.s32.totalorder %s17, 0
    %p58 = por %p56, %p57
    %p59 = scmp.ne.s32.totalorder %s51, %s53
    %p60 = scmp.eq.s32.totalorder %s22, 1
    %p61 = por %p59, %p60
    %p62 = scmp.ne.s32.totalorder %s53, %s54
    %p63 = scmp.eq.s32.totalorder %s22, 0
    %p64 = por %p62, %p63
    %p65 = scmp.ne.s32.totalorder %s53, %s54
    %p66 = scmp.eq.s32.totalorder %s23, 1
    %p67 = por %p65, %p66
    %p69 = scmp.ne.s32.totalorder %s54, %s68
    %p70 = scmp.eq.s32.totalorder %s23, 0
    %p71 = por %p69, %p70
    %s73 = sadd.s32 %s72, 1
    %p76 = scmp.eq.s32.totalorder %s17, 1
    %p77 = scmp.ne.s32.totalorder %s72, %s74
    %p78 = scmp.eq.s32.totalorder %s17, 0
    %p79 = por %p77, %p78
    %p80 = scmp.ne.s32.totalorder %s72, %s74
    %p81 = scmp.eq.s32.totalorder %s22, 1
    %p82 = por %p80, %p81
    %p83 = scmp.ne.s32.totalorder %s74, %s75
    %p84 = scmp.eq.s32.totalorder %s22, 0
    %p85 = por %p83, %p84
    %p86 = scmp.ne.s32.totalorder %s74, %s75
    %p87 = scmp.eq.s32.totalorder %s23, 1
    %p88 = por %p86, %p87
    %p90 = scmp.ne.s32.totalorder %s75, %s89
    %p91 = scmp.eq.s32.totalorder %s23, 0
    %p92 = por %p90, %p91
    %s94 = sadd.s32 %s93, 1
    %p97 = scmp.eq.s32.totalorder %s17, 1
    %p98 = scmp.ne.s32.totalorder %s93, %s95
    %p99 = scmp.eq.s32.totalorder %s17, 0
    %p100 = por %p98, %p99
    %p101 = scmp.ne.s32.totalorder %s93, %s95
    %p102 = scmp.eq.s32.totalorder %s22, 1
    %p103 = por %p101, %p102
    %p104 = scmp.ne.s32.totalorder %s95, %s96
    %p105 = scmp.eq.s32.totalorder %s22, 0
    %p106 = por %p104, %p105
    %p107 = scmp.ne.s32.totalorder %s95, %s96
    %p108 = scmp.eq.s32.totalorder %s23, 1
    %p109 = por %p107, %p108
    %p111 = scmp.ne.s32.totalorder %s96, %s110
    %p112 = scmp.eq.s32.totalorder %s23, 0
    %p113 = por %p111, %p112
    %s115 = sadd.s32 %s114, 1
    %p118 = scmp.eq.s32.totalorder %s17, 1
    %p119 = scmp.ne.s32.totalorder %s114, %s116
    %p120 = scmp.eq.s32.totalorder %s17, 0
    %p121 = por %p119, %p120
    %p122 = scmp.ne.s32.totalorder %s114, %s116
    %p123 = scmp.eq.s32.totalorder %s22, 1
    %p124 = por %p122, %p123
    %p125 = scmp.ne.s32.totalorder %s116, %s117
    %p126 = scmp.eq.s32.totalorder %s22, 0
    %p127 = por %p125, %p126
    %p128 = scmp.ne.s32.totalorder %s116, %s117
    %p129 = scmp.eq.s32.totalorder %s23, 1
    %p130 = por %p128, %p129
    %p132 = scmp.ne.s32.totalorder %s117, %s131
    %p133 = scmp.eq.s32.totalorder %s23, 0
    %p134 = por %p132, %p133
    %s136 = sadd.s32 %s135, 1
    %p139 = scmp.eq.s32.totalorder %s17, 1
    %p140 = scmp.ne.s32.totalorder %s135, %s137
    %p141 = scmp.eq.s32.totalorder %s17, 0
    %p142 = por %p140, %p141
    %p143 = scmp.ne.s32.totalorder %s135, %s137
    %p144 = scmp.eq.s32.totalorder %s22, 1
    %p145 = por %p143, %p144
    %p146 = scmp.ne.s32.totalorder %s137, %s138
    %p147 = scmp.eq.s32.totalorder %s22, 0
    %p148 = por %p146, %p147
    %p149 = scmp.ne.s32.totalorder %s137, %s138
    %p150 = scmp.eq.s32.totalorder %s23, 1
    %p151 = por %p149, %p150
    %p153 = scmp.ne.s32.totalorder %s138, %s152
    %p154 = scmp.eq.s32.totalorder %s23, 0
    %p155 = por %p153, %p154
    %s157 = sadd.s32 %s156, 1
    %p160 = scmp.eq.s32.totalorder %s17, 1
    %p161 = scmp.ne.s32.totalorder %s156, %s158
    %p162 = scmp.eq.s32.totalorder %s17, 0
    %p163 = por %p161, %p162
    %p164 = scmp.ne.s32.totalorder %s156, %s158
    %p165 = scmp.eq.s32.totalorder %s22, 1
    %p166 = por %p164, %p165
    %p167 = scmp.ne.s32.totalorder %s158, %s159
    %p168 = scmp.eq.s32.totalorder %s22, 0
    %p169 = por %p167, %p168
    %p170 = scmp.ne.s32.totalorder %s158, %s159
    %p171 = scmp.eq.s32.totalorder %s23, 1
    %p172 = por %p170, %p171
    %p174 = scmp.ne.s32.totalorder %s159, %s173
    %p175 = scmp.eq.s32.totalorder %s23, 0
    %p176 = por %p174, %p175
    %s178 = sadd.s32 %s177, 1
    %p181 = scmp.eq.s32.totalorder %s17, 1
    %p182 = scmp.ne.s32.totalorder %s177, %s179
    %p183 = scmp.eq.s32.totalorder %s17, 0
    %p184 = por %p182, %p183
    %p185 = scmp.ne.s32.totalorder %s177, %s179
    %p186 = scmp.eq.s32.totalorder %s22, 1
    %p187 = por %p185, %p186
    %p188 = scmp.ne.s32.totalorder %s179, %s180
    %p189 = scmp.eq.s32.totalorder %s22, 0
    %p190 = por %p188, %p189
    %p191 = scmp.ne.s32.totalorder %s179, %s180
    %p192 = scmp.eq.s32.totalorder %s23, 1
    %p193 = por %p191, %p192
    %p195 = scmp.ne.s32.totalorder %s180, %s194
    %p196 = scmp.eq.s32.totalorder %s23, 0
    %p197 = por %p195, %p196
    %s199 = sadd.s32 %s198, 1
    %p202 = scmp.eq.s32.totalorder %s17, 1
    %p203 = scmp.ne.s32.totalorder %s198, %s200
    %p204 = scmp.eq.s32.totalorder %s17, 0
    %p205 = por %p203, %p204
    %p206 = scmp.ne.s32.totalorder %s198, %s200
    %p207 = scmp.eq.s32.totalorder %s22, 1
    %p208 = por %p206, %p207
    %p209 = scmp.ne.s32.totalorder %s200, %s201
    %p210 = scmp.eq.s32.totalorder %s22, 0
    %p211 = por %p209, %p210
    %p212 = scmp.ne.s32.totalorder %s200, %s201
    %p213 = scmp.eq.s32.totalorder %s23, 1
    %p214 = por %p212, %p213
    %p216 = scmp.ne.s32.totalorder %s201, %s215
    %p217 = scmp.eq.s32.totalorder %s23, 0
    %p218 = por %p216, %p217
    %s219 = ssub.s32 %s17, %s24
    %p220 = scmp.eq.s32.totalorder %s219, 0
    %s222 = sadd.s32 %s221, 1
    %s223 = scalar_select %p220, %s221, %s222
    %p226 = pneg %p220
    %p227 = scmp.eq.s32.totalorder %s17, 1
    %p228 = por %p226, %p227
    %p229 = scmp.ne.s32.totalorder %s221, %s224
    %p230 = scmp.eq.s32.totalorder %s17, 0
    %p231 = por %p229, %p230
    %p232 = scmp.ne.s32.totalorder %s221, %s224
    %p233 = scmp.eq.s32.totalorder %s22, 1
    %p234 = por %p232, %p233
    %p235 = scmp.ne.s32.totalorder %s224, %s225
    %p236 = scmp.eq.s32.totalorder %s22, 0
    %p237 = por %p235, %p236
    %p238 = scmp.ne.s32.totalorder %s224, %s225
    %p239 = scmp.eq.s32.totalorder %s23, 1
    %p240 = por %p238, %p239
    %p242 = scmp.ne.s32.totalorder %s225, %s241
    %p243 = scmp.eq.s32.totalorder %s23, 0
    %p244 = por %p242, %p243
    %p245 = scmp.le.s32.totalorder 1, %s17
    %p246 = scmp.lt.s32.totalorder %s17, 3
    %p247 = pnand %p245, %p246
    %p248 = pneg %p247
    // Predicated region
    $region9: #{escape_model_2d.1} parent=5 // pred_check
      _
    $region10: #{escape_model_2d.1} parent=5 // pred_check_branch
      %250 = sbr.rel (%p247) target = $region12
    $region11: #{escape_model_2d.1} parent=5 // pred_region
      %s251 = ssub.s32 %s17, 1
      // Predicated region
      $region13: #{escape_model_2d.1} parent=11 // pred_check
        %p252 = pneg %p64
      $region14: #{escape_model_2d.1} parent=11 // pred_check_branch
        %254 = sbr.rel (%p252) target = $region16
      $region15: #{escape_model_2d.1} parent=11 // pred_region
        _
      $region16: #{escape_model_2d.1} parent=11 // pred_fallthru
        _
      // Predicated region
      $region17: #{escape_model_2d.1} parent=11 // pred_check
        %p255 = pneg %p85
      $region18: #{escape_model_2d.1} parent=11 // pred_check_branch
        %257 = sbr.rel (%p255) target = $region20
      $region19: #{escape_model_2d.1} parent=11 // pred_region
        _
      $region20: #{escape_model_2d.1} parent=11 // pred_fallthru
        _
      // Predicated region
      $region21: #{escape_model_2d.1} parent=11 // pred_check
        %p258 = pneg %p106
      $region22: #{escape_model_2d.1} parent=11 // pred_check_branch
        %260 = sbr.rel (%p258) target = $region24
      $region23: #{escape_model_2d.1} parent=11 // pred_region
        _
      $region24: #{escape_model_2d.1} parent=11 // pred_fallthru
        _
      // Predicated region
      $region25: #{escape_model_2d.1} parent=11 // pred_check
        %p261 = pneg %p127
      $region26: #{escape_model_2d.1} parent=11 // pred_check_branch
        %263 = sbr.rel (%p261) target = $region28
      $region27: #{escape_model_2d.1} parent=11 // pred_region
        _
      $region28: #{escape_model_2d.1} parent=11 // pred_fallthru
        _
      // Predicated region
      $region29: #{escape_model_2d.1} parent=11 // pred_check
        %p264 = pneg %p148
      $region30: #{escape_model_2d.1} parent=11 // pred_check_branch
        %266 = sbr.rel (%p264) target = $region32
      $region31: #{escape_model_2d.1} parent=11 // pred_region
        _
      $region32: #{escape_model_2d.1} parent=11 // pred_fallthru
        _
      // Predicated region
      $region33: #{escape_model_2d.1} parent=11 // pred_check
        %p267 = pneg %p169
      $region34: #{escape_model_2d.1} parent=11 // pred_check_branch
        %269 = sbr.rel (%p267) target = $region36
      $region35: #{escape_model_2d.1} parent=11 // pred_region
        _
      $region36: #{escape_model_2d.1} parent=11 // pred_fallthru
        _
      // Predicated region
      $region37: #{escape_model_2d.1} parent=11 // pred_check
        %p270 = pneg %p190
      $region38: #{escape_model_2d.1} parent=11 // pred_check_branch
        %272 = sbr.rel (%p270) target = $region40
      $region39: #{escape_model_2d.1} parent=11 // pred_region
        _
      $region40: #{escape_model_2d.1} parent=11 // pred_fallthru
        _
      // Predicated region
      $region41: #{escape_model_2d.1} parent=11 // pred_check
        %p273 = pneg %p211
      $region42: #{escape_model_2d.1} parent=11 // pred_check_branch
        %275 = sbr.rel (%p273) target = $region44
      $region43: #{escape_model_2d.1} parent=11 // pred_region
        _
      $region44: #{escape_model_2d.1} parent=11 // pred_fallthru
        _
    $region12: #{escape_model_2d.1} parent=5 // pred_fallthru
      _
    %p276 = scmp.lt.s32.totalorder %s17, 2
    // Predicated region
    $region45: #{escape_model_2d.1} parent=5 // pred_check
      %p277 = pneg %p276
    $region46: #{escape_model_2d.1} parent=5 // pred_check_branch
      %279 = sbr.rel (%p277) target = $region48
    $region47: #{escape_model_2d.1} parent=5 // pred_region
      // Predicated region
      $region49: #{escape_model_2d.1} parent=47 // pred_check
        %p280 = pneg %p37
      $region50: #{escape_model_2d.1} parent=47 // pred_check_branch
        %282 = sbr.rel (%p280) target = $region52
      $region51: #{escape_model_2d.1} parent=47 // pred_region
        %s283 = smul.u32 2, %s17
        %p284 = scmp.lt.s32.totalorder %s283, 3
        %s285 = scalar_select %p284, %s283, 3
        %s286 = smul.addr %s285, 2
        %s287 = scalar_lea.vmem %s0, %s286
        %s288 = smul.u32 2, %s17
      $region52: #{escape_model_2d.1} parent=47 // pred_fallthru
        _
    $region48: #{escape_model_2d.1} parent=5 // pred_fallthru
      _
    %p289 = scmp.le.s32.totalorder 1, %s17
    %p290 = scmp.lt.s32.totalorder %s17, 3
    %p291 = pnand %p289, %p290
    %p292 = pneg %p291
    // Predicated region
    $region53: #{escape_model_2d.1} parent=5 // pred_check
      _
    $region54: #{escape_model_2d.1} parent=5 // pred_check_branch
      %294 = sbr.rel (%p291) target = $region56
    $region55: #{escape_model_2d.1} parent=5 // pred_region
      %s295 = ssub.s32 %s17, 1
      %s296 = smul.u32 2, %s22
      %p297 = scmp.lt.s32.totalorder %s296, 3
      %s298 = scalar_select %p297, %s296, 3
      %s299 = smul.addr %s298, 2
      %s300 = scalar_lea.vmem %s0, %s299
      %p301 = pneg %p43
      %p302 = pneg %p40
      %p303 = pneg %p64
      %p304 = pneg %p61
      %p305 = pneg %p85
      %p306 = pneg %p82
      %p307 = pneg %p106
      %p308 = pneg %p103
      %p309 = pneg %p127
      %p310 = pneg %p124
      %p311 = pneg %p148
      %p312 = pneg %p145
      %p313 = pneg %p169
      %p314 = pneg %p166
      %p315 = pneg %p190
      %p316 = pneg %p187
      %p317 = pneg %p211
      %p318 = pneg %p208
      %p319 = pneg %p237
      %p320 = pneg %p234
      %s321 = smul.u32 2, %s22
      %p322 = scmp.lt.s32.totalorder %s321, 3
      %s323 = scalar_select %p322, %s321, 3
      %s324 = scalar_lea.vmem %s9, %s323
      %s325 = smul.u32 2, %s22
      %p326 = scmp.lt.s32.totalorder %s325, 3
      %s327 = scalar_select %p326, %s325, 3
      %s328 = smul.addr %s327, 2
      %s329 = scalar_lea.vmem %s0, %s328
      %s330 = smul.u32 2, %s22
      %s331 = smul.u32 2, %s22
      %p332 = scmp.lt.s32.totalorder %s331, 3
      %s333 = scalar_select %p332, %s331, 3
      %s334 = scalar_lea.vmem %s9, %s333
      %s335 = smul.u32 2, %s22
      %v336 = vld [vmem:[%s329] sm:$0xf]
      %v337 = vld [vmem:[%s1] sm:$0xff]
      %v338 = vld [vmem:[%s1 + $0x8] sm:$0xff]
      %v339 = vld [vmem:[%s1 + $0x10] sm:$0xff]
      %v340 = vld [vmem:[%s1 + $0x18] sm:$0xff]
      %v341 = vld [vmem:[%s1 + $0x20] sm:$0xff]
      %v342 = vld [vmem:[%s1 + $0x28] sm:$0xff]
      %v343 = vld [vmem:[%s1 + $0x30] sm:$0xff]
      %v344 = vld [vmem:[%s1 + $0x38] sm:$0xff]
      %v345 = vld [vmem:[%s1 + $0x40] sm:$0xff]
      %v346 = vld [vmem:[%s1 + $0x48] sm:$0xff]
      %v347 = vld [vmem:[%s1 + $0x50] sm:$0xff]
      %v348 = vld [vmem:[%s1 + $0x58] sm:$0xff]
      %v349 = vld [vmem:[%s1 + $0x60] sm:$0xff]
      %v350 = vld [vmem:[%s1 + $0x68] sm:$0xff]
      %v351 = vld [vmem:[%s1 + $0x70] sm:$0xff]
      %v352 = vld [vmem:[%s1 + $0x78] sm:$0xff]
      %v353 = vld [vmem:[%s1 + $0x80] sm:$0xff]
      %v354 = vld [vmem:[%s1 + $0x88] sm:$0xff]
      %v355 = vld [vmem:[%s1 + $0x90] sm:$0xff]
      %v356 = vld [vmem:[%s1 + $0x98] sm:$0xff]
      %v357 = vld [vmem:[%s1 + $0xa0] sm:$0xff]
      %v358 = vld [vmem:[%s1 + $0xa8] sm:$0xff]
      %v359 = vld [vmem:[%s1 + $0xb0] sm:$0xff]
      %v360 = vld [vmem:[%s1 + $0xb8] sm:$0xff]
      %v361 = vld [vmem:[%s1 + $0xc0] sm:$0xff]
      %v362 = vld [vmem:[%s1 + $0xc8] sm:$0xff]
      %v363 = vld [vmem:[%s1 + $0xd0] sm:$0xff]
      %v364 = vld [vmem:[%s1 + $0xd8] sm:$0xff]
      %v365 = vld [vmem:[%s1 + $0xe0] sm:$0xff]
      %v366 = vld [vmem:[%s1 + $0xe8] sm:$0xff]
      %v367 = vld [vmem:[%s1 + $0xf0] sm:$0xff]
      %v368 = vld [vmem:[%s1 + $0xf8] sm:$0xff]
      %v369 = vld [vmem:[%s1 + $0x100] sm:$0xff]
      %v370 = vld [vmem:[%s1 + $0x108] sm:$0xff]
      %v371 = vld [vmem:[%s1 + $0x110] sm:$0xff]
      %v372 = vld [vmem:[%s1 + $0x118] sm:$0xff]
      %v373 = vld [vmem:[%s1 + $0x120] sm:$0xff]
      %v374 = vld [vmem:[%s1 + $0x128] sm:$0xff]
      %v375 = vld [vmem:[%s1 + $0x130] sm:$0xff]
      %v376 = vld [vmem:[%s1 + $0x138] sm:$0xff]
      %v377 = vld [vmem:[%s1 + $0x140] sm:$0xff]
      %v378 = vld [vmem:[%s1 + $0x148] sm:$0xff]
      %v379 = vld [vmem:[%s1 + $0x150] sm:$0xff]
      %v380 = vld [vmem:[%s1 + $0x158] sm:$0xff]
      %v381 = vld [vmem:[%s1 + $0x160] sm:$0xff]
      %v382 = vld [vmem:[%s1 + $0x168] sm:$0xff]
      %v383 = vld [vmem:[%s1 + $0x170] sm:$0xff]
      %v384 = vld [vmem:[%s1 + $0x178] sm:$0xff]
      %v385 = vld [vmem:[%s1 + $0x180] sm:$0xff]
      %v386 = vld [vmem:[%s1 + $0x188] sm:$0xff]
      %v387 = vld [vmem:[%s1 + $0x190] sm:$0xff]
      %v388 = vld [vmem:[%s1 + $0x198] sm:$0xff]
      %v389 = vld [vmem:[%s1 + $0x1a0] sm:$0xff]
      %v390 = vld [vmem:[%s1 + $0x1a8] sm:$0xff]
      %v391 = vld [vmem:[%s1 + $0x1b0] sm:$0xff]
      %v392 = vld [vmem:[%s1 + $0x1b8] sm:$0xff]
      %v393 = vld [vmem:[%s1 + $0x1c0] sm:$0xff]
      %v394 = vld [vmem:[%s1 + $0x1c8] sm:$0xff]
      %v395 = vld [vmem:[%s1 + $0x1d0] sm:$0xff]
      %v396 = vld [vmem:[%s1 + $0x1d8] sm:$0xff]
      %v397 = vld [vmem:[%s1 + $0x1e0] sm:$0xff]
      %v398 = vld [vmem:[%s1 + $0x1e8] sm:$0xff]
      %v399 = vld [vmem:[%s1 + $0x1f0] sm:$0xff]
      %v400 = vld [vmem:[%s1 + $0x1f8] sm:$0xff]
      %402 = vset.pattern.permute.xlu0 0
      %403 = vperm.xlu0 %402, %v337
      %v404 = vpop.permute.xlu0 %403
      %407 = vset.pattern.permute.xlu0 0
      %408 = vperm.xlu0 %407, %v338
      %v409 = vpop.permute.xlu0 %408
      %412 = vset.pattern.permute.xlu0 0
      %413 = vperm.xlu0 %412, %v339
      %v414 = vpop.permute.xlu0 %413
      %417 = vset.pattern.permute.xlu0 0
      %418 = vperm.xlu0 %417, %v340
      %v419 = vpop.permute.xlu0 %418
      %422 = vset.pattern.permute.xlu0 0
      %423 = vperm.xlu0 %422, %v341
      %v424 = vpop.permute.xlu0 %423
      %427 = vset.pattern.permute.xlu0 0
      %428 = vperm.xlu0 %427, %v342
      %v429 = vpop.permute.xlu0 %428
      %432 = vset.pattern.permute.xlu0 0
      %433 = vperm.xlu0 %432, %v343
      %v434 = vpop.permute.xlu0 %433
      %437 = vset.pattern.permute.xlu0 0
      %438 = vperm.xlu0 %437, %v344
      %v439 = vpop.permute.xlu0 %438
      %442 = vset.pattern.permute.xlu0 0
      %443 = vperm.xlu0 %442, %v345
      %v444 = vpop.permute.xlu0 %443
      %447 = vset.pattern.permute.xlu0 0
      %448 = vperm.xlu0 %447, %v346
      %v449 = vpop.permute.xlu0 %448
      %452 = vset.pattern.permute.xlu0 0
      %453 = vperm.xlu0 %452, %v347
      %v454 = vpop.permute.xlu0 %453
      %457 = vset.pattern.permute.xlu0 0
      %458 = vperm.xlu0 %457, %v348
      %v459 = vpop.permute.xlu0 %458
      %462 = vset.pattern.permute.xlu0 0
      %463 = vperm.xlu0 %462, %v349
      %v464 = vpop.permute.xlu0 %463
      %467 = vset.pattern.permute.xlu0 0
      %468 = vperm.xlu0 %467, %v350
      %v469 = vpop.permute.xlu0 %468
      %472 = vset.pattern.permute.xlu0 0
      %473 = vperm.xlu0 %472, %v351
      %v474 = vpop.permute.xlu0 %473
      %477 = vset.pattern.permute.xlu0 0
      %478 = vperm.xlu0 %477, %v352
      %v479 = vpop.permute.xlu0 %478
      %482 = vset.pattern.permute.xlu0 0
      %483 = vperm.xlu0 %482, %v353
      %v484 = vpop.permute.xlu0 %483
      %487 = vset.pattern.permute.xlu0 0
      %488 = vperm.xlu0 %487, %v354
      %v489 = vpop.permute.xlu0 %488
      %492 = vset.pattern.permute.xlu0 0
      %493 = vperm.xlu0 %492, %v355
      %v494 = vpop.permute.xlu0 %493
      %497 = vset.pattern.permute.xlu0 0
      %498 = vperm.xlu0 %497, %v356
      %v499 = vpop.permute.xlu0 %498
      %502 = vset.pattern.permute.xlu0 0
      %503 = vperm.xlu0 %502, %v357
      %v504 = vpop.permute.xlu0 %503
      %507 = vset.pattern.permute.xlu0 0
      %508 = vperm.xlu0 %507, %v358
      %v509 = vpop.permute.xlu0 %508
      %512 = vset.pattern.permute.xlu0 0
      %513 = vperm.xlu0 %512, %v359
      %v514 = vpop.permute.xlu0 %513
      %517 = vset.pattern.permute.xlu0 0
      %518 = vperm.xlu0 %517, %v360
      %v519 = vpop.permute.xlu0 %518
      %522 = vset.pattern.permute.xlu0 0
      %523 = vperm.xlu0 %522, %v361
      %v524 = vpop.permute.xlu0 %523
      %527 = vset.pattern.permute.xlu0 0
      %528 = vperm.xlu0 %527, %v362
      %v529 = vpop.permute.xlu0 %528
      %532 = vset.pattern.permute.xlu0 0
      %533 = vperm.xlu0 %532, %v363
      %v534 = vpop.permute.xlu0 %533
      %537 = vset.pattern.permute.xlu0 0
      %538 = vperm.xlu0 %537, %v364
      %v539 = vpop.permute.xlu0 %538
      %542 = vset.pattern.permute.xlu0 0
      %543 = vperm.xlu0 %542, %v365
      %v544 = vpop.permute.xlu0 %543
      %547 = vset.pattern.permute.xlu0 0
      %548 = vperm.xlu0 %547, %v366
      %v549 = vpop.permute.xlu0 %548
      %552 = vset.pattern.permute.xlu0 0
      %553 = vperm.xlu0 %552, %v367
      %v554 = vpop.permute.xlu0 %553
      %557 = vset.pattern.permute.xlu0 0
      %558 = vperm.xlu0 %557, %v368
      %v559 = vpop.permute.xlu0 %558
      %562 = vset.pattern.permute.xlu0 0
      %563 = vperm.xlu0 %562, %v369
      %v564 = vpop.permute.xlu0 %563
      %567 = vset.pattern.permute.xlu0 0
      %568 = vperm.xlu0 %567, %v370
      %v569 = vpop.permute.xlu0 %568
      %572 = vset.pattern.permute.xlu0 0
      %573 = vperm.xlu0 %572, %v371
      %v574 = vpop.permute.xlu0 %573
      %577 = vset.pattern.permute.xlu0 0
      %578 = vperm.xlu0 %577, %v372
      %v579 = vpop.permute.xlu0 %578
      %582 = vset.pattern.permute.xlu0 0
      %583 = vperm.xlu0 %582, %v373
      %v584 = vpop.permute.xlu0 %583
      %587 = vset.pattern.permute.xlu0 0
      %588 = vperm.xlu0 %587, %v374
      %v589 = vpop.permute.xlu0 %588
      %592 = vset.pattern.permute.xlu0 0
      %593 = vperm.xlu0 %592, %v375
      %v594 = vpop.permute.xlu0 %593
      %597 = vset.pattern.permute.xlu0 0
      %598 = vperm.xlu0 %597, %v376
      %v599 = vpop.permute.xlu0 %598
      %602 = vset.pattern.permute.xlu0 0
      %603 = vperm.xlu0 %602, %v377
      %v604 = vpop.permute.xlu0 %603
      %607 = vset.pattern.permute.xlu0 0
      %608 = vperm.xlu0 %607, %v378
      %v609 = vpop.permute.xlu0 %608
      %612 = vset.pattern.permute.xlu0 0
      %613 = vperm.xlu0 %612, %v379
      %v614 = vpop.permute.xlu0 %613
      %617 = vset.pattern.permute.xlu0 0
      %618 = vperm.xlu0 %617, %v380
      %v619 = vpop.permute.xlu0 %618
      %622 = vset.pattern.permute.xlu0 0
      %623 = vperm.xlu0 %622, %v381
      %v624 = vpop.permute.xlu0 %623
      %627 = vset.pattern.permute.xlu0 0
      %628 = vperm.xlu0 %627, %v382
      %v629 = vpop.permute.xlu0 %628
      %632 = vset.pattern.permute.xlu0 0
      %633 = vperm.xlu0 %632, %v383
      %v634 = vpop.permute.xlu0 %633
      %637 = vset.pattern.permute.xlu0 0
      %638 = vperm.xlu0 %637, %v384
      %v639 = vpop.permute.xlu0 %638
      %642 = vset.pattern.permute.xlu0 0
      %643 = vperm.xlu0 %642, %v385
      %v644 = vpop.permute.xlu0 %643
      %647 = vset.pattern.permute.xlu0 0
      %648 = vperm.xlu0 %647, %v386
      %v649 = vpop.permute.xlu0 %648
      %652 = vset.pattern.permute.xlu0 0
      %653 = vperm.xlu0 %652, %v387
      %v654 = vpop.permute.xlu0 %653
      %657 = vset.pattern.permute.xlu0 0
      %658 = vperm.xlu0 %657, %v388
      %v659 = vpop.permute.xlu0 %658
      %662 = vset.pattern.permute.xlu0 0
      %663 = vperm.xlu0 %662, %v389
      %v664 = vpop.permute.xlu0 %663
      %667 = vset.pattern.permute.xlu0 0
      %668 = vperm.xlu0 %667, %v390
      %v669 = vpop.permute.xlu0 %668
      %672 = vset.pattern.permute.xlu0 0
      %673 = vperm.xlu0 %672, %v391
      %v674 = vpop.permute.xlu0 %673
      %677 = vset.pattern.permute.xlu0 0
      %678 = vperm.xlu0 %677, %v392
      %v679 = vpop.permute.xlu0 %678
      %682 = vset.pattern.permute.xlu0 0
      %683 = vperm.xlu0 %682, %v393
      %v684 = vpop.permute.xlu0 %683
      %687 = vset.pattern.permute.xlu0 0
      %688 = vperm.xlu0 %687, %v394
      %v689 = vpop.permute.xlu0 %688
      %692 = vset.pattern.permute.xlu0 0
      %693 = vperm.xlu0 %692, %v395
      %v694 = vpop.permute.xlu0 %693
      %697 = vset.pattern.permute.xlu0 0
      %698 = vperm.xlu0 %697, %v396
      %v699 = vpop.permute.xlu0 %698
      %702 = vset.pattern.permute.xlu0 0
      %703 = vperm.xlu0 %702, %v397
      %v704 = vpop.permute.xlu0 %703
      %707 = vset.pattern.permute.xlu0 0
      %708 = vperm.xlu0 %707, %v398
      %v709 = vpop.permute.xlu0 %708
      %712 = vset.pattern.permute.xlu0 0
      %713 = vperm.xlu0 %712, %v399
      %v714 = vpop.permute.xlu0 %713
      %717 = vset.pattern.permute.xlu0 0
      %718 = vperm.xlu0 %717, %v400
      %v719 = vpop.permute.xlu0 %718
      %v722 = vperm.slane %v336, 0
      %v723 = vperm.slane %v336, 2
      %v726 = vperm.slane %v722, 0
      %v727 = vperm.slane %v723, 0
      %v728 = vmul.f32 %v404, %v726
      %v729 = vmul.f32 %v404, %v727
      %v730 = vmul.f32 %v409, %v726
      %v731 = vmul.f32 %v409, %v727
      %v732 = vmul.f32 %v414, %v726
      %v733 = vmul.f32 %v414, %v727
      %v734 = vmul.f32 %v419, %v726
      %v735 = vmul.f32 %v419, %v727
      %v736 = vmul.f32 %v424, %v726
      %v737 = vmul.f32 %v424, %v727
      %v738 = vmul.f32 %v429, %v726
      %v739 = vmul.f32 %v429, %v727
      %v740 = vmul.f32 %v434, %v726
      %v741 = vmul.f32 %v434, %v727
      %v742 = vmul.f32 %v439, %v726
      %v743 = vmul.f32 %v439, %v727
      %v744 = vmul.f32 %v444, %v726
      %v745 = vmul.f32 %v444, %v727
      %v746 = vmul.f32 %v449, %v726
      %v747 = vmul.f32 %v449, %v727
      %v748 = vmul.f32 %v454, %v726
      %v749 = vmul.f32 %v454, %v727
      %v750 = vmul.f32 %v459, %v726
      %v751 = vmul.f32 %v459, %v727
      %v752 = vmul.f32 %v464, %v726
      %v753 = vmul.f32 %v464, %v727
      %v754 = vmul.f32 %v469, %v726
      %v755 = vmul.f32 %v469, %v727
      %v756 = vmul.f32 %v474, %v726
      %v757 = vmul.f32 %v474, %v727
      %v758 = vmul.f32 %v479, %v726
      %v759 = vmul.f32 %v479, %v727
      %v760 = vmul.f32 %v484, %v726
      %v761 = vmul.f32 %v484, %v727
      %v762 = vmul.f32 %v489, %v726
      %v763 = vmul.f32 %v489, %v727
      %v764 = vmul.f32 %v494, %v726
      %v765 = vmul.f32 %v494, %v727
      %v766 = vmul.f32 %v499, %v726
      %v767 = vmul.f32 %v499, %v727
      %v768 = vmul.f32 %v504, %v726
      %v769 = vmul.f32 %v504, %v727
      %v770 = vmul.f32 %v509, %v726
      %v771 = vmul.f32 %v509, %v727
      %v772 = vmul.f32 %v514, %v726
      %v773 = vmul.f32 %v514, %v727
      %v774 = vmul.f32 %v519, %v726
      %v775 = vmul.f32 %v519, %v727
      %v776 = vmul.f32 %v524, %v726
      %v777 = vmul.f32 %v524, %v727
      %v778 = vmul.f32 %v529, %v726
      %v779 = vmul.f32 %v529, %v727
      %v780 = vmul.f32 %v534, %v726
      %v781 = vmul.f32 %v534, %v727
      %v782 = vmul.f32 %v539, %v726
      %v783 = vmul.f32 %v539, %v727
      %v784 = vmul.f32 %v544, %v726
      %v785 = vmul.f32 %v544, %v727
      %v786 = vmul.f32 %v549, %v726
      %v787 = vmul.f32 %v549, %v727
      %v788 = vmul.f32 %v554, %v726
      %v789 = vmul.f32 %v554, %v727
      %v790 = vmul.f32 %v559, %v726
      %v791 = vmul.f32 %v559, %v727
      %v792 = vmul.f32 %v564, %v726
      %v793 = vmul.f32 %v564, %v727
      %v794 = vmul.f32 %v569, %v726
      %v795 = vmul.f32 %v569, %v727
      %v796 = vmul.f32 %v574, %v726
      %v797 = vmul.f32 %v574, %v727
      %v798 = vmul.f32 %v579, %v726
      %v799 = vmul.f32 %v579, %v727
      %v800 = vmul.f32 %v584, %v726
      %v801 = vmul.f32 %v584, %v727
      %v802 = vmul.f32 %v589, %v726
      %v803 = vmul.f32 %v589, %v727
      %v804 = vmul.f32 %v594, %v726
      %v805 = vmul.f32 %v594, %v727
      %v806 = vmul.f32 %v599, %v726
      %v807 = vmul.f32 %v599, %v727
      %v808 = vmul.f32 %v604, %v726
      %v809 = vmul.f32 %v604, %v727
      %v810 = vmul.f32 %v609, %v726
      %v811 = vmul.f32 %v609, %v727
      %v812 = vmul.f32 %v614, %v726
      %v813 = vmul.f32 %v614, %v727
      %v814 = vmul.f32 %v619, %v726
      %v815 = vmul.f32 %v619, %v727
      %v816 = vmul.f32 %v624, %v726
      %v817 = vmul.f32 %v624, %v727
      %v818 = vmul.f32 %v629, %v726
      %v819 = vmul.f32 %v629, %v727
      %v820 = vmul.f32 %v634, %v726
      %v821 = vmul.f32 %v634, %v727
      %v822 = vmul.f32 %v639, %v726
      %v823 = vmul.f32 %v639, %v727
      %v824 = vmul.f32 %v644, %v726
      %v825 = vmul.f32 %v644, %v727
      %v826 = vmul.f32 %v649, %v726
      %v827 = vmul.f32 %v649, %v727
      %v828 = vmul.f32 %v654, %v726
      %v829 = vmul.f32 %v654, %v727
      %v830 = vmul.f32 %v659, %v726
      %v831 = vmul.f32 %v659, %v727
      %v832 = vmul.f32 %v664, %v726
      %v833 = vmul.f32 %v664, %v727
      %v834 = vmul.f32 %v669, %v726
      %v835 = vmul.f32 %v669, %v727
      %v836 = vmul.f32 %v674, %v726
      %v837 = vmul.f32 %v674, %v727
      %v838 = vmul.f32 %v679, %v726
      %v839 = vmul.f32 %v679, %v727
      %v840 = vmul.f32 %v684, %v726
      %v841 = vmul.f32 %v684, %v727
      %v842 = vmul.f32 %v689, %v726
      %v843 = vmul.f32 %v689, %v727
      %v844 = vmul.f32 %v694, %v726
      %v845 = vmul.f32 %v694, %v727
      %v846 = vmul.f32 %v699, %v726
      %v847 = vmul.f32 %v699, %v727
      %v848 = vmul.f32 %v704, %v726
      %v849 = vmul.f32 %v704, %v727
      %v850 = vmul.f32 %v709, %v726
      %v851 = vmul.f32 %v709, %v727
      %v852 = vmul.f32 %v714, %v726
      %v853 = vmul.f32 %v714, %v727
      %v854 = vmul.f32 %v719, %v726
      %v855 = vmul.f32 %v719, %v727
      %856 = vset.pattern.permute.xlu0 1
      %857 = vperm.xlu0 %856, %v337
      %v858 = vpop.permute.xlu0 %857
      %860 = vset.pattern.permute.xlu0 1
      %861 = vperm.xlu0 %860, %v338
      %v862 = vpop.permute.xlu0 %861
      %864 = vset.pattern.permute.xlu0 1
      %865 = vperm.xlu0 %864, %v339
      %v866 = vpop.permute.xlu0 %865
      %868 = vset.pattern.permute.xlu0 1
      %869 = vperm.xlu0 %868, %v340
      %v870 = vpop.permute.xlu0 %869
      %872 = vset.pattern.permute.xlu0 1
      %873 = vperm.xlu0 %872, %v341
      %v874 = vpop.permute.xlu0 %873
      %876 = vset.pattern.permute.xlu0 1
      %877 = vperm.xlu0 %876, %v342
      %v878 = vpop.permute.xlu0 %877
      %880 = vset.pattern.permute.xlu0 1
      %881 = vperm.xlu0 %880, %v343
      %v882 = vpop.permute.xlu0 %881
      %884 = vset.pattern.permute.xlu0 1
      %885 = vperm.xlu0 %884, %v344
      %v886 = vpop.permute.xlu0 %885
      %888 = vset.pattern.permute.xlu0 1
      %889 = vperm.xlu0 %888, %v345
      %v890 = vpop.permute.xlu0 %889
      %892 = vset.pattern.permute.xlu0 1
      %893 = vperm.xlu0 %892, %v346
      %v894 = vpop.permute.xlu0 %893
      %896 = vset.pattern.permute.xlu0 1
      %897 = vperm.xlu0 %896, %v347
      %v898 = vpop.permute.xlu0 %897
      %900 = vset.pattern.permute.xlu0 1
      %901 = vperm.xlu0 %900, %v348
      %v902 = vpop.permute.xlu0 %901
      %904 = vset.pattern.permute.xlu0 1
      %905 = vperm.xlu0 %904, %v349
      %v906 = vpop.permute.xlu0 %905
      %908 = vset.pattern.permute.xlu0 1
      %909 = vperm.xlu0 %908, %v350
      %v910 = vpop.permute.xlu0 %909
      %912 = vset.pattern.permute.xlu0 1
      %913 = vperm.xlu0 %912, %v351
      %v914 = vpop.permute.xlu0 %913
      %916 = vset.pattern.permute.xlu0 1
      %917 = vperm.xlu0 %916, %v352
      %v918 = vpop.permute.xlu0 %917
      %920 = vset.pattern.permute.xlu0 1
      %921 = vperm.xlu0 %920, %v353
      %v922 = vpop.permute.xlu0 %921
      %924 = vset.pattern.permute.xlu0 1
      %925 = vperm.xlu0 %924, %v354
      %v926 = vpop.permute.xlu0 %925
      %928 = vset.pattern.permute.xlu0 1
      %929 = vperm.xlu0 %928, %v355
      %v930 = vpop.permute.xlu0 %929
      %932 = vset.pattern.permute.xlu0 1
      %933 = vperm.xlu0 %932, %v356
      %v934 = vpop.permute.xlu0 %933
      %936 = vset.pattern.permute.xlu0 1
      %937 = vperm.xlu0 %936, %v357
      %v938 = vpop.permute.xlu0 %937
      %940 = vset.pattern.permute.xlu0 1
      %941 = vperm.xlu0 %940, %v358
      %v942 = vpop.permute.xlu0 %941
      %944 = vset.pattern.permute.xlu0 1
      %945 = vperm.xlu0 %944, %v359
      %v946 = vpop.permute.xlu0 %945
      %948 = vset.pattern.permute.xlu0 1
      %949 = vperm.xlu0 %948, %v360
      %v950 = vpop.permute.xlu0 %949
      %952 = vset.pattern.permute.xlu0 1
      %953 = vperm.xlu0 %952, %v361
      %v954 = vpop.permute.xlu0 %953
      %956 = vset.pattern.permute.xlu0 1
      %957 = vperm.xlu0 %956, %v362
      %v958 = vpop.permute.xlu0 %957
      %960 = vset.pattern.permute.xlu0 1
      %961 = vperm.xlu0 %960, %v363
      %v962 = vpop.permute.xlu0 %961
      %964 = vset.pattern.permute.xlu0 1
      %965 = vperm.xlu0 %964, %v364
      %v966 = vpop.permute.xlu0 %965
      %968 = vset.pattern.permute.xlu0 1
      %969 = vperm.xlu0 %968, %v365
      %v970 = vpop.permute.xlu0 %969
      %972 = vset.pattern.permute.xlu0 1
      %973 = vperm.xlu0 %972, %v366
      %v974 = vpop.permute.xlu0 %973
      %976 = vset.pattern.permute.xlu0 1
      %977 = vperm.xlu0 %976, %v367
      %v978 = vpop.permute.xlu0 %977
      %980 = vset.pattern.permute.xlu0 1
      %981 = vperm.xlu0 %980, %v368
      %v982 = vpop.permute.xlu0 %981
      %984 = vset.pattern.permute.xlu0 1
      %985 = vperm.xlu0 %984, %v369
      %v986 = vpop.permute.xlu0 %985
      %988 = vset.pattern.permute.xlu0 1
      %989 = vperm.xlu0 %988, %v370
      %v990 = vpop.permute.xlu0 %989
      %992 = vset.pattern.permute.xlu0 1
      %993 = vperm.xlu0 %992, %v371
      %v994 = vpop.permute.xlu0 %993
      %996 = vset.pattern.permute.xlu0 1
      %997 = vperm.xlu0 %996, %v372
      %v998 = vpop.permute.xlu0 %997
      %1000 = vset.pattern.permute.xlu0 1
      %1001 = vperm.xlu0 %1000, %v373
      %v1002 = vpop.permute.xlu0 %1001
      %1004 = vset.pattern.permute.xlu0 1
      %1005 = vperm.xlu0 %1004, %v374
      %v1006 = vpop.permute.xlu0 %1005
      %1008 = vset.pattern.permute.xlu0 1
      %1009 = vperm.xlu0 %1008, %v375
      %v1010 = vpop.permute.xlu0 %1009
      %1012 = vset.pattern.permute.xlu0 1
      %1013 = vperm.xlu0 %1012, %v376
      %v1014 = vpop.permute.xlu0 %1013
      %1016 = vset.pattern.permute.xlu0 1
      %1017 = vperm.xlu0 %1016, %v377
      %v1018 = vpop.permute.xlu0 %1017
      %1020 = vset.pattern.permute.xlu0 1
      %1021 = vperm.xlu0 %1020, %v378
      %v1022 = vpop.permute.xlu0 %1021
      %1024 = vset.pattern.permute.xlu0 1
      %1025 = vperm.xlu0 %1024, %v379
      %v1026 = vpop.permute.xlu0 %1025
      %1028 = vset.pattern.permute.xlu0 1
      %1029 = vperm.xlu0 %1028, %v380
      %v1030 = vpop.permute.xlu0 %1029
      %1032 = vset.pattern.permute.xlu0 1
      %1033 = vperm.xlu0 %1032, %v381
      %v1034 = vpop.permute.xlu0 %1033
      %1036 = vset.pattern.permute.xlu0 1
      %1037 = vperm.xlu0 %1036, %v382
      %v1038 = vpop.permute.xlu0 %1037
      %1040 = vset.pattern.permute.xlu0 1
      %1041 = vperm.xlu0 %1040, %v383
      %v1042 = vpop.permute.xlu0 %1041
      %1044 = vset.pattern.permute.xlu0 1
      %1045 = vperm.xlu0 %1044, %v384
      %v1046 = vpop.permute.xlu0 %1045
      %1048 = vset.pattern.permute.xlu0 1
      %1049 = vperm.xlu0 %1048, %v385
      %v1050 = vpop.permute.xlu0 %1049
      %1052 = vset.pattern.permute.xlu0 1
      %1053 = vperm.xlu0 %1052, %v386
      %v1054 = vpop.permute.xlu0 %1053
      %1056 = vset.pattern.permute.xlu0 1
      %1057 = vperm.xlu0 %1056, %v387
      %v1058 = vpop.permute.xlu0 %1057
      %1060 = vset.pattern.permute.xlu0 1
      %1061 = vperm.xlu0 %1060, %v388
      %v1062 = vpop.permute.xlu0 %1061
      %1064 = vset.pattern.permute.xlu0 1
      %1065 = vperm.xlu0 %1064, %v389
      %v1066 = vpop.permute.xlu0 %1065
      %1068 = vset.pattern.permute.xlu0 1
      %1069 = vperm.xlu0 %1068, %v390
      %v1070 = vpop.permute.xlu0 %1069
      %1072 = vset.pattern.permute.xlu0 1
      %1073 = vperm.xlu0 %1072, %v391
      %v1074 = vpop.permute.xlu0 %1073
      %1076 = vset.pattern.permute.xlu0 1
      %1077 = vperm.xlu0 %1076, %v392
      %v1078 = vpop.permute.xlu0 %1077
      %1080 = vset.pattern.permute.xlu0 1
      %1081 = vperm.xlu0 %1080, %v393
      %v1082 = vpop.permute.xlu0 %1081
      %1084 = vset.pattern.permute.xlu0 1
      %1085 = vperm.xlu0 %1084, %v394
      %v1086 = vpop.permute.xlu0 %1085
      %1088 = vset.pattern.permute.xlu0 1
      %1089 = vperm.xlu0 %1088, %v395
      %v1090 = vpop.permute.xlu0 %1089
      %1092 = vset.pattern.permute.xlu0 1
      %1093 = vperm.xlu0 %1092, %v396
      %v1094 = vpop.permute.xlu0 %1093
      %1096 = vset.pattern.permute.xlu0 1
      %1097 = vperm.xlu0 %1096, %v397
      %v1098 = vpop.permute.xlu0 %1097
      %1100 = vset.pattern.permute.xlu0 1
      %1101 = vperm.xlu0 %1100, %v398
      %v1102 = vpop.permute.xlu0 %1101
      %1104 = vset.pattern.permute.xlu0 1
      %1105 = vperm.xlu0 %1104, %v399
      %v1106 = vpop.permute.xlu0 %1105
      %1108 = vset.pattern.permute.xlu0 1
      %1109 = vperm.xlu0 %1108, %v400
      %v1110 = vpop.permute.xlu0 %1109
      %v1112 = vperm.slane %v336, 1
      %v1113 = vperm.slane %v336, 3
      %v1116 = vperm.slane %v1112, 1
      %v1117 = vperm.slane %v1113, 1
      %v1118 = vmul.f32 %v858, %v1116
      %v1119 = vmul.f32 %v858, %v1117
      %v1120 = vmul.f32 %v862, %v1116
      %v1121 = vmul.f32 %v862, %v1117
      %v1122 = vmul.f32 %v866, %v1116
      %v1123 = vmul.f32 %v866, %v1117
      %v1124 = vmul.f32 %v870, %v1116
      %v1125 = vmul.f32 %v870, %v1117
      %v1126 = vmul.f32 %v874, %v1116
      %v1127 = vmul.f32 %v874, %v1117
      %v1128 = vmul.f32 %v878, %v1116
      %v1129 = vmul.f32 %v878, %v1117
      %v1130 = vmul.f32 %v882, %v1116
      %v1131 = vmul.f32 %v882, %v1117
      %v1132 = vmul.f32 %v886, %v1116
      %v1133 = vmul.f32 %v886, %v1117
      %v1134 = vmul.f32 %v890, %v1116
      %v1135 = vmul.f32 %v890, %v1117
      %v1136 = vmul.f32 %v894, %v1116
      %v1137 = vmul.f32 %v894, %v1117
      %v1138 = vmul.f32 %v898, %v1116
      %v1139 = vmul.f32 %v898, %v1117
      %v1140 = vmul.f32 %v902, %v1116
      %v1141 = vmul.f32 %v902, %v1117
      %v1142 = vmul.f32 %v906, %v1116
      %v1143 = vmul.f32 %v906, %v1117
      %v1144 = vmul.f32 %v910, %v1116
      %v1145 = vmul.f32 %v910, %v1117
      %v1146 = vmul.f32 %v914, %v1116
      %v1147 = vmul.f32 %v914, %v1117
      %v1148 = vmul.f32 %v918, %v1116
      %v1149 = vmul.f32 %v918, %v1117
      %v1150 = vmul.f32 %v922, %v1116
      %v1151 = vmul.f32 %v922, %v1117
      %v1152 = vmul.f32 %v926, %v1116
      %v1153 = vmul.f32 %v926, %v1117
      %v1154 = vmul.f32 %v930, %v1116
      %v1155 = vmul.f32 %v930, %v1117
      %v1156 = vmul.f32 %v934, %v1116
      %v1157 = vmul.f32 %v934, %v1117
      %v1158 = vmul.f32 %v938, %v1116
      %v1159 = vmul.f32 %v938, %v1117
      %v1160 = vmul.f32 %v942, %v1116
      %v1161 = vmul.f32 %v942, %v1117
      %v1162 = vmul.f32 %v946, %v1116
      %v1163 = vmul.f32 %v946, %v1117
      %v1164 = vmul.f32 %v950, %v1116
      %v1165 = vmul.f32 %v950, %v1117
      %v1166 = vmul.f32 %v954, %v1116
      %v1167 = vmul.f32 %v954, %v1117
      %v1168 = vmul.f32 %v958, %v1116
      %v1169 = vmul.f32 %v958, %v1117
      %v1170 = vmul.f32 %v962, %v1116
      %v1171 = vmul.f32 %v962, %v1117
      %v1172 = vmul.f32 %v966, %v1116
      %v1173 = vmul.f32 %v966, %v1117
      %v1174 = vmul.f32 %v970, %v1116
      %v1175 = vmul.f32 %v970, %v1117
      %v1176 = vmul.f32 %v974, %v1116
      %v1177 = vmul.f32 %v974, %v1117
      %v1178 = vmul.f32 %v978, %v1116
      %v1179 = vmul.f32 %v978, %v1117
      %v1180 = vmul.f32 %v982, %v1116
      %v1181 = vmul.f32 %v982, %v1117
      %v1182 = vmul.f32 %v986, %v1116
      %v1183 = vmul.f32 %v986, %v1117
      %v1184 = vmul.f32 %v990, %v1116
      %v1185 = vmul.f32 %v990, %v1117
      %v1186 = vmul.f32 %v994, %v1116
      %v1187 = vmul.f32 %v994, %v1117
      %v1188 = vmul.f32 %v998, %v1116
      %v1189 = vmul.f32 %v998, %v1117
      %v1190 = vmul.f32 %v1002, %v1116
      %v1191 = vmul.f32 %v1002, %v1117
      %v1192 = vmul.f32 %v1006, %v1116
      %v1193 = vmul.f32 %v1006, %v1117
      %v1194 = vmul.f32 %v1010, %v1116
      %v1195 = vmul.f32 %v1010, %v1117
      %v1196 = vmul.f32 %v1014, %v1116
      %v1197 = vmul.f32 %v1014, %v1117
      %v1198 = vmul.f32 %v1018, %v1116
      %v1199 = vmul.f32 %v1018, %v1117
      %v1200 = vmul.f32 %v1022, %v1116
      %v1201 = vmul.f32 %v1022, %v1117
      %v1202 = vmul.f32 %v1026, %v1116
      %v1203 = vmul.f32 %v1026, %v1117
      %v1204 = vmul.f32 %v1030, %v1116
      %v1205 = vmul.f32 %v1030, %v1117
      %v1206 = vmul.f32 %v1034, %v1116
      %v1207 = vmul.f32 %v1034, %v1117
      %v1208 = vmul.f32 %v1038, %v1116
      %v1209 = vmul.f32 %v1038, %v1117
      %v1210 = vmul.f32 %v1042, %v1116
      %v1211 = vmul.f32 %v1042, %v1117
      %v1212 = vmul.f32 %v1046, %v1116
      %v1213 = vmul.f32 %v1046, %v1117
      %v1214 = vmul.f32 %v1050, %v1116
      %v1215 = vmul.f32 %v1050, %v1117
      %v1216 = vmul.f32 %v1054, %v1116
      %v1217 = vmul.f32 %v1054, %v1117
      %v1218 = vmul.f32 %v1058, %v1116
      %v1219 = vmul.f32 %v1058, %v1117
      %v1220 = vmul.f32 %v1062, %v1116
      %v1221 = vmul.f32 %v1062, %v1117
      %v1222 = vmul.f32 %v1066, %v1116
      %v1223 = vmul.f32 %v1066, %v1117
      %v1224 = vmul.f32 %v1070, %v1116
      %v1225 = vmul.f32 %v1070, %v1117
      %v1226 = vmul.f32 %v1074, %v1116
      %v1227 = vmul.f32 %v1074, %v1117
      %v1228 = vmul.f32 %v1078, %v1116
      %v1229 = vmul.f32 %v1078, %v1117
      %v1230 = vmul.f32 %v1082, %v1116
      %v1231 = vmul.f32 %v1082, %v1117
      %v1232 = vmul.f32 %v1086, %v1116
      %v1233 = vmul.f32 %v1086, %v1117
      %v1234 = vmul.f32 %v1090, %v1116
      %v1235 = vmul.f32 %v1090, %v1117
      %v1236 = vmul.f32 %v1094, %v1116
      %v1237 = vmul.f32 %v1094, %v1117
      %v1238 = vmul.f32 %v1098, %v1116
      %v1239 = vmul.f32 %v1098, %v1117
      %v1240 = vmul.f32 %v1102, %v1116
      %v1241 = vmul.f32 %v1102, %v1117
      %v1242 = vmul.f32 %v1106, %v1116
      %v1243 = vmul.f32 %v1106, %v1117
      %v1244 = vmul.f32 %v1110, %v1116
      %v1245 = vmul.f32 %v1110, %v1117
      %v1246 = vadd.f32 %v728, %v1118
      %v1247 = vadd.f32 %v729, %v1119
      %v1248 = vadd.f32 %v730, %v1120
      %v1249 = vadd.f32 %v731, %v1121
      %v1250 = vadd.f32 %v732, %v1122
      %v1251 = vadd.f32 %v733, %v1123
      %v1252 = vadd.f32 %v734, %v1124
      %v1253 = vadd.f32 %v735, %v1125
      %v1254 = vadd.f32 %v736, %v1126
      %v1255 = vadd.f32 %v737, %v1127
      %v1256 = vadd.f32 %v738, %v1128
      %v1257 = vadd.f32 %v739, %v1129
      %v1258 = vadd.f32 %v740, %v1130
      %v1259 = vadd.f32 %v741, %v1131
      %v1260 = vadd.f32 %v742, %v1132
      %v1261 = vadd.f32 %v743, %v1133
      %v1262 = vadd.f32 %v744, %v1134
      %v1263 = vadd.f32 %v745, %v1135
      %v1264 = vadd.f32 %v746, %v1136
      %v1265 = vadd.f32 %v747, %v1137
      %v1266 = vadd.f32 %v748, %v1138
      %v1267 = vadd.f32 %v749, %v1139
      %v1268 = vadd.f32 %v750, %v1140
      %v1269 = vadd.f32 %v751, %v1141
      %v1270 = vadd.f32 %v752, %v1142
      %v1271 = vadd.f32 %v753, %v1143
      %v1272 = vadd.f32 %v754, %v1144
      %v1273 = vadd.f32 %v755, %v1145
      %v1274 = vadd.f32 %v756, %v1146
      %v1275 = vadd.f32 %v757, %v1147
      %v1276 = vadd.f32 %v758, %v1148
      %v1277 = vadd.f32 %v759, %v1149
      %v1278 = vadd.f32 %v760, %v1150
      %v1279 = vadd.f32 %v761, %v1151
      %v1280 = vadd.f32 %v762, %v1152
      %v1281 = vadd.f32 %v763, %v1153
      %v1282 = vadd.f32 %v764, %v1154
      %v1283 = vadd.f32 %v765, %v1155
      %v1284 = vadd.f32 %v766, %v1156
      %v1285 = vadd.f32 %v767, %v1157
      %v1286 = vadd.f32 %v768, %v1158
      %v1287 = vadd.f32 %v769, %v1159
      %v1288 = vadd.f32 %v770, %v1160
      %v1289 = vadd.f32 %v771, %v1161
      %v1290 = vadd.f32 %v772, %v1162
      %v1291 = vadd.f32 %v773, %v1163
      %v1292 = vadd.f32 %v774, %v1164
      %v1293 = vadd.f32 %v775, %v1165
      %v1294 = vadd.f32 %v776, %v1166
      %v1295 = vadd.f32 %v777, %v1167
      %v1296 = vadd.f32 %v778, %v1168
      %v1297 = vadd.f32 %v779, %v1169
      %v1298 = vadd.f32 %v780, %v1170
      %v1299 = vadd.f32 %v781, %v1171
      %v1300 = vadd.f32 %v782, %v1172
      %v1301 = vadd.f32 %v783, %v1173
      %v1302 = vadd.f32 %v784, %v1174
      %v1303 = vadd.f32 %v785, %v1175
      %v1304 = vadd.f32 %v786, %v1176
      %v1305 = vadd.f32 %v787, %v1177
      %v1306 = vadd.f32 %v788, %v1178
      %v1307 = vadd.f32 %v789, %v1179
      %v1308 = vadd.f32 %v790, %v1180
      %v1309 = vadd.f32 %v791, %v1181
      %v1310 = vadd.f32 %v792, %v1182
      %v1311 = vadd.f32 %v793, %v1183
      %v1312 = vadd.f32 %v794, %v1184
      %v1313 = vadd.f32 %v795, %v1185
      %v1314 = vadd.f32 %v796, %v1186
      %v1315 = vadd.f32 %v797, %v1187
      %v1316 = vadd.f32 %v798, %v1188
      %v1317 = vadd.f32 %v799, %v1189
      %v1318 = vadd.f32 %v800, %v1190
      %v1319 = vadd.f32 %v801, %v1191
      %v1320 = vadd.f32 %v802, %v1192
      %v1321 = vadd.f32 %v803, %v1193
      %v1322 = vadd.f32 %v804, %v1194
      %v1323 = vadd.f32 %v805, %v1195
      %v1324 = vadd.f32 %v806, %v1196
      %v1325 = vadd.f32 %v807, %v1197
      %v1326 = vadd.f32 %v808, %v1198
      %v1327 = vadd.f32 %v809, %v1199
      %v1328 = vadd.f32 %v810, %v1200
      %v1329 = vadd.f32 %v811, %v1201
      %v1330 = vadd.f32 %v812, %v1202
      %v1331 = vadd.f32 %v813, %v1203
      %v1332 = vadd.f32 %v814, %v1204
      %v1333 = vadd.f32 %v815, %v1205
      %v1334 = vadd.f32 %v816, %v1206
      %v1335 = vadd.f32 %v817, %v1207
      %v1336 = vadd.f32 %v818, %v1208
      %v1337 = vadd.f32 %v819, %v1209
      %v1338 = vadd.f32 %v820, %v1210
      %v1339 = vadd.f32 %v821, %v1211
      %v1340 = vadd.f32 %v822, %v1212
      %v1341 = vadd.f32 %v823, %v1213
      %v1342 = vadd.f32 %v824, %v1214
      %v1343 = vadd.f32 %v825, %v1215
      %v1344 = vadd.f32 %v826, %v1216
      %v1345 = vadd.f32 %v827, %v1217
      %v1346 = vadd.f32 %v828, %v1218
      %v1347 = vadd.f32 %v829, %v1219
      %v1348 = vadd.f32 %v830, %v1220
      %v1349 = vadd.f32 %v831, %v1221
      %v1350 = vadd.f32 %v832, %v1222
      %v1351 = vadd.f32 %v833, %v1223
      %v1352 = vadd.f32 %v834, %v1224
      %v1353 = vadd.f32 %v835, %v1225
      %v1354 = vadd.f32 %v836, %v1226
      %v1355 = vadd.f32 %v837, %v1227
      %v1356 = vadd.f32 %v838, %v1228
      %v1357 = vadd.f32 %v839, %v1229
      %v1358 = vadd.f32 %v840, %v1230
      %v1359 = vadd.f32 %v841, %v1231
      %v1360 = vadd.f32 %v842, %v1232
      %v1361 = vadd.f32 %v843, %v1233
      %v1362 = vadd.f32 %v844, %v1234
      %v1363 = vadd.f32 %v845, %v1235
      %v1364 = vadd.f32 %v846, %v1236
      %v1365 = vadd.f32 %v847, %v1237
      %v1366 = vadd.f32 %v848, %v1238
      %v1367 = vadd.f32 %v849, %v1239
      %v1368 = vadd.f32 %v850, %v1240
      %v1369 = vadd.f32 %v851, %v1241
      %v1370 = vadd.f32 %v852, %v1242
      %v1371 = vadd.f32 %v853, %v1243
      %v1372 = vadd.f32 %v854, %v1244
      %v1373 = vadd.f32 %v855, %v1245
      %v1374 = vld [vmem:[%s2] sm:$0xff]
      %v1375 = vld [vmem:[%s2 + $0x8] sm:$0xff]
      %v1376 = vld [vmem:[%s2 + $0x10] sm:$0xff]
      %v1377 = vld [vmem:[%s2 + $0x18] sm:$0xff]
      %v1378 = vld [vmem:[%s2 + $0x20] sm:$0xff]
      %v1379 = vld [vmem:[%s2 + $0x28] sm:$0xff]
      %v1380 = vld [vmem:[%s2 + $0x30] sm:$0xff]
      %v1381 = vld [vmem:[%s2 + $0x38] sm:$0xff]
      %v1382 = vld [vmem:[%s2 + $0x40] sm:$0xff]
      %v1383 = vld [vmem:[%s2 + $0x48] sm:$0xff]
      %v1384 = vld [vmem:[%s2 + $0x50] sm:$0xff]
      %v1385 = vld [vmem:[%s2 + $0x58] sm:$0xff]
      %v1386 = vld [vmem:[%s2 + $0x60] sm:$0xff]
      %v1387 = vld [vmem:[%s2 + $0x68] sm:$0xff]
      %v1388 = vld [vmem:[%s2 + $0x70] sm:$0xff]
      %v1389 = vld [vmem:[%s2 + $0x78] sm:$0xff]
      %v1390 = vld [vmem:[%s2 + $0x80] sm:$0xff]
      %v1391 = vld [vmem:[%s2 + $0x88] sm:$0xff]
      %v1392 = vld [vmem:[%s2 + $0x90] sm:$0xff]
      %v1393 = vld [vmem:[%s2 + $0x98] sm:$0xff]
      %v1394 = vld [vmem:[%s2 + $0xa0] sm:$0xff]
      %v1395 = vld [vmem:[%s2 + $0xa8] sm:$0xff]
      %v1396 = vld [vmem:[%s2 + $0xb0] sm:$0xff]
      %v1397 = vld [vmem:[%s2 + $0xb8] sm:$0xff]
      %v1398 = vld [vmem:[%s2 + $0xc0] sm:$0xff]
      %v1399 = vld [vmem:[%s2 + $0xc8] sm:$0xff]
      %v1400 = vld [vmem:[%s2 + $0xd0] sm:$0xff]
      %v1401 = vld [vmem:[%s2 + $0xd8] sm:$0xff]
      %v1402 = vld [vmem:[%s2 + $0xe0] sm:$0xff]
      %v1403 = vld [vmem:[%s2 + $0xe8] sm:$0xff]
      %v1404 = vld [vmem:[%s2 + $0xf0] sm:$0xff]
      %v1405 = vld [vmem:[%s2 + $0xf8] sm:$0xff]
      %v1406 = vld [vmem:[%s2 + $0x100] sm:$0xff]
      %v1407 = vld [vmem:[%s2 + $0x108] sm:$0xff]
      %v1408 = vld [vmem:[%s2 + $0x110] sm:$0xff]
      %v1409 = vld [vmem:[%s2 + $0x118] sm:$0xff]
      %v1410 = vld [vmem:[%s2 + $0x120] sm:$0xff]
      %v1411 = vld [vmem:[%s2 + $0x128] sm:$0xff]
      %v1412 = vld [vmem:[%s2 + $0x130] sm:$0xff]
      %v1413 = vld [vmem:[%s2 + $0x138] sm:$0xff]
      %v1414 = vld [vmem:[%s2 + $0x140] sm:$0xff]
      %v1415 = vld [vmem:[%s2 + $0x148] sm:$0xff]
      %v1416 = vld [vmem:[%s2 + $0x150] sm:$0xff]
      %v1417 = vld [vmem:[%s2 + $0x158] sm:$0xff]
      %v1418 = vld [vmem:[%s2 + $0x160] sm:$0xff]
      %v1419 = vld [vmem:[%s2 + $0x168] sm:$0xff]
      %v1420 = vld [vmem:[%s2 + $0x170] sm:$0xff]
      %v1421 = vld [vmem:[%s2 + $0x178] sm:$0xff]
      %v1422 = vld [vmem:[%s2 + $0x180] sm:$0xff]
      %v1423 = vld [vmem:[%s2 + $0x188] sm:$0xff]
      %v1424 = vld [vmem:[%s2 + $0x190] sm:$0xff]
      %v1425 = vld [vmem:[%s2 + $0x198] sm:$0xff]
      %v1426 = vld [vmem:[%s2 + $0x1a0] sm:$0xff]
      %v1427 = vld [vmem:[%s2 + $0x1a8] sm:$0xff]
      %v1428 = vld [vmem:[%s2 + $0x1b0] sm:$0xff]
      %v1429 = vld [vmem:[%s2 + $0x1b8] sm:$0xff]
      %v1430 = vld [vmem:[%s2 + $0x1c0] sm:$0xff]
      %v1431 = vld [vmem:[%s2 + $0x1c8] sm:$0xff]
      %v1432 = vld [vmem:[%s2 + $0x1d0] sm:$0xff]
      %v1433 = vld [vmem:[%s2 + $0x1d8] sm:$0xff]
      %v1434 = vld [vmem:[%s2 + $0x1e0] sm:$0xff]
      %v1435 = vld [vmem:[%s2 + $0x1e8] sm:$0xff]
      %v1436 = vld [vmem:[%s2 + $0x1f0] sm:$0xff]
      %v1437 = vld [vmem:[%s2 + $0x1f8] sm:$0xff]
      %1439 = vset.pattern.permute.xlu0 0
      %1440 = vperm.xlu0 %1439, %v1374
      %v1441 = vpop.permute.xlu0 %1440
      %1444 = vset.pattern.permute.xlu0 0
      %1445 = vperm.xlu0 %1444, %v1375
      %v1446 = vpop.permute.xlu0 %1445
      %1449 = vset.pattern.permute.xlu0 0
      %1450 = vperm.xlu0 %1449, %v1376
      %v1451 = vpop.permute.xlu0 %1450
      %1454 = vset.pattern.permute.xlu0 0
      %1455 = vperm.xlu0 %1454, %v1377
      %v1456 = vpop.permute.xlu0 %1455
      %1459 = vset.pattern.permute.xlu0 0
      %1460 = vperm.xlu0 %1459, %v1378
      %v1461 = vpop.permute.xlu0 %1460
      %1464 = vset.pattern.permute.xlu0 0
      %1465 = vperm.xlu0 %1464, %v1379
      %v1466 = vpop.permute.xlu0 %1465
      %1469 = vset.pattern.permute.xlu0 0
      %1470 = vperm.xlu0 %1469, %v1380
      %v1471 = vpop.permute.xlu0 %1470
      %1474 = vset.pattern.permute.xlu0 0
      %1475 = vperm.xlu0 %1474, %v1381
      %v1476 = vpop.permute.xlu0 %1475
      %1479 = vset.pattern.permute.xlu0 0
      %1480 = vperm.xlu0 %1479, %v1382
      %v1481 = vpop.permute.xlu0 %1480
      %1484 = vset.pattern.permute.xlu0 0
      %1485 = vperm.xlu0 %1484, %v1383
      %v1486 = vpop.permute.xlu0 %1485
      %1489 = vset.pattern.permute.xlu0 0
      %1490 = vperm.xlu0 %1489, %v1384
      %v1491 = vpop.permute.xlu0 %1490
      %1494 = vset.pattern.permute.xlu0 0
      %1495 = vperm.xlu0 %1494, %v1385
      %v1496 = vpop.permute.xlu0 %1495
      %1499 = vset.pattern.permute.xlu0 0
      %1500 = vperm.xlu0 %1499, %v1386
      %v1501 = vpop.permute.xlu0 %1500
      %1504 = vset.pattern.permute.xlu0 0
      %1505 = vperm.xlu0 %1504, %v1387
      %v1506 = vpop.permute.xlu0 %1505
      %1509 = vset.pattern.permute.xlu0 0
      %1510 = vperm.xlu0 %1509, %v1388
      %v1511 = vpop.permute.xlu0 %1510
      %1514 = vset.pattern.permute.xlu0 0
      %1515 = vperm.xlu0 %1514, %v1389
      %v1516 = vpop.permute.xlu0 %1515
      %1519 = vset.pattern.permute.xlu0 0
      %1520 = vperm.xlu0 %1519, %v1390
      %v1521 = vpop.permute.xlu0 %1520
      %1524 = vset.pattern.permute.xlu0 0
      %1525 = vperm.xlu0 %1524, %v1391
      %v1526 = vpop.permute.xlu0 %1525
      %1529 = vset.pattern.permute.xlu0 0
      %1530 = vperm.xlu0 %1529, %v1392
      %v1531 = vpop.permute.xlu0 %1530
      %1534 = vset.pattern.permute.xlu0 0
      %1535 = vperm.xlu0 %1534, %v1393
      %v1536 = vpop.permute.xlu0 %1535
      %1539 = vset.pattern.permute.xlu0 0
      %1540 = vperm.xlu0 %1539, %v1394
      %v1541 = vpop.permute.xlu0 %1540
      %1544 = vset.pattern.permute.xlu0 0
      %1545 = vperm.xlu0 %1544, %v1395
      %v1546 = vpop.permute.xlu0 %1545
      %1549 = vset.pattern.permute.xlu0 0
      %1550 = vperm.xlu0 %1549, %v1396
      %v1551 = vpop.permute.xlu0 %1550
      %1554 = vset.pattern.permute.xlu0 0
      %1555 = vperm.xlu0 %1554, %v1397
      %v1556 = vpop.permute.xlu0 %1555
      %1559 = vset.pattern.permute.xlu0 0
      %1560 = vperm.xlu0 %1559, %v1398
      %v1561 = vpop.permute.xlu0 %1560
      %1564 = vset.pattern.permute.xlu0 0
      %1565 = vperm.xlu0 %1564, %v1399
      %v1566 = vpop.permute.xlu0 %1565
      %1569 = vset.pattern.permute.xlu0 0
      %1570 = vperm.xlu0 %1569, %v1400
      %v1571 = vpop.permute.xlu0 %1570
      %1574 = vset.pattern.permute.xlu0 0
      %1575 = vperm.xlu0 %1574, %v1401
      %v1576 = vpop.permute.xlu0 %1575
      %1579 = vset.pattern.permute.xlu0 0
      %1580 = vperm.xlu0 %1579, %v1402
      %v1581 = vpop.permute.xlu0 %1580
      %1584 = vset.pattern.permute.xlu0 0
      %1585 = vperm.xlu0 %1584, %v1403
      %v1586 = vpop.permute.xlu0 %1585
      %1589 = vset.pattern.permute.xlu0 0
      %1590 = vperm.xlu0 %1589, %v1404
      %v1591 = vpop.permute.xlu0 %1590
      %1594 = vset.pattern.permute.xlu0 0
      %1595 = vperm.xlu0 %1594, %v1405
      %v1596 = vpop.permute.xlu0 %1595
      %1599 = vset.pattern.permute.xlu0 0
      %1600 = vperm.xlu0 %1599, %v1406
      %v1601 = vpop.permute.xlu0 %1600
      %1604 = vset.pattern.permute.xlu0 0
      %1605 = vperm.xlu0 %1604, %v1407
      %v1606 = vpop.permute.xlu0 %1605
      %1609 = vset.pattern.permute.xlu0 0
      %1610 = vperm.xlu0 %1609, %v1408
      %v1611 = vpop.permute.xlu0 %1610
      %1614 = vset.pattern.permute.xlu0 0
      %1615 = vperm.xlu0 %1614, %v1409
      %v1616 = vpop.permute.xlu0 %1615
      %1619 = vset.pattern.permute.xlu0 0
      %1620 = vperm.xlu0 %1619, %v1410
      %v1621 = vpop.permute.xlu0 %1620
      %1624 = vset.pattern.permute.xlu0 0
      %1625 = vperm.xlu0 %1624, %v1411
      %v1626 = vpop.permute.xlu0 %1625
      %1629 = vset.pattern.permute.xlu0 0
      %1630 = vperm.xlu0 %1629, %v1412
      %v1631 = vpop.permute.xlu0 %1630
      %1634 = vset.pattern.permute.xlu0 0
      %1635 = vperm.xlu0 %1634, %v1413
      %v1636 = vpop.permute.xlu0 %1635
      %1639 = vset.pattern.permute.xlu0 0
      %1640 = vperm.xlu0 %1639, %v1414
      %v1641 = vpop.permute.xlu0 %1640
      %1644 = vset.pattern.permute.xlu0 0
      %1645 = vperm.xlu0 %1644, %v1415
      %v1646 = vpop.permute.xlu0 %1645
      %1649 = vset.pattern.permute.xlu0 0
      %1650 = vperm.xlu0 %1649, %v1416
      %v1651 = vpop.permute.xlu0 %1650
      %1654 = vset.pattern.permute.xlu0 0
      %1655 = vperm.xlu0 %1654, %v1417
      %v1656 = vpop.permute.xlu0 %1655
      %1659 = vset.pattern.permute.xlu0 0
      %1660 = vperm.xlu0 %1659, %v1418
      %v1661 = vpop.permute.xlu0 %1660
      %1664 = vset.pattern.permute.xlu0 0
      %1665 = vperm.xlu0 %1664, %v1419
      %v1666 = vpop.permute.xlu0 %1665
      %1669 = vset.pattern.permute.xlu0 0
      %1670 = vperm.xlu0 %1669, %v1420
      %v1671 = vpop.permute.xlu0 %1670
      %1674 = vset.pattern.permute.xlu0 0
      %1675 = vperm.xlu0 %1674, %v1421
      %v1676 = vpop.permute.xlu0 %1675
      %1679 = vset.pattern.permute.xlu0 0
      %1680 = vperm.xlu0 %1679, %v1422
      %v1681 = vpop.permute.xlu0 %1680
      %1684 = vset.pattern.permute.xlu0 0
      %1685 = vperm.xlu0 %1684, %v1423
      %v1686 = vpop.permute.xlu0 %1685
      %1689 = vset.pattern.permute.xlu0 0
      %1690 = vperm.xlu0 %1689, %v1424
      %v1691 = vpop.permute.xlu0 %1690
      %1694 = vset.pattern.permute.xlu0 0
      %1695 = vperm.xlu0 %1694, %v1425
      %v1696 = vpop.permute.xlu0 %1695
      %1699 = vset.pattern.permute.xlu0 0
      %1700 = vperm.xlu0 %1699, %v1426
      %v1701 = vpop.permute.xlu0 %1700
      %1704 = vset.pattern.permute.xlu0 0
      %1705 = vperm.xlu0 %1704, %v1427
      %v1706 = vpop.permute.xlu0 %1705
      %1709 = vset.pattern.permute.xlu0 0
      %1710 = vperm.xlu0 %1709, %v1428
      %v1711 = vpop.permute.xlu0 %1710
      %1714 = vset.pattern.permute.xlu0 0
      %1715 = vperm.xlu0 %1714, %v1429
      %v1716 = vpop.permute.xlu0 %1715
      %1719 = vset.pattern.permute.xlu0 0
      %1720 = vperm.xlu0 %1719, %v1430
      %v1721 = vpop.permute.xlu0 %1720
      %1724 = vset.pattern.permute.xlu0 0
      %1725 = vperm.xlu0 %1724, %v1431
      %v1726 = vpop.permute.xlu0 %1725
      %1729 = vset.pattern.permute.xlu0 0
      %1730 = vperm.xlu0 %1729, %v1432
      %v1731 = vpop.permute.xlu0 %1730
      %1734 = vset.pattern.permute.xlu0 0
      %1735 = vperm.xlu0 %1734, %v1433
      %v1736 = vpop.permute.xlu0 %1735
      %1739 = vset.pattern.permute.xlu0 0
      %1740 = vperm.xlu0 %1739, %v1434
      %v1741 = vpop.permute.xlu0 %1740
      %1744 = vset.pattern.permute.xlu0 0
      %1745 = vperm.xlu0 %1744, %v1435
      %v1746 = vpop.permute.xlu0 %1745
      %1749 = vset.pattern.permute.xlu0 0
      %1750 = vperm.xlu0 %1749, %v1436
      %v1751 = vpop.permute.xlu0 %1750
      %1754 = vset.pattern.permute.xlu0 0
      %1755 = vperm.xlu0 %1754, %v1437
      %v1756 = vpop.permute.xlu0 %1755
      %v1758 = vadd.f32 %v1246, %v1441
      %v1759 = vadd.f32 %v1247, %v1441
      %v1760 = vadd.f32 %v1248, %v1446
      %v1761 = vadd.f32 %v1249, %v1446
      %v1762 = vadd.f32 %v1250, %v1451
      %v1763 = vadd.f32 %v1251, %v1451
      %v1764 = vadd.f32 %v1252, %v1456
      %v1765 = vadd.f32 %v1253, %v1456
      %v1766 = vadd.f32 %v1254, %v1461
      %v1767 = vadd.f32 %v1255, %v1461
      %v1768 = vadd.f32 %v1256, %v1466
      %v1769 = vadd.f32 %v1257, %v1466
      %v1770 = vadd.f32 %v1258, %v1471
      %v1771 = vadd.f32 %v1259, %v1471
      %v1772 = vadd.f32 %v1260, %v1476
      %v1773 = vadd.f32 %v1261, %v1476
      %v1774 = vadd.f32 %v1262, %v1481
      %v1775 = vadd.f32 %v1263, %v1481
      %v1776 = vadd.f32 %v1264, %v1486
      %v1777 = vadd.f32 %v1265, %v1486
      %v1778 = vadd.f32 %v1266, %v1491
      %v1779 = vadd.f32 %v1267, %v1491
      %v1780 = vadd.f32 %v1268, %v1496
      %v1781 = vadd.f32 %v1269, %v1496
      %v1782 = vadd.f32 %v1270, %v1501
      %v1783 = vadd.f32 %v1271, %v1501
      %v1784 = vadd.f32 %v1272, %v1506
      %v1785 = vadd.f32 %v1273, %v1506
      %v1786 = vadd.f32 %v1274, %v1511
      %v1787 = vadd.f32 %v1275, %v1511
      %v1788 = vadd.f32 %v1276, %v1516
      %v1789 = vadd.f32 %v1277, %v1516
      %v1790 = vadd.f32 %v1278, %v1521
      %v1791 = vadd.f32 %v1279, %v1521
      %v1792 = vadd.f32 %v1280, %v1526
      %v1793 = vadd.f32 %v1281, %v1526
      %v1794 = vadd.f32 %v1282, %v1531
      %v1795 = vadd.f32 %v1283, %v1531
      %v1796 = vadd.f32 %v1284, %v1536
      %v1797 = vadd.f32 %v1285, %v1536
      %v1798 = vadd.f32 %v1286, %v1541
      %v1799 = vadd.f32 %v1287, %v1541
      %v1800 = vadd.f32 %v1288, %v1546
      %v1801 = vadd.f32 %v1289, %v1546
      %v1802 = vadd.f32 %v1290, %v1551
      %v1803 = vadd.f32 %v1291, %v1551
      %v1804 = vadd.f32 %v1292, %v1556
      %v1805 = vadd.f32 %v1293, %v1556
      %v1806 = vadd.f32 %v1294, %v1561
      %v1807 = vadd.f32 %v1295, %v1561
      %v1808 = vadd.f32 %v1296, %v1566
      %v1809 = vadd.f32 %v1297, %v1566
      %v1810 = vadd.f32 %v1298, %v1571
      %v1811 = vadd.f32 %v1299, %v1571
      %v1812 = vadd.f32 %v1300, %v1576
      %v1813 = vadd.f32 %v1301, %v1576
      %v1814 = vadd.f32 %v1302, %v1581
      %v1815 = vadd.f32 %v1303, %v1581
      %v1816 = vadd.f32 %v1304, %v1586
      %v1817 = vadd.f32 %v1305, %v1586
      %v1818 = vadd.f32 %v1306, %v1591
      %v1819 = vadd.f32 %v1307, %v1591
      %v1820 = vadd.f32 %v1308, %v1596
      %v1821 = vadd.f32 %v1309, %v1596
      %v1822 = vadd.f32 %v1310, %v1601
      %v1823 = vadd.f32 %v1311, %v1601
      %v1824 = vadd.f32 %v1312, %v1606
      %v1825 = vadd.f32 %v1313, %v1606
      %v1826 = vadd.f32 %v1314, %v1611
      %v1827 = vadd.f32 %v1315, %v1611
      %v1828 = vadd.f32 %v1316, %v1616
      %v1829 = vadd.f32 %v1317, %v1616
      %v1830 = vadd.f32 %v1318, %v1621
      %v1831 = vadd.f32 %v1319, %v1621
      %v1832 = vadd.f32 %v1320, %v1626
      %v1833 = vadd.f32 %v1321, %v1626
      %v1834 = vadd.f32 %v1322, %v1631
      %v1835 = vadd.f32 %v1323, %v1631
      %v1836 = vadd.f32 %v1324, %v1636
      %v1837 = vadd.f32 %v1325, %v1636
      %v1838 = vadd.f32 %v1326, %v1641
      %v1839 = vadd.f32 %v1327, %v1641
      %v1840 = vadd.f32 %v1328, %v1646
      %v1841 = vadd.f32 %v1329, %v1646
      %v1842 = vadd.f32 %v1330, %v1651
      %v1843 = vadd.f32 %v1331, %v1651
      %v1844 = vadd.f32 %v1332, %v1656
      %v1845 = vadd.f32 %v1333, %v1656
      %v1846 = vadd.f32 %v1334, %v1661
      %v1847 = vadd.f32 %v1335, %v1661
      %v1848 = vadd.f32 %v1336, %v1666
      %v1849 = vadd.f32 %v1337, %v1666
      %v1850 = vadd.f32 %v1338, %v1671
      %v1851 = vadd.f32 %v1339, %v1671
      %v1852 = vadd.f32 %v1340, %v1676
      %v1853 = vadd.f32 %v1341, %v1676
      %v1854 = vadd.f32 %v1342, %v1681
      %v1855 = vadd.f32 %v1343, %v1681
      %v1856 = vadd.f32 %v1344, %v1686
      %v1857 = vadd.f32 %v1345, %v1686
      %v1858 = vadd.f32 %v1346, %v1691
      %v1859 = vadd.f32 %v1347, %v1691
      %v1860 = vadd.f32 %v1348, %v1696
      %v1861 = vadd.f32 %v1349, %v1696
      %v1862 = vadd.f32 %v1350, %v1701
      %v1863 = vadd.f32 %v1351, %v1701
      %v1864 = vadd.f32 %v1352, %v1706
      %v1865 = vadd.f32 %v1353, %v1706
      %v1866 = vadd.f32 %v1354, %v1711
      %v1867 = vadd.f32 %v1355, %v1711
      %v1868 = vadd.f32 %v1356, %v1716
      %v1869 = vadd.f32 %v1357, %v1716
      %v1870 = vadd.f32 %v1358, %v1721
      %v1871 = vadd.f32 %v1359, %v1721
      %v1872 = vadd.f32 %v1360, %v1726
      %v1873 = vadd.f32 %v1361, %v1726
      %v1874 = vadd.f32 %v1362, %v1731
      %v1875 = vadd.f32 %v1363, %v1731
      %v1876 = vadd.f32 %v1364, %v1736
      %v1877 = vadd.f32 %v1365, %v1736
      %v1878 = vadd.f32 %v1366, %v1741
      %v1879 = vadd.f32 %v1367, %v1741
      %v1880 = vadd.f32 %v1368, %v1746
      %v1881 = vadd.f32 %v1369, %v1746
      %v1882 = vadd.f32 %v1370, %v1751
      %v1883 = vadd.f32 %v1371, %v1751
      %v1884 = vadd.f32 %v1372, %v1756
      %v1885 = vadd.f32 %v1373, %v1756
      %vm1886 = vcmp.gt.f32.partialorder %v1758, 0.0
      %vm1887 = vcmp.gt.f32.partialorder %v1759, 0.0
      %vm1888 = vcmp.gt.f32.partialorder %v1760, 0.0
      %vm1889 = vcmp.gt.f32.partialorder %v1761, 0.0
      %vm1890 = vcmp.gt.f32.partialorder %v1762, 0.0
      %vm1891 = vcmp.gt.f32.partialorder %v1763, 0.0
      %vm1892 = vcmp.gt.f32.partialorder %v1764, 0.0
      %vm1893 = vcmp.gt.f32.partialorder %v1765, 0.0
      %vm1894 = vcmp.gt.f32.partialorder %v1766, 0.0
      %vm1895 = vcmp.gt.f32.partialorder %v1767, 0.0
      %vm1896 = vcmp.gt.f32.partialorder %v1768, 0.0
      %vm1897 = vcmp.gt.f32.partialorder %v1769, 0.0
      %vm1898 = vcmp.gt.f32.partialorder %v1770, 0.0
      %vm1899 = vcmp.gt.f32.partialorder %v1771, 0.0
      %vm1900 = vcmp.gt.f32.partialorder %v1772, 0.0
      %vm1901 = vcmp.gt.f32.partialorder %v1773, 0.0
      %vm1902 = vcmp.gt.f32.partialorder %v1774, 0.0
      %vm1903 = vcmp.gt.f32.partialorder %v1775, 0.0
      %vm1904 = vcmp.gt.f32.partialorder %v1776, 0.0
      %vm1905 = vcmp.gt.f32.partialorder %v1777, 0.0
      %vm1906 = vcmp.gt.f32.partialorder %v1778, 0.0
      %vm1907 = vcmp.gt.f32.partialorder %v1779, 0.0
      %vm1908 = vcmp.gt.f32.partialorder %v1780, 0.0
      %vm1909 = vcmp.gt.f32.partialorder %v1781, 0.0
      %vm1910 = vcmp.gt.f32.partialorder %v1782, 0.0
      %vm1911 = vcmp.gt.f32.partialorder %v1783, 0.0
      %vm1912 = vcmp.gt.f32.partialorder %v1784, 0.0
      %vm1913 = vcmp.gt.f32.partialorder %v1785, 0.0
      %vm1914 = vcmp.gt.f32.partialorder %v1786, 0.0
      %vm1915 = vcmp.gt.f32.partialorder %v1787, 0.0
      %vm1916 = vcmp.gt.f32.partialorder %v1788, 0.0
      %vm1917 = vcmp.gt.f32.partialorder %v1789, 0.0
      %vm1918 = vcmp.gt.f32.partialorder %v1790, 0.0
      %vm1919 = vcmp.gt.f32.partialorder %v1791, 0.0
      %vm1920 = vcmp.gt.f32.partialorder %v1792, 0.0
      %vm1921 = vcmp.gt.f32.partialorder %v1793, 0.0
      %vm1922 = vcmp.gt.f32.partialorder %v1794, 0.0
      %vm1923 = vcmp.gt.f32.partialorder %v1795, 0.0
      %vm1924 = vcmp.gt.f32.partialorder %v1796, 0.0
      %vm1925 = vcmp.gt.f32.partialorder %v1797, 0.0
      %vm1926 = vcmp.gt.f32.partialorder %v1798, 0.0
      %vm1927 = vcmp.gt.f32.partialorder %v1799, 0.0
      %vm1928 = vcmp.gt.f32.partialorder %v1800, 0.0
      %vm1929 = vcmp.gt.f32.partialorder %v1801, 0.0
      %vm1930 = vcmp.gt.f32.partialorder %v1802, 0.0
      %vm1931 = vcmp.gt.f32.partialorder %v1803, 0.0
      %vm1932 = vcmp.gt.f32.partialorder %v1804, 0.0
      %vm1933 = vcmp.gt.f32.partialorder %v1805, 0.0
      %vm1934 = vcmp.gt.f32.partialorder %v1806, 0.0
      %vm1935 = vcmp.gt.f32.partialorder %v1807, 0.0
      %vm1936 = vcmp.gt.f32.partialorder %v1808, 0.0
      %vm1937 = vcmp.gt.f32.partialorder %v1809, 0.0
      %vm1938 = vcmp.gt.f32.partialorder %v1810, 0.0
      %vm1939 = vcmp.gt.f32.partialorder %v1811, 0.0
      %vm1940 = vcmp.gt.f32.partialorder %v1812, 0.0
      %vm1941 = vcmp.gt.f32.partialorder %v1813, 0.0
      %vm1942 = vcmp.gt.f32.partialorder %v1814, 0.0
      %vm1943 = vcmp.gt.f32.partialorder %v1815, 0.0
      %vm1944 = vcmp.gt.f32.partialorder %v1816, 0.0
      %vm1945 = vcmp.gt.f32.partialorder %v1817, 0.0
      %vm1946 = vcmp.gt.f32.partialorder %v1818, 0.0
      %vm1947 = vcmp.gt.f32.partialorder %v1819, 0.0
      %vm1948 = vcmp.gt.f32.partialorder %v1820, 0.0
      %vm1949 = vcmp.gt.f32.partialorder %v1821, 0.0
      %vm1950 = vcmp.gt.f32.partialorder %v1822, 0.0
      %vm1951 = vcmp.gt.f32.partialorder %v1823, 0.0
      %vm1952 = vcmp.gt.f32.partialorder %v1824, 0.0
      %vm1953 = vcmp.gt.f32.partialorder %v1825, 0.0
      %vm1954 = vcmp.gt.f32.partialorder %v1826, 0.0
      %vm1955 = vcmp.gt.f32.partialorder %v1827, 0.0
      %vm1956 = vcmp.gt.f32.partialorder %v1828, 0.0
      %vm1957 = vcmp.gt.f32.partialorder %v1829, 0.0
      %vm1958 = vcmp.gt.f32.partialorder %v1830, 0.0
      %vm1959 = vcmp.gt.f32.partialorder %v1831, 0.0
      %vm1960 = vcmp.gt.f32.partialorder %v1832, 0.0
      %vm1961 = vcmp.gt.f32.partialorder %v1833, 0.0
      %vm1962 = vcmp.gt.f32.partialorder %v1834, 0.0
      %vm1963 = vcmp.gt.f32.partialorder %v1835, 0.0
      %vm1964 = vcmp.gt.f32.partialorder %v1836, 0.0
      %vm1965 = vcmp.gt.f32.partialorder %v1837, 0.0
      %vm1966 = vcmp.gt.f32.partialorder %v1838, 0.0
      %vm1967 = vcmp.gt.f32.partialorder %v1839, 0.0
      %vm1968 = vcmp.gt.f32.partialorder %v1840, 0.0
      %vm1969 = vcmp.gt.f32.partialorder %v1841, 0.0
      %vm1970 = vcmp.gt.f32.partialorder %v1842, 0.0
      %vm1971 = vcmp.gt.f32.partialorder %v1843, 0.0
      %vm1972 = vcmp.gt.f32.partialorder %v1844, 0.0
      %vm1973 = vcmp.gt.f32.partialorder %v1845, 0.0
      %vm1974 = vcmp.gt.f32.partialorder %v1846, 0.0
      %vm1975 = vcmp.gt.f32.partialorder %v1847, 0.0
      %vm1976 = vcmp.gt.f32.partialorder %v1848, 0.0
      %vm1977 = vcmp.gt.f32.partialorder %v1849, 0.0
      %vm1978 = vcmp.gt.f32.partialorder %v1850, 0.0
      %vm1979 = vcmp.gt.f32.partialorder %v1851, 0.0
      %vm1980 = vcmp.gt.f32.partialorder %v1852, 0.0
      %vm1981 = vcmp.gt.f32.partialorder %v1853, 0.0
      %vm1982 = vcmp.gt.f32.partialorder %v1854, 0.0
      %vm1983 = vcmp.gt.f32.partialorder %v1855, 0.0
      %vm1984 = vcmp.gt.f32.partialorder %v1856, 0.0
      %vm1985 = vcmp.gt.f32.partialorder %v1857, 0.0
      %vm1986 = vcmp.gt.f32.partialorder %v1858, 0.0
      %vm1987 = vcmp.gt.f32.partialorder %v1859, 0.0
      %vm1988 = vcmp.gt.f32.partialorder %v1860, 0.0
      %vm1989 = vcmp.gt.f32.partialorder %v1861, 0.0
      %vm1990 = vcmp.gt.f32.partialorder %v1862, 0.0
      %vm1991 = vcmp.gt.f32.partialorder %v1863, 0.0
      %vm1992 = vcmp.gt.f32.partialorder %v1864, 0.0
      %vm1993 = vcmp.gt.f32.partialorder %v1865, 0.0
      %vm1994 = vcmp.gt.f32.partialorder %v1866, 0.0
      %vm1995 = vcmp.gt.f32.partialorder %v1867, 0.0
      %vm1996 = vcmp.gt.f32.partialorder %v1868, 0.0
      %vm1997 = vcmp.gt.f32.partialorder %v1869, 0.0
      %vm1998 = vcmp.gt.f32.partialorder %v1870, 0.0
      %vm1999 = vcmp.gt.f32.partialorder %v1871, 0.0
      %vm2000 = vcmp.gt.f32.partialorder %v1872, 0.0
      %vm2001 = vcmp.gt.f32.partialorder %v1873, 0.0
      %vm2002 = vcmp.gt.f32.partialorder %v1874, 0.0
      %vm2003 = vcmp.gt.f32.partialorder %v1875, 0.0
      %vm2004 = vcmp.gt.f32.partialorder %v1876, 0.0
      %vm2005 = vcmp.gt.f32.partialorder %v1877, 0.0
      %vm2006 = vcmp.gt.f32.partialorder %v1878, 0.0
      %vm2007 = vcmp.gt.f32.partialorder %v1879, 0.0
      %vm2008 = vcmp.gt.f32.partialorder %v1880, 0.0
      %vm2009 = vcmp.gt.f32.partialorder %v1881, 0.0
      %vm2010 = vcmp.gt.f32.partialorder %v1882, 0.0
      %vm2011 = vcmp.gt.f32.partialorder %v1883, 0.0
      %vm2012 = vcmp.gt.f32.partialorder %v1884, 0.0
      %vm2013 = vcmp.gt.f32.partialorder %v1885, 0.0
      %v2014 = vmul.f32 %v1758, 0.01
      %v2015 = vmul.f32 %v1759, 0.01
      %v2016 = vmul.f32 %v1760, 0.01
      %v2017 = vmul.f32 %v1761, 0.01
      %v2018 = vmul.f32 %v1762, 0.01
      %v2019 = vmul.f32 %v1763, 0.01
      %v2020 = vmul.f32 %v1764, 0.01
      %v2021 = vmul.f32 %v1765, 0.01
      %v2022 = vmul.f32 %v1766, 0.01
      %v2023 = vmul.f32 %v1767, 0.01
      %v2024 = vmul.f32 %v1768, 0.01
      %v2025 = vmul.f32 %v1769, 0.01
      %v2026 = vmul.f32 %v1770, 0.01
      %v2027 = vmul.f32 %v1771, 0.01
      %v2028 = vmul.f32 %v1772, 0.01
      %v2029 = vmul.f32 %v1773, 0.01
      %v2030 = vmul.f32 %v1774, 0.01
      %v2031 = vmul.f32 %v1775, 0.01
      %v2032 = vmul.f32 %v1776, 0.01
      %v2033 = vmul.f32 %v1777, 0.01
      %v2034 = vmul.f32 %v1778, 0.01
      %v2035 = vmul.f32 %v1779, 0.01
      %v2036 = vmul.f32 %v1780, 0.01
      %v2037 = vmul.f32 %v1781, 0.01
      %v2038 = vmul.f32 %v1782, 0.01
      %v2039 = vmul.f32 %v1783, 0.01
      %v2040 = vmul.f32 %v1784, 0.01
      %v2041 = vmul.f32 %v1785, 0.01
      %v2042 = vmul.f32 %v1786, 0.01
      %v2043 = vmul.f32 %v1787, 0.01
      %v2044 = vmul.f32 %v1788, 0.01
      %v2045 = vmul.f32 %v1789, 0.01
      %v2046 = vmul.f32 %v1790, 0.01
      %v2047 = vmul.f32 %v1791, 0.01
      %v2048 = vmul.f32 %v1792, 0.01
      %v2049 = vmul.f32 %v1793, 0.01
      %v2050 = vmul.f32 %v1794, 0.01
      %v2051 = vmul.f32 %v1795, 0.01
      %v2052 = vmul.f32 %v1796, 0.01
      %v2053 = vmul.f32 %v1797, 0.01
      %v2054 = vmul.f32 %v1798, 0.01
      %v2055 = vmul.f32 %v1799, 0.01
      %v2056 = vmul.f32 %v1800, 0.01
      %v2057 = vmul.f32 %v1801, 0.01
      %v2058 = vmul.f32 %v1802, 0.01
      %v2059 = vmul.f32 %v1803, 0.01
      %v2060 = vmul.f32 %v1804, 0.01
      %v2061 = vmul.f32 %v1805, 0.01
      %v2062 = vmul.f32 %v1806, 0.01
      %v2063 = vmul.f32 %v1807, 0.01
      %v2064 = vmul.f32 %v1808, 0.01
      %v2065 = vmul.f32 %v1809, 0.01
      %v2066 = vmul.f32 %v1810, 0.01
      %v2067 = vmul.f32 %v1811, 0.01
      %v2068 = vmul.f32 %v1812, 0.01
      %v2069 = vmul.f32 %v1813, 0.01
      %v2070 = vmul.f32 %v1814, 0.01
      %v2071 = vmul.f32 %v1815, 0.01
      %v2072 = vmul.f32 %v1816, 0.01
      %v2073 = vmul.f32 %v1817, 0.01
      %v2074 = vmul.f32 %v1818, 0.01
      %v2075 = vmul.f32 %v1819, 0.01
      %v2076 = vmul.f32 %v1820, 0.01
      %v2077 = vmul.f32 %v1821, 0.01
      %v2078 = vmul.f32 %v1822, 0.01
      %v2079 = vmul.f32 %v1823, 0.01
      %v2080 = vmul.f32 %v1824, 0.01
      %v2081 = vmul.f32 %v1825, 0.01
      %v2082 = vmul.f32 %v1826, 0.01
      %v2083 = vmul.f32 %v1827, 0.01
      %v2084 = vmul.f32 %v1828, 0.01
      %v2085 = vmul.f32 %v1829, 0.01
      %v2086 = vmul.f32 %v1830, 0.01
      %v2087 = vmul.f32 %v1831, 0.01
      %v2088 = vmul.f32 %v1832, 0.01
      %v2089 = vmul.f32 %v1833, 0.01
      %v2090 = vmul.f32 %v1834, 0.01
      %v2091 = vmul.f32 %v1835, 0.01
      %v2092 = vmul.f32 %v1836, 0.01
      %v2093 = vmul.f32 %v1837, 0.01
      %v2094 = vmul.f32 %v1838, 0.01
      %v2095 = vmul.f32 %v1839, 0.01
      %v2096 = vmul.f32 %v1840, 0.01
      %v2097 = vmul.f32 %v1841, 0.01
      %v2098 = vmul.f32 %v1842, 0.01
      %v2099 = vmul.f32 %v1843, 0.01
      %v2100 = vmul.f32 %v1844, 0.01
      %v2101 = vmul.f32 %v1845, 0.01
      %v2102 = vmul.f32 %v1846, 0.01
      %v2103 = vmul.f32 %v1847, 0.01
      %v2104 = vmul.f32 %v1848, 0.01
      %v2105 = vmul.f32 %v1849, 0.01
      %v2106 = vmul.f32 %v1850, 0.01
      %v2107 = vmul.f32 %v1851, 0.01
      %v2108 = vmul.f32 %v1852, 0.01
      %v2109 = vmul.f32 %v1853, 0.01
      %v2110 = vmul.f32 %v1854, 0.01
      %v2111 = vmul.f32 %v1855, 0.01
      %v2112 = vmul.f32 %v1856, 0.01
      %v2113 = vmul.f32 %v1857, 0.01
      %v2114 = vmul.f32 %v1858, 0.01
      %v2115 = vmul.f32 %v1859, 0.01
      %v2116 = vmul.f32 %v1860, 0.01
      %v2117 = vmul.f32 %v1861, 0.01
      %v2118 = vmul.f32 %v1862, 0.01
      %v2119 = vmul.f32 %v1863, 0.01
      %v2120 = vmul.f32 %v1864, 0.01
      %v2121 = vmul.f32 %v1865, 0.01
      %v2122 = vmul.f32 %v1866, 0.01
      %v2123 = vmul.f32 %v1867, 0.01
      %v2124 = vmul.f32 %v1868, 0.01
      %v2125 = vmul.f32 %v1869, 0.01
      %v2126 = vmul.f32 %v1870, 0.01
      %v2127 = vmul.f32 %v1871, 0.01
      %v2128 = vmul.f32 %v1872, 0.01
      %v2129 = vmul.f32 %v1873, 0.01
      %v2130 = vmul.f32 %v1874, 0.01
      %v2131 = vmul.f32 %v1875, 0.01
      %v2132 = vmul.f32 %v1876, 0.01
      %v2133 = vmul.f32 %v1877, 0.01
      %v2134 = vmul.f32 %v1878, 0.01
      %v2135 = vmul.f32 %v1879, 0.01
      %v2136 = vmul.f32 %v1880, 0.01
      %v2137 = vmul.f32 %v1881, 0.01
      %v2138 = vmul.f32 %v1882, 0.01
      %v2139 = vmul.f32 %v1883, 0.01
      %v2140 = vmul.f32 %v1884, 0.01
      %v2141 = vmul.f32 %v1885, 0.01
      %v2142 = vsel %vm1886, %v1758, %v2014
      %v2143 = vsel %vm1887, %v1759, %v2015
      %v2144 = vsel %vm1888, %v1760, %v2016
      %v2145 = vsel %vm1889, %v1761, %v2017
      %v2146 = vsel %vm1890, %v1762, %v2018
      %v2147 = vsel %vm1891, %v1763, %v2019
      %v2148 = vsel %vm1892, %v1764, %v2020
      %v2149 = vsel %vm1893, %v1765, %v2021
      %v2150 = vsel %vm1894, %v1766, %v2022
      %v2151 = vsel %vm1895, %v1767, %v2023
      %v2152 = vsel %vm1896, %v1768, %v2024
      %v2153 = vsel %vm1897, %v1769, %v2025
      %v2154 = vsel %vm1898, %v1770, %v2026
      %v2155 = vsel %vm1899, %v1771, %v2027
      %v2156 = vsel %vm1900, %v1772, %v2028
      %v2157 = vsel %vm1901, %v1773, %v2029
      %v2158 = vsel %vm1902, %v1774, %v2030
      %v2159 = vsel %vm1903, %v1775, %v2031
      %v2160 = vsel %vm1904, %v1776, %v2032
      %v2161 = vsel %vm1905, %v1777, %v2033
      %v2162 = vsel %vm1906, %v1778, %v2034
      %v2163 = vsel %vm1907, %v1779, %v2035
      %v2164 = vsel %vm1908, %v1780, %v2036
      %v2165 = vsel %vm1909, %v1781, %v2037
      %v2166 = vsel %vm1910, %v1782, %v2038
      %v2167 = vsel %vm1911, %v1783, %v2039
      %v2168 = vsel %vm1912, %v1784, %v2040
      %v2169 = vsel %vm1913, %v1785, %v2041
      %v2170 = vsel %vm1914, %v1786, %v2042
      %v2171 = vsel %vm1915, %v1787, %v2043
      %v2172 = vsel %vm1916, %v1788, %v2044
      %v2173 = vsel %vm1917, %v1789, %v2045
      %v2174 = vsel %vm1918, %v1790, %v2046
      %v2175 = vsel %vm1919, %v1791, %v2047
      %v2176 = vsel %vm1920, %v1792, %v2048
      %v2177 = vsel %vm1921, %v1793, %v2049
      %v2178 = vsel %vm1922, %v1794, %v2050
      %v2179 = vsel %vm1923, %v1795, %v2051
      %v2180 = vsel %vm1924, %v1796, %v2052
      %v2181 = vsel %vm1925, %v1797, %v2053
      %v2182 = vsel %vm1926, %v1798, %v2054
      %v2183 = vsel %vm1927, %v1799, %v2055
      %v2184 = vsel %vm1928, %v1800, %v2056
      %v2185 = vsel %vm1929, %v1801, %v2057
      %v2186 = vsel %vm1930, %v1802, %v2058
      %v2187 = vsel %vm1931, %v1803, %v2059
      %v2188 = vsel %vm1932, %v1804, %v2060
      %v2189 = vsel %vm1933, %v1805, %v2061
      %v2190 = vsel %vm1934, %v1806, %v2062
      %v2191 = vsel %vm1935, %v1807, %v2063
      %v2192 = vsel %vm1936, %v1808, %v2064
      %v2193 = vsel %vm1937, %v1809, %v2065
      %v2194 = vsel %vm1938, %v1810, %v2066
      %v2195 = vsel %vm1939, %v1811, %v2067
      %v2196 = vsel %vm1940, %v1812, %v2068
      %v2197 = vsel %vm1941, %v1813, %v2069
      %v2198 = vsel %vm1942, %v1814, %v2070
      %v2199 = vsel %vm1943, %v1815, %v2071
      %v2200 = vsel %vm1944, %v1816, %v2072
      %v2201 = vsel %vm1945, %v1817, %v2073
      %v2202 = vsel %vm1946, %v1818, %v2074
      %v2203 = vsel %vm1947, %v1819, %v2075
      %v2204 = vsel %vm1948, %v1820, %v2076
      %v2205 = vsel %vm1949, %v1821, %v2077
      %v2206 = vsel %vm1950, %v1822, %v2078
      %v2207 = vsel %vm1951, %v1823, %v2079
      %v2208 = vsel %vm1952, %v1824, %v2080
      %v2209 = vsel %vm1953, %v1825, %v2081
      %v2210 = vsel %vm1954, %v1826, %v2082
      %v2211 = vsel %vm1955, %v1827, %v2083
      %v2212 = vsel %vm1956, %v1828, %v2084
      %v2213 = vsel %vm1957, %v1829, %v2085
      %v2214 = vsel %vm1958, %v1830, %v2086
      %v2215 = vsel %vm1959, %v1831, %v2087
      %v2216 = vsel %vm1960, %v1832, %v2088
      %v2217 = vsel %vm1961, %v1833, %v2089
      %v2218 = vsel %vm1962, %v1834, %v2090
      %v2219 = vsel %vm1963, %v1835, %v2091
      %v2220 = vsel %vm1964, %v1836, %v2092
      %v2221 = vsel %vm1965, %v1837, %v2093
      %v2222 = vsel %vm1966, %v1838, %v2094
      %v2223 = vsel %vm1967, %v1839, %v2095
      %v2224 = vsel %vm1968, %v1840, %v2096
      %v2225 = vsel %vm1969, %v1841, %v2097
      %v2226 = vsel %vm1970, %v1842, %v2098
      %v2227 = vsel %vm1971, %v1843, %v2099
      %v2228 = vsel %vm1972, %v1844, %v2100
      %v2229 = vsel %vm1973, %v1845, %v2101
      %v2230 = vsel %vm1974, %v1846, %v2102
      %v2231 = vsel %vm1975, %v1847, %v2103
      %v2232 = vsel %vm1976, %v1848, %v2104
      %v2233 = vsel %vm1977, %v1849, %v2105
      %v2234 = vsel %vm1978, %v1850, %v2106
      %v2235 = vsel %vm1979, %v1851, %v2107
      %v2236 = vsel %vm1980, %v1852, %v2108
      %v2237 = vsel %vm1981, %v1853, %v2109
      %v2238 = vsel %vm1982, %v1854, %v2110
      %v2239 = vsel %vm1983, %v1855, %v2111
      %v2240 = vsel %vm1984, %v1856, %v2112
      %v2241 = vsel %vm1985, %v1857, %v2113
      %v2242 = vsel %vm1986, %v1858, %v2114
      %v2243 = vsel %vm1987, %v1859, %v2115
      %v2244 = vsel %vm1988, %v1860, %v2116
      %v2245 = vsel %vm1989, %v1861, %v2117
      %v2246 = vsel %vm1990, %v1862, %v2118
      %v2247 = vsel %vm1991, %v1863, %v2119
      %v2248 = vsel %vm1992, %v1864, %v2120
      %v2249 = vsel %vm1993, %v1865, %v2121
      %v2250 = vsel %vm1994, %v1866, %v2122
      %v2251 = vsel %vm1995, %v1867, %v2123
      %v2252 = vsel %vm1996, %v1868, %v2124
      %v2253 = vsel %vm1997, %v1869, %v2125
      %v2254 = vsel %vm1998, %v1870, %v2126
      %v2255 = vsel %vm1999, %v1871, %v2127
      %v2256 = vsel %vm2000, %v1872, %v2128
      %v2257 = vsel %vm2001, %v1873, %v2129
      %v2258 = vsel %vm2002, %v1874, %v2130
      %v2259 = vsel %vm2003, %v1875, %v2131
      %v2260 = vsel %vm2004, %v1876, %v2132
      %v2261 = vsel %vm2005, %v1877, %v2133
      %v2262 = vsel %vm2006, %v1878, %v2134
      %v2263 = vsel %vm2007, %v1879, %v2135
      %v2264 = vsel %vm2008, %v1880, %v2136
      %v2265 = vsel %vm2009, %v1881, %v2137
      %v2266 = vsel %vm2010, %v1882, %v2138
      %v2267 = vsel %vm2011, %v1883, %v2139
      %v2268 = vsel %vm2012, %v1884, %v2140
      %v2269 = vsel %vm2013, %v1885, %v2141
      %v2270 = vld [vmem:[%s3] sm:$0xff]
      %v2271 = vld [vmem:[%s3 + $0x8] sm:$0xff]
      %v2272 = vld [vmem:[%s3 + $0x10] sm:$0xff]
      %v2273 = vld [vmem:[%s3 + $0x18] sm:$0xff]
      %v2274 = vld [vmem:[%s3 + $0x20] sm:$0xff]
      %v2275 = vld [vmem:[%s3 + $0x28] sm:$0xff]
      %v2276 = vld [vmem:[%s3 + $0x30] sm:$0xff]
      %v2277 = vld [vmem:[%s3 + $0x38] sm:$0xff]
      %v2278 = vld [vmem:[%s3 + $0x40] sm:$0xff]
      %v2279 = vld [vmem:[%s3 + $0x48] sm:$0xff]
      %v2280 = vld [vmem:[%s3 + $0x50] sm:$0xff]
      %v2281 = vld [vmem:[%s3 + $0x58] sm:$0xff]
      %v2282 = vld [vmem:[%s3 + $0x60] sm:$0xff]
      %v2283 = vld [vmem:[%s3 + $0x68] sm:$0xff]
      %v2284 = vld [vmem:[%s3 + $0x70] sm:$0xff]
      %v2285 = vld [vmem:[%s3 + $0x78] sm:$0xff]
      %v2286 = vld [vmem:[%s3 + $0x80] sm:$0xff]
      %v2287 = vld [vmem:[%s3 + $0x88] sm:$0xff]
      %v2288 = vld [vmem:[%s3 + $0x90] sm:$0xff]
      %v2289 = vld [vmem:[%s3 + $0x98] sm:$0xff]
      %v2290 = vld [vmem:[%s3 + $0xa0] sm:$0xff]
      %v2291 = vld [vmem:[%s3 + $0xa8] sm:$0xff]
      %v2292 = vld [vmem:[%s3 + $0xb0] sm:$0xff]
      %v2293 = vld [vmem:[%s3 + $0xb8] sm:$0xff]
      %v2294 = vld [vmem:[%s3 + $0xc0] sm:$0xff]
      %v2295 = vld [vmem:[%s3 + $0xc8] sm:$0xff]
      %v2296 = vld [vmem:[%s3 + $0xd0] sm:$0xff]
      %v2297 = vld [vmem:[%s3 + $0xd8] sm:$0xff]
      %v2298 = vld [vmem:[%s3 + $0xe0] sm:$0xff]
      %v2299 = vld [vmem:[%s3 + $0xe8] sm:$0xff]
      %v2300 = vld [vmem:[%s3 + $0xf0] sm:$0xff]
      %v2301 = vld [vmem:[%s3 + $0xf8] sm:$0xff]
      %v2302 = vld [vmem:[%s3 + $0x100] sm:$0xff]
      %v2303 = vld [vmem:[%s3 + $0x108] sm:$0xff]
      %v2304 = vld [vmem:[%s3 + $0x110] sm:$0xff]
      %v2305 = vld [vmem:[%s3 + $0x118] sm:$0xff]
      %v2306 = vld [vmem:[%s3 + $0x120] sm:$0xff]
      %v2307 = vld [vmem:[%s3 + $0x128] sm:$0xff]
      %v2308 = vld [vmem:[%s3 + $0x130] sm:$0xff]
      %v2309 = vld [vmem:[%s3 + $0x138] sm:$0xff]
      %v2310 = vld [vmem:[%s3 + $0x140] sm:$0xff]
      %v2311 = vld [vmem:[%s3 + $0x148] sm:$0xff]
      %v2312 = vld [vmem:[%s3 + $0x150] sm:$0xff]
      %v2313 = vld [vmem:[%s3 + $0x158] sm:$0xff]
      %v2314 = vld [vmem:[%s3 + $0x160] sm:$0xff]
      %v2315 = vld [vmem:[%s3 + $0x168] sm:$0xff]
      %v2316 = vld [vmem:[%s3 + $0x170] sm:$0xff]
      %v2317 = vld [vmem:[%s3 + $0x178] sm:$0xff]
      %v2318 = vld [vmem:[%s3 + $0x180] sm:$0xff]
      %v2319 = vld [vmem:[%s3 + $0x188] sm:$0xff]
      %v2320 = vld [vmem:[%s3 + $0x190] sm:$0xff]
      %v2321 = vld [vmem:[%s3 + $0x198] sm:$0xff]
      %v2322 = vld [vmem:[%s3 + $0x1a0] sm:$0xff]
      %v2323 = vld [vmem:[%s3 + $0x1a8] sm:$0xff]
      %v2324 = vld [vmem:[%s3 + $0x1b0] sm:$0xff]
      %v2325 = vld [vmem:[%s3 + $0x1b8] sm:$0xff]
      %v2326 = vld [vmem:[%s3 + $0x1c0] sm:$0xff]
      %v2327 = vld [vmem:[%s3 + $0x1c8] sm:$0xff]
      %v2328 = vld [vmem:[%s3 + $0x1d0] sm:$0xff]
      %v2329 = vld [vmem:[%s3 + $0x1d8] sm:$0xff]
      %v2330 = vld [vmem:[%s3 + $0x1e0] sm:$0xff]
      %v2331 = vld [vmem:[%s3 + $0x1e8] sm:$0xff]
      %v2332 = vld [vmem:[%s3 + $0x1f0] sm:$0xff]
      %v2333 = vld [vmem:[%s3 + $0x1f8] sm:$0xff]
      %v2334 = vld [vmem:[%s3 + $0x200] sm:$0xff]
      %v2335 = vld [vmem:[%s3 + $0x208] sm:$0xff]
      %v2336 = vld [vmem:[%s3 + $0x210] sm:$0xff]
      %v2337 = vld [vmem:[%s3 + $0x218] sm:$0xff]
      %v2338 = vld [vmem:[%s3 + $0x220] sm:$0xff]
      %v2339 = vld [vmem:[%s3 + $0x228] sm:$0xff]
      %v2340 = vld [vmem:[%s3 + $0x230] sm:$0xff]
      %v2341 = vld [vmem:[%s3 + $0x238] sm:$0xff]
      %v2342 = vld [vmem:[%s3 + $0x240] sm:$0xff]
      %v2343 = vld [vmem:[%s3 + $0x248] sm:$0xff]
      %v2344 = vld [vmem:[%s3 + $0x250] sm:$0xff]
      %v2345 = vld [vmem:[%s3 + $0x258] sm:$0xff]
      %v2346 = vld [vmem:[%s3 + $0x260] sm:$0xff]
      %v2347 = vld [vmem:[%s3 + $0x268] sm:$0xff]
      %v2348 = vld [vmem:[%s3 + $0x270] sm:$0xff]
      %v2349 = vld [vmem:[%s3 + $0x278] sm:$0xff]
      %v2350 = vld [vmem:[%s3 + $0x280] sm:$0xff]
      %v2351 = vld [vmem:[%s3 + $0x288] sm:$0xff]
      %v2352 = vld [vmem:[%s3 + $0x290] sm:$0xff]
      %v2353 = vld [vmem:[%s3 + $0x298] sm:$0xff]
      %v2354 = vld [vmem:[%s3 + $0x2a0] sm:$0xff]
      %v2355 = vld [vmem:[%s3 + $0x2a8] sm:$0xff]
      %v2356 = vld [vmem:[%s3 + $0x2b0] sm:$0xff]
      %v2357 = vld [vmem:[%s3 + $0x2b8] sm:$0xff]
      %v2358 = vld [vmem:[%s3 + $0x2c0] sm:$0xff]
      %v2359 = vld [vmem:[%s3 + $0x2c8] sm:$0xff]
      %v2360 = vld [vmem:[%s3 + $0x2d0] sm:$0xff]
      %v2361 = vld [vmem:[%s3 + $0x2d8] sm:$0xff]
      %v2362 = vld [vmem:[%s3 + $0x2e0] sm:$0xff]
      %v2363 = vld [vmem:[%s3 + $0x2e8] sm:$0xff]
      %v2364 = vld [vmem:[%s3 + $0x2f0] sm:$0xff]
      %v2365 = vld [vmem:[%s3 + $0x2f8] sm:$0xff]
      %v2366 = vld [vmem:[%s3 + $0x300] sm:$0xff]
      %v2367 = vld [vmem:[%s3 + $0x308] sm:$0xff]
      %v2368 = vld [vmem:[%s3 + $0x310] sm:$0xff]
      %v2369 = vld [vmem:[%s3 + $0x318] sm:$0xff]
      %v2370 = vld [vmem:[%s3 + $0x320] sm:$0xff]
      %v2371 = vld [vmem:[%s3 + $0x328] sm:$0xff]
      %v2372 = vld [vmem:[%s3 + $0x330] sm:$0xff]
      %v2373 = vld [vmem:[%s3 + $0x338] sm:$0xff]
      %v2374 = vld [vmem:[%s3 + $0x340] sm:$0xff]
      %v2375 = vld [vmem:[%s3 + $0x348] sm:$0xff]
      %v2376 = vld [vmem:[%s3 + $0x350] sm:$0xff]
      %v2377 = vld [vmem:[%s3 + $0x358] sm:$0xff]
      %v2378 = vld [vmem:[%s3 + $0x360] sm:$0xff]
      %v2379 = vld [vmem:[%s3 + $0x368] sm:$0xff]
      %v2380 = vld [vmem:[%s3 + $0x370] sm:$0xff]
      %v2381 = vld [vmem:[%s3 + $0x378] sm:$0xff]
      %v2382 = vld [vmem:[%s3 + $0x380] sm:$0xff]
      %v2383 = vld [vmem:[%s3 + $0x388] sm:$0xff]
      %v2384 = vld [vmem:[%s3 + $0x390] sm:$0xff]
      %v2385 = vld [vmem:[%s3 + $0x398] sm:$0xff]
      %v2386 = vld [vmem:[%s3 + $0x3a0] sm:$0xff]
      %v2387 = vld [vmem:[%s3 + $0x3a8] sm:$0xff]
      %v2388 = vld [vmem:[%s3 + $0x3b0] sm:$0xff]
      %v2389 = vld [vmem:[%s3 + $0x3b8] sm:$0xff]
      %v2390 = vld [vmem:[%s3 + $0x3c0] sm:$0xff]
      %v2391 = vld [vmem:[%s3 + $0x3c8] sm:$0xff]
      %v2392 = vld [vmem:[%s3 + $0x3d0] sm:$0xff]
      %v2393 = vld [vmem:[%s3 + $0x3d8] sm:$0xff]
      %v2394 = vld [vmem:[%s3 + $0x3e0] sm:$0xff]
      %v2395 = vld [vmem:[%s3 + $0x3e8] sm:$0xff]
      %v2396 = vld [vmem:[%s3 + $0x3f0] sm:$0xff]
      %v2397 = vld [vmem:[%s3 + $0x3f8] sm:$0xff]
      %v2398 = vpack.c.bf16 %v2144, %v2142
      %v2399 = vpack.c.bf16 %v2145, %v2143
      %v2400 = vpack.c.bf16 %v2148, %v2146
      %v2401 = vpack.c.bf16 %v2149, %v2147
      %v2402 = vpack.c.bf16 %v2152, %v2150
      %v2403 = vpack.c.bf16 %v2153, %v2151
      %v2404 = vpack.c.bf16 %v2156, %v2154
      %v2405 = vpack.c.bf16 %v2157, %v2155
      %v2406 = vpack.c.bf16 %v2160, %v2158
      %v2407 = vpack.c.bf16 %v2161, %v2159
      %v2408 = vpack.c.bf16 %v2164, %v2162
      %v2409 = vpack.c.bf16 %v2165, %v2163
      %v2410 = vpack.c.bf16 %v2168, %v2166
      %v2411 = vpack.c.bf16 %v2169, %v2167
      %v2412 = vpack.c.bf16 %v2172, %v2170
      %v2413 = vpack.c.bf16 %v2173, %v2171
      %v2414 = vpack.c.bf16 %v2176, %v2174
      %v2415 = vpack.c.bf16 %v2177, %v2175
      %v2416 = vpack.c.bf16 %v2180, %v2178
      %v2417 = vpack.c.bf16 %v2181, %v2179
      %v2418 = vpack.c.bf16 %v2184, %v2182
      %v2419 = vpack.c.bf16 %v2185, %v2183
      %v2420 = vpack.c.bf16 %v2188, %v2186
      %v2421 = vpack.c.bf16 %v2189, %v2187
      %v2422 = vpack.c.bf16 %v2192, %v2190
      %v2423 = vpack.c.bf16 %v2193, %v2191
      %v2424 = vpack.c.bf16 %v2196, %v2194
      %v2425 = vpack.c.bf16 %v2197, %v2195
      %v2426 = vpack.c.bf16 %v2200, %v2198
      %v2427 = vpack.c.bf16 %v2201, %v2199
      %v2428 = vpack.c.bf16 %v2204, %v2202
      %v2429 = vpack.c.bf16 %v2205, %v2203
      %v2430 = vpack.c.bf16 %v2208, %v2206
      %v2431 = vpack.c.bf16 %v2209, %v2207
      %v2432 = vpack.c.bf16 %v2212, %v2210
      %v2433 = vpack.c.bf16 %v2213, %v2211
      %v2434 = vpack.c.bf16 %v2216, %v2214
      %v2435 = vpack.c.bf16 %v2217, %v2215
      %v2436 = vpack.c.bf16 %v2220, %v2218
      %v2437 = vpack.c.bf16 %v2221, %v2219
      %v2438 = vpack.c.bf16 %v2224, %v2222
      %v2439 = vpack.c.bf16 %v2225, %v2223
      %v2440 = vpack.c.bf16 %v2228, %v2226
      %v2441 = vpack.c.bf16 %v2229, %v2227
      %v2442 = vpack.c.bf16 %v2232, %v2230
      %v2443 = vpack.c.bf16 %v2233, %v2231
      %v2444 = vpack.c.bf16 %v2236, %v2234
      %v2445 = vpack.c.bf16 %v2237, %v2235
      %v2446 = vpack.c.bf16 %v2240, %v2238
      %v2447 = vpack.c.bf16 %v2241, %v2239
      %v2448 = vpack.c.bf16 %v2244, %v2242
      %v2449 = vpack.c.bf16 %v2245, %v2243
      %v2450 = vpack.c.bf16 %v2248, %v2246
      %v2451 = vpack.c.bf16 %v2249, %v2247
      %v2452 = vpack.c.bf16 %v2252, %v2250
      %v2453 = vpack.c.bf16 %v2253, %v2251
      %v2454 = vpack.c.bf16 %v2256, %v2254
      %v2455 = vpack.c.bf16 %v2257, %v2255
      %v2456 = vpack.c.bf16 %v2260, %v2258
      %v2457 = vpack.c.bf16 %v2261, %v2259
      %v2458 = vpack.c.bf16 %v2264, %v2262
      %v2459 = vpack.c.bf16 %v2265, %v2263
      %v2460 = vpack.c.bf16 %v2268, %v2266
      %v2461 = vpack.c.bf16 %v2269, %v2267
      %v2462 = vld [vmem:[%s4] sm:$0xff]
      %v2463 = vld [vmem:[%s4 + $0x8] sm:$0xff]
      %v2464 = vld [vmem:[%s4 + $0x10] sm:$0xff]
      %v2465 = vld [vmem:[%s4 + $0x18] sm:$0xff]
      %v2466 = vld [vmem:[%s4 + $0x20] sm:$0xff]
      %v2467 = vld [vmem:[%s4 + $0x28] sm:$0xff]
      %v2468 = vld [vmem:[%s4 + $0x30] sm:$0xff]
      %v2469 = vld [vmem:[%s4 + $0x38] sm:$0xff]
      %v2470 = vld [vmem:[%s4 + $0x40] sm:$0xff]
      %v2471 = vld [vmem:[%s4 + $0x48] sm:$0xff]
      %v2472 = vld [vmem:[%s4 + $0x50] sm:$0xff]
      %v2473 = vld [vmem:[%s4 + $0x58] sm:$0xff]
      %v2474 = vld [vmem:[%s4 + $0x60] sm:$0xff]
      %v2475 = vld [vmem:[%s4 + $0x68] sm:$0xff]
      %v2476 = vld [vmem:[%s4 + $0x70] sm:$0xff]
      %v2477 = vld [vmem:[%s4 + $0x78] sm:$0xff]
      %v2478 = vld [vmem:[%s4 + $0x80] sm:$0xff]
      %v2479 = vld [vmem:[%s4 + $0x88] sm:$0xff]
      %v2480 = vld [vmem:[%s4 + $0x90] sm:$0xff]
      %v2481 = vld [vmem:[%s4 + $0x98] sm:$0xff]
      %v2482 = vld [vmem:[%s4 + $0xa0] sm:$0xff]
      %v2483 = vld [vmem:[%s4 + $0xa8] sm:$0xff]
      %v2484 = vld [vmem:[%s4 + $0xb0] sm:$0xff]
      %v2485 = vld [vmem:[%s4 + $0xb8] sm:$0xff]
      %v2486 = vld [vmem:[%s4 + $0xc0] sm:$0xff]
      %v2487 = vld [vmem:[%s4 + $0xc8] sm:$0xff]
      %v2488 = vld [vmem:[%s4 + $0xd0] sm:$0xff]
      %v2489 = vld [vmem:[%s4 + $0xd8] sm:$0xff]
      %v2490 = vld [vmem:[%s4 + $0xe0] sm:$0xff]
      %v2491 = vld [vmem:[%s4 + $0xe8] sm:$0xff]
      %v2492 = vld [vmem:[%s4 + $0xf0] sm:$0xff]
      %v2493 = vld [vmem:[%s4 + $0xf8] sm:$0xff]
      %v2494 = vld [vmem:[%s4 + $0x100] sm:$0xff]
      %v2495 = vld [vmem:[%s4 + $0x108] sm:$0xff]
      %v2496 = vld [vmem:[%s4 + $0x110] sm:$0xff]
      %v2497 = vld [vmem:[%s4 + $0x118] sm:$0xff]
      %v2498 = vld [vmem:[%s4 + $0x120] sm:$0xff]
      %v2499 = vld [vmem:[%s4 + $0x128] sm:$0xff]
      %v2500 = vld [vmem:[%s4 + $0x130] sm:$0xff]
      %v2501 = vld [vmem:[%s4 + $0x138] sm:$0xff]
      %v2502 = vld [vmem:[%s4 + $0x140] sm:$0xff]
      %v2503 = vld [vmem:[%s4 + $0x148] sm:$0xff]
      %v2504 = vld [vmem:[%s4 + $0x150] sm:$0xff]
      %v2505 = vld [vmem:[%s4 + $0x158] sm:$0xff]
      %v2506 = vld [vmem:[%s4 + $0x160] sm:$0xff]
      %v2507 = vld [vmem:[%s4 + $0x168] sm:$0xff]
      %v2508 = vld [vmem:[%s4 + $0x170] sm:$0xff]
      %v2509 = vld [vmem:[%s4 + $0x178] sm:$0xff]
      %v2510 = vld [vmem:[%s4 + $0x180] sm:$0xff]
      %v2511 = vld [vmem:[%s4 + $0x188] sm:$0xff]
      %v2512 = vld [vmem:[%s4 + $0x190] sm:$0xff]
      %v2513 = vld [vmem:[%s4 + $0x198] sm:$0xff]
      %v2514 = vld [vmem:[%s4 + $0x1a0] sm:$0xff]
      %v2515 = vld [vmem:[%s4 + $0x1a8] sm:$0xff]
      %v2516 = vld [vmem:[%s4 + $0x1b0] sm:$0xff]
      %v2517 = vld [vmem:[%s4 + $0x1b8] sm:$0xff]
      %v2518 = vld [vmem:[%s4 + $0x1c0] sm:$0xff]
      %v2519 = vld [vmem:[%s4 + $0x1c8] sm:$0xff]
      %v2520 = vld [vmem:[%s4 + $0x1d0] sm:$0xff]
      %v2521 = vld [vmem:[%s4 + $0x1d8] sm:$0xff]
      %v2522 = vld [vmem:[%s4 + $0x1e0] sm:$0xff]
      %v2523 = vld [vmem:[%s4 + $0x1e8] sm:$0xff]
      %v2524 = vld [vmem:[%s4 + $0x1f0] sm:$0xff]
      %v2525 = vld [vmem:[%s4 + $0x1f8] sm:$0xff]
      %2527 = vset.pattern.permute.xlu0 0
      %2528 = vperm.xlu0 %2527, %v2462
      %v2529 = vpop.permute.xlu0 %2528
      %2532 = vset.pattern.permute.xlu0 0
      %2533 = vperm.xlu0 %2532, %v2463
      %v2534 = vpop.permute.xlu0 %2533
      %2537 = vset.pattern.permute.xlu0 0
      %2538 = vperm.xlu0 %2537, %v2464
      %v2539 = vpop.permute.xlu0 %2538
      %2542 = vset.pattern.permute.xlu0 0
      %2543 = vperm.xlu0 %2542, %v2465
      %v2544 = vpop.permute.xlu0 %2543
      %2547 = vset.pattern.permute.xlu0 0
      %2548 = vperm.xlu0 %2547, %v2466
      %v2549 = vpop.permute.xlu0 %2548
      %2552 = vset.pattern.permute.xlu0 0
      %2553 = vperm.xlu0 %2552, %v2467
      %v2554 = vpop.permute.xlu0 %2553
      %2557 = vset.pattern.permute.xlu0 0
      %2558 = vperm.xlu0 %2557, %v2468
      %v2559 = vpop.permute.xlu0 %2558
      %2562 = vset.pattern.permute.xlu0 0
      %2563 = vperm.xlu0 %2562, %v2469
      %v2564 = vpop.permute.xlu0 %2563
      %2567 = vset.pattern.permute.xlu0 0
      %2568 = vperm.xlu0 %2567, %v2470
      %v2569 = vpop.permute.xlu0 %2568
      %2572 = vset.pattern.permute.xlu0 0
      %2573 = vperm.xlu0 %2572, %v2471
      %v2574 = vpop.permute.xlu0 %2573
      %2577 = vset.pattern.permute.xlu0 0
      %2578 = vperm.xlu0 %2577, %v2472
      %v2579 = vpop.permute.xlu0 %2578
      %2582 = vset.pattern.permute.xlu0 0
      %2583 = vperm.xlu0 %2582, %v2473
      %v2584 = vpop.permute.xlu0 %2583
      %2587 = vset.pattern.permute.xlu0 0
      %2588 = vperm.xlu0 %2587, %v2474
      %v2589 = vpop.permute.xlu0 %2588
      %2592 = vset.pattern.permute.xlu0 0
      %2593 = vperm.xlu0 %2592, %v2475
      %v2594 = vpop.permute.xlu0 %2593
      %2597 = vset.pattern.permute.xlu0 0
      %2598 = vperm.xlu0 %2597, %v2476
      %v2599 = vpop.permute.xlu0 %2598
      %2602 = vset.pattern.permute.xlu0 0
      %2603 = vperm.xlu0 %2602, %v2477
      %v2604 = vpop.permute.xlu0 %2603
      %2607 = vset.pattern.permute.xlu0 0
      %2608 = vperm.xlu0 %2607, %v2478
      %v2609 = vpop.permute.xlu0 %2608
      %2612 = vset.pattern.permute.xlu0 0
      %2613 = vperm.xlu0 %2612, %v2479
      %v2614 = vpop.permute.xlu0 %2613
      %2617 = vset.pattern.permute.xlu0 0
      %2618 = vperm.xlu0 %2617, %v2480
      %v2619 = vpop.permute.xlu0 %2618
      %2622 = vset.pattern.permute.xlu0 0
      %2623 = vperm.xlu0 %2622, %v2481
      %v2624 = vpop.permute.xlu0 %2623
      %2627 = vset.pattern.permute.xlu0 0
      %2628 = vperm.xlu0 %2627, %v2482
      %v2629 = vpop.permute.xlu0 %2628
      %2632 = vset.pattern.permute.xlu0 0
      %2633 = vperm.xlu0 %2632, %v2483
      %v2634 = vpop.permute.xlu0 %2633
      %2637 = vset.pattern.permute.xlu0 0
      %2638 = vperm.xlu0 %2637, %v2484
      %v2639 = vpop.permute.xlu0 %2638
      %2642 = vset.pattern.permute.xlu0 0
      %2643 = vperm.xlu0 %2642, %v2485
      %v2644 = vpop.permute.xlu0 %2643
      %2647 = vset.pattern.permute.xlu0 0
      %2648 = vperm.xlu0 %2647, %v2486
      %v2649 = vpop.permute.xlu0 %2648
      %2652 = vset.pattern.permute.xlu0 0
      %2653 = vperm.xlu0 %2652, %v2487
      %v2654 = vpop.permute.xlu0 %2653
      %2657 = vset.pattern.permute.xlu0 0
      %2658 = vperm.xlu0 %2657, %v2488
      %v2659 = vpop.permute.xlu0 %2658
      %2662 = vset.pattern.permute.xlu0 0
      %2663 = vperm.xlu0 %2662, %v2489
      %v2664 = vpop.permute.xlu0 %2663
      %2667 = vset.pattern.permute.xlu0 0
      %2668 = vperm.xlu0 %2667, %v2490
      %v2669 = vpop.permute.xlu0 %2668
      %2672 = vset.pattern.permute.xlu0 0
      %2673 = vperm.xlu0 %2672, %v2491
      %v2674 = vpop.permute.xlu0 %2673
      %2677 = vset.pattern.permute.xlu0 0
      %2678 = vperm.xlu0 %2677, %v2492
      %v2679 = vpop.permute.xlu0 %2678
      %2682 = vset.pattern.permute.xlu0 0
      %2683 = vperm.xlu0 %2682, %v2493
      %v2684 = vpop.permute.xlu0 %2683
      %2687 = vset.pattern.permute.xlu0 0
      %2688 = vperm.xlu0 %2687, %v2494
      %v2689 = vpop.permute.xlu0 %2688
      %2692 = vset.pattern.permute.xlu0 0
      %2693 = vperm.xlu0 %2692, %v2495
      %v2694 = vpop.permute.xlu0 %2693
      %2697 = vset.pattern.permute.xlu0 0
      %2698 = vperm.xlu0 %2697, %v2496
      %v2699 = vpop.permute.xlu0 %2698
      %2702 = vset.pattern.permute.xlu0 0
      %2703 = vperm.xlu0 %2702, %v2497
      %v2704 = vpop.permute.xlu0 %2703
      %2707 = vset.pattern.permute.xlu0 0
      %2708 = vperm.xlu0 %2707, %v2498
      %v2709 = vpop.permute.xlu0 %2708
      %2712 = vset.pattern.permute.xlu0 0
      %2713 = vperm.xlu0 %2712, %v2499
      %v2714 = vpop.permute.xlu0 %2713
      %2717 = vset.pattern.permute.xlu0 0
      %2718 = vperm.xlu0 %2717, %v2500
      %v2719 = vpop.permute.xlu0 %2718
      %2722 = vset.pattern.permute.xlu0 0
      %2723 = vperm.xlu0 %2722, %v2501
      %v2724 = vpop.permute.xlu0 %2723
      %2727 = vset.pattern.permute.xlu0 0
      %2728 = vperm.xlu0 %2727, %v2502
      %v2729 = vpop.permute.xlu0 %2728
      %2732 = vset.pattern.permute.xlu0 0
      %2733 = vperm.xlu0 %2732, %v2503
      %v2734 = vpop.permute.xlu0 %2733
      %2737 = vset.pattern.permute.xlu0 0
      %2738 = vperm.xlu0 %2737, %v2504
      %v2739 = vpop.permute.xlu0 %2738
      %2742 = vset.pattern.permute.xlu0 0
      %2743 = vperm.xlu0 %2742, %v2505
      %v2744 = vpop.permute.xlu0 %2743
      %2747 = vset.pattern.permute.xlu0 0
      %2748 = vperm.xlu0 %2747, %v2506
      %v2749 = vpop.permute.xlu0 %2748
      %2752 = vset.pattern.permute.xlu0 0
      %2753 = vperm.xlu0 %2752, %v2507
      %v2754 = vpop.permute.xlu0 %2753
      %2757 = vset.pattern.permute.xlu0 0
      %2758 = vperm.xlu0 %2757, %v2508
      %v2759 = vpop.permute.xlu0 %2758
      %2762 = vset.pattern.permute.xlu0 0
      %2763 = vperm.xlu0 %2762, %v2509
      %v2764 = vpop.permute.xlu0 %2763
      %2767 = vset.pattern.permute.xlu0 0
      %2768 = vperm.xlu0 %2767, %v2510
      %v2769 = vpop.permute.xlu0 %2768
      %2772 = vset.pattern.permute.xlu0 0
      %2773 = vperm.xlu0 %2772, %v2511
      %v2774 = vpop.permute.xlu0 %2773
      %2777 = vset.pattern.permute.xlu0 0
      %2778 = vperm.xlu0 %2777, %v2512
      %v2779 = vpop.permute.xlu0 %2778
      %2782 = vset.pattern.permute.xlu0 0
      %2783 = vperm.xlu0 %2782, %v2513
      %v2784 = vpop.permute.xlu0 %2783
      %2787 = vset.pattern.permute.xlu0 0
      %2788 = vperm.xlu0 %2787, %v2514
      %v2789 = vpop.permute.xlu0 %2788
      %2792 = vset.pattern.permute.xlu0 0
      %2793 = vperm.xlu0 %2792, %v2515
      %v2794 = vpop.permute.xlu0 %2793
      %2797 = vset.pattern.permute.xlu0 0
      %2798 = vperm.xlu0 %2797, %v2516
      %v2799 = vpop.permute.xlu0 %2798
      %2802 = vset.pattern.permute.xlu0 0
      %2803 = vperm.xlu0 %2802, %v2517
      %v2804 = vpop.permute.xlu0 %2803
      %2807 = vset.pattern.permute.xlu0 0
      %2808 = vperm.xlu0 %2807, %v2518
      %v2809 = vpop.permute.xlu0 %2808
      %2812 = vset.pattern.permute.xlu0 0
      %2813 = vperm.xlu0 %2812, %v2519
      %v2814 = vpop.permute.xlu0 %2813
      %2817 = vset.pattern.permute.xlu0 0
      %2818 = vperm.xlu0 %2817, %v2520
      %v2819 = vpop.permute.xlu0 %2818
      %2822 = vset.pattern.permute.xlu0 0
      %2823 = vperm.xlu0 %2822, %v2521
      %v2824 = vpop.permute.xlu0 %2823
      %2827 = vset.pattern.permute.xlu0 0
      %2828 = vperm.xlu0 %2827, %v2522
      %v2829 = vpop.permute.xlu0 %2828
      %2832 = vset.pattern.permute.xlu0 0
      %2833 = vperm.xlu0 %2832, %v2523
      %v2834 = vpop.permute.xlu0 %2833
      %2837 = vset.pattern.permute.xlu0 0
      %2838 = vperm.xlu0 %2837, %v2524
      %v2839 = vpop.permute.xlu0 %2838
      %2842 = vset.pattern.permute.xlu0 0
      %2843 = vperm.xlu0 %2842, %v2525
      %v2844 = vpop.permute.xlu0 %2843
      %v2974 = vunpack.c.l.b16 %v2270
      %v2975 = vunpack.c.h.b16 %v2270
      %v2976 = vunpack.c.l.b16 %v2271
      %v2977 = vunpack.c.h.b16 %v2271
      %v2978 = vunpack.c.l.b16 %v2272
      %v2979 = vunpack.c.h.b16 %v2272
      %v2980 = vunpack.c.l.b16 %v2273
      %v2981 = vunpack.c.h.b16 %v2273
      %v2982 = vunpack.c.l.b16 %v2274
      %v2983 = vunpack.c.h.b16 %v2274
      %v2984 = vunpack.c.l.b16 %v2275
      %v2985 = vunpack.c.h.b16 %v2275
      %v2986 = vunpack.c.l.b16 %v2276
      %v2987 = vunpack.c.h.b16 %v2276
      %v2988 = vunpack.c.l.b16 %v2277
      %v2989 = vunpack.c.h.b16 %v2277
      %v2990 = vunpack.c.l.b16 %v2278
      %v2991 = vunpack.c.h.b16 %v2278
      %v2992 = vunpack.c.l.b16 %v2279
      %v2993 = vunpack.c.h.b16 %v2279
      %v2994 = vunpack.c.l.b16 %v2280
      %v2995 = vunpack.c.h.b16 %v2280
      %v2996 = vunpack.c.l.b16 %v2281
      %v2997 = vunpack.c.h.b16 %v2281
      %v2998 = vunpack.c.l.b16 %v2282
      %v2999 = vunpack.c.h.b16 %v2282
      %v3000 = vunpack.c.l.b16 %v2283
      %v3001 = vunpack.c.h.b16 %v2283
      %v3002 = vunpack.c.l.b16 %v2284
      %v3003 = vunpack.c.h.b16 %v2284
      %v3004 = vunpack.c.l.b16 %v2285
      %v3005 = vunpack.c.h.b16 %v2285
      %v3006 = vunpack.c.l.b16 %v2286
      %v3007 = vunpack.c.h.b16 %v2286
      %v3008 = vunpack.c.l.b16 %v2287
      %v3009 = vunpack.c.h.b16 %v2287
      %v3010 = vunpack.c.l.b16 %v2288
      %v3011 = vunpack.c.h.b16 %v2288
      %v3012 = vunpack.c.l.b16 %v2289
      %v3013 = vunpack.c.h.b16 %v2289
      %v3014 = vunpack.c.l.b16 %v2290
      %v3015 = vunpack.c.h.b16 %v2290
      %v3016 = vunpack.c.l.b16 %v2291
      %v3017 = vunpack.c.h.b16 %v2291
      %v3018 = vunpack.c.l.b16 %v2292
      %v3019 = vunpack.c.h.b16 %v2292
      %v3020 = vunpack.c.l.b16 %v2293
      %v3021 = vunpack.c.h.b16 %v2293
      %v3022 = vunpack.c.l.b16 %v2294
      %v3023 = vunpack.c.h.b16 %v2294
      %v3024 = vunpack.c.l.b16 %v2295
      %v3025 = vunpack.c.h.b16 %v2295
      %v3026 = vunpack.c.l.b16 %v2296
      %v3027 = vunpack.c.h.b16 %v2296
      %v3028 = vunpack.c.l.b16 %v2297
      %v3029 = vunpack.c.h.b16 %v2297
      %v3030 = vunpack.c.l.b16 %v2298
      %v3031 = vunpack.c.h.b16 %v2298
      %v3032 = vunpack.c.l.b16 %v2299
      %v3033 = vunpack.c.h.b16 %v2299
      %v3034 = vunpack.c.l.b16 %v2300
      %v3035 = vunpack.c.h.b16 %v2300
      %v3036 = vunpack.c.l.b16 %v2301
      %v3037 = vunpack.c.h.b16 %v2301
      %v3038 = vunpack.c.l.b16 %v2302
      %v3039 = vunpack.c.h.b16 %v2302
      %v3040 = vunpack.c.l.b16 %v2303
      %v3041 = vunpack.c.h.b16 %v2303
      %v3042 = vunpack.c.l.b16 %v2304
      %v3043 = vunpack.c.h.b16 %v2304
      %v3044 = vunpack.c.l.b16 %v2305
      %v3045 = vunpack.c.h.b16 %v2305
      %v3046 = vunpack.c.l.b16 %v2306
      %v3047 = vunpack.c.h.b16 %v2306
      %v3048 = vunpack.c.l.b16 %v2307
      %v3049 = vunpack.c.h.b16 %v2307
      %v3050 = vunpack.c.l.b16 %v2308
      %v3051 = vunpack.c.h.b16 %v2308
      %v3052 = vunpack.c.l.b16 %v2309
      %v3053 = vunpack.c.h.b16 %v2309
      %v3054 = vunpack.c.l.b16 %v2310
      %v3055 = vunpack.c.h.b16 %v2310
      %v3056 = vunpack.c.l.b16 %v2311
      %v3057 = vunpack.c.h.b16 %v2311
      %v3058 = vunpack.c.l.b16 %v2312
      %v3059 = vunpack.c.h.b16 %v2312
      %v3060 = vunpack.c.l.b16 %v2313
      %v3061 = vunpack.c.h.b16 %v2313
      %v3062 = vunpack.c.l.b16 %v2314
      %v3063 = vunpack.c.h.b16 %v2314
      %v3064 = vunpack.c.l.b16 %v2315
      %v3065 = vunpack.c.h.b16 %v2315
      %v3066 = vunpack.c.l.b16 %v2316
      %v3067 = vunpack.c.h.b16 %v2316
      %v3068 = vunpack.c.l.b16 %v2317
      %v3069 = vunpack.c.h.b16 %v2317
      %v3070 = vunpack.c.l.b16 %v2318
      %v3071 = vunpack.c.h.b16 %v2318
      %v3072 = vunpack.c.l.b16 %v2319
      %v3073 = vunpack.c.h.b16 %v2319
      %v3074 = vunpack.c.l.b16 %v2320
      %v3075 = vunpack.c.h.b16 %v2320
      %v3076 = vunpack.c.l.b16 %v2321
      %v3077 = vunpack.c.h.b16 %v2321
      %v3078 = vunpack.c.l.b16 %v2322
      %v3079 = vunpack.c.h.b16 %v2322
      %v3080 = vunpack.c.l.b16 %v2323
      %v3081 = vunpack.c.h.b16 %v2323
      %v3082 = vunpack.c.l.b16 %v2324
      %v3083 = vunpack.c.h.b16 %v2324
      %v3084 = vunpack.c.l.b16 %v2325
      %v3085 = vunpack.c.h.b16 %v2325
      %v3086 = vunpack.c.l.b16 %v2326
      %v3087 = vunpack.c.h.b16 %v2326
      %v3088 = vunpack.c.l.b16 %v2327
      %v3089 = vunpack.c.h.b16 %v2327
      %v3090 = vunpack.c.l.b16 %v2328
      %v3091 = vunpack.c.h.b16 %v2328
      %v3092 = vunpack.c.l.b16 %v2329
      %v3093 = vunpack.c.h.b16 %v2329
      %v3094 = vunpack.c.l.b16 %v2330
      %v3095 = vunpack.c.h.b16 %v2330
      %v3096 = vunpack.c.l.b16 %v2331
      %v3097 = vunpack.c.h.b16 %v2331
      %v3098 = vunpack.c.l.b16 %v2332
      %v3099 = vunpack.c.h.b16 %v2332
      %v3100 = vunpack.c.l.b16 %v2333
      %v3101 = vunpack.c.h.b16 %v2333
      %v3102 = vunpack.c.l.b16 %v2334
      %v3103 = vunpack.c.h.b16 %v2334
      %v3104 = vunpack.c.l.b16 %v2335
      %v3105 = vunpack.c.h.b16 %v2335
      %v3106 = vunpack.c.l.b16 %v2336
      %v3107 = vunpack.c.h.b16 %v2336
      %v3108 = vunpack.c.l.b16 %v2337
      %v3109 = vunpack.c.h.b16 %v2337
      %v3110 = vunpack.c.l.b16 %v2338
      %v3111 = vunpack.c.h.b16 %v2338
      %v3112 = vunpack.c.l.b16 %v2339
      %v3113 = vunpack.c.h.b16 %v2339
      %v3114 = vunpack.c.l.b16 %v2340
      %v3115 = vunpack.c.h.b16 %v2340
      %v3116 = vunpack.c.l.b16 %v2341
      %v3117 = vunpack.c.h.b16 %v2341
      %v3118 = vunpack.c.l.b16 %v2342
      %v3119 = vunpack.c.h.b16 %v2342
      %v3120 = vunpack.c.l.b16 %v2343
      %v3121 = vunpack.c.h.b16 %v2343
      %v3122 = vunpack.c.l.b16 %v2344
      %v3123 = vunpack.c.h.b16 %v2344
      %v3124 = vunpack.c.l.b16 %v2345
      %v3125 = vunpack.c.h.b16 %v2345
      %v3126 = vunpack.c.l.b16 %v2346
      %v3127 = vunpack.c.h.b16 %v2346
      %v3128 = vunpack.c.l.b16 %v2347
      %v3129 = vunpack.c.h.b16 %v2347
      %v3130 = vunpack.c.l.b16 %v2348
      %v3131 = vunpack.c.h.b16 %v2348
      %v3132 = vunpack.c.l.b16 %v2349
      %v3133 = vunpack.c.h.b16 %v2349
      %v3134 = vunpack.c.l.b16 %v2350
      %v3135 = vunpack.c.h.b16 %v2350
      %v3136 = vunpack.c.l.b16 %v2351
      %v3137 = vunpack.c.h.b16 %v2351
      %v3138 = vunpack.c.l.b16 %v2352
      %v3139 = vunpack.c.h.b16 %v2352
      %v3140 = vunpack.c.l.b16 %v2353
      %v3141 = vunpack.c.h.b16 %v2353
      %v3142 = vunpack.c.l.b16 %v2354
      %v3143 = vunpack.c.h.b16 %v2354
      %v3144 = vunpack.c.l.b16 %v2355
      %v3145 = vunpack.c.h.b16 %v2355
      %v3146 = vunpack.c.l.b16 %v2356
      %v3147 = vunpack.c.h.b16 %v2356
      %v3148 = vunpack.c.l.b16 %v2357
      %v3149 = vunpack.c.h.b16 %v2357
      %v3150 = vunpack.c.l.b16 %v2358
      %v3151 = vunpack.c.h.b16 %v2358
      %v3152 = vunpack.c.l.b16 %v2359
      %v3153 = vunpack.c.h.b16 %v2359
      %v3154 = vunpack.c.l.b16 %v2360
      %v3155 = vunpack.c.h.b16 %v2360
      %v3156 = vunpack.c.l.b16 %v2361
      %v3157 = vunpack.c.h.b16 %v2361
      %v3158 = vunpack.c.l.b16 %v2362
      %v3159 = vunpack.c.h.b16 %v2362
      %v3160 = vunpack.c.l.b16 %v2363
      %v3161 = vunpack.c.h.b16 %v2363
      %v3162 = vunpack.c.l.b16 %v2364
      %v3163 = vunpack.c.h.b16 %v2364
      %v3164 = vunpack.c.l.b16 %v2365
      %v3165 = vunpack.c.h.b16 %v2365
      %v3166 = vunpack.c.l.b16 %v2366
      %v3167 = vunpack.c.h.b16 %v2366
      %v3168 = vunpack.c.l.b16 %v2367
      %v3169 = vunpack.c.h.b16 %v2367
      %v3170 = vunpack.c.l.b16 %v2368
      %v3171 = vunpack.c.h.b16 %v2368
      %v3172 = vunpack.c.l.b16 %v2369
      %v3173 = vunpack.c.h.b16 %v2369
      %v3174 = vunpack.c.l.b16 %v2370
      %v3175 = vunpack.c.h.b16 %v2370
      %v3176 = vunpack.c.l.b16 %v2371
      %v3177 = vunpack.c.h.b16 %v2371
      %v3178 = vunpack.c.l.b16 %v2372
      %v3179 = vunpack.c.h.b16 %v2372
      %v3180 = vunpack.c.l.b16 %v2373
      %v3181 = vunpack.c.h.b16 %v2373
      %v3182 = vunpack.c.l.b16 %v2374
      %v3183 = vunpack.c.h.b16 %v2374
      %v3184 = vunpack.c.l.b16 %v2375
      %v3185 = vunpack.c.h.b16 %v2375
      %v3186 = vunpack.c.l.b16 %v2376
      %v3187 = vunpack.c.h.b16 %v2376
      %v3188 = vunpack.c.l.b16 %v2377
      %v3189 = vunpack.c.h.b16 %v2377
      %v3190 = vunpack.c.l.b16 %v2378
      %v3191 = vunpack.c.h.b16 %v2378
      %v3192 = vunpack.c.l.b16 %v2379
      %v3193 = vunpack.c.h.b16 %v2379
      %v3194 = vunpack.c.l.b16 %v2380
      %v3195 = vunpack.c.h.b16 %v2380
      %v3196 = vunpack.c.l.b16 %v2381
      %v3197 = vunpack.c.h.b16 %v2381
      %v3198 = vunpack.c.l.b16 %v2382
      %v3199 = vunpack.c.h.b16 %v2382
      %v3200 = vunpack.c.l.b16 %v2383
      %v3201 = vunpack.c.h.b16 %v2383
      %v3202 = vunpack.c.l.b16 %v2384
      %v3203 = vunpack.c.h.b16 %v2384
      %v3204 = vunpack.c.l.b16 %v2385
      %v3205 = vunpack.c.h.b16 %v2385
      %v3206 = vunpack.c.l.b16 %v2386
      %v3207 = vunpack.c.h.b16 %v2386
      %v3208 = vunpack.c.l.b16 %v2387
      %v3209 = vunpack.c.h.b16 %v2387
      %v3210 = vunpack.c.l.b16 %v2388
      %v3211 = vunpack.c.h.b16 %v2388
      %v3212 = vunpack.c.l.b16 %v2389
      %v3213 = vunpack.c.h.b16 %v2389
      %v3214 = vunpack.c.l.b16 %v2390
      %v3215 = vunpack.c.h.b16 %v2390
      %v3216 = vunpack.c.l.b16 %v2391
      %v3217 = vunpack.c.h.b16 %v2391
      %v3218 = vunpack.c.l.b16 %v2392
      %v3219 = vunpack.c.h.b16 %v2392
      %v3220 = vunpack.c.l.b16 %v2393
      %v3221 = vunpack.c.h.b16 %v2393
      %v3222 = vunpack.c.l.b16 %v2394
      %v3223 = vunpack.c.h.b16 %v2394
      %v3224 = vunpack.c.l.b16 %v2395
      %v3225 = vunpack.c.h.b16 %v2395
      %v3226 = vunpack.c.l.b16 %v2396
      %v3227 = vunpack.c.h.b16 %v2396
      %v3228 = vunpack.c.l.b16 %v2397
      %v3229 = vunpack.c.h.b16 %v2397
      %v3230 = vpack.c.b16 %v2978, %v2974
      %v3231 = vpack.c.b16 %v2979, %v2975
      %v3232 = vpack.c.b16 %v2980, %v2976
      %v3233 = vpack.c.b16 %v2981, %v2977
      %v3234 = vpack.c.b16 %v2986, %v2982
      %v3235 = vpack.c.b16 %v2987, %v2983
      %v3236 = vpack.c.b16 %v2988, %v2984
      %v3237 = vpack.c.b16 %v2989, %v2985
      %v3238 = vpack.c.b16 %v2994, %v2990
      %v3239 = vpack.c.b16 %v2995, %v2991
      %v3240 = vpack.c.b16 %v2996, %v2992
      %v3241 = vpack.c.b16 %v2997, %v2993
      %v3242 = vpack.c.b16 %v3002, %v2998
      %v3243 = vpack.c.b16 %v3003, %v2999
      %v3244 = vpack.c.b16 %v3004, %v3000
      %v3245 = vpack.c.b16 %v3005, %v3001
      %v3246 = vpack.c.b16 %v3010, %v3006
      %v3247 = vpack.c.b16 %v3011, %v3007
      %v3248 = vpack.c.b16 %v3012, %v3008
      %v3249 = vpack.c.b16 %v3013, %v3009
      %v3250 = vpack.c.b16 %v3018, %v3014
      %v3251 = vpack.c.b16 %v3019, %v3015
      %v3252 = vpack.c.b16 %v3020, %v3016
      %v3253 = vpack.c.b16 %v3021, %v3017
      %v3254 = vpack.c.b16 %v3026, %v3022
      %v3255 = vpack.c.b16 %v3027, %v3023
      %v3256 = vpack.c.b16 %v3028, %v3024
      %v3257 = vpack.c.b16 %v3029, %v3025
      %v3258 = vpack.c.b16 %v3034, %v3030
      %v3259 = vpack.c.b16 %v3035, %v3031
      %v3260 = vpack.c.b16 %v3036, %v3032
      %v3261 = vpack.c.b16 %v3037, %v3033
      %v3262 = vpack.c.b16 %v3042, %v3038
      %v3263 = vpack.c.b16 %v3043, %v3039
      %v3264 = vpack.c.b16 %v3044, %v3040
      %v3265 = vpack.c.b16 %v3045, %v3041
      %v3266 = vpack.c.b16 %v3050, %v3046
      %v3267 = vpack.c.b16 %v3051, %v3047
      %v3268 = vpack.c.b16 %v3052, %v3048
      %v3269 = vpack.c.b16 %v3053, %v3049
      %v3270 = vpack.c.b16 %v3058, %v3054
      %v3271 = vpack.c.b16 %v3059, %v3055
      %v3272 = vpack.c.b16 %v3060, %v3056
      %v3273 = vpack.c.b16 %v3061, %v3057
      %v3274 = vpack.c.b16 %v3066, %v3062
      %v3275 = vpack.c.b16 %v3067, %v3063
      %v3276 = vpack.c.b16 %v3068, %v3064
      %v3277 = vpack.c.b16 %v3069, %v3065
      %v3278 = vpack.c.b16 %v3074, %v3070
      %v3279 = vpack.c.b16 %v3075, %v3071
      %v3280 = vpack.c.b16 %v3076, %v3072
      %v3281 = vpack.c.b16 %v3077, %v3073
      %v3282 = vpack.c.b16 %v3082, %v3078
      %v3283 = vpack.c.b16 %v3083, %v3079
      %v3284 = vpack.c.b16 %v3084, %v3080
      %v3285 = vpack.c.b16 %v3085, %v3081
      %v3286 = vpack.c.b16 %v3090, %v3086
      %v3287 = vpack.c.b16 %v3091, %v3087
      %v3288 = vpack.c.b16 %v3092, %v3088
      %v3289 = vpack.c.b16 %v3093, %v3089
      %v3290 = vpack.c.b16 %v3098, %v3094
      %v3291 = vpack.c.b16 %v3099, %v3095
      %v3292 = vpack.c.b16 %v3100, %v3096
      %v3293 = vpack.c.b16 %v3101, %v3097
      %v3294 = vpack.c.b16 %v3106, %v3102
      %v3295 = vpack.c.b16 %v3107, %v3103
      %v3296 = vpack.c.b16 %v3108, %v3104
      %v3297 = vpack.c.b16 %v3109, %v3105
      %v3298 = vpack.c.b16 %v3114, %v3110
      %v3299 = vpack.c.b16 %v3115, %v3111
      %v3300 = vpack.c.b16 %v3116, %v3112
      %v3301 = vpack.c.b16 %v3117, %v3113
      %v3302 = vpack.c.b16 %v3122, %v3118
      %v3303 = vpack.c.b16 %v3123, %v3119
      %v3304 = vpack.c.b16 %v3124, %v3120
      %v3305 = vpack.c.b16 %v3125, %v3121
      %v3306 = vpack.c.b16 %v3130, %v3126
      %v3307 = vpack.c.b16 %v3131, %v3127
      %v3308 = vpack.c.b16 %v3132, %v3128
      %v3309 = vpack.c.b16 %v3133, %v3129
      %v3310 = vpack.c.b16 %v3138, %v3134
      %v3311 = vpack.c.b16 %v3139, %v3135
      %v3312 = vpack.c.b16 %v3140, %v3136
      %v3313 = vpack.c.b16 %v3141, %v3137
      %v3314 = vpack.c.b16 %v3146, %v3142
      %v3315 = vpack.c.b16 %v3147, %v3143
      %v3316 = vpack.c.b16 %v3148, %v3144
      %v3317 = vpack.c.b16 %v3149, %v3145
      %v3318 = vpack.c.b16 %v3154, %v3150
      %v3319 = vpack.c.b16 %v3155, %v3151
      %v3320 = vpack.c.b16 %v3156, %v3152
      %v3321 = vpack.c.b16 %v3157, %v3153
      %v3322 = vpack.c.b16 %v3162, %v3158
      %v3323 = vpack.c.b16 %v3163, %v3159
      %v3324 = vpack.c.b16 %v3164, %v3160
      %v3325 = vpack.c.b16 %v3165, %v3161
      %v3326 = vpack.c.b16 %v3170, %v3166
      %v3327 = vpack.c.b16 %v3171, %v3167
      %v3328 = vpack.c.b16 %v3172, %v3168
      %v3329 = vpack.c.b16 %v3173, %v3169
      %v3330 = vpack.c.b16 %v3178, %v3174
      %v3331 = vpack.c.b16 %v3179, %v3175
      %v3332 = vpack.c.b16 %v3180, %v3176
      %v3333 = vpack.c.b16 %v3181, %v3177
      %v3334 = vpack.c.b16 %v3186, %v3182
      %v3335 = vpack.c.b16 %v3187, %v3183
      %v3336 = vpack.c.b16 %v3188, %v3184
      %v3337 = vpack.c.b16 %v3189, %v3185
      %v3338 = vpack.c.b16 %v3194, %v3190
      %v3339 = vpack.c.b16 %v3195, %v3191
      %v3340 = vpack.c.b16 %v3196, %v3192
      %v3341 = vpack.c.b16 %v3197, %v3193
      %v3342 = vpack.c.b16 %v3202, %v3198
      %v3343 = vpack.c.b16 %v3203, %v3199
      %v3344 = vpack.c.b16 %v3204, %v3200
      %v3345 = vpack.c.b16 %v3205, %v3201
      %v3346 = vpack.c.b16 %v3210, %v3206
      %v3347 = vpack.c.b16 %v3211, %v3207
      %v3348 = vpack.c.b16 %v3212, %v3208
      %v3349 = vpack.c.b16 %v3213, %v3209
      %v3350 = vpack.c.b16 %v3218, %v3214
      %v3351 = vpack.c.b16 %v3219, %v3215
      %v3352 = vpack.c.b16 %v3220, %v3216
      %v3353 = vpack.c.b16 %v3221, %v3217
      %v3354 = vpack.c.b16 %v3226, %v3222
      %v3355 = vpack.c.b16 %v3227, %v3223
      %v3356 = vpack.c.b16 %v3228, %v3224
      %v3357 = vpack.c.b16 %v3229, %v3225
      %3486 = vmatpush.bf16.msra.mxu0 %v2412
      %3487 = vmatpush.bf16.msra.mxu0 %v2410
      %3488 = vmatpush.bf16.msra.mxu0 %v2408
      %3489 = vmatpush.bf16.msra.mxu0 %v2406
      %3490 = vmatpush.bf16.msra.mxu0 %v2404
      %3491 = vmatpush.bf16.msra.mxu0 %v2402
      %3492 = vmatpush.bf16.msra.mxu0 %v2400
      %3493 = vmatpush.bf16.msra.mxu0 %v2398
      %3494 = vmatmul.bf16.gmra.mxu0 %v3230
      %v3495 = vpop.f32.mrf.mxu0
      %v3496 = vadd.f32 %v2529, %v3495
      %v3497 = vpop.f32.mrf.mxu0
      %v3498 = vadd.f32 %v2534, %v3497
      %3499 = vmatmul.bf16.gmra.mxu0 %v3234
      %v3500 = vpop.f32.mrf.mxu0
      %v3501 = vadd.f32 %v2539, %v3500
      %v3502 = vpop.f32.mrf.mxu0
      %v3503 = vadd.f32 %v2544, %v3502
      %3504 = vmatmul.bf16.gmra.mxu0 %v3238
      %v3505 = vpop.f32.mrf.mxu0
      %v3506 = vadd.f32 %v2549, %v3505
      %v3507 = vpop.f32.mrf.mxu0
      %v3508 = vadd.f32 %v2554, %v3507
      %3509 = vmatmul.bf16.gmra.mxu0 %v3242
      %v3510 = vpop.f32.mrf.mxu0
      %v3511 = vadd.f32 %v2559, %v3510
      %v3512 = vpop.f32.mrf.mxu0
      %v3513 = vadd.f32 %v2564, %v3512
      %3514 = vmatmul.bf16.gmra.mxu0 %v3246
      %v3515 = vpop.f32.mrf.mxu0
      %v3516 = vadd.f32 %v2569, %v3515
      %v3517 = vpop.f32.mrf.mxu0
      %v3518 = vadd.f32 %v2574, %v3517
      %3519 = vmatmul.bf16.gmra.mxu0 %v3250
      %v3520 = vpop.f32.mrf.mxu0
      %v3521 = vadd.f32 %v2579, %v3520
      %v3522 = vpop.f32.mrf.mxu0
      %v3523 = vadd.f32 %v2584, %v3522
      %3524 = vmatmul.bf16.gmra.mxu0 %v3254
      %v3525 = vpop.f32.mrf.mxu0
      %v3526 = vadd.f32 %v2589, %v3525
      %v3527 = vpop.f32.mrf.mxu0
      %v3528 = vadd.f32 %v2594, %v3527
      %3529 = vmatmul.bf16.gmra.mxu0 %v3258
      %v3530 = vpop.f32.mrf.mxu0
      %v3531 = vadd.f32 %v2599, %v3530
      %v3532 = vpop.f32.mrf.mxu0
      %v3533 = vadd.f32 %v2604, %v3532
      %3534 = vmatmul.bf16.gmra.mxu0 %v3262
      %v3535 = vpop.f32.mrf.mxu0
      %v3536 = vadd.f32 %v2609, %v3535
      %v3537 = vpop.f32.mrf.mxu0
      %v3538 = vadd.f32 %v2614, %v3537
      %3539 = vmatmul.bf16.gmra.mxu0 %v3266
      %v3540 = vpop.f32.mrf.mxu0
      %v3541 = vadd.f32 %v2619, %v3540
      %v3542 = vpop.f32.mrf.mxu0
      %v3543 = vadd.f32 %v2624, %v3542
      %3544 = vmatmul.bf16.gmra.mxu0 %v3270
      %v3545 = vpop.f32.mrf.mxu0
      %v3546 = vadd.f32 %v2629, %v3545
      %v3547 = vpop.f32.mrf.mxu0
      %v3548 = vadd.f32 %v2634, %v3547
      %3549 = vmatmul.bf16.gmra.mxu0 %v3274
      %v3550 = vpop.f32.mrf.mxu0
      %v3551 = vadd.f32 %v2639, %v3550
      %v3552 = vpop.f32.mrf.mxu0
      %v3553 = vadd.f32 %v2644, %v3552
      %3554 = vmatmul.bf16.gmra.mxu0 %v3278
      %v3555 = vpop.f32.mrf.mxu0
      %v3556 = vadd.f32 %v2649, %v3555
      %v3557 = vpop.f32.mrf.mxu0
      %v3558 = vadd.f32 %v2654, %v3557
      %3559 = vmatmul.bf16.gmra.mxu0 %v3282
      %v3560 = vpop.f32.mrf.mxu0
      %v3561 = vadd.f32 %v2659, %v3560
      %v3562 = vpop.f32.mrf.mxu0
      %v3563 = vadd.f32 %v2664, %v3562
      %3564 = vmatmul.bf16.gmra.mxu0 %v3286
      %v3565 = vpop.f32.mrf.mxu0
      %v3566 = vadd.f32 %v2669, %v3565
      %v3567 = vpop.f32.mrf.mxu0
      %v3568 = vadd.f32 %v2674, %v3567
      %3569 = vmatmul.bf16.gmra.mxu0 %v3290
      %v3570 = vpop.f32.mrf.mxu0
      %v3571 = vadd.f32 %v2679, %v3570
      %v3572 = vpop.f32.mrf.mxu0
      %v3573 = vadd.f32 %v2684, %v3572
      %3574 = vmatmul.bf16.gmra.mxu0 %v3294
      %v3575 = vpop.f32.mrf.mxu0
      %v3576 = vadd.f32 %v2689, %v3575
      %v3577 = vpop.f32.mrf.mxu0
      %v3578 = vadd.f32 %v2694, %v3577
      %3579 = vmatmul.bf16.gmra.mxu0 %v3298
      %v3580 = vpop.f32.mrf.mxu0
      %v3581 = vadd.f32 %v2699, %v3580
      %v3582 = vpop.f32.mrf.mxu0
      %v3583 = vadd.f32 %v2704, %v3582
      %3584 = vmatmul.bf16.gmra.mxu0 %v3302
      %v3585 = vpop.f32.mrf.mxu0
      %v3586 = vadd.f32 %v2709, %v3585
      %v3587 = vpop.f32.mrf.mxu0
      %v3588 = vadd.f32 %v2714, %v3587
      %3589 = vmatmul.bf16.gmra.mxu0 %v3306
      %v3590 = vpop.f32.mrf.mxu0
      %v3591 = vadd.f32 %v2719, %v3590
      %v3592 = vpop.f32.mrf.mxu0
      %v3593 = vadd.f32 %v2724, %v3592
      %3594 = vmatmul.bf16.gmra.mxu0 %v3310
      %v3595 = vpop.f32.mrf.mxu0
      %v3596 = vadd.f32 %v2729, %v3595
      %v3597 = vpop.f32.mrf.mxu0
      %v3598 = vadd.f32 %v2734, %v3597
      %3599 = vmatmul.bf16.gmra.mxu0 %v3314
      %v3600 = vpop.f32.mrf.mxu0
      %v3601 = vadd.f32 %v2739, %v3600
      %v3602 = vpop.f32.mrf.mxu0
      %v3603 = vadd.f32 %v2744, %v3602
      %3604 = vmatmul.bf16.gmra.mxu0 %v3318
      %v3605 = vpop.f32.mrf.mxu0
      %v3606 = vadd.f32 %v2749, %v3605
      %v3607 = vpop.f32.mrf.mxu0
      %v3608 = vadd.f32 %v2754, %v3607
      %3609 = vmatmul.bf16.gmra.mxu0 %v3322
      %v3610 = vpop.f32.mrf.mxu0
      %v3611 = vadd.f32 %v2759, %v3610
      %v3612 = vpop.f32.mrf.mxu0
      %v3613 = vadd.f32 %v2764, %v3612
      %3614 = vmatmul.bf16.gmra.mxu0 %v3326
      %v3615 = vpop.f32.mrf.mxu0
      %v3616 = vadd.f32 %v2769, %v3615
      %v3617 = vpop.f32.mrf.mxu0
      %v3618 = vadd.f32 %v2774, %v3617
      %3619 = vmatmul.bf16.gmra.mxu0 %v3330
      %v3620 = vpop.f32.mrf.mxu0
      %v3621 = vadd.f32 %v2779, %v3620
      %v3622 = vpop.f32.mrf.mxu0
      %v3623 = vadd.f32 %v2784, %v3622
      %3624 = vmatmul.bf16.gmra.mxu0 %v3334
      %v3625 = vpop.f32.mrf.mxu0
      %v3626 = vadd.f32 %v2789, %v3625
      %v3627 = vpop.f32.mrf.mxu0
      %v3628 = vadd.f32 %v2794, %v3627
      %3629 = vmatmul.bf16.gmra.mxu0 %v3338
      %v3630 = vpop.f32.mrf.mxu0
      %v3631 = vadd.f32 %v2799, %v3630
      %v3632 = vpop.f32.mrf.mxu0
      %v3633 = vadd.f32 %v2804, %v3632
      %3634 = vmatmul.bf16.gmra.mxu0 %v3342
      %v3635 = vpop.f32.mrf.mxu0
      %v3636 = vadd.f32 %v2809, %v3635
      %v3637 = vpop.f32.mrf.mxu0
      %v3638 = vadd.f32 %v2814, %v3637
      %3639 = vmatmul.bf16.gmra.mxu0 %v3346
      %v3640 = vpop.f32.mrf.mxu0
      %v3641 = vadd.f32 %v2819, %v3640
      %v3642 = vpop.f32.mrf.mxu0
      %v3643 = vadd.f32 %v2824, %v3642
      %3644 = vmatmul.bf16.gmra.mxu0 %v3350
      %v3645 = vpop.f32.mrf.mxu0
      %v3646 = vadd.f32 %v2829, %v3645
      %v3647 = vpop.f32.mrf.mxu0
      %v3648 = vadd.f32 %v2834, %v3647
      %3649 = vmatmul.bf16.gmra.mxu0 %v3354
      %v3650 = vpop.f32.mrf.mxu0
      %v3651 = vadd.f32 %v2839, %v3650
      %v3652 = vpop.f32.mrf.mxu0
      %v3653 = vadd.f32 %v2844, %v3652
      %3654 = vdwg.mxu0
      %3655 = vmatpush.bf16.msra.mxu0 %v2428
      %3656 = vmatpush.bf16.msra.mxu0 %v2426
      %3657 = vmatpush.bf16.msra.mxu0 %v2424
      %3658 = vmatpush.bf16.msra.mxu0 %v2422
      %3659 = vmatpush.bf16.msra.mxu0 %v2420
      %3660 = vmatpush.bf16.msra.mxu0 %v2418
      %3661 = vmatpush.bf16.msra.mxu0 %v2416
      %3662 = vmatpush.bf16.msra.mxu0 %v2414
      %3663 = vmatmul.bf16.gmra.mxu0 %v3231
      %v3664 = vpop.f32.mrf.mxu0
      %v3665 = vadd.f32 %v3496, %v3664
      %v3666 = vpop.f32.mrf.mxu0
      %v3667 = vadd.f32 %v3498, %v3666
      %3668 = vmatmul.bf16.gmra.mxu0 %v3235
      %v3669 = vpop.f32.mrf.mxu0
      %v3670 = vadd.f32 %v3501, %v3669
      %v3671 = vpop.f32.mrf.mxu0
      %v3672 = vadd.f32 %v3503, %v3671
      %3673 = vmatmul.bf16.gmra.mxu0 %v3239
      %v3674 = vpop.f32.mrf.mxu0
      %v3675 = vadd.f32 %v3506, %v3674
      %v3676 = vpop.f32.mrf.mxu0
      %v3677 = vadd.f32 %v3508, %v3676
      %3678 = vmatmul.bf16.gmra.mxu0 %v3243
      %v3679 = vpop.f32.mrf.mxu0
      %v3680 = vadd.f32 %v3511, %v3679
      %v3681 = vpop.f32.mrf.mxu0
      %v3682 = vadd.f32 %v3513, %v3681
      %3683 = vmatmul.bf16.gmra.mxu0 %v3247
      %v3684 = vpop.f32.mrf.mxu0
      %v3685 = vadd.f32 %v3516, %v3684
      %v3686 = vpop.f32.mrf.mxu0
      %v3687 = vadd.f32 %v3518, %v3686
      %3688 = vmatmul.bf16.gmra.mxu0 %v3251
      %v3689 = vpop.f32.mrf.mxu0
      %v3690 = vadd.f32 %v3521, %v3689
      %v3691 = vpop.f32.mrf.mxu0
      %v3692 = vadd.f32 %v3523, %v3691
      %3693 = vmatmul.bf16.gmra.mxu0 %v3255
      %v3694 = vpop.f32.mrf.mxu0
      %v3695 = vadd.f32 %v3526, %v3694
      %v3696 = vpop.f32.mrf.mxu0
      %v3697 = vadd.f32 %v3528, %v3696
      %3698 = vmatmul.bf16.gmra.mxu0 %v3259
      %v3699 = vpop.f32.mrf.mxu0
      %v3700 = vadd.f32 %v3531, %v3699
      %v3701 = vpop.f32.mrf.mxu0
      %v3702 = vadd.f32 %v3533, %v3701
      %3703 = vmatmul.bf16.gmra.mxu0 %v3263
      %v3704 = vpop.f32.mrf.mxu0
      %v3705 = vadd.f32 %v3536, %v3704
      %v3706 = vpop.f32.mrf.mxu0
      %v3707 = vadd.f32 %v3538, %v3706
      %3708 = vmatmul.bf16.gmra.mxu0 %v3267
      %v3709 = vpop.f32.mrf.mxu0
      %v3710 = vadd.f32 %v3541, %v3709
      %v3711 = vpop.f32.mrf.mxu0
      %v3712 = vadd.f32 %v3543, %v3711
      %3713 = vmatmul.bf16.gmra.mxu0 %v3271
      %v3714 = vpop.f32.mrf.mxu0
      %v3715 = vadd.f32 %v3546, %v3714
      %v3716 = vpop.f32.mrf.mxu0
      %v3717 = vadd.f32 %v3548, %v3716
      %3718 = vmatmul.bf16.gmra.mxu0 %v3275
      %v3719 = vpop.f32.mrf.mxu0
      %v3720 = vadd.f32 %v3551, %v3719
      %v3721 = vpop.f32.mrf.mxu0
      %v3722 = vadd.f32 %v3553, %v3721
      %3723 = vmatmul.bf16.gmra.mxu0 %v3279
      %v3724 = vpop.f32.mrf.mxu0
      %v3725 = vadd.f32 %v3556, %v3724
      %v3726 = vpop.f32.mrf.mxu0
      %v3727 = vadd.f32 %v3558, %v3726
      %3728 = vmatmul.bf16.gmra.mxu0 %v3283
      %v3729 = vpop.f32.mrf.mxu0
      %v3730 = vadd.f32 %v3561, %v3729
      %v3731 = vpop.f32.mrf.mxu0
      %v3732 = vadd.f32 %v3563, %v3731
      %3733 = vmatmul.bf16.gmra.mxu0 %v3287
      %v3734 = vpop.f32.mrf.mxu0
      %v3735 = vadd.f32 %v3566, %v3734
      %v3736 = vpop.f32.mrf.mxu0
      %v3737 = vadd.f32 %v3568, %v3736
      %3738 = vmatmul.bf16.gmra.mxu0 %v3291
      %v3739 = vpop.f32.mrf.mxu0
      %v3740 = vadd.f32 %v3571, %v3739
      %v3741 = vpop.f32.mrf.mxu0
      %v3742 = vadd.f32 %v3573, %v3741
      %3743 = vmatmul.bf16.gmra.mxu0 %v3295
      %v3744 = vpop.f32.mrf.mxu0
      %v3745 = vadd.f32 %v3576, %v3744
      %v3746 = vpop.f32.mrf.mxu0
      %v3747 = vadd.f32 %v3578, %v3746
      %3748 = vmatmul.bf16.gmra.mxu0 %v3299
      %v3749 = vpop.f32.mrf.mxu0
      %v3750 = vadd.f32 %v3581, %v3749
      %v3751 = vpop.f32.mrf.mxu0
      %v3752 = vadd.f32 %v3583, %v3751
      %3753 = vmatmul.bf16.gmra.mxu0 %v3303
      %v3754 = vpop.f32.mrf.mxu0
      %v3755 = vadd.f32 %v3586, %v3754
      %v3756 = vpop.f32.mrf.mxu0
      %v3757 = vadd.f32 %v3588, %v3756
      %3758 = vmatmul.bf16.gmra.mxu0 %v3307
      %v3759 = vpop.f32.mrf.mxu0
      %v3760 = vadd.f32 %v3591, %v3759
      %v3761 = vpop.f32.mrf.mxu0
      %v3762 = vadd.f32 %v3593, %v3761
      %3763 = vmatmul.bf16.gmra.mxu0 %v3311
      %v3764 = vpop.f32.mrf.mxu0
      %v3765 = vadd.f32 %v3596, %v3764
      %v3766 = vpop.f32.mrf.mxu0
      %v3767 = vadd.f32 %v3598, %v3766
      %3768 = vmatmul.bf16.gmra.mxu0 %v3315
      %v3769 = vpop.f32.mrf.mxu0
      %v3770 = vadd.f32 %v3601, %v3769
      %v3771 = vpop.f32.mrf.mxu0
      %v3772 = vadd.f32 %v3603, %v3771
      %3773 = vmatmul.bf16.gmra.mxu0 %v3319
      %v3774 = vpop.f32.mrf.mxu0
      %v3775 = vadd.f32 %v3606, %v3774
      %v3776 = vpop.f32.mrf.mxu0
      %v3777 = vadd.f32 %v3608, %v3776
      %3778 = vmatmul.bf16.gmra.mxu0 %v3323
      %v3779 = vpop.f32.mrf.mxu0
      %v3780 = vadd.f32 %v3611, %v3779
      %v3781 = vpop.f32.mrf.mxu0
      %v3782 = vadd.f32 %v3613, %v3781
      %3783 = vmatmul.bf16.gmra.mxu0 %v3327
      %v3784 = vpop.f32.mrf.mxu0
      %v3785 = vadd.f32 %v3616, %v3784
      %v3786 = vpop.f32.mrf.mxu0
      %v3787 = vadd.f32 %v3618, %v3786
      %3788 = vmatmul.bf16.gmra.mxu0 %v3331
      %v3789 = vpop.f32.mrf.mxu0
      %v3790 = vadd.f32 %v3621, %v3789
      %v3791 = vpop.f32.mrf.mxu0
      %v3792 = vadd.f32 %v3623, %v3791
      %3793 = vmatmul.bf16.gmra.mxu0 %v3335
      %v3794 = vpop.f32.mrf.mxu0
      %v3795 = vadd.f32 %v3626, %v3794
      %v3796 = vpop.f32.mrf.mxu0
      %v3797 = vadd.f32 %v3628, %v3796
      %3798 = vmatmul.bf16.gmra.mxu0 %v3339
      %v3799 = vpop.f32.mrf.mxu0
      %v3800 = vadd.f32 %v3631, %v3799
      %v3801 = vpop.f32.mrf.mxu0
      %v3802 = vadd.f32 %v3633, %v3801
      %3803 = vmatmul.bf16.gmra.mxu0 %v3343
      %v3804 = vpop.f32.mrf.mxu0
      %v3805 = vadd.f32 %v3636, %v3804
      %v3806 = vpop.f32.mrf.mxu0
      %v3807 = vadd.f32 %v3638, %v3806
      %3808 = vmatmul.bf16.gmra.mxu0 %v3347
      %v3809 = vpop.f32.mrf.mxu0
      %v3810 = vadd.f32 %v3641, %v3809
      %v3811 = vpop.f32.mrf.mxu0
      %v3812 = vadd.f32 %v3643, %v3811
      %3813 = vmatmul.bf16.gmra.mxu0 %v3351
      %v3814 = vpop.f32.mrf.mxu0
      %v3815 = vadd.f32 %v3646, %v3814
      %v3816 = vpop.f32.mrf.mxu0
      %v3817 = vadd.f32 %v3648, %v3816
      %3818 = vmatmul.bf16.gmra.mxu0 %v3355
      %v3819 = vpop.f32.mrf.mxu0
      %v3820 = vadd.f32 %v3651, %v3819
      %v3821 = vpop.f32.mrf.mxu0
      %v3822 = vadd.f32 %v3653, %v3821
      %3823 = vdwg.mxu0
      %3824 = vmatpush.bf16.msra.mxu0 %v2444
      %3825 = vmatpush.bf16.msra.mxu0 %v2442
      %3826 = vmatpush.bf16.msra.mxu0 %v2440
      %3827 = vmatpush.bf16.msra.mxu0 %v2438
      %3828 = vmatpush.bf16.msra.mxu0 %v2436
      %3829 = vmatpush.bf16.msra.mxu0 %v2434
      %3830 = vmatpush.bf16.msra.mxu0 %v2432
      %3831 = vmatpush.bf16.msra.mxu0 %v2430
      %3832 = vmatmul.bf16.gmra.mxu0 %v3232
      %v3833 = vpop.f32.mrf.mxu0
      %v3834 = vadd.f32 %v3665, %v3833
      %v3835 = vpop.f32.mrf.mxu0
      %v3836 = vadd.f32 %v3667, %v3835
      %3837 = vmatmul.bf16.gmra.mxu0 %v3236
      %v3838 = vpop.f32.mrf.mxu0
      %v3839 = vadd.f32 %v3670, %v3838
      %v3840 = vpop.f32.mrf.mxu0
      %v3841 = vadd.f32 %v3672, %v3840
      %3842 = vmatmul.bf16.gmra.mxu0 %v3240
      %v3843 = vpop.f32.mrf.mxu0
      %v3844 = vadd.f32 %v3675, %v3843
      %v3845 = vpop.f32.mrf.mxu0
      %v3846 = vadd.f32 %v3677, %v3845
      %3847 = vmatmul.bf16.gmra.mxu0 %v3244
      %v3848 = vpop.f32.mrf.mxu0
      %v3849 = vadd.f32 %v3680, %v3848
      %v3850 = vpop.f32.mrf.mxu0
      %v3851 = vadd.f32 %v3682, %v3850
      %3852 = vmatmul.bf16.gmra.mxu0 %v3248
      %v3853 = vpop.f32.mrf.mxu0
      %v3854 = vadd.f32 %v3685, %v3853
      %v3855 = vpop.f32.mrf.mxu0
      %v3856 = vadd.f32 %v3687, %v3855
      %3857 = vmatmul.bf16.gmra.mxu0 %v3252
      %v3858 = vpop.f32.mrf.mxu0
      %v3859 = vadd.f32 %v3690, %v3858
      %v3860 = vpop.f32.mrf.mxu0
      %v3861 = vadd.f32 %v3692, %v3860
      %3862 = vmatmul.bf16.gmra.mxu0 %v3256
      %v3863 = vpop.f32.mrf.mxu0
      %v3864 = vadd.f32 %v3695, %v3863
      %v3865 = vpop.f32.mrf.mxu0
      %v3866 = vadd.f32 %v3697, %v3865
      %3867 = vmatmul.bf16.gmra.mxu0 %v3260
      %v3868 = vpop.f32.mrf.mxu0
      %v3869 = vadd.f32 %v3700, %v3868
      %v3870 = vpop.f32.mrf.mxu0
      %v3871 = vadd.f32 %v3702, %v3870
      %3872 = vmatmul.bf16.gmra.mxu0 %v3264
      %v3873 = vpop.f32.mrf.mxu0
      %v3874 = vadd.f32 %v3705, %v3873
      %v3875 = vpop.f32.mrf.mxu0
      %v3876 = vadd.f32 %v3707, %v3875
      %3877 = vmatmul.bf16.gmra.mxu0 %v3268
      %v3878 = vpop.f32.mrf.mxu0
      %v3879 = vadd.f32 %v3710, %v3878
      %v3880 = vpop.f32.mrf.mxu0
      %v3881 = vadd.f32 %v3712, %v3880
      %3882 = vmatmul.bf16.gmra.mxu0 %v3272
      %v3883 = vpop.f32.mrf.mxu0
      %v3884 = vadd.f32 %v3715, %v3883
      %v3885 = vpop.f32.mrf.mxu0
      %v3886 = vadd.f32 %v3717, %v3885
      %3887 = vmatmul.bf16.gmra.mxu0 %v3276
      %v3888 = vpop.f32.mrf.mxu0
      %v3889 = vadd.f32 %v3720, %v3888
      %v3890 = vpop.f32.mrf.mxu0
      %v3891 = vadd.f32 %v3722, %v3890
      %3892 = vmatmul.bf16.gmra.mxu0 %v3280
      %v3893 = vpop.f32.mrf.mxu0
      %v3894 = vadd.f32 %v3725, %v3893
      %v3895 = vpop.f32.mrf.mxu0
      %v3896 = vadd.f32 %v3727, %v3895
      %3897 = vmatmul.bf16.gmra.mxu0 %v3284
      %v3898 = vpop.f32.mrf.mxu0
      %v3899 = vadd.f32 %v3730, %v3898
      %v3900 = vpop.f32.mrf.mxu0
      %v3901 = vadd.f32 %v3732, %v3900
      %3902 = vmatmul.bf16.gmra.mxu0 %v3288
      %v3903 = vpop.f32.mrf.mxu0
      %v3904 = vadd.f32 %v3735, %v3903
      %v3905 = vpop.f32.mrf.mxu0
      %v3906 = vadd.f32 %v3737, %v3905
      %3907 = vmatmul.bf16.gmra.mxu0 %v3292
      %v3908 = vpop.f32.mrf.mxu0
      %v3909 = vadd.f32 %v3740, %v3908
      %v3910 = vpop.f32.mrf.mxu0
      %v3911 = vadd.f32 %v3742, %v3910
      %3912 = vmatmul.bf16.gmra.mxu0 %v3296
      %v3913 = vpop.f32.mrf.mxu0
      %v3914 = vadd.f32 %v3745, %v3913
      %v3915 = vpop.f32.mrf.mxu0
      %v3916 = vadd.f32 %v3747, %v3915
      %3917 = vmatmul.bf16.gmra.mxu0 %v3300
      %v3918 = vpop.f32.mrf.mxu0
      %v3919 = vadd.f32 %v3750, %v3918
      %v3920 = vpop.f32.mrf.mxu0
      %v3921 = vadd.f32 %v3752, %v3920
      %3922 = vmatmul.bf16.gmra.mxu0 %v3304
      %v3923 = vpop.f32.mrf.mxu0
      %v3924 = vadd.f32 %v3755, %v3923
      %v3925 = vpop.f32.mrf.mxu0
      %v3926 = vadd.f32 %v3757, %v3925
      %3927 = vmatmul.bf16.gmra.mxu0 %v3308
      %v3928 = vpop.f32.mrf.mxu0
      %v3929 = vadd.f32 %v3760, %v3928
      %v3930 = vpop.f32.mrf.mxu0
      %v3931 = vadd.f32 %v3762, %v3930
      %3932 = vmatmul.bf16.gmra.mxu0 %v3312
      %v3933 = vpop.f32.mrf.mxu0
      %v3934 = vadd.f32 %v3765, %v3933
      %v3935 = vpop.f32.mrf.mxu0
      %v3936 = vadd.f32 %v3767, %v3935
      %3937 = vmatmul.bf16.gmra.mxu0 %v3316
      %v3938 = vpop.f32.mrf.mxu0
      %v3939 = vadd.f32 %v3770, %v3938
      %v3940 = vpop.f32.mrf.mxu0
      %v3941 = vadd.f32 %v3772, %v3940
      %3942 = vmatmul.bf16.gmra.mxu0 %v3320
      %v3943 = vpop.f32.mrf.mxu0
      %v3944 = vadd.f32 %v3775, %v3943
      %v3945 = vpop.f32.mrf.mxu0
      %v3946 = vadd.f32 %v3777, %v3945
      %3947 = vmatmul.bf16.gmra.mxu0 %v3324
      %v3948 = vpop.f32.mrf.mxu0
      %v3949 = vadd.f32 %v3780, %v3948
      %v3950 = vpop.f32.mrf.mxu0
      %v3951 = vadd.f32 %v3782, %v3950
      %3952 = vmatmul.bf16.gmra.mxu0 %v3328
      %v3953 = vpop.f32.mrf.mxu0
      %v3954 = vadd.f32 %v3785, %v3953
      %v3955 = vpop.f32.mrf.mxu0
      %v3956 = vadd.f32 %v3787, %v3955
      %3957 = vmatmul.bf16.gmra.mxu0 %v3332
      %v3958 = vpop.f32.mrf.mxu0
      %v3959 = vadd.f32 %v3790, %v3958
      %v3960 = vpop.f32.mrf.mxu0
      %v3961 = vadd.f32 %v3792, %v3960
      %3962 = vmatmul.bf16.gmra.mxu0 %v3336
      %v3963 = vpop.f32.mrf.mxu0
      %v3964 = vadd.f32 %v3795, %v3963
      %v3965 = vpop.f32.mrf.mxu0
      %v3966 = vadd.f32 %v3797, %v3965
      %3967 = vmatmul.bf16.gmra.mxu0 %v3340
      %v3968 = vpop.f32.mrf.mxu0
      %v3969 = vadd.f32 %v3800, %v3968
      %v3970 = vpop.f32.mrf.mxu0
      %v3971 = vadd.f32 %v3802, %v3970
      %3972 = vmatmul.bf16.gmra.mxu0 %v3344
      %v3973 = vpop.f32.mrf.mxu0
      %v3974 = vadd.f32 %v3805, %v3973
      %v3975 = vpop.f32.mrf.mxu0
      %v3976 = vadd.f32 %v3807, %v3975
      %3977 = vmatmul.bf16.gmra.mxu0 %v3348
      %v3978 = vpop.f32.mrf.mxu0
      %v3979 = vadd.f32 %v3810, %v3978
      %v3980 = vpop.f32.mrf.mxu0
      %v3981 = vadd.f32 %v3812, %v3980
      %3982 = vmatmul.bf16.gmra.mxu0 %v3352
      %v3983 = vpop.f32.mrf.mxu0
      %v3984 = vadd.f32 %v3815, %v3983
      %v3985 = vpop.f32.mrf.mxu0
      %v3986 = vadd.f32 %v3817, %v3985
      %3987 = vmatmul.bf16.gmra.mxu0 %v3356
      %v3988 = vpop.f32.mrf.mxu0
      %v3989 = vadd.f32 %v3820, %v3988
      %v3990 = vpop.f32.mrf.mxu0
      %v3991 = vadd.f32 %v3822, %v3990
      %3992 = vdwg.mxu0
      %3993 = vmatpush.bf16.msra.mxu0 %v2460
      %3994 = vmatpush.bf16.msra.mxu0 %v2458
      %3995 = vmatpush.bf16.msra.mxu0 %v2456
      %3996 = vmatpush.bf16.msra.mxu0 %v2454
      %3997 = vmatpush.bf16.msra.mxu0 %v2452
      %3998 = vmatpush.bf16.msra.mxu0 %v2450
      %3999 = vmatpush.bf16.msra.mxu0 %v2448
      %4000 = vmatpush.bf16.msra.mxu0 %v2446
      %4001 = vmatmul.bf16.gmra.mxu0 %v3233
      %v4002 = vpop.f32.mrf.mxu0
      %v4003 = vadd.f32 %v3834, %v4002
      %v4004 = vpop.f32.mrf.mxu0
      %v4005 = vadd.f32 %v3836, %v4004
      %4006 = vmatmul.bf16.gmra.mxu0 %v3237
      %v4007 = vpop.f32.mrf.mxu0
      %v4008 = vadd.f32 %v3839, %v4007
      %v4009 = vpop.f32.mrf.mxu0
      %v4010 = vadd.f32 %v3841, %v4009
      %4011 = vmatmul.bf16.gmra.mxu0 %v3241
      %v4012 = vpop.f32.mrf.mxu0
      %v4013 = vadd.f32 %v3844, %v4012
      %v4014 = vpop.f32.mrf.mxu0
      %v4015 = vadd.f32 %v3846, %v4014
      %4016 = vmatmul.bf16.gmra.mxu0 %v3245
      %v4017 = vpop.f32.mrf.mxu0
      %v4018 = vadd.f32 %v3849, %v4017
      %v4019 = vpop.f32.mrf.mxu0
      %v4020 = vadd.f32 %v3851, %v4019
      %4021 = vmatmul.bf16.gmra.mxu0 %v3249
      %v4022 = vpop.f32.mrf.mxu0
      %v4023 = vadd.f32 %v3854, %v4022
      %v4024 = vpop.f32.mrf.mxu0
      %v4025 = vadd.f32 %v3856, %v4024
      %4026 = vmatmul.bf16.gmra.mxu0 %v3253
      %v4027 = vpop.f32.mrf.mxu0
      %v4028 = vadd.f32 %v3859, %v4027
      %v4029 = vpop.f32.mrf.mxu0
      %v4030 = vadd.f32 %v3861, %v4029
      %4031 = vmatmul.bf16.gmra.mxu0 %v3257
      %v4032 = vpop.f32.mrf.mxu0
      %v4033 = vadd.f32 %v3864, %v4032
      %v4034 = vpop.f32.mrf.mxu0
      %v4035 = vadd.f32 %v3866, %v4034
      %4036 = vmatmul.bf16.gmra.mxu0 %v3261
      %v4037 = vpop.f32.mrf.mxu0
      %v4038 = vadd.f32 %v3869, %v4037
      %v4039 = vpop.f32.mrf.mxu0
      %v4040 = vadd.f32 %v3871, %v4039
      %4041 = vmatmul.bf16.gmra.mxu0 %v3265
      %v4042 = vpop.f32.mrf.mxu0
      %v4043 = vadd.f32 %v3874, %v4042
      %v4044 = vpop.f32.mrf.mxu0
      %v4045 = vadd.f32 %v3876, %v4044
      %4046 = vmatmul.bf16.gmra.mxu0 %v3269
      %v4047 = vpop.f32.mrf.mxu0
      %v4048 = vadd.f32 %v3879, %v4047
      %v4049 = vpop.f32.mrf.mxu0
      %v4050 = vadd.f32 %v3881, %v4049
      %4051 = vmatmul.bf16.gmra.mxu0 %v3273
      %v4052 = vpop.f32.mrf.mxu0
      %v4053 = vadd.f32 %v3884, %v4052
      %v4054 = vpop.f32.mrf.mxu0
      %v4055 = vadd.f32 %v3886, %v4054
      %4056 = vmatmul.bf16.gmra.mxu0 %v3277
      %v4057 = vpop.f32.mrf.mxu0
      %v4058 = vadd.f32 %v3889, %v4057
      %v4059 = vpop.f32.mrf.mxu0
      %v4060 = vadd.f32 %v3891, %v4059
      %4061 = vmatmul.bf16.gmra.mxu0 %v3281
      %v4062 = vpop.f32.mrf.mxu0
      %v4063 = vadd.f32 %v3894, %v4062
      %v4064 = vpop.f32.mrf.mxu0
      %v4065 = vadd.f32 %v3896, %v4064
      %4066 = vmatmul.bf16.gmra.mxu0 %v3285
      %v4067 = vpop.f32.mrf.mxu0
      %v4068 = vadd.f32 %v3899, %v4067
      %v4069 = vpop.f32.mrf.mxu0
      %v4070 = vadd.f32 %v3901, %v4069
      %4071 = vmatmul.bf16.gmra.mxu0 %v3289
      %v4072 = vpop.f32.mrf.mxu0
      %v4073 = vadd.f32 %v3904, %v4072
      %v4074 = vpop.f32.mrf.mxu0
      %v4075 = vadd.f32 %v3906, %v4074
      %4076 = vmatmul.bf16.gmra.mxu0 %v3293
      %v4077 = vpop.f32.mrf.mxu0
      %v4078 = vadd.f32 %v3909, %v4077
      %v4079 = vpop.f32.mrf.mxu0
      %v4080 = vadd.f32 %v3911, %v4079
      %4081 = vmatmul.bf16.gmra.mxu0 %v3297
      %v4082 = vpop.f32.mrf.mxu0
      %v4083 = vadd.f32 %v3914, %v4082
      %v4084 = vpop.f32.mrf.mxu0
      %v4085 = vadd.f32 %v3916, %v4084
      %4086 = vmatmul.bf16.gmra.mxu0 %v3301
      %v4087 = vpop.f32.mrf.mxu0
      %v4088 = vadd.f32 %v3919, %v4087
      %v4089 = vpop.f32.mrf.mxu0
      %v4090 = vadd.f32 %v3921, %v4089
      %4091 = vmatmul.bf16.gmra.mxu0 %v3305
      %v4092 = vpop.f32.mrf.mxu0
      %v4093 = vadd.f32 %v3924, %v4092
      %v4094 = vpop.f32.mrf.mxu0
      %v4095 = vadd.f32 %v3926, %v4094
      %4096 = vmatmul.bf16.gmra.mxu0 %v3309
      %v4097 = vpop.f32.mrf.mxu0
      %v4098 = vadd.f32 %v3929, %v4097
      %v4099 = vpop.f32.mrf.mxu0
      %v4100 = vadd.f32 %v3931, %v4099
      %4101 = vmatmul.bf16.gmra.mxu0 %v3313
      %v4102 = vpop.f32.mrf.mxu0
      %v4103 = vadd.f32 %v3934, %v4102
      %v4104 = vpop.f32.mrf.mxu0
      %v4105 = vadd.f32 %v3936, %v4104
      %4106 = vmatmul.bf16.gmra.mxu0 %v3317
      %v4107 = vpop.f32.mrf.mxu0
      %v4108 = vadd.f32 %v3939, %v4107
      %v4109 = vpop.f32.mrf.mxu0
      %v4110 = vadd.f32 %v3941, %v4109
      %4111 = vmatmul.bf16.gmra.mxu0 %v3321
      %v4112 = vpop.f32.mrf.mxu0
      %v4113 = vadd.f32 %v3944, %v4112
      %v4114 = vpop.f32.mrf.mxu0
      %v4115 = vadd.f32 %v3946, %v4114
      %4116 = vmatmul.bf16.gmra.mxu0 %v3325
      %v4117 = vpop.f32.mrf.mxu0
      %v4118 = vadd.f32 %v3949, %v4117
      %v4119 = vpop.f32.mrf.mxu0
      %v4120 = vadd.f32 %v3951, %v4119
      %4121 = vmatmul.bf16.gmra.mxu0 %v3329
      %v4122 = vpop.f32.mrf.mxu0
      %v4123 = vadd.f32 %v3954, %v4122
      %v4124 = vpop.f32.mrf.mxu0
      %v4125 = vadd.f32 %v3956, %v4124
      %4126 = vmatmul.bf16.gmra.mxu0 %v3333
      %v4127 = vpop.f32.mrf.mxu0
      %v4128 = vadd.f32 %v3959, %v4127
      %v4129 = vpop.f32.mrf.mxu0
      %v4130 = vadd.f32 %v3961, %v4129
      %4131 = vmatmul.bf16.gmra.mxu0 %v3337
      %v4132 = vpop.f32.mrf.mxu0
      %v4133 = vadd.f32 %v3964, %v4132
      %v4134 = vpop.f32.mrf.mxu0
      %v4135 = vadd.f32 %v3966, %v4134
      %4136 = vmatmul.bf16.gmra.mxu0 %v3341
      %v4137 = vpop.f32.mrf.mxu0
      %v4138 = vadd.f32 %v3969, %v4137
      %v4139 = vpop.f32.mrf.mxu0
      %v4140 = vadd.f32 %v3971, %v4139
      %4141 = vmatmul.bf16.gmra.mxu0 %v3345
      %v4142 = vpop.f32.mrf.mxu0
      %v4143 = vadd.f32 %v3974, %v4142
      %v4144 = vpop.f32.mrf.mxu0
      %v4145 = vadd.f32 %v3976, %v4144
      %4146 = vmatmul.bf16.gmra.mxu0 %v3349
      %v4147 = vpop.f32.mrf.mxu0
      %v4148 = vadd.f32 %v3979, %v4147
      %v4149 = vpop.f32.mrf.mxu0
      %v4150 = vadd.f32 %v3981, %v4149
      %4151 = vmatmul.bf16.gmra.mxu0 %v3353
      %v4152 = vpop.f32.mrf.mxu0
      %v4153 = vadd.f32 %v3984, %v4152
      %v4154 = vpop.f32.mrf.mxu0
      %v4155 = vadd.f32 %v3986, %v4154
      %4156 = vmatmul.bf16.gmra.mxu0 %v3357
      %v4157 = vpop.f32.mrf.mxu0
      %v4158 = vadd.f32 %v3989, %v4157
      %v4159 = vpop.f32.mrf.mxu0
      %v4160 = vadd.f32 %v3991, %v4159
      %4161 = vdwg.mxu0
      %4162 = vmatpush.bf16.msra.mxu0 %v2413
      %4163 = vmatpush.bf16.msra.mxu0 %v2411
      %4164 = vmatpush.bf16.msra.mxu0 %v2409
      %4165 = vmatpush.bf16.msra.mxu0 %v2407
      %4166 = vmatpush.bf16.msra.mxu0 %v2405
      %4167 = vmatpush.bf16.msra.mxu0 %v2403
      %4168 = vmatpush.bf16.msra.mxu0 %v2401
      %4169 = vmatpush.bf16.msra.mxu0 %v2399
      %4170 = vmatmul.bf16.gmra.mxu0 %v3230
      %v4171 = vpop.f32.mrf.mxu0
      %v4172 = vadd.f32 %v2529, %v4171
      %v4173 = vpop.f32.mrf.mxu0
      %v4174 = vadd.f32 %v2534, %v4173
      %4175 = vmatmul.bf16.gmra.mxu0 %v3234
      %v4176 = vpop.f32.mrf.mxu0
      %v4177 = vadd.f32 %v2539, %v4176
      %v4178 = vpop.f32.mrf.mxu0
      %v4179 = vadd.f32 %v2544, %v4178
      %4180 = vmatmul.bf16.gmra.mxu0 %v3238
      %v4181 = vpop.f32.mrf.mxu0
      %v4182 = vadd.f32 %v2549, %v4181
      %v4183 = vpop.f32.mrf.mxu0
      %v4184 = vadd.f32 %v2554, %v4183
      %4185 = vmatmul.bf16.gmra.mxu0 %v3242
      %v4186 = vpop.f32.mrf.mxu0
      %v4187 = vadd.f32 %v2559, %v4186
      %v4188 = vpop.f32.mrf.mxu0
      %v4189 = vadd.f32 %v2564, %v4188
      %4190 = vmatmul.bf16.gmra.mxu0 %v3246
      %v4191 = vpop.f32.mrf.mxu0
      %v4192 = vadd.f32 %v2569, %v4191
      %v4193 = vpop.f32.mrf.mxu0
      %v4194 = vadd.f32 %v2574, %v4193
      %4195 = vmatmul.bf16.gmra.mxu0 %v3250
      %v4196 = vpop.f32.mrf.mxu0
      %v4197 = vadd.f32 %v2579, %v4196
      %v4198 = vpop.f32.mrf.mxu0
      %v4199 = vadd.f32 %v2584, %v4198
      %4200 = vmatmul.bf16.gmra.mxu0 %v3254
      %v4201 = vpop.f32.mrf.mxu0
      %v4202 = vadd.f32 %v2589, %v4201
      %v4203 = vpop.f32.mrf.mxu0
      %v4204 = vadd.f32 %v2594, %v4203
      %4205 = vmatmul.bf16.gmra.mxu0 %v3258
      %v4206 = vpop.f32.mrf.mxu0
      %v4207 = vadd.f32 %v2599, %v4206
      %v4208 = vpop.f32.mrf.mxu0
      %v4209 = vadd.f32 %v2604, %v4208
      %4210 = vmatmul.bf16.gmra.mxu0 %v3262
      %v4211 = vpop.f32.mrf.mxu0
      %v4212 = vadd.f32 %v2609, %v4211
      %v4213 = vpop.f32.mrf.mxu0
      %v4214 = vadd.f32 %v2614, %v4213
      %4215 = vmatmul.bf16.gmra.mxu0 %v3266
      %v4216 = vpop.f32.mrf.mxu0
      %v4217 = vadd.f32 %v2619, %v4216
      %v4218 = vpop.f32.mrf.mxu0
      %v4219 = vadd.f32 %v2624, %v4218
      %4220 = vmatmul.bf16.gmra.mxu0 %v3270
      %v4221 = vpop.f32.mrf.mxu0
      %v4222 = vadd.f32 %v2629, %v4221
      %v4223 = vpop.f32.mrf.mxu0
      %v4224 = vadd.f32 %v2634, %v4223
      %4225 = vmatmul.bf16.gmra.mxu0 %v3274
      %v4226 = vpop.f32.mrf.mxu0
      %v4227 = vadd.f32 %v2639, %v4226
      %v4228 = vpop.f32.mrf.mxu0
      %v4229 = vadd.f32 %v2644, %v4228
      %4230 = vmatmul.bf16.gmra.mxu0 %v3278
      %v4231 = vpop.f32.mrf.mxu0
      %v4232 = vadd.f32 %v2649, %v4231
      %v4233 = vpop.f32.mrf.mxu0
      %v4234 = vadd.f32 %v2654, %v4233
      %4235 = vmatmul.bf16.gmra.mxu0 %v3282
      %v4236 = vpop.f32.mrf.mxu0
      %v4237 = vadd.f32 %v2659, %v4236
      %v4238 = vpop.f32.mrf.mxu0
      %v4239 = vadd.f32 %v2664, %v4238
      %4240 = vmatmul.bf16.gmra.mxu0 %v3286
      %v4241 = vpop.f32.mrf.mxu0
      %v4242 = vadd.f32 %v2669, %v4241
      %v4243 = vpop.f32.mrf.mxu0
      %v4244 = vadd.f32 %v2674, %v4243
      %4245 = vmatmul.bf16.gmra.mxu0 %v3290
      %v4246 = vpop.f32.mrf.mxu0
      %v4247 = vadd.f32 %v2679, %v4246
      %v4248 = vpop.f32.mrf.mxu0
      %v4249 = vadd.f32 %v2684, %v4248
      %4250 = vmatmul.bf16.gmra.mxu0 %v3294
      %v4251 = vpop.f32.mrf.mxu0
      %v4252 = vadd.f32 %v2689, %v4251
      %v4253 = vpop.f32.mrf.mxu0
      %v4254 = vadd.f32 %v2694, %v4253
      %4255 = vmatmul.bf16.gmra.mxu0 %v3298
      %v4256 = vpop.f32.mrf.mxu0
      %v4257 = vadd.f32 %v2699, %v4256
      %v4258 = vpop.f32.mrf.mxu0
      %v4259 = vadd.f32 %v2704, %v4258
      %4260 = vmatmul.bf16.gmra.mxu0 %v3302
      %v4261 = vpop.f32.mrf.mxu0
      %v4262 = vadd.f32 %v2709, %v4261
      %v4263 = vpop.f32.mrf.mxu0
      %v4264 = vadd.f32 %v2714, %v4263
      %4265 = vmatmul.bf16.gmra.mxu0 %v3306
      %v4266 = vpop.f32.mrf.mxu0
      %v4267 = vadd.f32 %v2719, %v4266
      %v4268 = vpop.f32.mrf.mxu0
      %v4269 = vadd.f32 %v2724, %v4268
      %4270 = vmatmul.bf16.gmra.mxu0 %v3310
      %v4271 = vpop.f32.mrf.mxu0
      %v4272 = vadd.f32 %v2729, %v4271
      %v4273 = vpop.f32.mrf.mxu0
      %v4274 = vadd.f32 %v2734, %v4273
      %4275 = vmatmul.bf16.gmra.mxu0 %v3314
      %v4276 = vpop.f32.mrf.mxu0
      %v4277 = vadd.f32 %v2739, %v4276
      %v4278 = vpop.f32.mrf.mxu0
      %v4279 = vadd.f32 %v2744, %v4278
      %4280 = vmatmul.bf16.gmra.mxu0 %v3318
      %v4281 = vpop.f32.mrf.mxu0
      %v4282 = vadd.f32 %v2749, %v4281
      %v4283 = vpop.f32.mrf.mxu0
      %v4284 = vadd.f32 %v2754, %v4283
      %4285 = vmatmul.bf16.gmra.mxu0 %v3322
      %v4286 = vpop.f32.mrf.mxu0
      %v4287 = vadd.f32 %v2759, %v4286
      %v4288 = vpop.f32.mrf.mxu0
      %v4289 = vadd.f32 %v2764, %v4288
      %4290 = vmatmul.bf16.gmra.mxu0 %v3326
      %v4291 = vpop.f32.mrf.mxu0
      %v4292 = vadd.f32 %v2769, %v4291
      %v4293 = vpop.f32.mrf.mxu0
      %v4294 = vadd.f32 %v2774, %v4293
      %4295 = vmatmul.bf16.gmra.mxu0 %v3330
      %v4296 = vpop.f32.mrf.mxu0
      %v4297 = vadd.f32 %v2779, %v4296
      %v4298 = vpop.f32.mrf.mxu0
      %v4299 = vadd.f32 %v2784, %v4298
      %4300 = vmatmul.bf16.gmra.mxu0 %v3334
      %v4301 = vpop.f32.mrf.mxu0
      %v4302 = vadd.f32 %v2789, %v4301
      %v4303 = vpop.f32.mrf.mxu0
      %v4304 = vadd.f32 %v2794, %v4303
      %4305 = vmatmul.bf16.gmra.mxu0 %v3338
      %v4306 = vpop.f32.mrf.mxu0
      %v4307 = vadd.f32 %v2799, %v4306
      %v4308 = vpop.f32.mrf.mxu0
      %v4309 = vadd.f32 %v2804, %v4308
      %4310 = vmatmul.bf16.gmra.mxu0 %v3342
      %v4311 = vpop.f32.mrf.mxu0
      %v4312 = vadd.f32 %v2809, %v4311
      %v4313 = vpop.f32.mrf.mxu0
      %v4314 = vadd.f32 %v2814, %v4313
      %4315 = vmatmul.bf16.gmra.mxu0 %v3346
      %v4316 = vpop.f32.mrf.mxu0
      %v4317 = vadd.f32 %v2819, %v4316
      %v4318 = vpop.f32.mrf.mxu0
      %v4319 = vadd.f32 %v2824, %v4318
      %4320 = vmatmul.bf16.gmra.mxu0 %v3350
      %v4321 = vpop.f32.mrf.mxu0
      %v4322 = vadd.f32 %v2829, %v4321
      %v4323 = vpop.f32.mrf.mxu0
      %v4324 = vadd.f32 %v2834, %v4323
      %4325 = vmatmul.bf16.gmra.mxu0 %v3354
      %v4326 = vpop.f32.mrf.mxu0
      %v4327 = vadd.f32 %v2839, %v4326
      %v4328 = vpop.f32.mrf.mxu0
      %v4329 = vadd.f32 %v2844, %v4328
      %4330 = vdwg.mxu0
      %4331 = vmatpush.bf16.msra.mxu0 %v2429
      %4332 = vmatpush.bf16.msra.mxu0 %v2427
      %4333 = vmatpush.bf16.msra.mxu0 %v2425
      %4334 = vmatpush.bf16.msra.mxu0 %v2423
      %4335 = vmatpush.bf16.msra.mxu0 %v2421
      %4336 = vmatpush.bf16.msra.mxu0 %v2419
      %4337 = vmatpush.bf16.msra.mxu0 %v2417
      %4338 = vmatpush.bf16.msra.mxu0 %v2415
      %4339 = vmatmul.bf16.gmra.mxu0 %v3231
      %v4340 = vpop.f32.mrf.mxu0
      %v4341 = vadd.f32 %v4172, %v4340
      %v4342 = vpop.f32.mrf.mxu0
      %v4343 = vadd.f32 %v4174, %v4342
      %4344 = vmatmul.bf16.gmra.mxu0 %v3235
      %v4345 = vpop.f32.mrf.mxu0
      %v4346 = vadd.f32 %v4177, %v4345
      %v4347 = vpop.f32.mrf.mxu0
      %v4348 = vadd.f32 %v4179, %v4347
      %4349 = vmatmul.bf16.gmra.mxu0 %v3239
      %v4350 = vpop.f32.mrf.mxu0
      %v4351 = vadd.f32 %v4182, %v4350
      %v4352 = vpop.f32.mrf.mxu0
      %v4353 = vadd.f32 %v4184, %v4352
      %4354 = vmatmul.bf16.gmra.mxu0 %v3243
      %v4355 = vpop.f32.mrf.mxu0
      %v4356 = vadd.f32 %v4187, %v4355
      %v4357 = vpop.f32.mrf.mxu0
      %v4358 = vadd.f32 %v4189, %v4357
      %4359 = vmatmul.bf16.gmra.mxu0 %v3247
      %v4360 = vpop.f32.mrf.mxu0
      %v4361 = vadd.f32 %v4192, %v4360
      %v4362 = vpop.f32.mrf.mxu0
      %v4363 = vadd.f32 %v4194, %v4362
      %4364 = vmatmul.bf16.gmra.mxu0 %v3251
      %v4365 = vpop.f32.mrf.mxu0
      %v4366 = vadd.f32 %v4197, %v4365
      %v4367 = vpop.f32.mrf.mxu0
      %v4368 = vadd.f32 %v4199, %v4367
      %4369 = vmatmul.bf16.gmra.mxu0 %v3255
      %v4370 = vpop.f32.mrf.mxu0
      %v4371 = vadd.f32 %v4202, %v4370
      %v4372 = vpop.f32.mrf.mxu0
      %v4373 = vadd.f32 %v4204, %v4372
      %4374 = vmatmul.bf16.gmra.mxu0 %v3259
      %v4375 = vpop.f32.mrf.mxu0
      %v4376 = vadd.f32 %v4207, %v4375
      %v4377 = vpop.f32.mrf.mxu0
      %v4378 = vadd.f32 %v4209, %v4377
      %4379 = vmatmul.bf16.gmra.mxu0 %v3263
      %v4380 = vpop.f32.mrf.mxu0
      %v4381 = vadd.f32 %v4212, %v4380
      %v4382 = vpop.f32.mrf.mxu0
      %v4383 = vadd.f32 %v4214, %v4382
      %4384 = vmatmul.bf16.gmra.mxu0 %v3267
      %v4385 = vpop.f32.mrf.mxu0
      %v4386 = vadd.f32 %v4217, %v4385
      %v4387 = vpop.f32.mrf.mxu0
      %v4388 = vadd.f32 %v4219, %v4387
      %4389 = vmatmul.bf16.gmra.mxu0 %v3271
      %v4390 = vpop.f32.mrf.mxu0
      %v4391 = vadd.f32 %v4222, %v4390
      %v4392 = vpop.f32.mrf.mxu0
      %v4393 = vadd.f32 %v4224, %v4392
      %4394 = vmatmul.bf16.gmra.mxu0 %v3275
      %v4395 = vpop.f32.mrf.mxu0
      %v4396 = vadd.f32 %v4227, %v4395
      %v4397 = vpop.f32.mrf.mxu0
      %v4398 = vadd.f32 %v4229, %v4397
      %4399 = vmatmul.bf16.gmra.mxu0 %v3279
      %v4400 = vpop.f32.mrf.mxu0
      %v4401 = vadd.f32 %v4232, %v4400
      %v4402 = vpop.f32.mrf.mxu0
      %v4403 = vadd.f32 %v4234, %v4402
      %4404 = vmatmul.bf16.gmra.mxu0 %v3283
      %v4405 = vpop.f32.mrf.mxu0
      %v4406 = vadd.f32 %v4237, %v4405
      %v4407 = vpop.f32.mrf.mxu0
      %v4408 = vadd.f32 %v4239, %v4407
      %4409 = vmatmul.bf16.gmra.mxu0 %v3287
      %v4410 = vpop.f32.mrf.mxu0
      %v4411 = vadd.f32 %v4242, %v4410
      %v4412 = vpop.f32.mrf.mxu0
      %v4413 = vadd.f32 %v4244, %v4412
      %4414 = vmatmul.bf16.gmra.mxu0 %v3291
      %v4415 = vpop.f32.mrf.mxu0
      %v4416 = vadd.f32 %v4247, %v4415
      %v4417 = vpop.f32.mrf.mxu0
      %v4418 = vadd.f32 %v4249, %v4417
      %4419 = vmatmul.bf16.gmra.mxu0 %v3295
      %v4420 = vpop.f32.mrf.mxu0
      %v4421 = vadd.f32 %v4252, %v4420
      %v4422 = vpop.f32.mrf.mxu0
      %v4423 = vadd.f32 %v4254, %v4422
      %4424 = vmatmul.bf16.gmra.mxu0 %v3299
      %v4425 = vpop.f32.mrf.mxu0
      %v4426 = vadd.f32 %v4257, %v4425
      %v4427 = vpop.f32.mrf.mxu0
      %v4428 = vadd.f32 %v4259, %v4427
      %4429 = vmatmul.bf16.gmra.mxu0 %v3303
      %v4430 = vpop.f32.mrf.mxu0
      %v4431 = vadd.f32 %v4262, %v4430
      %v4432 = vpop.f32.mrf.mxu0
      %v4433 = vadd.f32 %v4264, %v4432
      %4434 = vmatmul.bf16.gmra.mxu0 %v3307
      %v4435 = vpop.f32.mrf.mxu0
      %v4436 = vadd.f32 %v4267, %v4435
      %v4437 = vpop.f32.mrf.mxu0
      %v4438 = vadd.f32 %v4269, %v4437
      %4439 = vmatmul.bf16.gmra.mxu0 %v3311
      %v4440 = vpop.f32.mrf.mxu0
      %v4441 = vadd.f32 %v4272, %v4440
      %v4442 = vpop.f32.mrf.mxu0
      %v4443 = vadd.f32 %v4274, %v4442
      %4444 = vmatmul.bf16.gmra.mxu0 %v3315
      %v4445 = vpop.f32.mrf.mxu0
      %v4446 = vadd.f32 %v4277, %v4445
      %v4447 = vpop.f32.mrf.mxu0
      %v4448 = vadd.f32 %v4279, %v4447
      %4449 = vmatmul.bf16.gmra.mxu0 %v3319
      %v4450 = vpop.f32.mrf.mxu0
      %v4451 = vadd.f32 %v4282, %v4450
      %v4452 = vpop.f32.mrf.mxu0
      %v4453 = vadd.f32 %v4284, %v4452
      %4454 = vmatmul.bf16.gmra.mxu0 %v3323
      %v4455 = vpop.f32.mrf.mxu0
      %v4456 = vadd.f32 %v4287, %v4455
      %v4457 = vpop.f32.mrf.mxu0
      %v4458 = vadd.f32 %v4289, %v4457
      %4459 = vmatmul.bf16.gmra.mxu0 %v3327
      %v4460 = vpop.f32.mrf.mxu0
      %v4461 = vadd.f32 %v4292, %v4460
      %v4462 = vpop.f32.mrf.mxu0
      %v4463 = vadd.f32 %v4294, %v4462
      %4464 = vmatmul.bf16.gmra.mxu0 %v3331
      %v4465 = vpop.f32.mrf.mxu0
      %v4466 = vadd.f32 %v4297, %v4465
      %v4467 = vpop.f32.mrf.mxu0
      %v4468 = vadd.f32 %v4299, %v4467
      %4469 = vmatmul.bf16.gmra.mxu0 %v3335
      %v4470 = vpop.f32.mrf.mxu0
      %v4471 = vadd.f32 %v4302, %v4470
      %v4472 = vpop.f32.mrf.mxu0
      %v4473 = vadd.f32 %v4304, %v4472
      %4474 = vmatmul.bf16.gmra.mxu0 %v3339
      %v4475 = vpop.f32.mrf.mxu0
      %v4476 = vadd.f32 %v4307, %v4475
      %v4477 = vpop.f32.mrf.mxu0
      %v4478 = vadd.f32 %v4309, %v4477
      %4479 = vmatmul.bf16.gmra.mxu0 %v3343
      %v4480 = vpop.f32.mrf.mxu0
      %v4481 = vadd.f32 %v4312, %v4480
      %v4482 = vpop.f32.mrf.mxu0
      %v4483 = vadd.f32 %v4314, %v4482
      %4484 = vmatmul.bf16.gmra.mxu0 %v3347
      %v4485 = vpop.f32.mrf.mxu0
      %v4486 = vadd.f32 %v4317, %v4485
      %v4487 = vpop.f32.mrf.mxu0
      %v4488 = vadd.f32 %v4319, %v4487
      %4489 = vmatmul.bf16.gmra.mxu0 %v3351
      %v4490 = vpop.f32.mrf.mxu0
      %v4491 = vadd.f32 %v4322, %v4490
      %v4492 = vpop.f32.mrf.mxu0
      %v4493 = vadd.f32 %v4324, %v4492
      %4494 = vmatmul.bf16.gmra.mxu0 %v3355
      %v4495 = vpop.f32.mrf.mxu0
      %v4496 = vadd.f32 %v4327, %v4495
      %v4497 = vpop.f32.mrf.mxu0
      %v4498 = vadd.f32 %v4329, %v4497
      %4499 = vdwg.mxu0
      %4500 = vmatpush.bf16.msra.mxu0 %v2445
      %4501 = vmatpush.bf16.msra.mxu0 %v2443
      %4502 = vmatpush.bf16.msra.mxu0 %v2441
      %4503 = vmatpush.bf16.msra.mxu0 %v2439
      %4504 = vmatpush.bf16.msra.mxu0 %v2437
      %4505 = vmatpush.bf16.msra.mxu0 %v2435
      %4506 = vmatpush.bf16.msra.mxu0 %v2433
      %4507 = vmatpush.bf16.msra.mxu0 %v2431
      %4508 = vmatmul.bf16.gmra.mxu0 %v3232
      %v4509 = vpop.f32.mrf.mxu0
      %v4510 = vadd.f32 %v4341, %v4509
      %v4511 = vpop.f32.mrf.mxu0
      %v4512 = vadd.f32 %v4343, %v4511
      %4513 = vmatmul.bf16.gmra.mxu0 %v3236
      %v4514 = vpop.f32.mrf.mxu0
      %v4515 = vadd.f32 %v4346, %v4514
      %v4516 = vpop.f32.mrf.mxu0
      %v4517 = vadd.f32 %v4348, %v4516
      %4518 = vmatmul.bf16.gmra.mxu0 %v3240
      %v4519 = vpop.f32.mrf.mxu0
      %v4520 = vadd.f32 %v4351, %v4519
      %v4521 = vpop.f32.mrf.mxu0
      %v4522 = vadd.f32 %v4353, %v4521
      %4523 = vmatmul.bf16.gmra.mxu0 %v3244
      %v4524 = vpop.f32.mrf.mxu0
      %v4525 = vadd.f32 %v4356, %v4524
      %v4526 = vpop.f32.mrf.mxu0
      %v4527 = vadd.f32 %v4358, %v4526
      %4528 = vmatmul.bf16.gmra.mxu0 %v3248
      %v4529 = vpop.f32.mrf.mxu0
      %v4530 = vadd.f32 %v4361, %v4529
      %v4531 = vpop.f32.mrf.mxu0
      %v4532 = vadd.f32 %v4363, %v4531
      %4533 = vmatmul.bf16.gmra.mxu0 %v3252
      %v4534 = vpop.f32.mrf.mxu0
      %v4535 = vadd.f32 %v4366, %v4534
      %v4536 = vpop.f32.mrf.mxu0
      %v4537 = vadd.f32 %v4368, %v4536
      %4538 = vmatmul.bf16.gmra.mxu0 %v3256
      %v4539 = vpop.f32.mrf.mxu0
      %v4540 = vadd.f32 %v4371, %v4539
      %v4541 = vpop.f32.mrf.mxu0
      %v4542 = vadd.f32 %v4373, %v4541
      %4543 = vmatmul.bf16.gmra.mxu0 %v3260
      %v4544 = vpop.f32.mrf.mxu0
      %v4545 = vadd.f32 %v4376, %v4544
      %v4546 = vpop.f32.mrf.mxu0
      %v4547 = vadd.f32 %v4378, %v4546
      %4548 = vmatmul.bf16.gmra.mxu0 %v3264
      %v4549 = vpop.f32.mrf.mxu0
      %v4550 = vadd.f32 %v4381, %v4549
      %v4551 = vpop.f32.mrf.mxu0
      %v4552 = vadd.f32 %v4383, %v4551
      %4553 = vmatmul.bf16.gmra.mxu0 %v3268
      %v4554 = vpop.f32.mrf.mxu0
      %v4555 = vadd.f32 %v4386, %v4554
      %v4556 = vpop.f32.mrf.mxu0
      %v4557 = vadd.f32 %v4388, %v4556
      %4558 = vmatmul.bf16.gmra.mxu0 %v3272
      %v4559 = vpop.f32.mrf.mxu0
      %v4560 = vadd.f32 %v4391, %v4559
      %v4561 = vpop.f32.mrf.mxu0
      %v4562 = vadd.f32 %v4393, %v4561
      %4563 = vmatmul.bf16.gmra.mxu0 %v3276
      %v4564 = vpop.f32.mrf.mxu0
      %v4565 = vadd.f32 %v4396, %v4564
      %v4566 = vpop.f32.mrf.mxu0
      %v4567 = vadd.f32 %v4398, %v4566
      %4568 = vmatmul.bf16.gmra.mxu0 %v3280
      %v4569 = vpop.f32.mrf.mxu0
      %v4570 = vadd.f32 %v4401, %v4569
      %v4571 = vpop.f32.mrf.mxu0
      %v4572 = vadd.f32 %v4403, %v4571
      %4573 = vmatmul.bf16.gmra.mxu0 %v3284
      %v4574 = vpop.f32.mrf.mxu0
      %v4575 = vadd.f32 %v4406, %v4574
      %v4576 = vpop.f32.mrf.mxu0
      %v4577 = vadd.f32 %v4408, %v4576
      %4578 = vmatmul.bf16.gmra.mxu0 %v3288
      %v4579 = vpop.f32.mrf.mxu0
      %v4580 = vadd.f32 %v4411, %v4579
      %v4581 = vpop.f32.mrf.mxu0
      %v4582 = vadd.f32 %v4413, %v4581
      %4583 = vmatmul.bf16.gmra.mxu0 %v3292
      %v4584 = vpop.f32.mrf.mxu0
      %v4585 = vadd.f32 %v4416, %v4584
      %v4586 = vpop.f32.mrf.mxu0
      %v4587 = vadd.f32 %v4418, %v4586
      %4588 = vmatmul.bf16.gmra.mxu0 %v3296
      %v4589 = vpop.f32.mrf.mxu0
      %v4590 = vadd.f32 %v4421, %v4589
      %v4591 = vpop.f32.mrf.mxu0
      %v4592 = vadd.f32 %v4423, %v4591
      %4593 = vmatmul.bf16.gmra.mxu0 %v3300
      %v4594 = vpop.f32.mrf.mxu0
      %v4595 = vadd.f32 %v4426, %v4594
      %v4596 = vpop.f32.mrf.mxu0
      %v4597 = vadd.f32 %v4428, %v4596
      %4598 = vmatmul.bf16.gmra.mxu0 %v3304
      %v4599 = vpop.f32.mrf.mxu0
      %v4600 = vadd.f32 %v4431, %v4599
      %v4601 = vpop.f32.mrf.mxu0
      %v4602 = vadd.f32 %v4433, %v4601
      %4603 = vmatmul.bf16.gmra.mxu0 %v3308
      %v4604 = vpop.f32.mrf.mxu0
      %v4605 = vadd.f32 %v4436, %v4604
      %v4606 = vpop.f32.mrf.mxu0
      %v4607 = vadd.f32 %v4438, %v4606
      %4608 = vmatmul.bf16.gmra.mxu0 %v3312
      %v4609 = vpop.f32.mrf.mxu0
      %v4610 = vadd.f32 %v4441, %v4609
      %v4611 = vpop.f32.mrf.mxu0
      %v4612 = vadd.f32 %v4443, %v4611
      %4613 = vmatmul.bf16.gmra.mxu0 %v3316
      %v4614 = vpop.f32.mrf.mxu0
      %v4615 = vadd.f32 %v4446, %v4614
      %v4616 = vpop.f32.mrf.mxu0
      %v4617 = vadd.f32 %v4448, %v4616
      %4618 = vmatmul.bf16.gmra.mxu0 %v3320
      %v4619 = vpop.f32.mrf.mxu0
      %v4620 = vadd.f32 %v4451, %v4619
      %v4621 = vpop.f32.mrf.mxu0
      %v4622 = vadd.f32 %v4453, %v4621
      %4623 = vmatmul.bf16.gmra.mxu0 %v3324
      %v4624 = vpop.f32.mrf.mxu0
      %v4625 = vadd.f32 %v4456, %v4624
      %v4626 = vpop.f32.mrf.mxu0
      %v4627 = vadd.f32 %v4458, %v4626
      %4628 = vmatmul.bf16.gmra.mxu0 %v3328
      %v4629 = vpop.f32.mrf.mxu0
      %v4630 = vadd.f32 %v4461, %v4629
      %v4631 = vpop.f32.mrf.mxu0
      %v4632 = vadd.f32 %v4463, %v4631
      %4633 = vmatmul.bf16.gmra.mxu0 %v3332
      %v4634 = vpop.f32.mrf.mxu0
      %v4635 = vadd.f32 %v4466, %v4634
      %v4636 = vpop.f32.mrf.mxu0
      %v4637 = vadd.f32 %v4468, %v4636
      %4638 = vmatmul.bf16.gmra.mxu0 %v3336
      %v4639 = vpop.f32.mrf.mxu0
      %v4640 = vadd.f32 %v4471, %v4639
      %v4641 = vpop.f32.mrf.mxu0
      %v4642 = vadd.f32 %v4473, %v4641
      %4643 = vmatmul.bf16.gmra.mxu0 %v3340
      %v4644 = vpop.f32.mrf.mxu0
      %v4645 = vadd.f32 %v4476, %v4644
      %v4646 = vpop.f32.mrf.mxu0
      %v4647 = vadd.f32 %v4478, %v4646
      %4648 = vmatmul.bf16.gmra.mxu0 %v3344
      %v4649 = vpop.f32.mrf.mxu0
      %v4650 = vadd.f32 %v4481, %v4649
      %v4651 = vpop.f32.mrf.mxu0
      %v4652 = vadd.f32 %v4483, %v4651
      %4653 = vmatmul.bf16.gmra.mxu0 %v3348
      %v4654 = vpop.f32.mrf.mxu0
      %v4655 = vadd.f32 %v4486, %v4654
      %v4656 = vpop.f32.mrf.mxu0
      %v4657 = vadd.f32 %v4488, %v4656
      %4658 = vmatmul.bf16.gmra.mxu0 %v3352
      %v4659 = vpop.f32.mrf.mxu0
      %v4660 = vadd.f32 %v4491, %v4659
      %v4661 = vpop.f32.mrf.mxu0
      %v4662 = vadd.f32 %v4493, %v4661
      %4663 = vmatmul.bf16.gmra.mxu0 %v3356
      %v4664 = vpop.f32.mrf.mxu0
      %v4665 = vadd.f32 %v4496, %v4664
      %v4666 = vpop.f32.mrf.mxu0
      %v4667 = vadd.f32 %v4498, %v4666
      %4668 = vdwg.mxu0
      %4669 = vmatpush.bf16.msra.mxu0 %v2461
      %4670 = vmatpush.bf16.msra.mxu0 %v2459
      %4671 = vmatpush.bf16.msra.mxu0 %v2457
      %4672 = vmatpush.bf16.msra.mxu0 %v2455
      %4673 = vmatpush.bf16.msra.mxu0 %v2453
      %4674 = vmatpush.bf16.msra.mxu0 %v2451
      %4675 = vmatpush.bf16.msra.mxu0 %v2449
      %4676 = vmatpush.bf16.msra.mxu0 %v2447
      %4677 = vmatmul.bf16.gmra.mxu0 %v3233
      %v4678 = vpop.f32.mrf.mxu0
      %v4679 = vadd.f32 %v4510, %v4678
      %v4680 = vpop.f32.mrf.mxu0
      %v4681 = vadd.f32 %v4512, %v4680
      %4682 = vmatmul.bf16.gmra.mxu0 %v3237
      %v4683 = vpop.f32.mrf.mxu0
      %v4684 = vadd.f32 %v4515, %v4683
      %v4685 = vpop.f32.mrf.mxu0
      %v4686 = vadd.f32 %v4517, %v4685
      %4687 = vmatmul.bf16.gmra.mxu0 %v3241
      %v4688 = vpop.f32.mrf.mxu0
      %v4689 = vadd.f32 %v4520, %v4688
      %v4690 = vpop.f32.mrf.mxu0
      %v4691 = vadd.f32 %v4522, %v4690
      %4692 = vmatmul.bf16.gmra.mxu0 %v3245
      %v4693 = vpop.f32.mrf.mxu0
      %v4694 = vadd.f32 %v4525, %v4693
      %v4695 = vpop.f32.mrf.mxu0
      %v4696 = vadd.f32 %v4527, %v4695
      %4697 = vmatmul.bf16.gmra.mxu0 %v3249
      %v4698 = vpop.f32.mrf.mxu0
      %v4699 = vadd.f32 %v4530, %v4698
      %v4700 = vpop.f32.mrf.mxu0
      %v4701 = vadd.f32 %v4532, %v4700
      %4702 = vmatmul.bf16.gmra.mxu0 %v3253
      %v4703 = vpop.f32.mrf.mxu0
      %v4704 = vadd.f32 %v4535, %v4703
      %v4705 = vpop.f32.mrf.mxu0
      %v4706 = vadd.f32 %v4537, %v4705
      %4707 = vmatmul.bf16.gmra.mxu0 %v3257
      %v4708 = vpop.f32.mrf.mxu0
      %v4709 = vadd.f32 %v4540, %v4708
      %v4710 = vpop.f32.mrf.mxu0
      %v4711 = vadd.f32 %v4542, %v4710
      %4712 = vmatmul.bf16.gmra.mxu0 %v3261
      %v4713 = vpop.f32.mrf.mxu0
      %v4714 = vadd.f32 %v4545, %v4713
      %v4715 = vpop.f32.mrf.mxu0
      %v4716 = vadd.f32 %v4547, %v4715
      %4717 = vmatmul.bf16.gmra.mxu0 %v3265
      %v4718 = vpop.f32.mrf.mxu0
      %v4719 = vadd.f32 %v4550, %v4718
      %v4720 = vpop.f32.mrf.mxu0
      %v4721 = vadd.f32 %v4552, %v4720
      %4722 = vmatmul.bf16.gmra.mxu0 %v3269
      %v4723 = vpop.f32.mrf.mxu0
      %v4724 = vadd.f32 %v4555, %v4723
      %v4725 = vpop.f32.mrf.mxu0
      %v4726 = vadd.f32 %v4557, %v4725
      %4727 = vmatmul.bf16.gmra.mxu0 %v3273
      %v4728 = vpop.f32.mrf.mxu0
      %v4729 = vadd.f32 %v4560, %v4728
      %v4730 = vpop.f32.mrf.mxu0
      %v4731 = vadd.f32 %v4562, %v4730
      %4732 = vmatmul.bf16.gmra.mxu0 %v3277
      %v4733 = vpop.f32.mrf.mxu0
      %v4734 = vadd.f32 %v4565, %v4733
      %v4735 = vpop.f32.mrf.mxu0
      %v4736 = vadd.f32 %v4567, %v4735
      %4737 = vmatmul.bf16.gmra.mxu0 %v3281
      %v4738 = vpop.f32.mrf.mxu0
      %v4739 = vadd.f32 %v4570, %v4738
      %v4740 = vpop.f32.mrf.mxu0
      %v4741 = vadd.f32 %v4572, %v4740
      %4742 = vmatmul.bf16.gmra.mxu0 %v3285
      %v4743 = vpop.f32.mrf.mxu0
      %v4744 = vadd.f32 %v4575, %v4743
      %v4745 = vpop.f32.mrf.mxu0
      %v4746 = vadd.f32 %v4577, %v4745
      %4747 = vmatmul.bf16.gmra.mxu0 %v3289
      %v4748 = vpop.f32.mrf.mxu0
      %v4749 = vadd.f32 %v4580, %v4748
      %v4750 = vpop.f32.mrf.mxu0
      %v4751 = vadd.f32 %v4582, %v4750
      %4752 = vmatmul.bf16.gmra.mxu0 %v3293
      %v4753 = vpop.f32.mrf.mxu0
      %v4754 = vadd.f32 %v4585, %v4753
      %v4755 = vpop.f32.mrf.mxu0
      %v4756 = vadd.f32 %v4587, %v4755
      %4757 = vmatmul.bf16.gmra.mxu0 %v3297
      %v4758 = vpop.f32.mrf.mxu0
      %v4759 = vadd.f32 %v4590, %v4758
      %v4760 = vpop.f32.mrf.mxu0
      %v4761 = vadd.f32 %v4592, %v4760
      %4762 = vmatmul.bf16.gmra.mxu0 %v3301
      %v4763 = vpop.f32.mrf.mxu0
      %v4764 = vadd.f32 %v4595, %v4763
      %v4765 = vpop.f32.mrf.mxu0
      %v4766 = vadd.f32 %v4597, %v4765
      %4767 = vmatmul.bf16.gmra.mxu0 %v3305
      %v4768 = vpop.f32.mrf.mxu0
      %v4769 = vadd.f32 %v4600, %v4768
      %v4770 = vpop.f32.mrf.mxu0
      %v4771 = vadd.f32 %v4602, %v4770
      %4772 = vmatmul.bf16.gmra.mxu0 %v3309
      %v4773 = vpop.f32.mrf.mxu0
      %v4774 = vadd.f32 %v4605, %v4773
      %v4775 = vpop.f32.mrf.mxu0
      %v4776 = vadd.f32 %v4607, %v4775
      %4777 = vmatmul.bf16.gmra.mxu0 %v3313
      %v4778 = vpop.f32.mrf.mxu0
      %v4779 = vadd.f32 %v4610, %v4778
      %v4780 = vpop.f32.mrf.mxu0
      %v4781 = vadd.f32 %v4612, %v4780
      %4782 = vmatmul.bf16.gmra.mxu0 %v3317
      %v4783 = vpop.f32.mrf.mxu0
      %v4784 = vadd.f32 %v4615, %v4783
      %v4785 = vpop.f32.mrf.mxu0
      %v4786 = vadd.f32 %v4617, %v4785
      %4787 = vmatmul.bf16.gmra.mxu0 %v3321
      %v4788 = vpop.f32.mrf.mxu0
      %v4789 = vadd.f32 %v4620, %v4788
      %v4790 = vpop.f32.mrf.mxu0
      %v4791 = vadd.f32 %v4622, %v4790
      %4792 = vmatmul.bf16.gmra.mxu0 %v3325
      %v4793 = vpop.f32.mrf.mxu0
      %v4794 = vadd.f32 %v4625, %v4793
      %v4795 = vpop.f32.mrf.mxu0
      %v4796 = vadd.f32 %v4627, %v4795
      %4797 = vmatmul.bf16.gmra.mxu0 %v3329
      %v4798 = vpop.f32.mrf.mxu0
      %v4799 = vadd.f32 %v4630, %v4798
      %v4800 = vpop.f32.mrf.mxu0
      %v4801 = vadd.f32 %v4632, %v4800
      %4802 = vmatmul.bf16.gmra.mxu0 %v3333
      %v4803 = vpop.f32.mrf.mxu0
      %v4804 = vadd.f32 %v4635, %v4803
      %v4805 = vpop.f32.mrf.mxu0
      %v4806 = vadd.f32 %v4637, %v4805
      %4807 = vmatmul.bf16.gmra.mxu0 %v3337
      %v4808 = vpop.f32.mrf.mxu0
      %v4809 = vadd.f32 %v4640, %v4808
      %v4810 = vpop.f32.mrf.mxu0
      %v4811 = vadd.f32 %v4642, %v4810
      %4812 = vmatmul.bf16.gmra.mxu0 %v3341
      %v4813 = vpop.f32.mrf.mxu0
      %v4814 = vadd.f32 %v4645, %v4813
      %v4815 = vpop.f32.mrf.mxu0
      %v4816 = vadd.f32 %v4647, %v4815
      %4817 = vmatmul.bf16.gmra.mxu0 %v3345
      %v4818 = vpop.f32.mrf.mxu0
      %v4819 = vadd.f32 %v4650, %v4818
      %v4820 = vpop.f32.mrf.mxu0
      %v4821 = vadd.f32 %v4652, %v4820
      %4822 = vmatmul.bf16.gmra.mxu0 %v3349
      %v4823 = vpop.f32.mrf.mxu0
      %v4824 = vadd.f32 %v4655, %v4823
      %v4825 = vpop.f32.mrf.mxu0
      %v4826 = vadd.f32 %v4657, %v4825
      %4827 = vmatmul.bf16.gmra.mxu0 %v3353
      %v4828 = vpop.f32.mrf.mxu0
      %v4829 = vadd.f32 %v4660, %v4828
      %v4830 = vpop.f32.mrf.mxu0
      %v4831 = vadd.f32 %v4662, %v4830
      %4832 = vmatmul.bf16.gmra.mxu0 %v3357
      %v4833 = vpop.f32.mrf.mxu0
      %v4834 = vadd.f32 %v4665, %v4833
      %v4835 = vpop.f32.mrf.mxu0
      %v4836 = vadd.f32 %v4667, %v4835
      %4837 = vdwg.mxu0
      %vm4838 = vcmp.gt.f32.partialorder %v4003, 0.0
      %vm4839 = vcmp.gt.f32.partialorder %v4679, 0.0
      %vm4840 = vcmp.gt.f32.partialorder %v4005, 0.0
      %vm4841 = vcmp.gt.f32.partialorder %v4681, 0.0
      %vm4842 = vcmp.gt.f32.partialorder %v4008, 0.0
      %vm4843 = vcmp.gt.f32.partialorder %v4684, 0.0
      %vm4844 = vcmp.gt.f32.partialorder %v4010, 0.0
      %vm4845 = vcmp.gt.f32.partialorder %v4686, 0.0
      %vm4846 = vcmp.gt.f32.partialorder %v4013, 0.0
      %vm4847 = vcmp.gt.f32.partialorder %v4689, 0.0
      %vm4848 = vcmp.gt.f32.partialorder %v4015, 0.0
      %vm4849 = vcmp.gt.f32.partialorder %v4691, 0.0
      %vm4850 = vcmp.gt.f32.partialorder %v4018, 0.0
      %vm4851 = vcmp.gt.f32.partialorder %v4694, 0.0
      %vm4852 = vcmp.gt.f32.partialorder %v4020, 0.0
      %vm4853 = vcmp.gt.f32.partialorder %v4696, 0.0
      %vm4854 = vcmp.gt.f32.partialorder %v4023, 0.0
      %vm4855 = vcmp.gt.f32.partialorder %v4699, 0.0
      %vm4856 = vcmp.gt.f32.partialorder %v4025, 0.0
      %vm4857 = vcmp.gt.f32.partialorder %v4701, 0.0
      %vm4858 = vcmp.gt.f32.partialorder %v4028, 0.0
      %vm4859 = vcmp.gt.f32.partialorder %v4704, 0.0
      %vm4860 = vcmp.gt.f32.partialorder %v4030, 0.0
      %vm4861 = vcmp.gt.f32.partialorder %v4706, 0.0
      %vm4862 = vcmp.gt.f32.partialorder %v4033, 0.0
      %vm4863 = vcmp.gt.f32.partialorder %v4709, 0.0
      %vm4864 = vcmp.gt.f32.partialorder %v4035, 0.0
      %vm4865 = vcmp.gt.f32.partialorder %v4711, 0.0
      %vm4866 = vcmp.gt.f32.partialorder %v4038, 0.0
      %vm4867 = vcmp.gt.f32.partialorder %v4714, 0.0
      %vm4868 = vcmp.gt.f32.partialorder %v4040, 0.0
      %vm4869 = vcmp.gt.f32.partialorder %v4716, 0.0
      %vm4870 = vcmp.gt.f32.partialorder %v4043, 0.0
      %vm4871 = vcmp.gt.f32.partialorder %v4719, 0.0
      %vm4872 = vcmp.gt.f32.partialorder %v4045, 0.0
      %vm4873 = vcmp.gt.f32.partialorder %v4721, 0.0
      %vm4874 = vcmp.gt.f32.partialorder %v4048, 0.0
      %vm4875 = vcmp.gt.f32.partialorder %v4724, 0.0
      %vm4876 = vcmp.gt.f32.partialorder %v4050, 0.0
      %vm4877 = vcmp.gt.f32.partialorder %v4726, 0.0
      %vm4878 = vcmp.gt.f32.partialorder %v4053, 0.0
      %vm4879 = vcmp.gt.f32.partialorder %v4729, 0.0
      %vm4880 = vcmp.gt.f32.partialorder %v4055, 0.0
      %vm4881 = vcmp.gt.f32.partialorder %v4731, 0.0
      %vm4882 = vcmp.gt.f32.partialorder %v4058, 0.0
      %vm4883 = vcmp.gt.f32.partialorder %v4734, 0.0
      %vm4884 = vcmp.gt.f32.partialorder %v4060, 0.0
      %vm4885 = vcmp.gt.f32.partialorder %v4736, 0.0
      %vm4886 = vcmp.gt.f32.partialorder %v4063, 0.0
      %vm4887 = vcmp.gt.f32.partialorder %v4739, 0.0
      %vm4888 = vcmp.gt.f32.partialorder %v4065, 0.0
      %vm4889 = vcmp.gt.f32.partialorder %v4741, 0.0
      %vm4890 = vcmp.gt.f32.partialorder %v4068, 0.0
      %vm4891 = vcmp.gt.f32.partialorder %v4744, 0.0
      %vm4892 = vcmp.gt.f32.partialorder %v4070, 0.0
      %vm4893 = vcmp.gt.f32.partialorder %v4746, 0.0
      %vm4894 = vcmp.gt.f32.partialorder %v4073, 0.0
      %vm4895 = vcmp.gt.f32.partialorder %v4749, 0.0
      %vm4896 = vcmp.gt.f32.partialorder %v4075, 0.0
      %vm4897 = vcmp.gt.f32.partialorder %v4751, 0.0
      %vm4898 = vcmp.gt.f32.partialorder %v4078, 0.0
      %vm4899 = vcmp.gt.f32.partialorder %v4754, 0.0
      %vm4900 = vcmp.gt.f32.partialorder %v4080, 0.0
      %vm4901 = vcmp.gt.f32.partialorder %v4756, 0.0
      %vm4902 = vcmp.gt.f32.partialorder %v4083, 0.0
      %vm4903 = vcmp.gt.f32.partialorder %v4759, 0.0
      %vm4904 = vcmp.gt.f32.partialorder %v4085, 0.0
      %vm4905 = vcmp.gt.f32.partialorder %v4761, 0.0
      %vm4906 = vcmp.gt.f32.partialorder %v4088, 0.0
      %vm4907 = vcmp.gt.f32.partialorder %v4764, 0.0
      %vm4908 = vcmp.gt.f32.partialorder %v4090, 0.0
      %vm4909 = vcmp.gt.f32.partialorder %v4766, 0.0
      %vm4910 = vcmp.gt.f32.partialorder %v4093, 0.0
      %vm4911 = vcmp.gt.f32.partialorder %v4769, 0.0
      %vm4912 = vcmp.gt.f32.partialorder %v4095, 0.0
      %vm4913 = vcmp.gt.f32.partialorder %v4771, 0.0
      %vm4914 = vcmp.gt.f32.partialorder %v4098, 0.0
      %vm4915 = vcmp.gt.f32.partialorder %v4774, 0.0
      %vm4916 = vcmp.gt.f32.partialorder %v4100, 0.0
      %vm4917 = vcmp.gt.f32.partialorder %v4776, 0.0
      %vm4918 = vcmp.gt.f32.partialorder %v4103, 0.0
      %vm4919 = vcmp.gt.f32.partialorder %v4779, 0.0
      %vm4920 = vcmp.gt.f32.partialorder %v4105, 0.0
      %vm4921 = vcmp.gt.f32.partialorder %v4781, 0.0
      %vm4922 = vcmp.gt.f32.partialorder %v4108, 0.0
      %vm4923 = vcmp.gt.f32.partialorder %v4784, 0.0
      %vm4924 = vcmp.gt.f32.partialorder %v4110, 0.0
      %vm4925 = vcmp.gt.f32.partialorder %v4786, 0.0
      %vm4926 = vcmp.gt.f32.partialorder %v4113, 0.0
      %vm4927 = vcmp.gt.f32.partialorder %v4789, 0.0
      %vm4928 = vcmp.gt.f32.partialorder %v4115, 0.0
      %vm4929 = vcmp.gt.f32.partialorder %v4791, 0.0
      %vm4930 = vcmp.gt.f32.partialorder %v4118, 0.0
      %vm4931 = vcmp.gt.f32.partialorder %v4794, 0.0
      %vm4932 = vcmp.gt.f32.partialorder %v4120, 0.0
      %vm4933 = vcmp.gt.f32.partialorder %v4796, 0.0
      %vm4934 = vcmp.gt.f32.partialorder %v4123, 0.0
      %vm4935 = vcmp.gt.f32.partialorder %v4799, 0.0
      %vm4936 = vcmp.gt.f32.partialorder %v4125, 0.0
      %vm4937 = vcmp.gt.f32.partialorder %v4801, 0.0
      %vm4938 = vcmp.gt.f32.partialorder %v4128, 0.0
      %vm4939 = vcmp.gt.f32.partialorder %v4804, 0.0
      %vm4940 = vcmp.gt.f32.partialorder %v4130, 0.0
      %vm4941 = vcmp.gt.f32.partialorder %v4806, 0.0
      %vm4942 = vcmp.gt.f32.partialorder %v4133, 0.0
      %vm4943 = vcmp.gt.f32.partialorder %v4809, 0.0
      %vm4944 = vcmp.gt.f32.partialorder %v4135, 0.0
      %vm4945 = vcmp.gt.f32.partialorder %v4811, 0.0
      %vm4946 = vcmp.gt.f32.partialorder %v4138, 0.0
      %vm4947 = vcmp.gt.f32.partialorder %v4814, 0.0
      %vm4948 = vcmp.gt.f32.partialorder %v4140, 0.0
      %vm4949 = vcmp.gt.f32.partialorder %v4816, 0.0
      %vm4950 = vcmp.gt.f32.partialorder %v4143, 0.0
      %vm4951 = vcmp.gt.f32.partialorder %v4819, 0.0
      %vm4952 = vcmp.gt.f32.partialorder %v4145, 0.0
      %vm4953 = vcmp.gt.f32.partialorder %v4821, 0.0
      %vm4954 = vcmp.gt.f32.partialorder %v4148, 0.0
      %vm4955 = vcmp.gt.f32.partialorder %v4824, 0.0
      %vm4956 = vcmp.gt.f32.partialorder %v4150, 0.0
      %vm4957 = vcmp.gt.f32.partialorder %v4826, 0.0
      %vm4958 = vcmp.gt.f32.partialorder %v4153, 0.0
      %vm4959 = vcmp.gt.f32.partialorder %v4829, 0.0
      %vm4960 = vcmp.gt.f32.partialorder %v4155, 0.0
      %vm4961 = vcmp.gt.f32.partialorder %v4831, 0.0
      %vm4962 = vcmp.gt.f32.partialorder %v4158, 0.0
      %vm4963 = vcmp.gt.f32.partialorder %v4834, 0.0
      %vm4964 = vcmp.gt.f32.partialorder %v4160, 0.0
      %vm4965 = vcmp.gt.f32.partialorder %v4836, 0.0
      %v4966 = vmul.f32 %v4003, 0.01
      %v4967 = vmul.f32 %v4679, 0.01
      %v4968 = vmul.f32 %v4005, 0.01
      %v4969 = vmul.f32 %v4681, 0.01
      %v4970 = vmul.f32 %v4008, 0.01
      %v4971 = vmul.f32 %v4684, 0.01
      %v4972 = vmul.f32 %v4010, 0.01
      %v4973 = vmul.f32 %v4686, 0.01
      %v4974 = vmul.f32 %v4013, 0.01
      %v4975 = vmul.f32 %v4689, 0.01
      %v4976 = vmul.f32 %v4015, 0.01
      %v4977 = vmul.f32 %v4691, 0.01
      %v4978 = vmul.f32 %v4018, 0.01
      %v4979 = vmul.f32 %v4694, 0.01
      %v4980 = vmul.f32 %v4020, 0.01
      %v4981 = vmul.f32 %v4696, 0.01
      %v4982 = vmul.f32 %v4023, 0.01
      %v4983 = vmul.f32 %v4699, 0.01
      %v4984 = vmul.f32 %v4025, 0.01
      %v4985 = vmul.f32 %v4701, 0.01
      %v4986 = vmul.f32 %v4028, 0.01
      %v4987 = vmul.f32 %v4704, 0.01
      %v4988 = vmul.f32 %v4030, 0.01
      %v4989 = vmul.f32 %v4706, 0.01
      %v4990 = vmul.f32 %v4033, 0.01
      %v4991 = vmul.f32 %v4709, 0.01
      %v4992 = vmul.f32 %v4035, 0.01
      %v4993 = vmul.f32 %v4711, 0.01
      %v4994 = vmul.f32 %v4038, 0.01
      %v4995 = vmul.f32 %v4714, 0.01
      %v4996 = vmul.f32 %v4040, 0.01
      %v4997 = vmul.f32 %v4716, 0.01
      %v4998 = vmul.f32 %v4043, 0.01
      %v4999 = vmul.f32 %v4719, 0.01
      %v5000 = vmul.f32 %v4045, 0.01
      %v5001 = vmul.f32 %v4721, 0.01
      %v5002 = vmul.f32 %v4048, 0.01
      %v5003 = vmul.f32 %v4724, 0.01
      %v5004 = vmul.f32 %v4050, 0.01
      %v5005 = vmul.f32 %v4726, 0.01
      %v5006 = vmul.f32 %v4053, 0.01
      %v5007 = vmul.f32 %v4729, 0.01
      %v5008 = vmul.f32 %v4055, 0.01
      %v5009 = vmul.f32 %v4731, 0.01
      %v5010 = vmul.f32 %v4058, 0.01
      %v5011 = vmul.f32 %v4734, 0.01
      %v5012 = vmul.f32 %v4060, 0.01
      %v5013 = vmul.f32 %v4736, 0.01
      %v5014 = vmul.f32 %v4063, 0.01
      %v5015 = vmul.f32 %v4739, 0.01
      %v5016 = vmul.f32 %v4065, 0.01
      %v5017 = vmul.f32 %v4741, 0.01
      %v5018 = vmul.f32 %v4068, 0.01
      %v5019 = vmul.f32 %v4744, 0.01
      %v5020 = vmul.f32 %v4070, 0.01
      %v5021 = vmul.f32 %v4746, 0.01
      %v5022 = vmul.f32 %v4073, 0.01
      %v5023 = vmul.f32 %v4749, 0.01
      %v5024 = vmul.f32 %v4075, 0.01
      %v5025 = vmul.f32 %v4751, 0.01
      %v5026 = vmul.f32 %v4078, 0.01
      %v5027 = vmul.f32 %v4754, 0.01
      %v5028 = vmul.f32 %v4080, 0.01
      %v5029 = vmul.f32 %v4756, 0.01
      %v5030 = vmul.f32 %v4083, 0.01
      %v5031 = vmul.f32 %v4759, 0.01
      %v5032 = vmul.f32 %v4085, 0.01
      %v5033 = vmul.f32 %v4761, 0.01
      %v5034 = vmul.f32 %v4088, 0.01
      %v5035 = vmul.f32 %v4764, 0.01
      %v5036 = vmul.f32 %v4090, 0.01
      %v5037 = vmul.f32 %v4766, 0.01
      %v5038 = vmul.f32 %v4093, 0.01
      %v5039 = vmul.f32 %v4769, 0.01
      %v5040 = vmul.f32 %v4095, 0.01
      %v5041 = vmul.f32 %v4771, 0.01
      %v5042 = vmul.f32 %v4098, 0.01
      %v5043 = vmul.f32 %v4774, 0.01
      %v5044 = vmul.f32 %v4100, 0.01
      %v5045 = vmul.f32 %v4776, 0.01
      %v5046 = vmul.f32 %v4103, 0.01
      %v5047 = vmul.f32 %v4779, 0.01
      %v5048 = vmul.f32 %v4105, 0.01
      %v5049 = vmul.f32 %v4781, 0.01
      %v5050 = vmul.f32 %v4108, 0.01
      %v5051 = vmul.f32 %v4784, 0.01
      %v5052 = vmul.f32 %v4110, 0.01
      %v5053 = vmul.f32 %v4786, 0.01
      %v5054 = vmul.f32 %v4113, 0.01
      %v5055 = vmul.f32 %v4789, 0.01
      %v5056 = vmul.f32 %v4115, 0.01
      %v5057 = vmul.f32 %v4791, 0.01
      %v5058 = vmul.f32 %v4118, 0.01
      %v5059 = vmul.f32 %v4794, 0.01
      %v5060 = vmul.f32 %v4120, 0.01
      %v5061 = vmul.f32 %v4796, 0.01
      %v5062 = vmul.f32 %v4123, 0.01
      %v5063 = vmul.f32 %v4799, 0.01
      %v5064 = vmul.f32 %v4125, 0.01
      %v5065 = vmul.f32 %v4801, 0.01
      %v5066 = vmul.f32 %v4128, 0.01
      %v5067 = vmul.f32 %v4804, 0.01
      %v5068 = vmul.f32 %v4130, 0.01
      %v5069 = vmul.f32 %v4806, 0.01
      %v5070 = vmul.f32 %v4133, 0.01
      %v5071 = vmul.f32 %v4809, 0.01
      %v5072 = vmul.f32 %v4135, 0.01
      %v5073 = vmul.f32 %v4811, 0.01
      %v5074 = vmul.f32 %v4138, 0.01
      %v5075 = vmul.f32 %v4814, 0.01
      %v5076 = vmul.f32 %v4140, 0.01
      %v5077 = vmul.f32 %v4816, 0.01
      %v5078 = vmul.f32 %v4143, 0.01
      %v5079 = vmul.f32 %v4819, 0.01
      %v5080 = vmul.f32 %v4145, 0.01
      %v5081 = vmul.f32 %v4821, 0.01
      %v5082 = vmul.f32 %v4148, 0.01
      %v5083 = vmul.f32 %v4824, 0.01
      %v5084 = vmul.f32 %v4150, 0.01
      %v5085 = vmul.f32 %v4826, 0.01
      %v5086 = vmul.f32 %v4153, 0.01
      %v5087 = vmul.f32 %v4829, 0.01
      %v5088 = vmul.f32 %v4155, 0.01
      %v5089 = vmul.f32 %v4831, 0.01
      %v5090 = vmul.f32 %v4158, 0.01
      %v5091 = vmul.f32 %v4834, 0.01
      %v5092 = vmul.f32 %v4160, 0.01
      %v5093 = vmul.f32 %v4836, 0.01
      %v5094 = vsel %vm4838, %v4003, %v4966
      %v5095 = vsel %vm4839, %v4679, %v4967
      %v5096 = vsel %vm4840, %v4005, %v4968
      %v5097 = vsel %vm4841, %v4681, %v4969
      %v5098 = vsel %vm4842, %v4008, %v4970
      %v5099 = vsel %vm4843, %v4684, %v4971
      %v5100 = vsel %vm4844, %v4010, %v4972
      %v5101 = vsel %vm4845, %v4686, %v4973
      %v5102 = vsel %vm4846, %v4013, %v4974
      %v5103 = vsel %vm4847, %v4689, %v4975
      %v5104 = vsel %vm4848, %v4015, %v4976
      %v5105 = vsel %vm4849, %v4691, %v4977
      %v5106 = vsel %vm4850, %v4018, %v4978
      %v5107 = vsel %vm4851, %v4694, %v4979
      %v5108 = vsel %vm4852, %v4020, %v4980
      %v5109 = vsel %vm4853, %v4696, %v4981
      %v5110 = vsel %vm4854, %v4023, %v4982
      %v5111 = vsel %vm4855, %v4699, %v4983
      %v5112 = vsel %vm4856, %v4025, %v4984
      %v5113 = vsel %vm4857, %v4701, %v4985
      %v5114 = vsel %vm4858, %v4028, %v4986
      %v5115 = vsel %vm4859, %v4704, %v4987
      %v5116 = vsel %vm4860, %v4030, %v4988
      %v5117 = vsel %vm4861, %v4706, %v4989
      %v5118 = vsel %vm4862, %v4033, %v4990
      %v5119 = vsel %vm4863, %v4709, %v4991
      %v5120 = vsel %vm4864, %v4035, %v4992
      %v5121 = vsel %vm4865, %v4711, %v4993
      %v5122 = vsel %vm4866, %v4038, %v4994
      %v5123 = vsel %vm4867, %v4714, %v4995
      %v5124 = vsel %vm4868, %v4040, %v4996
      %v5125 = vsel %vm4869, %v4716, %v4997
      %v5126 = vsel %vm4870, %v4043, %v4998
      %v5127 = vsel %vm4871, %v4719, %v4999
      %v5128 = vsel %vm4872, %v4045, %v5000
      %v5129 = vsel %vm4873, %v4721, %v5001
      %v5130 = vsel %vm4874, %v4048, %v5002
      %v5131 = vsel %vm4875, %v4724, %v5003
      %v5132 = vsel %vm4876, %v4050, %v5004
      %v5133 = vsel %vm4877, %v4726, %v5005
      %v5134 = vsel %vm4878, %v4053, %v5006
      %v5135 = vsel %vm4879, %v4729, %v5007
      %v5136 = vsel %vm4880, %v4055, %v5008
      %v5137 = vsel %vm4881, %v4731, %v5009
      %v5138 = vsel %vm4882, %v4058, %v5010
      %v5139 = vsel %vm4883, %v4734, %v5011
      %v5140 = vsel %vm4884, %v4060, %v5012
      %v5141 = vsel %vm4885, %v4736, %v5013
      %v5142 = vsel %vm4886, %v4063, %v5014
      %v5143 = vsel %vm4887, %v4739, %v5015
      %v5144 = vsel %vm4888, %v4065, %v5016
      %v5145 = vsel %vm4889, %v4741, %v5017
      %v5146 = vsel %vm4890, %v4068, %v5018
      %v5147 = vsel %vm4891, %v4744, %v5019
      %v5148 = vsel %vm4892, %v4070, %v5020
      %v5149 = vsel %vm4893, %v4746, %v5021
      %v5150 = vsel %vm4894, %v4073, %v5022
      %v5151 = vsel %vm4895, %v4749, %v5023
      %v5152 = vsel %vm4896, %v4075, %v5024
      %v5153 = vsel %vm4897, %v4751, %v5025
      %v5154 = vsel %vm4898, %v4078, %v5026
      %v5155 = vsel %vm4899, %v4754, %v5027
      %v5156 = vsel %vm4900, %v4080, %v5028
      %v5157 = vsel %vm4901, %v4756, %v5029
      %v5158 = vsel %vm4902, %v4083, %v5030
      %v5159 = vsel %vm4903, %v4759, %v5031
      %v5160 = vsel %vm4904, %v4085, %v5032
      %v5161 = vsel %vm4905, %v4761, %v5033
      %v5162 = vsel %vm4906, %v4088, %v5034
      %v5163 = vsel %vm4907, %v4764, %v5035
      %v5164 = vsel %vm4908, %v4090, %v5036
      %v5165 = vsel %vm4909, %v4766, %v5037
      %v5166 = vsel %vm4910, %v4093, %v5038
      %v5167 = vsel %vm4911, %v4769, %v5039
      %v5168 = vsel %vm4912, %v4095, %v5040
      %v5169 = vsel %vm4913, %v4771, %v5041
      %v5170 = vsel %vm4914, %v4098, %v5042
      %v5171 = vsel %vm4915, %v4774, %v5043
      %v5172 = vsel %vm4916, %v4100, %v5044
      %v5173 = vsel %vm4917, %v4776, %v5045
      %v5174 = vsel %vm4918, %v4103, %v5046
      %v5175 = vsel %vm4919, %v4779, %v5047
      %v5176 = vsel %vm4920, %v4105, %v5048
      %v5177 = vsel %vm4921, %v4781, %v5049
      %v5178 = vsel %vm4922, %v4108, %v5050
      %v5179 = vsel %vm4923, %v4784, %v5051
      %v5180 = vsel %vm4924, %v4110, %v5052
      %v5181 = vsel %vm4925, %v4786, %v5053
      %v5182 = vsel %vm4926, %v4113, %v5054
      %v5183 = vsel %vm4927, %v4789, %v5055
      %v5184 = vsel %vm4928, %v4115, %v5056
      %v5185 = vsel %vm4929, %v4791, %v5057
      %v5186 = vsel %vm4930, %v4118, %v5058
      %v5187 = vsel %vm4931, %v4794, %v5059
      %v5188 = vsel %vm4932, %v4120, %v5060
      %v5189 = vsel %vm4933, %v4796, %v5061
      %v5190 = vsel %vm4934, %v4123, %v5062
      %v5191 = vsel %vm4935, %v4799, %v5063
      %v5192 = vsel %vm4936, %v4125, %v5064
      %v5193 = vsel %vm4937, %v4801, %v5065
      %v5194 = vsel %vm4938, %v4128, %v5066
      %v5195 = vsel %vm4939, %v4804, %v5067
      %v5196 = vsel %vm4940, %v4130, %v5068
      %v5197 = vsel %vm4941, %v4806, %v5069
      %v5198 = vsel %vm4942, %v4133, %v5070
      %v5199 = vsel %vm4943, %v4809, %v5071
      %v5200 = vsel %vm4944, %v4135, %v5072
      %v5201 = vsel %vm4945, %v4811, %v5073
      %v5202 = vsel %vm4946, %v4138, %v5074
      %v5203 = vsel %vm4947, %v4814, %v5075
      %v5204 = vsel %vm4948, %v4140, %v5076
      %v5205 = vsel %vm4949, %v4816, %v5077
      %v5206 = vsel %vm4950, %v4143, %v5078
      %v5207 = vsel %vm4951, %v4819, %v5079
      %v5208 = vsel %vm4952, %v4145, %v5080
      %v5209 = vsel %vm4953, %v4821, %v5081
      %v5210 = vsel %vm4954, %v4148, %v5082
      %v5211 = vsel %vm4955, %v4824, %v5083
      %v5212 = vsel %vm4956, %v4150, %v5084
      %v5213 = vsel %vm4957, %v4826, %v5085
      %v5214 = vsel %vm4958, %v4153, %v5086
      %v5215 = vsel %vm4959, %v4829, %v5087
      %v5216 = vsel %vm4960, %v4155, %v5088
      %v5217 = vsel %vm4961, %v4831, %v5089
      %v5218 = vsel %vm4962, %v4158, %v5090
      %v5219 = vsel %vm4963, %v4834, %v5091
      %v5220 = vsel %vm4964, %v4160, %v5092
      %v5221 = vsel %vm4965, %v4836, %v5093
      %v5222 = vld [vmem:[%s5] sm:$0xff]
      %v5223 = vld [vmem:[%s5 + $0x8] sm:$0xff]
      %v5224 = vld [vmem:[%s5 + $0x10] sm:$0xff]
      %v5225 = vld [vmem:[%s5 + $0x18] sm:$0xff]
      %v5226 = vld [vmem:[%s5 + $0x20] sm:$0xff]
      %v5227 = vld [vmem:[%s5 + $0x28] sm:$0xff]
      %v5228 = vld [vmem:[%s5 + $0x30] sm:$0xff]
      %v5229 = vld [vmem:[%s5 + $0x38] sm:$0xff]
      %v5230 = vld [vmem:[%s5 + $0x40] sm:$0xff]
      %v5231 = vld [vmem:[%s5 + $0x48] sm:$0xff]
      %v5232 = vld [vmem:[%s5 + $0x50] sm:$0xff]
      %v5233 = vld [vmem:[%s5 + $0x58] sm:$0xff]
      %v5234 = vld [vmem:[%s5 + $0x60] sm:$0xff]
      %v5235 = vld [vmem:[%s5 + $0x68] sm:$0xff]
      %v5236 = vld [vmem:[%s5 + $0x70] sm:$0xff]
      %v5237 = vld [vmem:[%s5 + $0x78] sm:$0xff]
      %v5238 = vld [vmem:[%s5 + $0x80] sm:$0xff]
      %v5239 = vld [vmem:[%s5 + $0x88] sm:$0xff]
      %v5240 = vld [vmem:[%s5 + $0x90] sm:$0xff]
      %v5241 = vld [vmem:[%s5 + $0x98] sm:$0xff]
      %v5242 = vld [vmem:[%s5 + $0xa0] sm:$0xff]
      %v5243 = vld [vmem:[%s5 + $0xa8] sm:$0xff]
      %v5244 = vld [vmem:[%s5 + $0xb0] sm:$0xff]
      %v5245 = vld [vmem:[%s5 + $0xb8] sm:$0xff]
      %v5246 = vld [vmem:[%s5 + $0xc0] sm:$0xff]
      %v5247 = vld [vmem:[%s5 + $0xc8] sm:$0xff]
      %v5248 = vld [vmem:[%s5 + $0xd0] sm:$0xff]
      %v5249 = vld [vmem:[%s5 + $0xd8] sm:$0xff]
      %v5250 = vld [vmem:[%s5 + $0xe0] sm:$0xff]
      %v5251 = vld [vmem:[%s5 + $0xe8] sm:$0xff]
      %v5252 = vld [vmem:[%s5 + $0xf0] sm:$0xff]
      %v5253 = vld [vmem:[%s5 + $0xf8] sm:$0xff]
      %v5254 = vld [vmem:[%s5 + $0x100] sm:$0xff]
      %v5255 = vld [vmem:[%s5 + $0x108] sm:$0xff]
      %v5256 = vld [vmem:[%s5 + $0x110] sm:$0xff]
      %v5257 = vld [vmem:[%s5 + $0x118] sm:$0xff]
      %v5258 = vld [vmem:[%s5 + $0x120] sm:$0xff]
      %v5259 = vld [vmem:[%s5 + $0x128] sm:$0xff]
      %v5260 = vld [vmem:[%s5 + $0x130] sm:$0xff]
      %v5261 = vld [vmem:[%s5 + $0x138] sm:$0xff]
      %v5262 = vld [vmem:[%s5 + $0x140] sm:$0xff]
      %v5263 = vld [vmem:[%s5 + $0x148] sm:$0xff]
      %v5264 = vld [vmem:[%s5 + $0x150] sm:$0xff]
      %v5265 = vld [vmem:[%s5 + $0x158] sm:$0xff]
      %v5266 = vld [vmem:[%s5 + $0x160] sm:$0xff]
      %v5267 = vld [vmem:[%s5 + $0x168] sm:$0xff]
      %v5268 = vld [vmem:[%s5 + $0x170] sm:$0xff]
      %v5269 = vld [vmem:[%s5 + $0x178] sm:$0xff]
      %v5270 = vld [vmem:[%s5 + $0x180] sm:$0xff]
      %v5271 = vld [vmem:[%s5 + $0x188] sm:$0xff]
      %v5272 = vld [vmem:[%s5 + $0x190] sm:$0xff]
      %v5273 = vld [vmem:[%s5 + $0x198] sm:$0xff]
      %v5274 = vld [vmem:[%s5 + $0x1a0] sm:$0xff]
      %v5275 = vld [vmem:[%s5 + $0x1a8] sm:$0xff]
      %v5276 = vld [vmem:[%s5 + $0x1b0] sm:$0xff]
      %v5277 = vld [vmem:[%s5 + $0x1b8] sm:$0xff]
      %v5278 = vld [vmem:[%s5 + $0x1c0] sm:$0xff]
      %v5279 = vld [vmem:[%s5 + $0x1c8] sm:$0xff]
      %v5280 = vld [vmem:[%s5 + $0x1d0] sm:$0xff]
      %v5281 = vld [vmem:[%s5 + $0x1d8] sm:$0xff]
      %v5282 = vld [vmem:[%s5 + $0x1e0] sm:$0xff]
      %v5283 = vld [vmem:[%s5 + $0x1e8] sm:$0xff]
      %v5284 = vld [vmem:[%s5 + $0x1f0] sm:$0xff]
      %v5285 = vld [vmem:[%s5 + $0x1f8] sm:$0xff]
      %v5286 = vld [vmem:[%s5 + $0x200] sm:$0xff]
      %v5287 = vld [vmem:[%s5 + $0x208] sm:$0xff]
      %v5288 = vld [vmem:[%s5 + $0x210] sm:$0xff]
      %v5289 = vld [vmem:[%s5 + $0x218] sm:$0xff]
      %v5290 = vld [vmem:[%s5 + $0x220] sm:$0xff]
      %v5291 = vld [vmem:[%s5 + $0x228] sm:$0xff]
      %v5292 = vld [vmem:[%s5 + $0x230] sm:$0xff]
      %v5293 = vld [vmem:[%s5 + $0x238] sm:$0xff]
      %v5294 = vld [vmem:[%s5 + $0x240] sm:$0xff]
      %v5295 = vld [vmem:[%s5 + $0x248] sm:$0xff]
      %v5296 = vld [vmem:[%s5 + $0x250] sm:$0xff]
      %v5297 = vld [vmem:[%s5 + $0x258] sm:$0xff]
      %v5298 = vld [vmem:[%s5 + $0x260] sm:$0xff]
      %v5299 = vld [vmem:[%s5 + $0x268] sm:$0xff]
      %v5300 = vld [vmem:[%s5 + $0x270] sm:$0xff]
      %v5301 = vld [vmem:[%s5 + $0x278] sm:$0xff]
      %v5302 = vld [vmem:[%s5 + $0x280] sm:$0xff]
      %v5303 = vld [vmem:[%s5 + $0x288] sm:$0xff]
      %v5304 = vld [vmem:[%s5 + $0x290] sm:$0xff]
      %v5305 = vld [vmem:[%s5 + $0x298] sm:$0xff]
      %v5306 = vld [vmem:[%s5 + $0x2a0] sm:$0xff]
      %v5307 = vld [vmem:[%s5 + $0x2a8] sm:$0xff]
      %v5308 = vld [vmem:[%s5 + $0x2b0] sm:$0xff]
      %v5309 = vld [vmem:[%s5 + $0x2b8] sm:$0xff]
      %v5310 = vld [vmem:[%s5 + $0x2c0] sm:$0xff]
      %v5311 = vld [vmem:[%s5 + $0x2c8] sm:$0xff]
      %v5312 = vld [vmem:[%s5 + $0x2d0] sm:$0xff]
      %v5313 = vld [vmem:[%s5 + $0x2d8] sm:$0xff]
      %v5314 = vld [vmem:[%s5 + $0x2e0] sm:$0xff]
      %v5315 = vld [vmem:[%s5 + $0x2e8] sm:$0xff]
      %v5316 = vld [vmem:[%s5 + $0x2f0] sm:$0xff]
      %v5317 = vld [vmem:[%s5 + $0x2f8] sm:$0xff]
      %v5318 = vld [vmem:[%s5 + $0x300] sm:$0xff]
      %v5319 = vld [vmem:[%s5 + $0x308] sm:$0xff]
      %v5320 = vld [vmem:[%s5 + $0x310] sm:$0xff]
      %v5321 = vld [vmem:[%s5 + $0x318] sm:$0xff]
      %v5322 = vld [vmem:[%s5 + $0x320] sm:$0xff]
      %v5323 = vld [vmem:[%s5 + $0x328] sm:$0xff]
      %v5324 = vld [vmem:[%s5 + $0x330] sm:$0xff]
      %v5325 = vld [vmem:[%s5 + $0x338] sm:$0xff]
      %v5326 = vld [vmem:[%s5 + $0x340] sm:$0xff]
      %v5327 = vld [vmem:[%s5 + $0x348] sm:$0xff]
      %v5328 = vld [vmem:[%s5 + $0x350] sm:$0xff]
      %v5329 = vld [vmem:[%s5 + $0x358] sm:$0xff]
      %v5330 = vld [vmem:[%s5 + $0x360] sm:$0xff]
      %v5331 = vld [vmem:[%s5 + $0x368] sm:$0xff]
      %v5332 = vld [vmem:[%s5 + $0x370] sm:$0xff]
      %v5333 = vld [vmem:[%s5 + $0x378] sm:$0xff]
      %v5334 = vld [vmem:[%s5 + $0x380] sm:$0xff]
      %v5335 = vld [vmem:[%s5 + $0x388] sm:$0xff]
      %v5336 = vld [vmem:[%s5 + $0x390] sm:$0xff]
      %v5337 = vld [vmem:[%s5 + $0x398] sm:$0xff]
      %v5338 = vld [vmem:[%s5 + $0x3a0] sm:$0xff]
      %v5339 = vld [vmem:[%s5 + $0x3a8] sm:$0xff]
      %v5340 = vld [vmem:[%s5 + $0x3b0] sm:$0xff]
      %v5341 = vld [vmem:[%s5 + $0x3b8] sm:$0xff]
      %v5342 = vld [vmem:[%s5 + $0x3c0] sm:$0xff]
      %v5343 = vld [vmem:[%s5 + $0x3c8] sm:$0xff]
      %v5344 = vld [vmem:[%s5 + $0x3d0] sm:$0xff]
      %v5345 = vld [vmem:[%s5 + $0x3d8] sm:$0xff]
      %v5346 = vld [vmem:[%s5 + $0x3e0] sm:$0xff]
      %v5347 = vld [vmem:[%s5 + $0x3e8] sm:$0xff]
      %v5348 = vld [vmem:[%s5 + $0x3f0] sm:$0xff]
      %v5349 = vld [vmem:[%s5 + $0x3f8] sm:$0xff]
      %v5350 = vpack.c.bf16 %v5096, %v5094
      %v5351 = vpack.c.bf16 %v5097, %v5095
      %v5352 = vpack.c.bf16 %v5100, %v5098
      %v5353 = vpack.c.bf16 %v5101, %v5099
      %v5354 = vpack.c.bf16 %v5104, %v5102
      %v5355 = vpack.c.bf16 %v5105, %v5103
      %v5356 = vpack.c.bf16 %v5108, %v5106
      %v5357 = vpack.c.bf16 %v5109, %v5107
      %v5358 = vpack.c.bf16 %v5112, %v5110
      %v5359 = vpack.c.bf16 %v5113, %v5111
      %v5360 = vpack.c.bf16 %v5116, %v5114
      %v5361 = vpack.c.bf16 %v5117, %v5115
      %v5362 = vpack.c.bf16 %v5120, %v5118
      %v5363 = vpack.c.bf16 %v5121, %v5119
      %v5364 = vpack.c.bf16 %v5124, %v5122
      %v5365 = vpack.c.bf16 %v5125, %v5123
      %v5366 = vpack.c.bf16 %v5128, %v5126
      %v5367 = vpack.c.bf16 %v5129, %v5127
      %v5368 = vpack.c.bf16 %v5132, %v5130
      %v5369 = vpack.c.bf16 %v5133, %v5131
      %v5370 = vpack.c.bf16 %v5136, %v5134
      %v5371 = vpack.c.bf16 %v5137, %v5135
      %v5372 = vpack.c.bf16 %v5140, %v5138
      %v5373 = vpack.c.bf16 %v5141, %v5139
      %v5374 = vpack.c.bf16 %v5144, %v5142
      %v5375 = vpack.c.bf16 %v5145, %v5143
      %v5376 = vpack.c.bf16 %v5148, %v5146
      %v5377 = vpack.c.bf16 %v5149, %v5147
      %v5378 = vpack.c.bf16 %v5152, %v5150
      %v5379 = vpack.c.bf16 %v5153, %v5151
      %v5380 = vpack.c.bf16 %v5156, %v5154
      %v5381 = vpack.c.bf16 %v5157, %v5155
      %v5382 = vpack.c.bf16 %v5160, %v5158
      %v5383 = vpack.c.bf16 %v5161, %v5159
      %v5384 = vpack.c.bf16 %v5164, %v5162
      %v5385 = vpack.c.bf16 %v5165, %v5163
      %v5386 = vpack.c.bf16 %v5168, %v5166
      %v5387 = vpack.c.bf16 %v5169, %v5167
      %v5388 = vpack.c.bf16 %v5172, %v5170
      %v5389 = vpack.c.bf16 %v5173, %v5171
      %v5390 = vpack.c.bf16 %v5176, %v5174
      %v5391 = vpack.c.bf16 %v5177, %v5175
      %v5392 = vpack.c.bf16 %v5180, %v5178
      %v5393 = vpack.c.bf16 %v5181, %v5179
      %v5394 = vpack.c.bf16 %v5184, %v5182
      %v5395 = vpack.c.bf16 %v5185, %v5183
      %v5396 = vpack.c.bf16 %v5188, %v5186
      %v5397 = vpack.c.bf16 %v5189, %v5187
      %v5398 = vpack.c.bf16 %v5192, %v5190
      %v5399 = vpack.c.bf16 %v5193, %v5191
      %v5400 = vpack.c.bf16 %v5196, %v5194
      %v5401 = vpack.c.bf16 %v5197, %v5195
      %v5402 = vpack.c.bf16 %v5200, %v5198
      %v5403 = vpack.c.bf16 %v5201, %v5199
      %v5404 = vpack.c.bf16 %v5204, %v5202
      %v5405 = vpack.c.bf16 %v5205, %v5203
      %v5406 = vpack.c.bf16 %v5208, %v5206
      %v5407 = vpack.c.bf16 %v5209, %v5207
      %v5408 = vpack.c.bf16 %v5212, %v5210
      %v5409 = vpack.c.bf16 %v5213, %v5211
      %v5410 = vpack.c.bf16 %v5216, %v5214
      %v5411 = vpack.c.bf16 %v5217, %v5215
      %v5412 = vpack.c.bf16 %v5220, %v5218
      %v5413 = vpack.c.bf16 %v5221, %v5219
      %v5414 = vld [vmem:[%s6] sm:$0xff]
      %v5415 = vld [vmem:[%s6 + $0x8] sm:$0xff]
      %v5416 = vld [vmem:[%s6 + $0x10] sm:$0xff]
      %v5417 = vld [vmem:[%s6 + $0x18] sm:$0xff]
      %v5418 = vld [vmem:[%s6 + $0x20] sm:$0xff]
      %v5419 = vld [vmem:[%s6 + $0x28] sm:$0xff]
      %v5420 = vld [vmem:[%s6 + $0x30] sm:$0xff]
      %v5421 = vld [vmem:[%s6 + $0x38] sm:$0xff]
      %v5422 = vld [vmem:[%s6 + $0x40] sm:$0xff]
      %v5423 = vld [vmem:[%s6 + $0x48] sm:$0xff]
      %v5424 = vld [vmem:[%s6 + $0x50] sm:$0xff]
      %v5425 = vld [vmem:[%s6 + $0x58] sm:$0xff]
      %v5426 = vld [vmem:[%s6 + $0x60] sm:$0xff]
      %v5427 = vld [vmem:[%s6 + $0x68] sm:$0xff]
      %v5428 = vld [vmem:[%s6 + $0x70] sm:$0xff]
      %v5429 = vld [vmem:[%s6 + $0x78] sm:$0xff]
      %v5430 = vld [vmem:[%s6 + $0x80] sm:$0xff]
      %v5431 = vld [vmem:[%s6 + $0x88] sm:$0xff]
      %v5432 = vld [vmem:[%s6 + $0x90] sm:$0xff]
      %v5433 = vld [vmem:[%s6 + $0x98] sm:$0xff]
      %v5434 = vld [vmem:[%s6 + $0xa0] sm:$0xff]
      %v5435 = vld [vmem:[%s6 + $0xa8] sm:$0xff]
      %v5436 = vld [vmem:[%s6 + $0xb0] sm:$0xff]
      %v5437 = vld [vmem:[%s6 + $0xb8] sm:$0xff]
      %v5438 = vld [vmem:[%s6 + $0xc0] sm:$0xff]
      %v5439 = vld [vmem:[%s6 + $0xc8] sm:$0xff]
      %v5440 = vld [vmem:[%s6 + $0xd0] sm:$0xff]
      %v5441 = vld [vmem:[%s6 + $0xd8] sm:$0xff]
      %v5442 = vld [vmem:[%s6 + $0xe0] sm:$0xff]
      %v5443 = vld [vmem:[%s6 + $0xe8] sm:$0xff]
      %v5444 = vld [vmem:[%s6 + $0xf0] sm:$0xff]
      %v5445 = vld [vmem:[%s6 + $0xf8] sm:$0xff]
      %v5446 = vld [vmem:[%s6 + $0x100] sm:$0xff]
      %v5447 = vld [vmem:[%s6 + $0x108] sm:$0xff]
      %v5448 = vld [vmem:[%s6 + $0x110] sm:$0xff]
      %v5449 = vld [vmem:[%s6 + $0x118] sm:$0xff]
      %v5450 = vld [vmem:[%s6 + $0x120] sm:$0xff]
      %v5451 = vld [vmem:[%s6 + $0x128] sm:$0xff]
      %v5452 = vld [vmem:[%s6 + $0x130] sm:$0xff]
      %v5453 = vld [vmem:[%s6 + $0x138] sm:$0xff]
      %v5454 = vld [vmem:[%s6 + $0x140] sm:$0xff]
      %v5455 = vld [vmem:[%s6 + $0x148] sm:$0xff]
      %v5456 = vld [vmem:[%s6 + $0x150] sm:$0xff]
      %v5457 = vld [vmem:[%s6 + $0x158] sm:$0xff]
      %v5458 = vld [vmem:[%s6 + $0x160] sm:$0xff]
      %v5459 = vld [vmem:[%s6 + $0x168] sm:$0xff]
      %v5460 = vld [vmem:[%s6 + $0x170] sm:$0xff]
      %v5461 = vld [vmem:[%s6 + $0x178] sm:$0xff]
      %v5462 = vld [vmem:[%s6 + $0x180] sm:$0xff]
      %v5463 = vld [vmem:[%s6 + $0x188] sm:$0xff]
      %v5464 = vld [vmem:[%s6 + $0x190] sm:$0xff]
      %v5465 = vld [vmem:[%s6 + $0x198] sm:$0xff]
      %v5466 = vld [vmem:[%s6 + $0x1a0] sm:$0xff]
      %v5467 = vld [vmem:[%s6 + $0x1a8] sm:$0xff]
      %v5468 = vld [vmem:[%s6 + $0x1b0] sm:$0xff]
      %v5469 = vld [vmem:[%s6 + $0x1b8] sm:$0xff]
      %v5470 = vld [vmem:[%s6 + $0x1c0] sm:$0xff]
      %v5471 = vld [vmem:[%s6 + $0x1c8] sm:$0xff]
      %v5472 = vld [vmem:[%s6 + $0x1d0] sm:$0xff]
      %v5473 = vld [vmem:[%s6 + $0x1d8] sm:$0xff]
      %v5474 = vld [vmem:[%s6 + $0x1e0] sm:$0xff]
      %v5475 = vld [vmem:[%s6 + $0x1e8] sm:$0xff]
      %v5476 = vld [vmem:[%s6 + $0x1f0] sm:$0xff]
      %v5477 = vld [vmem:[%s6 + $0x1f8] sm:$0xff]
      %5479 = vset.pattern.permute.xlu0 0
      %5480 = vperm.xlu0 %5479, %v5414
      %v5481 = vpop.permute.xlu0 %5480
      %5484 = vset.pattern.permute.xlu0 0
      %5485 = vperm.xlu0 %5484, %v5415
      %v5486 = vpop.permute.xlu0 %5485
      %5489 = vset.pattern.permute.xlu0 0
      %5490 = vperm.xlu0 %5489, %v5416
      %v5491 = vpop.permute.xlu0 %5490
      %5494 = vset.pattern.permute.xlu0 0
      %5495 = vperm.xlu0 %5494, %v5417
      %v5496 = vpop.permute.xlu0 %5495
      %5499 = vset.pattern.permute.xlu0 0
      %5500 = vperm.xlu0 %5499, %v5418
      %v5501 = vpop.permute.xlu0 %5500
      %5504 = vset.pattern.permute.xlu0 0
      %5505 = vperm.xlu0 %5504, %v5419
      %v5506 = vpop.permute.xlu0 %5505
      %5509 = vset.pattern.permute.xlu0 0
      %5510 = vperm.xlu0 %5509, %v5420
      %v5511 = vpop.permute.xlu0 %5510
      %5514 = vset.pattern.permute.xlu0 0
      %5515 = vperm.xlu0 %5514, %v5421
      %v5516 = vpop.permute.xlu0 %5515
      %5519 = vset.pattern.permute.xlu0 0
      %5520 = vperm.xlu0 %5519, %v5422
      %v5521 = vpop.permute.xlu0 %5520
      %5524 = vset.pattern.permute.xlu0 0
      %5525 = vperm.xlu0 %5524, %v5423
      %v5526 = vpop.permute.xlu0 %5525
      %5529 = vset.pattern.permute.xlu0 0
      %5530 = vperm.xlu0 %5529, %v5424
      %v5531 = vpop.permute.xlu0 %5530
      %5534 = vset.pattern.permute.xlu0 0
      %5535 = vperm.xlu0 %5534, %v5425
      %v5536 = vpop.permute.xlu0 %5535
      %5539 = vset.pattern.permute.xlu0 0
      %5540 = vperm.xlu0 %5539, %v5426
      %v5541 = vpop.permute.xlu0 %5540
      %5544 = vset.pattern.permute.xlu0 0
      %5545 = vperm.xlu0 %5544, %v5427
      %v5546 = vpop.permute.xlu0 %5545
      %5549 = vset.pattern.permute.xlu0 0
      %5550 = vperm.xlu0 %5549, %v5428
      %v5551 = vpop.permute.xlu0 %5550
      %5554 = vset.pattern.permute.xlu0 0
      %5555 = vperm.xlu0 %5554, %v5429
      %v5556 = vpop.permute.xlu0 %5555
      %5559 = vset.pattern.permute.xlu0 0
      %5560 = vperm.xlu0 %5559, %v5430
      %v5561 = vpop.permute.xlu0 %5560
      %5564 = vset.pattern.permute.xlu0 0
      %5565 = vperm.xlu0 %5564, %v5431
      %v5566 = vpop.permute.xlu0 %5565
      %5569 = vset.pattern.permute.xlu0 0
      %5570 = vperm.xlu0 %5569, %v5432
      %v5571 = vpop.permute.xlu0 %5570
      %5574 = vset.pattern.permute.xlu0 0
      %5575 = vperm.xlu0 %5574, %v5433
      %v5576 = vpop.permute.xlu0 %5575
      %5579 = vset.pattern.permute.xlu0 0
      %5580 = vperm.xlu0 %5579, %v5434
      %v5581 = vpop.permute.xlu0 %5580
      %5584 = vset.pattern.permute.xlu0 0
      %5585 = vperm.xlu0 %5584, %v5435
      %v5586 = vpop.permute.xlu0 %5585
      %5589 = vset.pattern.permute.xlu0 0
      %5590 = vperm.xlu0 %5589, %v5436
      %v5591 = vpop.permute.xlu0 %5590
      %5594 = vset.pattern.permute.xlu0 0
      %5595 = vperm.xlu0 %5594, %v5437
      %v5596 = vpop.permute.xlu0 %5595
      %5599 = vset.pattern.permute.xlu0 0
      %5600 = vperm.xlu0 %5599, %v5438
      %v5601 = vpop.permute.xlu0 %5600
      %5604 = vset.pattern.permute.xlu0 0
      %5605 = vperm.xlu0 %5604, %v5439
      %v5606 = vpop.permute.xlu0 %5605
      %5609 = vset.pattern.permute.xlu0 0
      %5610 = vperm.xlu0 %5609, %v5440
      %v5611 = vpop.permute.xlu0 %5610
      %5614 = vset.pattern.permute.xlu0 0
      %5615 = vperm.xlu0 %5614, %v5441
      %v5616 = vpop.permute.xlu0 %5615
      %5619 = vset.pattern.permute.xlu0 0
      %5620 = vperm.xlu0 %5619, %v5442
      %v5621 = vpop.permute.xlu0 %5620
      %5624 = vset.pattern.permute.xlu0 0
      %5625 = vperm.xlu0 %5624, %v5443
      %v5626 = vpop.permute.xlu0 %5625
      %5629 = vset.pattern.permute.xlu0 0
      %5630 = vperm.xlu0 %5629, %v5444
      %v5631 = vpop.permute.xlu0 %5630
      %5634 = vset.pattern.permute.xlu0 0
      %5635 = vperm.xlu0 %5634, %v5445
      %v5636 = vpop.permute.xlu0 %5635
      %5639 = vset.pattern.permute.xlu0 0
      %5640 = vperm.xlu0 %5639, %v5446
      %v5641 = vpop.permute.xlu0 %5640
      %5644 = vset.pattern.permute.xlu0 0
      %5645 = vperm.xlu0 %5644, %v5447
      %v5646 = vpop.permute.xlu0 %5645
      %5649 = vset.pattern.permute.xlu0 0
      %5650 = vperm.xlu0 %5649, %v5448
      %v5651 = vpop.permute.xlu0 %5650
      %5654 = vset.pattern.permute.xlu0 0
      %5655 = vperm.xlu0 %5654, %v5449
      %v5656 = vpop.permute.xlu0 %5655
      %5659 = vset.pattern.permute.xlu0 0
      %5660 = vperm.xlu0 %5659, %v5450
      %v5661 = vpop.permute.xlu0 %5660
      %5664 = vset.pattern.permute.xlu0 0
      %5665 = vperm.xlu0 %5664, %v5451
      %v5666 = vpop.permute.xlu0 %5665
      %5669 = vset.pattern.permute.xlu0 0
      %5670 = vperm.xlu0 %5669, %v5452
      %v5671 = vpop.permute.xlu0 %5670
      %5674 = vset.pattern.permute.xlu0 0
      %5675 = vperm.xlu0 %5674, %v5453
      %v5676 = vpop.permute.xlu0 %5675
      %5679 = vset.pattern.permute.xlu0 0
      %5680 = vperm.xlu0 %5679, %v5454
      %v5681 = vpop.permute.xlu0 %5680
      %5684 = vset.pattern.permute.xlu0 0
      %5685 = vperm.xlu0 %5684, %v5455
      %v5686 = vpop.permute.xlu0 %5685
      %5689 = vset.pattern.permute.xlu0 0
      %5690 = vperm.xlu0 %5689, %v5456
      %v5691 = vpop.permute.xlu0 %5690
      %5694 = vset.pattern.permute.xlu0 0
      %5695 = vperm.xlu0 %5694, %v5457
      %v5696 = vpop.permute.xlu0 %5695
      %5699 = vset.pattern.permute.xlu0 0
      %5700 = vperm.xlu0 %5699, %v5458
      %v5701 = vpop.permute.xlu0 %5700
      %5704 = vset.pattern.permute.xlu0 0
      %5705 = vperm.xlu0 %5704, %v5459
      %v5706 = vpop.permute.xlu0 %5705
      %5709 = vset.pattern.permute.xlu0 0
      %5710 = vperm.xlu0 %5709, %v5460
      %v5711 = vpop.permute.xlu0 %5710
      %5714 = vset.pattern.permute.xlu0 0
      %5715 = vperm.xlu0 %5714, %v5461
      %v5716 = vpop.permute.xlu0 %5715
      %5719 = vset.pattern.permute.xlu0 0
      %5720 = vperm.xlu0 %5719, %v5462
      %v5721 = vpop.permute.xlu0 %5720
      %5724 = vset.pattern.permute.xlu0 0
      %5725 = vperm.xlu0 %5724, %v5463
      %v5726 = vpop.permute.xlu0 %5725
      %5729 = vset.pattern.permute.xlu0 0
      %5730 = vperm.xlu0 %5729, %v5464
      %v5731 = vpop.permute.xlu0 %5730
      %5734 = vset.pattern.permute.xlu0 0
      %5735 = vperm.xlu0 %5734, %v5465
      %v5736 = vpop.permute.xlu0 %5735
      %5739 = vset.pattern.permute.xlu0 0
      %5740 = vperm.xlu0 %5739, %v5466
      %v5741 = vpop.permute.xlu0 %5740
      %5744 = vset.pattern.permute.xlu0 0
      %5745 = vperm.xlu0 %5744, %v5467
      %v5746 = vpop.permute.xlu0 %5745
      %5749 = vset.pattern.permute.xlu0 0
      %5750 = vperm.xlu0 %5749, %v5468
      %v5751 = vpop.permute.xlu0 %5750
      %5754 = vset.pattern.permute.xlu0 0
      %5755 = vperm.xlu0 %5754, %v5469
      %v5756 = vpop.permute.xlu0 %5755
      %5759 = vset.pattern.permute.xlu0 0
      %5760 = vperm.xlu0 %5759, %v5470
      %v5761 = vpop.permute.xlu0 %5760
      %5764 = vset.pattern.permute.xlu0 0
      %5765 = vperm.xlu0 %5764, %v5471
      %v5766 = vpop.permute.xlu0 %5765
      %5769 = vset.pattern.permute.xlu0 0
      %5770 = vperm.xlu0 %5769, %v5472
      %v5771 = vpop.permute.xlu0 %5770
      %5774 = vset.pattern.permute.xlu0 0
      %5775 = vperm.xlu0 %5774, %v5473
      %v5776 = vpop.permute.xlu0 %5775
      %5779 = vset.pattern.permute.xlu0 0
      %5780 = vperm.xlu0 %5779, %v5474
      %v5781 = vpop.permute.xlu0 %5780
      %5784 = vset.pattern.permute.xlu0 0
      %5785 = vperm.xlu0 %5784, %v5475
      %v5786 = vpop.permute.xlu0 %5785
      %5789 = vset.pattern.permute.xlu0 0
      %5790 = vperm.xlu0 %5789, %v5476
      %v5791 = vpop.permute.xlu0 %5790
      %5794 = vset.pattern.permute.xlu0 0
      %5795 = vperm.xlu0 %5794, %v5477
      %v5796 = vpop.permute.xlu0 %5795
      %v5926 = vunpack.c.l.b16 %v5222
      %v5927 = vunpack.c.h.b16 %v5222
      %v5928 = vunpack.c.l.b16 %v5223
      %v5929 = vunpack.c.h.b16 %v5223
      %v5930 = vunpack.c.l.b16 %v5224
      %v5931 = vunpack.c.h.b16 %v5224
      %v5932 = vunpack.c.l.b16 %v5225
      %v5933 = vunpack.c.h.b16 %v5225
      %v5934 = vunpack.c.l.b16 %v5226
      %v5935 = vunpack.c.h.b16 %v5226
      %v5936 = vunpack.c.l.b16 %v5227
      %v5937 = vunpack.c.h.b16 %v5227
      %v5938 = vunpack.c.l.b16 %v5228
      %v5939 = vunpack.c.h.b16 %v5228
      %v5940 = vunpack.c.l.b16 %v5229
      %v5941 = vunpack.c.h.b16 %v5229
      %v5942 = vunpack.c.l.b16 %v5230
      %v5943 = vunpack.c.h.b16 %v5230
      %v5944 = vunpack.c.l.b16 %v5231
      %v5945 = vunpack.c.h.b16 %v5231
      %v5946 = vunpack.c.l.b16 %v5232
      %v5947 = vunpack.c.h.b16 %v5232
      %v5948 = vunpack.c.l.b16 %v5233
      %v5949 = vunpack.c.h.b16 %v5233
      %v5950 = vunpack.c.l.b16 %v5234
      %v5951 = vunpack.c.h.b16 %v5234
      %v5952 = vunpack.c.l.b16 %v5235
      %v5953 = vunpack.c.h.b16 %v5235
      %v5954 = vunpack.c.l.b16 %v5236
      %v5955 = vunpack.c.h.b16 %v5236
      %v5956 = vunpack.c.l.b16 %v5237
      %v5957 = vunpack.c.h.b16 %v5237
      %v5958 = vunpack.c.l.b16 %v5238
      %v5959 = vunpack.c.h.b16 %v5238
      %v5960 = vunpack.c.l.b16 %v5239
      %v5961 = vunpack.c.h.b16 %v5239
      %v5962 = vunpack.c.l.b16 %v5240
      %v5963 = vunpack.c.h.b16 %v5240
      %v5964 = vunpack.c.l.b16 %v5241
      %v5965 = vunpack.c.h.b16 %v5241
      %v5966 = vunpack.c.l.b16 %v5242
      %v5967 = vunpack.c.h.b16 %v5242
      %v5968 = vunpack.c.l.b16 %v5243
      %v5969 = vunpack.c.h.b16 %v5243
      %v5970 = vunpack.c.l.b16 %v5244
      %v5971 = vunpack.c.h.b16 %v5244
      %v5972 = vunpack.c.l.b16 %v5245
      %v5973 = vunpack.c.h.b16 %v5245
      %v5974 = vunpack.c.l.b16 %v5246
      %v5975 = vunpack.c.h.b16 %v5246
      %v5976 = vunpack.c.l.b16 %v5247
      %v5977 = vunpack.c.h.b16 %v5247
      %v5978 = vunpack.c.l.b16 %v5248
      %v5979 = vunpack.c.h.b16 %v5248
      %v5980 = vunpack.c.l.b16 %v5249
      %v5981 = vunpack.c.h.b16 %v5249
      %v5982 = vunpack.c.l.b16 %v5250
      %v5983 = vunpack.c.h.b16 %v5250
      %v5984 = vunpack.c.l.b16 %v5251
      %v5985 = vunpack.c.h.b16 %v5251
      %v5986 = vunpack.c.l.b16 %v5252
      %v5987 = vunpack.c.h.b16 %v5252
      %v5988 = vunpack.c.l.b16 %v5253
      %v5989 = vunpack.c.h.b16 %v5253
      %v5990 = vunpack.c.l.b16 %v5254
      %v5991 = vunpack.c.h.b16 %v5254
      %v5992 = vunpack.c.l.b16 %v5255
      %v5993 = vunpack.c.h.b16 %v5255
      %v5994 = vunpack.c.l.b16 %v5256
      %v5995 = vunpack.c.h.b16 %v5256
      %v5996 = vunpack.c.l.b16 %v5257
      %v5997 = vunpack.c.h.b16 %v5257
      %v5998 = vunpack.c.l.b16 %v5258
      %v5999 = vunpack.c.h.b16 %v5258
      %v6000 = vunpack.c.l.b16 %v5259
      %v6001 = vunpack.c.h.b16 %v5259
      %v6002 = vunpack.c.l.b16 %v5260
      %v6003 = vunpack.c.h.b16 %v5260
      %v6004 = vunpack.c.l.b16 %v5261
      %v6005 = vunpack.c.h.b16 %v5261
      %v6006 = vunpack.c.l.b16 %v5262
      %v6007 = vunpack.c.h.b16 %v5262
      %v6008 = vunpack.c.l.b16 %v5263
      %v6009 = vunpack.c.h.b16 %v5263
      %v6010 = vunpack.c.l.b16 %v5264
      %v6011 = vunpack.c.h.b16 %v5264
      %v6012 = vunpack.c.l.b16 %v5265
      %v6013 = vunpack.c.h.b16 %v5265
      %v6014 = vunpack.c.l.b16 %v5266
      %v6015 = vunpack.c.h.b16 %v5266
      %v6016 = vunpack.c.l.b16 %v5267
      %v6017 = vunpack.c.h.b16 %v5267
      %v6018 = vunpack.c.l.b16 %v5268
      %v6019 = vunpack.c.h.b16 %v5268
      %v6020 = vunpack.c.l.b16 %v5269
      %v6021 = vunpack.c.h.b16 %v5269
      %v6022 = vunpack.c.l.b16 %v5270
      %v6023 = vunpack.c.h.b16 %v5270
      %v6024 = vunpack.c.l.b16 %v5271
      %v6025 = vunpack.c.h.b16 %v5271
      %v6026 = vunpack.c.l.b16 %v5272
      %v6027 = vunpack.c.h.b16 %v5272
      %v6028 = vunpack.c.l.b16 %v5273
      %v6029 = vunpack.c.h.b16 %v5273
      %v6030 = vunpack.c.l.b16 %v5274
      %v6031 = vunpack.c.h.b16 %v5274
      %v6032 = vunpack.c.l.b16 %v5275
      %v6033 = vunpack.c.h.b16 %v5275
      %v6034 = vunpack.c.l.b16 %v5276
      %v6035 = vunpack.c.h.b16 %v5276
      %v6036 = vunpack.c.l.b16 %v5277
      %v6037 = vunpack.c.h.b16 %v5277
      %v6038 = vunpack.c.l.b16 %v5278
      %v6039 = vunpack.c.h.b16 %v5278
      %v6040 = vunpack.c.l.b16 %v5279
      %v6041 = vunpack.c.h.b16 %v5279
      %v6042 = vunpack.c.l.b16 %v5280
      %v6043 = vunpack.c.h.b16 %v5280
      %v6044 = vunpack.c.l.b16 %v5281
      %v6045 = vunpack.c.h.b16 %v5281
      %v6046 = vunpack.c.l.b16 %v5282
      %v6047 = vunpack.c.h.b16 %v5282
      %v6048 = vunpack.c.l.b16 %v5283
      %v6049 = vunpack.c.h.b16 %v5283
      %v6050 = vunpack.c.l.b16 %v5284
      %v6051 = vunpack.c.h.b16 %v5284
      %v6052 = vunpack.c.l.b16 %v5285
      %v6053 = vunpack.c.h.b16 %v5285
      %v6054 = vunpack.c.l.b16 %v5286
      %v6055 = vunpack.c.h.b16 %v5286
      %v6056 = vunpack.c.l.b16 %v5287
      %v6057 = vunpack.c.h.b16 %v5287
      %v6058 = vunpack.c.l.b16 %v5288
      %v6059 = vunpack.c.h.b16 %v5288
      %v6060 = vunpack.c.l.b16 %v5289
      %v6061 = vunpack.c.h.b16 %v5289
      %v6062 = vunpack.c.l.b16 %v5290
      %v6063 = vunpack.c.h.b16 %v5290
      %v6064 = vunpack.c.l.b16 %v5291
      %v6065 = vunpack.c.h.b16 %v5291
      %v6066 = vunpack.c.l.b16 %v5292
      %v6067 = vunpack.c.h.b16 %v5292
      %v6068 = vunpack.c.l.b16 %v5293
      %v6069 = vunpack.c.h.b16 %v5293
      %v6070 = vunpack.c.l.b16 %v5294
      %v6071 = vunpack.c.h.b16 %v5294
      %v6072 = vunpack.c.l.b16 %v5295
      %v6073 = vunpack.c.h.b16 %v5295
      %v6074 = vunpack.c.l.b16 %v5296
      %v6075 = vunpack.c.h.b16 %v5296
      %v6076 = vunpack.c.l.b16 %v5297
      %v6077 = vunpack.c.h.b16 %v5297
      %v6078 = vunpack.c.l.b16 %v5298
      %v6079 = vunpack.c.h.b16 %v5298
      %v6080 = vunpack.c.l.b16 %v5299
      %v6081 = vunpack.c.h.b16 %v5299
      %v6082 = vunpack.c.l.b16 %v5300
      %v6083 = vunpack.c.h.b16 %v5300
      %v6084 = vunpack.c.l.b16 %v5301
      %v6085 = vunpack.c.h.b16 %v5301
      %v6086 = vunpack.c.l.b16 %v5302
      %v6087 = vunpack.c.h.b16 %v5302
      %v6088 = vunpack.c.l.b16 %v5303
      %v6089 = vunpack.c.h.b16 %v5303
      %v6090 = vunpack.c.l.b16 %v5304
      %v6091 = vunpack.c.h.b16 %v5304
      %v6092 = vunpack.c.l.b16 %v5305
      %v6093 = vunpack.c.h.b16 %v5305
      %v6094 = vunpack.c.l.b16 %v5306
      %v6095 = vunpack.c.h.b16 %v5306
      %v6096 = vunpack.c.l.b16 %v5307
      %v6097 = vunpack.c.h.b16 %v5307
      %v6098 = vunpack.c.l.b16 %v5308
      %v6099 = vunpack.c.h.b16 %v5308
      %v6100 = vunpack.c.l.b16 %v5309
      %v6101 = vunpack.c.h.b16 %v5309
      %v6102 = vunpack.c.l.b16 %v5310
      %v6103 = vunpack.c.h.b16 %v5310
      %v6104 = vunpack.c.l.b16 %v5311
      %v6105 = vunpack.c.h.b16 %v5311
      %v6106 = vunpack.c.l.b16 %v5312
      %v6107 = vunpack.c.h.b16 %v5312
      %v6108 = vunpack.c.l.b16 %v5313
      %v6109 = vunpack.c.h.b16 %v5313
      %v6110 = vunpack.c.l.b16 %v5314
      %v6111 = vunpack.c.h.b16 %v5314
      %v6112 = vunpack.c.l.b16 %v5315
      %v6113 = vunpack.c.h.b16 %v5315
      %v6114 = vunpack.c.l.b16 %v5316
      %v6115 = vunpack.c.h.b16 %v5316
      %v6116 = vunpack.c.l.b16 %v5317
      %v6117 = vunpack.c.h.b16 %v5317
      %v6118 = vunpack.c.l.b16 %v5318
      %v6119 = vunpack.c.h.b16 %v5318
      %v6120 = vunpack.c.l.b16 %v5319
      %v6121 = vunpack.c.h.b16 %v5319
      %v6122 = vunpack.c.l.b16 %v5320
      %v6123 = vunpack.c.h.b16 %v5320
      %v6124 = vunpack.c.l.b16 %v5321
      %v6125 = vunpack.c.h.b16 %v5321
      %v6126 = vunpack.c.l.b16 %v5322
      %v6127 = vunpack.c.h.b16 %v5322
      %v6128 = vunpack.c.l.b16 %v5323
      %v6129 = vunpack.c.h.b16 %v5323
      %v6130 = vunpack.c.l.b16 %v5324
      %v6131 = vunpack.c.h.b16 %v5324
      %v6132 = vunpack.c.l.b16 %v5325
      %v6133 = vunpack.c.h.b16 %v5325
      %v6134 = vunpack.c.l.b16 %v5326
      %v6135 = vunpack.c.h.b16 %v5326
      %v6136 = vunpack.c.l.b16 %v5327
      %v6137 = vunpack.c.h.b16 %v5327
      %v6138 = vunpack.c.l.b16 %v5328
      %v6139 = vunpack.c.h.b16 %v5328
      %v6140 = vunpack.c.l.b16 %v5329
      %v6141 = vunpack.c.h.b16 %v5329
      %v6142 = vunpack.c.l.b16 %v5330
      %v6143 = vunpack.c.h.b16 %v5330
      %v6144 = vunpack.c.l.b16 %v5331
      %v6145 = vunpack.c.h.b16 %v5331
      %v6146 = vunpack.c.l.b16 %v5332
      %v6147 = vunpack.c.h.b16 %v5332
      %v6148 = vunpack.c.l.b16 %v5333
      %v6149 = vunpack.c.h.b16 %v5333
      %v6150 = vunpack.c.l.b16 %v5334
      %v6151 = vunpack.c.h.b16 %v5334
      %v6152 = vunpack.c.l.b16 %v5335
      %v6153 = vunpack.c.h.b16 %v5335
      %v6154 = vunpack.c.l.b16 %v5336
      %v6155 = vunpack.c.h.b16 %v5336
      %v6156 = vunpack.c.l.b16 %v5337
      %v6157 = vunpack.c.h.b16 %v5337
      %v6158 = vunpack.c.l.b16 %v5338
      %v6159 = vunpack.c.h.b16 %v5338
      %v6160 = vunpack.c.l.b16 %v5339
      %v6161 = vunpack.c.h.b16 %v5339
      %v6162 = vunpack.c.l.b16 %v5340
      %v6163 = vunpack.c.h.b16 %v5340
      %v6164 = vunpack.c.l.b16 %v5341
      %v6165 = vunpack.c.h.b16 %v5341
      %v6166 = vunpack.c.l.b16 %v5342
      %v6167 = vunpack.c.h.b16 %v5342
      %v6168 = vunpack.c.l.b16 %v5343
      %v6169 = vunpack.c.h.b16 %v5343
      %v6170 = vunpack.c.l.b16 %v5344
      %v6171 = vunpack.c.h.b16 %v5344
      %v6172 = vunpack.c.l.b16 %v5345
      %v6173 = vunpack.c.h.b16 %v5345
      %v6174 = vunpack.c.l.b16 %v5346
      %v6175 = vunpack.c.h.b16 %v5346
      %v6176 = vunpack.c.l.b16 %v5347
      %v6177 = vunpack.c.h.b16 %v5347
      %v6178 = vunpack.c.l.b16 %v5348
      %v6179 = vunpack.c.h.b16 %v5348
      %v6180 = vunpack.c.l.b16 %v5349
      %v6181 = vunpack.c.h.b16 %v5349
      %v6182 = vpack.c.b16 %v5930, %v5926
      %v6183 = vpack.c.b16 %v5931, %v5927
      %v6184 = vpack.c.b16 %v5932, %v5928
      %v6185 = vpack.c.b16 %v5933, %v5929
      %v6186 = vpack.c.b16 %v5938, %v5934
      %v6187 = vpack.c.b16 %v5939, %v5935
      %v6188 = vpack.c.b16 %v5940, %v5936
      %v6189 = vpack.c.b16 %v5941, %v5937
      %v6190 = vpack.c.b16 %v5946, %v5942
      %v6191 = vpack.c.b16 %v5947, %v5943
      %v6192 = vpack.c.b16 %v5948, %v5944
      %v6193 = vpack.c.b16 %v5949, %v5945
      %v6194 = vpack.c.b16 %v5954, %v5950
      %v6195 = vpack.c.b16 %v5955, %v5951
      %v6196 = vpack.c.b16 %v5956, %v5952
      %v6197 = vpack.c.b16 %v5957, %v5953
      %v6198 = vpack.c.b16 %v5962, %v5958
      %v6199 = vpack.c.b16 %v5963, %v5959
      %v6200 = vpack.c.b16 %v5964, %v5960
      %v6201 = vpack.c.b16 %v5965, %v5961
      %v6202 = vpack.c.b16 %v5970, %v5966
      %v6203 = vpack.c.b16 %v5971, %v5967
      %v6204 = vpack.c.b16 %v5972, %v5968
      %v6205 = vpack.c.b16 %v5973, %v5969
      %v6206 = vpack.c.b16 %v5978, %v5974
      %v6207 = vpack.c.b16 %v5979, %v5975
      %v6208 = vpack.c.b16 %v5980, %v5976
      %v6209 = vpack.c.b16 %v5981, %v5977
      %v6210 = vpack.c.b16 %v5986, %v5982
      %v6211 = vpack.c.b16 %v5987, %v5983
      %v6212 = vpack.c.b16 %v5988, %v5984
      %v6213 = vpack.c.b16 %v5989, %v5985
      %v6214 = vpack.c.b16 %v5994, %v5990
      %v6215 = vpack.c.b16 %v5995, %v5991
      %v6216 = vpack.c.b16 %v5996, %v5992
      %v6217 = vpack.c.b16 %v5997, %v5993
      %v6218 = vpack.c.b16 %v6002, %v5998
      %v6219 = vpack.c.b16 %v6003, %v5999
      %v6220 = vpack.c.b16 %v6004, %v6000
      %v6221 = vpack.c.b16 %v6005, %v6001
      %v6222 = vpack.c.b16 %v6010, %v6006
      %v6223 = vpack.c.b16 %v6011, %v6007
      %v6224 = vpack.c.b16 %v6012, %v6008
      %v6225 = vpack.c.b16 %v6013, %v6009
      %v6226 = vpack.c.b16 %v6018, %v6014
      %v6227 = vpack.c.b16 %v6019, %v6015
      %v6228 = vpack.c.b16 %v6020, %v6016
      %v6229 = vpack.c.b16 %v6021, %v6017
      %v6230 = vpack.c.b16 %v6026, %v6022
      %v6231 = vpack.c.b16 %v6027, %v6023
      %v6232 = vpack.c.b16 %v6028, %v6024
      %v6233 = vpack.c.b16 %v6029, %v6025
      %v6234 = vpack.c.b16 %v6034, %v6030
      %v6235 = vpack.c.b16 %v6035, %v6031
      %v6236 = vpack.c.b16 %v6036, %v6032
      %v6237 = vpack.c.b16 %v6037, %v6033
      %v6238 = vpack.c.b16 %v6042, %v6038
      %v6239 = vpack.c.b16 %v6043, %v6039
      %v6240 = vpack.c.b16 %v6044, %v6040
      %v6241 = vpack.c.b16 %v6045, %v6041
      %v6242 = vpack.c.b16 %v6050, %v6046
      %v6243 = vpack.c.b16 %v6051, %v6047
      %v6244 = vpack.c.b16 %v6052, %v6048
      %v6245 = vpack.c.b16 %v6053, %v6049
      %v6246 = vpack.c.b16 %v6058, %v6054
      %v6247 = vpack.c.b16 %v6059, %v6055
      %v6248 = vpack.c.b16 %v6060, %v6056
      %v6249 = vpack.c.b16 %v6061, %v6057
      %v6250 = vpack.c.b16 %v6066, %v6062
      %v6251 = vpack.c.b16 %v6067, %v6063
      %v6252 = vpack.c.b16 %v6068, %v6064
      %v6253 = vpack.c.b16 %v6069, %v6065
      %v6254 = vpack.c.b16 %v6074, %v6070
      %v6255 = vpack.c.b16 %v6075, %v6071
      %v6256 = vpack.c.b16 %v6076, %v6072
      %v6257 = vpack.c.b16 %v6077, %v6073
      %v6258 = vpack.c.b16 %v6082, %v6078
      %v6259 = vpack.c.b16 %v6083, %v6079
      %v6260 = vpack.c.b16 %v6084, %v6080
      %v6261 = vpack.c.b16 %v6085, %v6081
      %v6262 = vpack.c.b16 %v6090, %v6086
      %v6263 = vpack.c.b16 %v6091, %v6087
      %v6264 = vpack.c.b16 %v6092, %v6088
      %v6265 = vpack.c.b16 %v6093, %v6089
      %v6266 = vpack.c.b16 %v6098, %v6094
      %v6267 = vpack.c.b16 %v6099, %v6095
      %v6268 = vpack.c.b16 %v6100, %v6096
      %v6269 = vpack.c.b16 %v6101, %v6097
      %v6270 = vpack.c.b16 %v6106, %v6102
      %v6271 = vpack.c.b16 %v6107, %v6103
      %v6272 = vpack.c.b16 %v6108, %v6104
      %v6273 = vpack.c.b16 %v6109, %v6105
      %v6274 = vpack.c.b16 %v6114, %v6110
      %v6275 = vpack.c.b16 %v6115, %v6111
      %v6276 = vpack.c.b16 %v6116, %v6112
      %v6277 = vpack.c.b16 %v6117, %v6113
      %v6278 = vpack.c.b16 %v6122, %v6118
      %v6279 = vpack.c.b16 %v6123, %v6119
      %v6280 = vpack.c.b16 %v6124, %v6120
      %v6281 = vpack.c.b16 %v6125, %v6121
      %v6282 = vpack.c.b16 %v6130, %v6126
      %v6283 = vpack.c.b16 %v6131, %v6127
      %v6284 = vpack.c.b16 %v6132, %v6128
      %v6285 = vpack.c.b16 %v6133, %v6129
      %v6286 = vpack.c.b16 %v6138, %v6134
      %v6287 = vpack.c.b16 %v6139, %v6135
      %v6288 = vpack.c.b16 %v6140, %v6136
      %v6289 = vpack.c.b16 %v6141, %v6137
      %v6290 = vpack.c.b16 %v6146, %v6142
      %v6291 = vpack.c.b16 %v6147, %v6143
      %v6292 = vpack.c.b16 %v6148, %v6144
      %v6293 = vpack.c.b16 %v6149, %v6145
      %v6294 = vpack.c.b16 %v6154, %v6150
      %v6295 = vpack.c.b16 %v6155, %v6151
      %v6296 = vpack.c.b16 %v6156, %v6152
      %v6297 = vpack.c.b16 %v6157, %v6153
      %v6298 = vpack.c.b16 %v6162, %v6158
      %v6299 = vpack.c.b16 %v6163, %v6159
      %v6300 = vpack.c.b16 %v6164, %v6160
      %v6301 = vpack.c.b16 %v6165, %v6161
      %v6302 = vpack.c.b16 %v6170, %v6166
      %v6303 = vpack.c.b16 %v6171, %v6167
      %v6304 = vpack.c.b16 %v6172, %v6168
      %v6305 = vpack.c.b16 %v6173, %v6169
      %v6306 = vpack.c.b16 %v6178, %v6174
      %v6307 = vpack.c.b16 %v6179, %v6175
      %v6308 = vpack.c.b16 %v6180, %v6176
      %v6309 = vpack.c.b16 %v6181, %v6177
      %6438 = vmatpush.bf16.msra.mxu0 %v5364
      %6439 = vmatpush.bf16.msra.mxu0 %v5362
      %6440 = vmatpush.bf16.msra.mxu0 %v5360
      %6441 = vmatpush.bf16.msra.mxu0 %v5358
      %6442 = vmatpush.bf16.msra.mxu0 %v5356
      %6443 = vmatpush.bf16.msra.mxu0 %v5354
      %6444 = vmatpush.bf16.msra.mxu0 %v5352
      %6445 = vmatpush.bf16.msra.mxu0 %v5350
      %6446 = vmatmul.bf16.gmra.mxu0 %v6182
      %v6447 = vpop.f32.mrf.mxu0
      %v6448 = vadd.f32 %v5481, %v6447
      %v6449 = vpop.f32.mrf.mxu0
      %v6450 = vadd.f32 %v5486, %v6449
      %6451 = vmatmul.bf16.gmra.mxu0 %v6186
      %v6452 = vpop.f32.mrf.mxu0
      %v6453 = vadd.f32 %v5491, %v6452
      %v6454 = vpop.f32.mrf.mxu0
      %v6455 = vadd.f32 %v5496, %v6454
      %6456 = vmatmul.bf16.gmra.mxu0 %v6190
      %v6457 = vpop.f32.mrf.mxu0
      %v6458 = vadd.f32 %v5501, %v6457
      %v6459 = vpop.f32.mrf.mxu0
      %v6460 = vadd.f32 %v5506, %v6459
      %6461 = vmatmul.bf16.gmra.mxu0 %v6194
      %v6462 = vpop.f32.mrf.mxu0
      %v6463 = vadd.f32 %v5511, %v6462
      %v6464 = vpop.f32.mrf.mxu0
      %v6465 = vadd.f32 %v5516, %v6464
      %6466 = vmatmul.bf16.gmra.mxu0 %v6198
      %v6467 = vpop.f32.mrf.mxu0
      %v6468 = vadd.f32 %v5521, %v6467
      %v6469 = vpop.f32.mrf.mxu0
      %v6470 = vadd.f32 %v5526, %v6469
      %6471 = vmatmul.bf16.gmra.mxu0 %v6202
      %v6472 = vpop.f32.mrf.mxu0
      %v6473 = vadd.f32 %v5531, %v6472
      %v6474 = vpop.f32.mrf.mxu0
      %v6475 = vadd.f32 %v5536, %v6474
      %6476 = vmatmul.bf16.gmra.mxu0 %v6206
      %v6477 = vpop.f32.mrf.mxu0
      %v6478 = vadd.f32 %v5541, %v6477
      %v6479 = vpop.f32.mrf.mxu0
      %v6480 = vadd.f32 %v5546, %v6479
      %6481 = vmatmul.bf16.gmra.mxu0 %v6210
      %v6482 = vpop.f32.mrf.mxu0
      %v6483 = vadd.f32 %v5551, %v6482
      %v6484 = vpop.f32.mrf.mxu0
      %v6485 = vadd.f32 %v5556, %v6484
      %6486 = vmatmul.bf16.gmra.mxu0 %v6214
      %v6487 = vpop.f32.mrf.mxu0
      %v6488 = vadd.f32 %v5561, %v6487
      %v6489 = vpop.f32.mrf.mxu0
      %v6490 = vadd.f32 %v5566, %v6489
      %6491 = vmatmul.bf16.gmra.mxu0 %v6218
      %v6492 = vpop.f32.mrf.mxu0
      %v6493 = vadd.f32 %v5571, %v6492
      %v6494 = vpop.f32.mrf.mxu0
      %v6495 = vadd.f32 %v5576, %v6494
      %6496 = vmatmul.bf16.gmra.mxu0 %v6222
      %v6497 = vpop.f32.mrf.mxu0
      %v6498 = vadd.f32 %v5581, %v6497
      %v6499 = vpop.f32.mrf.mxu0
      %v6500 = vadd.f32 %v5586, %v6499
      %6501 = vmatmul.bf16.gmra.mxu0 %v6226
      %v6502 = vpop.f32.mrf.mxu0
      %v6503 = vadd.f32 %v5591, %v6502
      %v6504 = vpop.f32.mrf.mxu0
      %v6505 = vadd.f32 %v5596, %v6504
      %6506 = vmatmul.bf16.gmra.mxu0 %v6230
      %v6507 = vpop.f32.mrf.mxu0
      %v6508 = vadd.f32 %v5601, %v6507
      %v6509 = vpop.f32.mrf.mxu0
      %v6510 = vadd.f32 %v5606, %v6509
      %6511 = vmatmul.bf16.gmra.mxu0 %v6234
      %v6512 = vpop.f32.mrf.mxu0
      %v6513 = vadd.f32 %v5611, %v6512
      %v6514 = vpop.f32.mrf.mxu0
      %v6515 = vadd.f32 %v5616, %v6514
      %6516 = vmatmul.bf16.gmra.mxu0 %v6238
      %v6517 = vpop.f32.mrf.mxu0
      %v6518 = vadd.f32 %v5621, %v6517
      %v6519 = vpop.f32.mrf.mxu0
      %v6520 = vadd.f32 %v5626, %v6519
      %6521 = vmatmul.bf16.gmra.mxu0 %v6242
      %v6522 = vpop.f32.mrf.mxu0
      %v6523 = vadd.f32 %v5631, %v6522
      %v6524 = vpop.f32.mrf.mxu0
      %v6525 = vadd.f32 %v5636, %v6524
      %6526 = vmatmul.bf16.gmra.mxu0 %v6246
      %v6527 = vpop.f32.mrf.mxu0
      %v6528 = vadd.f32 %v5641, %v6527
      %v6529 = vpop.f32.mrf.mxu0
      %v6530 = vadd.f32 %v5646, %v6529
      %6531 = vmatmul.bf16.gmra.mxu0 %v6250
      %v6532 = vpop.f32.mrf.mxu0
      %v6533 = vadd.f32 %v5651, %v6532
      %v6534 = vpop.f32.mrf.mxu0
      %v6535 = vadd.f32 %v5656, %v6534
      %6536 = vmatmul.bf16.gmra.mxu0 %v6254
      %v6537 = vpop.f32.mrf.mxu0
      %v6538 = vadd.f32 %v5661, %v6537
      %v6539 = vpop.f32.mrf.mxu0
      %v6540 = vadd.f32 %v5666, %v6539
      %6541 = vmatmul.bf16.gmra.mxu0 %v6258
      %v6542 = vpop.f32.mrf.mxu0
      %v6543 = vadd.f32 %v5671, %v6542
      %v6544 = vpop.f32.mrf.mxu0
      %v6545 = vadd.f32 %v5676, %v6544
      %6546 = vmatmul.bf16.gmra.mxu0 %v6262
      %v6547 = vpop.f32.mrf.mxu0
      %v6548 = vadd.f32 %v5681, %v6547
      %v6549 = vpop.f32.mrf.mxu0
      %v6550 = vadd.f32 %v5686, %v6549
      %6551 = vmatmul.bf16.gmra.mxu0 %v6266
      %v6552 = vpop.f32.mrf.mxu0
      %v6553 = vadd.f32 %v5691, %v6552
      %v6554 = vpop.f32.mrf.mxu0
      %v6555 = vadd.f32 %v5696, %v6554
      %6556 = vmatmul.bf16.gmra.mxu0 %v6270
      %v6557 = vpop.f32.mrf.mxu0
      %v6558 = vadd.f32 %v5701, %v6557
      %v6559 = vpop.f32.mrf.mxu0
      %v6560 = vadd.f32 %v5706, %v6559
      %6561 = vmatmul.bf16.gmra.mxu0 %v6274
      %v6562 = vpop.f32.mrf.mxu0
      %v6563 = vadd.f32 %v5711, %v6562
      %v6564 = vpop.f32.mrf.mxu0
      %v6565 = vadd.f32 %v5716, %v6564
      %6566 = vmatmul.bf16.gmra.mxu0 %v6278
      %v6567 = vpop.f32.mrf.mxu0
      %v6568 = vadd.f32 %v5721, %v6567
      %v6569 = vpop.f32.mrf.mxu0
      %v6570 = vadd.f32 %v5726, %v6569
      %6571 = vmatmul.bf16.gmra.mxu0 %v6282
      %v6572 = vpop.f32.mrf.mxu0
      %v6573 = vadd.f32 %v5731, %v6572
      %v6574 = vpop.f32.mrf.mxu0
      %v6575 = vadd.f32 %v5736, %v6574
      %6576 = vmatmul.bf16.gmra.mxu0 %v6286
      %v6577 = vpop.f32.mrf.mxu0
      %v6578 = vadd.f32 %v5741, %v6577
      %v6579 = vpop.f32.mrf.mxu0
      %v6580 = vadd.f32 %v5746, %v6579
      %6581 = vmatmul.bf16.gmra.mxu0 %v6290
      %v6582 = vpop.f32.mrf.mxu0
      %v6583 = vadd.f32 %v5751, %v6582
      %v6584 = vpop.f32.mrf.mxu0
      %v6585 = vadd.f32 %v5756, %v6584
      %6586 = vmatmul.bf16.gmra.mxu0 %v6294
      %v6587 = vpop.f32.mrf.mxu0
      %v6588 = vadd.f32 %v5761, %v6587
      %v6589 = vpop.f32.mrf.mxu0
      %v6590 = vadd.f32 %v5766, %v6589
      %6591 = vmatmul.bf16.gmra.mxu0 %v6298
      %v6592 = vpop.f32.mrf.mxu0
      %v6593 = vadd.f32 %v5771, %v6592
      %v6594 = vpop.f32.mrf.mxu0
      %v6595 = vadd.f32 %v5776, %v6594
      %6596 = vmatmul.bf16.gmra.mxu0 %v6302
      %v6597 = vpop.f32.mrf.mxu0
      %v6598 = vadd.f32 %v5781, %v6597
      %v6599 = vpop.f32.mrf.mxu0
      %v6600 = vadd.f32 %v5786, %v6599
      %6601 = vmatmul.bf16.gmra.mxu0 %v6306
      %v6602 = vpop.f32.mrf.mxu0
      %v6603 = vadd.f32 %v5791, %v6602
      %v6604 = vpop.f32.mrf.mxu0
      %v6605 = vadd.f32 %v5796, %v6604
      %6606 = vdwg.mxu0
      %6607 = vmatpush.bf16.msra.mxu0 %v5380
      %6608 = vmatpush.bf16.msra.mxu0 %v5378
      %6609 = vmatpush.bf16.msra.mxu0 %v5376
      %6610 = vmatpush.bf16.msra.mxu0 %v5374
      %6611 = vmatpush.bf16.msra.mxu0 %v5372
      %6612 = vmatpush.bf16.msra.mxu0 %v5370
      %6613 = vmatpush.bf16.msra.mxu0 %v5368
      %6614 = vmatpush.bf16.msra.mxu0 %v5366
      %6615 = vmatmul.bf16.gmra.mxu0 %v6183
      %v6616 = vpop.f32.mrf.mxu0
      %v6617 = vadd.f32 %v6448, %v6616
      %v6618 = vpop.f32.mrf.mxu0
      %v6619 = vadd.f32 %v6450, %v6618
      %6620 = vmatmul.bf16.gmra.mxu0 %v6187
      %v6621 = vpop.f32.mrf.mxu0
      %v6622 = vadd.f32 %v6453, %v6621
      %v6623 = vpop.f32.mrf.mxu0
      %v6624 = vadd.f32 %v6455, %v6623
      %6625 = vmatmul.bf16.gmra.mxu0 %v6191
      %v6626 = vpop.f32.mrf.mxu0
      %v6627 = vadd.f32 %v6458, %v6626
      %v6628 = vpop.f32.mrf.mxu0
      %v6629 = vadd.f32 %v6460, %v6628
      %6630 = vmatmul.bf16.gmra.mxu0 %v6195
      %v6631 = vpop.f32.mrf.mxu0
      %v6632 = vadd.f32 %v6463, %v6631
      %v6633 = vpop.f32.mrf.mxu0
      %v6634 = vadd.f32 %v6465, %v6633
      %6635 = vmatmul.bf16.gmra.mxu0 %v6199
      %v6636 = vpop.f32.mrf.mxu0
      %v6637 = vadd.f32 %v6468, %v6636
      %v6638 = vpop.f32.mrf.mxu0
      %v6639 = vadd.f32 %v6470, %v6638
      %6640 = vmatmul.bf16.gmra.mxu0 %v6203
      %v6641 = vpop.f32.mrf.mxu0
      %v6642 = vadd.f32 %v6473, %v6641
      %v6643 = vpop.f32.mrf.mxu0
      %v6644 = vadd.f32 %v6475, %v6643
      %6645 = vmatmul.bf16.gmra.mxu0 %v6207
      %v6646 = vpop.f32.mrf.mxu0
      %v6647 = vadd.f32 %v6478, %v6646
      %v6648 = vpop.f32.mrf.mxu0
      %v6649 = vadd.f32 %v6480, %v6648
      %6650 = vmatmul.bf16.gmra.mxu0 %v6211
      %v6651 = vpop.f32.mrf.mxu0
      %v6652 = vadd.f32 %v6483, %v6651
      %v6653 = vpop.f32.mrf.mxu0
      %v6654 = vadd.f32 %v6485, %v6653
      %6655 = vmatmul.bf16.gmra.mxu0 %v6215
      %v6656 = vpop.f32.mrf.mxu0
      %v6657 = vadd.f32 %v6488, %v6656
      %v6658 = vpop.f32.mrf.mxu0
      %v6659 = vadd.f32 %v6490, %v6658
      %6660 = vmatmul.bf16.gmra.mxu0 %v6219
      %v6661 = vpop.f32.mrf.mxu0
      %v6662 = vadd.f32 %v6493, %v6661
      %v6663 = vpop.f32.mrf.mxu0
      %v6664 = vadd.f32 %v6495, %v6663
      %6665 = vmatmul.bf16.gmra.mxu0 %v6223
      %v6666 = vpop.f32.mrf.mxu0
      %v6667 = vadd.f32 %v6498, %v6666
      %v6668 = vpop.f32.mrf.mxu0
      %v6669 = vadd.f32 %v6500, %v6668
      %6670 = vmatmul.bf16.gmra.mxu0 %v6227
      %v6671 = vpop.f32.mrf.mxu0
      %v6672 = vadd.f32 %v6503, %v6671
      %v6673 = vpop.f32.mrf.mxu0
      %v6674 = vadd.f32 %v6505, %v6673
      %6675 = vmatmul.bf16.gmra.mxu0 %v6231
      %v6676 = vpop.f32.mrf.mxu0
      %v6677 = vadd.f32 %v6508, %v6676
      %v6678 = vpop.f32.mrf.mxu0
      %v6679 = vadd.f32 %v6510, %v6678
      %6680 = vmatmul.bf16.gmra.mxu0 %v6235
      %v6681 = vpop.f32.mrf.mxu0
      %v6682 = vadd.f32 %v6513, %v6681
      %v6683 = vpop.f32.mrf.mxu0
      %v6684 = vadd.f32 %v6515, %v6683
      %6685 = vmatmul.bf16.gmra.mxu0 %v6239
      %v6686 = vpop.f32.mrf.mxu0
      %v6687 = vadd.f32 %v6518, %v6686
      %v6688 = vpop.f32.mrf.mxu0
      %v6689 = vadd.f32 %v6520, %v6688
      %6690 = vmatmul.bf16.gmra.mxu0 %v6243
      %v6691 = vpop.f32.mrf.mxu0
      %v6692 = vadd.f32 %v6523, %v6691
      %v6693 = vpop.f32.mrf.mxu0
      %v6694 = vadd.f32 %v6525, %v6693
      %6695 = vmatmul.bf16.gmra.mxu0 %v6247
      %v6696 = vpop.f32.mrf.mxu0
      %v6697 = vadd.f32 %v6528, %v6696
      %v6698 = vpop.f32.mrf.mxu0
      %v6699 = vadd.f32 %v6530, %v6698
      %6700 = vmatmul.bf16.gmra.mxu0 %v6251
      %v6701 = vpop.f32.mrf.mxu0
      %v6702 = vadd.f32 %v6533, %v6701
      %v6703 = vpop.f32.mrf.mxu0
      %v6704 = vadd.f32 %v6535, %v6703
      %6705 = vmatmul.bf16.gmra.mxu0 %v6255
      %v6706 = vpop.f32.mrf.mxu0
      %v6707 = vadd.f32 %v6538, %v6706
      %v6708 = vpop.f32.mrf.mxu0
      %v6709 = vadd.f32 %v6540, %v6708
      %6710 = vmatmul.bf16.gmra.mxu0 %v6259
      %v6711 = vpop.f32.mrf.mxu0
      %v6712 = vadd.f32 %v6543, %v6711
      %v6713 = vpop.f32.mrf.mxu0
      %v6714 = vadd.f32 %v6545, %v6713
      %6715 = vmatmul.bf16.gmra.mxu0 %v6263
      %v6716 = vpop.f32.mrf.mxu0
      %v6717 = vadd.f32 %v6548, %v6716
      %v6718 = vpop.f32.mrf.mxu0
      %v6719 = vadd.f32 %v6550, %v6718
      %6720 = vmatmul.bf16.gmra.mxu0 %v6267
      %v6721 = vpop.f32.mrf.mxu0
      %v6722 = vadd.f32 %v6553, %v6721
      %v6723 = vpop.f32.mrf.mxu0
      %v6724 = vadd.f32 %v6555, %v6723
      %6725 = vmatmul.bf16.gmra.mxu0 %v6271
      %v6726 = vpop.f32.mrf.mxu0
      %v6727 = vadd.f32 %v6558, %v6726
      %v6728 = vpop.f32.mrf.mxu0
      %v6729 = vadd.f32 %v6560, %v6728
      %6730 = vmatmul.bf16.gmra.mxu0 %v6275
      %v6731 = vpop.f32.mrf.mxu0
      %v6732 = vadd.f32 %v6563, %v6731
      %v6733 = vpop.f32.mrf.mxu0
      %v6734 = vadd.f32 %v6565, %v6733
      %6735 = vmatmul.bf16.gmra.mxu0 %v6279
      %v6736 = vpop.f32.mrf.mxu0
      %v6737 = vadd.f32 %v6568, %v6736
      %v6738 = vpop.f32.mrf.mxu0
      %v6739 = vadd.f32 %v6570, %v6738
      %6740 = vmatmul.bf16.gmra.mxu0 %v6283
      %v6741 = vpop.f32.mrf.mxu0
      %v6742 = vadd.f32 %v6573, %v6741
      %v6743 = vpop.f32.mrf.mxu0
      %v6744 = vadd.f32 %v6575, %v6743
      %6745 = vmatmul.bf16.gmra.mxu0 %v6287
      %v6746 = vpop.f32.mrf.mxu0
      %v6747 = vadd.f32 %v6578, %v6746
      %v6748 = vpop.f32.mrf.mxu0
      %v6749 = vadd.f32 %v6580, %v6748
      %6750 = vmatmul.bf16.gmra.mxu0 %v6291
      %v6751 = vpop.f32.mrf.mxu0
      %v6752 = vadd.f32 %v6583, %v6751
      %v6753 = vpop.f32.mrf.mxu0
      %v6754 = vadd.f32 %v6585, %v6753
      %6755 = vmatmul.bf16.gmra.mxu0 %v6295
      %v6756 = vpop.f32.mrf.mxu0
      %v6757 = vadd.f32 %v6588, %v6756
      %v6758 = vpop.f32.mrf.mxu0
      %v6759 = vadd.f32 %v6590, %v6758
      %6760 = vmatmul.bf16.gmra.mxu0 %v6299
      %v6761 = vpop.f32.mrf.mxu0
      %v6762 = vadd.f32 %v6593, %v6761
      %v6763 = vpop.f32.mrf.mxu0
      %v6764 = vadd.f32 %v6595, %v6763
      %6765 = vmatmul.bf16.gmra.mxu0 %v6303
      %v6766 = vpop.f32.mrf.mxu0
      %v6767 = vadd.f32 %v6598, %v6766
      %v6768 = vpop.f32.mrf.mxu0
      %v6769 = vadd.f32 %v6600, %v6768
      %6770 = vmatmul.bf16.gmra.mxu0 %v6307
      %v6771 = vpop.f32.mrf.mxu0
      %v6772 = vadd.f32 %v6603, %v6771
      %v6773 = vpop.f32.mrf.mxu0
      %v6774 = vadd.f32 %v6605, %v6773
      %6775 = vdwg.mxu0
      %6776 = vmatpush.bf16.msra.mxu0 %v5396
      %6777 = vmatpush.bf16.msra.mxu0 %v5394
      %6778 = vmatpush.bf16.msra.mxu0 %v5392
      %6779 = vmatpush.bf16.msra.mxu0 %v5390
      %6780 = vmatpush.bf16.msra.mxu0 %v5388
      %6781 = vmatpush.bf16.msra.mxu0 %v5386
      %6782 = vmatpush.bf16.msra.mxu0 %v5384
      %6783 = vmatpush.bf16.msra.mxu0 %v5382
      %6784 = vmatmul.bf16.gmra.mxu0 %v6184
      %v6785 = vpop.f32.mrf.mxu0
      %v6786 = vadd.f32 %v6617, %v6785
      %v6787 = vpop.f32.mrf.mxu0
      %v6788 = vadd.f32 %v6619, %v6787
      %6789 = vmatmul.bf16.gmra.mxu0 %v6188
      %v6790 = vpop.f32.mrf.mxu0
      %v6791 = vadd.f32 %v6622, %v6790
      %v6792 = vpop.f32.mrf.mxu0
      %v6793 = vadd.f32 %v6624, %v6792
      %6794 = vmatmul.bf16.gmra.mxu0 %v6192
      %v6795 = vpop.f32.mrf.mxu0
      %v6796 = vadd.f32 %v6627, %v6795
      %v6797 = vpop.f32.mrf.mxu0
      %v6798 = vadd.f32 %v6629, %v6797
      %6799 = vmatmul.bf16.gmra.mxu0 %v6196
      %v6800 = vpop.f32.mrf.mxu0
      %v6801 = vadd.f32 %v6632, %v6800
      %v6802 = vpop.f32.mrf.mxu0
      %v6803 = vadd.f32 %v6634, %v6802
      %6804 = vmatmul.bf16.gmra.mxu0 %v6200
      %v6805 = vpop.f32.mrf.mxu0
      %v6806 = vadd.f32 %v6637, %v6805
      %v6807 = vpop.f32.mrf.mxu0
      %v6808 = vadd.f32 %v6639, %v6807
      %6809 = vmatmul.bf16.gmra.mxu0 %v6204
      %v6810 = vpop.f32.mrf.mxu0
      %v6811 = vadd.f32 %v6642, %v6810
      %v6812 = vpop.f32.mrf.mxu0
      %v6813 = vadd.f32 %v6644, %v6812
      %6814 = vmatmul.bf16.gmra.mxu0 %v6208
      %v6815 = vpop.f32.mrf.mxu0
      %v6816 = vadd.f32 %v6647, %v6815
      %v6817 = vpop.f32.mrf.mxu0
      %v6818 = vadd.f32 %v6649, %v6817
      %6819 = vmatmul.bf16.gmra.mxu0 %v6212
      %v6820 = vpop.f32.mrf.mxu0
      %v6821 = vadd.f32 %v6652, %v6820
      %v6822 = vpop.f32.mrf.mxu0
      %v6823 = vadd.f32 %v6654, %v6822
      %6824 = vmatmul.bf16.gmra.mxu0 %v6216
      %v6825 = vpop.f32.mrf.mxu0
      %v6826 = vadd.f32 %v6657, %v6825
      %v6827 = vpop.f32.mrf.mxu0
      %v6828 = vadd.f32 %v6659, %v6827
      %6829 = vmatmul.bf16.gmra.mxu0 %v6220
      %v6830 = vpop.f32.mrf.mxu0
      %v6831 = vadd.f32 %v6662, %v6830
      %v6832 = vpop.f32.mrf.mxu0
      %v6833 = vadd.f32 %v6664, %v6832
      %6834 = vmatmul.bf16.gmra.mxu0 %v6224
      %v6835 = vpop.f32.mrf.mxu0
      %v6836 = vadd.f32 %v6667, %v6835
      %v6837 = vpop.f32.mrf.mxu0
      %v6838 = vadd.f32 %v6669, %v6837
      %6839 = vmatmul.bf16.gmra.mxu0 %v6228
      %v6840 = vpop.f32.mrf.mxu0
      %v6841 = vadd.f32 %v6672, %v6840
      %v6842 = vpop.f32.mrf.mxu0
      %v6843 = vadd.f32 %v6674, %v6842
      %6844 = vmatmul.bf16.gmra.mxu0 %v6232
      %v6845 = vpop.f32.mrf.mxu0
      %v6846 = vadd.f32 %v6677, %v6845
      %v6847 = vpop.f32.mrf.mxu0
      %v6848 = vadd.f32 %v6679, %v6847
      %6849 = vmatmul.bf16.gmra.mxu0 %v6236
      %v6850 = vpop.f32.mrf.mxu0
      %v6851 = vadd.f32 %v6682, %v6850
      %v6852 = vpop.f32.mrf.mxu0
      %v6853 = vadd.f32 %v6684, %v6852
      %6854 = vmatmul.bf16.gmra.mxu0 %v6240
      %v6855 = vpop.f32.mrf.mxu0
      %v6856 = vadd.f32 %v6687, %v6855
      %v6857 = vpop.f32.mrf.mxu0
      %v6858 = vadd.f32 %v6689, %v6857
      %6859 = vmatmul.bf16.gmra.mxu0 %v6244
      %v6860 = vpop.f32.mrf.mxu0
      %v6861 = vadd.f32 %v6692, %v6860
      %v6862 = vpop.f32.mrf.mxu0
      %v6863 = vadd.f32 %v6694, %v6862
      %6864 = vmatmul.bf16.gmra.mxu0 %v6248
      %v6865 = vpop.f32.mrf.mxu0
      %v6866 = vadd.f32 %v6697, %v6865
      %v6867 = vpop.f32.mrf.mxu0
      %v6868 = vadd.f32 %v6699, %v6867
      %6869 = vmatmul.bf16.gmra.mxu0 %v6252
      %v6870 = vpop.f32.mrf.mxu0
      %v6871 = vadd.f32 %v6702, %v6870
      %v6872 = vpop.f32.mrf.mxu0
      %v6873 = vadd.f32 %v6704, %v6872
      %6874 = vmatmul.bf16.gmra.mxu0 %v6256
      %v6875 = vpop.f32.mrf.mxu0
      %v6876 = vadd.f32 %v6707, %v6875
      %v6877 = vpop.f32.mrf.mxu0
      %v6878 = vadd.f32 %v6709, %v6877
      %6879 = vmatmul.bf16.gmra.mxu0 %v6260
      %v6880 = vpop.f32.mrf.mxu0
      %v6881 = vadd.f32 %v6712, %v6880
      %v6882 = vpop.f32.mrf.mxu0
      %v6883 = vadd.f32 %v6714, %v6882
      %6884 = vmatmul.bf16.gmra.mxu0 %v6264
      %v6885 = vpop.f32.mrf.mxu0
      %v6886 = vadd.f32 %v6717, %v6885
      %v6887 = vpop.f32.mrf.mxu0
      %v6888 = vadd.f32 %v6719, %v6887
      %6889 = vmatmul.bf16.gmra.mxu0 %v6268
      %v6890 = vpop.f32.mrf.mxu0
      %v6891 = vadd.f32 %v6722, %v6890
      %v6892 = vpop.f32.mrf.mxu0
      %v6893 = vadd.f32 %v6724, %v6892
      %6894 = vmatmul.bf16.gmra.mxu0 %v6272
      %v6895 = vpop.f32.mrf.mxu0
      %v6896 = vadd.f32 %v6727, %v6895
      %v6897 = vpop.f32.mrf.mxu0
      %v6898 = vadd.f32 %v6729, %v6897
      %6899 = vmatmul.bf16.gmra.mxu0 %v6276
      %v6900 = vpop.f32.mrf.mxu0
      %v6901 = vadd.f32 %v6732, %v6900
      %v6902 = vpop.f32.mrf.mxu0
      %v6903 = vadd.f32 %v6734, %v6902
      %6904 = vmatmul.bf16.gmra.mxu0 %v6280
      %v6905 = vpop.f32.mrf.mxu0
      %v6906 = vadd.f32 %v6737, %v6905
      %v6907 = vpop.f32.mrf.mxu0
      %v6908 = vadd.f32 %v6739, %v6907
      %6909 = vmatmul.bf16.gmra.mxu0 %v6284
      %v6910 = vpop.f32.mrf.mxu0
      %v6911 = vadd.f32 %v6742, %v6910
      %v6912 = vpop.f32.mrf.mxu0
      %v6913 = vadd.f32 %v6744, %v6912
      %6914 = vmatmul.bf16.gmra.mxu0 %v6288
      %v6915 = vpop.f32.mrf.mxu0
      %v6916 = vadd.f32 %v6747, %v6915
      %v6917 = vpop.f32.mrf.mxu0
      %v6918 = vadd.f32 %v6749, %v6917
      %6919 = vmatmul.bf16.gmra.mxu0 %v6292
      %v6920 = vpop.f32.mrf.mxu0
      %v6921 = vadd.f32 %v6752, %v6920
      %v6922 = vpop.f32.mrf.mxu0
      %v6923 = vadd.f32 %v6754, %v6922
      %6924 = vmatmul.bf16.gmra.mxu0 %v6296
      %v6925 = vpop.f32.mrf.mxu0
      %v6926 = vadd.f32 %v6757, %v6925
      %v6927 = vpop.f32.mrf.mxu0
      %v6928 = vadd.f32 %v6759, %v6927
      %6929 = vmatmul.bf16.gmra.mxu0 %v6300
      %v6930 = vpop.f32.mrf.mxu0
      %v6931 = vadd.f32 %v6762, %v6930
      %v6932 = vpop.f32.mrf.mxu0
      %v6933 = vadd.f32 %v6764, %v6932
      %6934 = vmatmul.bf16.gmra.mxu0 %v6304
      %v6935 = vpop.f32.mrf.mxu0
      %v6936 = vadd.f32 %v6767, %v6935
      %v6937 = vpop.f32.mrf.mxu0
      %v6938 = vadd.f32 %v6769, %v6937
      %6939 = vmatmul.bf16.gmra.mxu0 %v6308
      %v6940 = vpop.f32.mrf.mxu0
      %v6941 = vadd.f32 %v6772, %v6940
      %v6942 = vpop.f32.mrf.mxu0
      %v6943 = vadd.f32 %v6774, %v6942
      %6944 = vdwg.mxu0
      %6945 = vmatpush.bf16.msra.mxu0 %v5412
      %6946 = vmatpush.bf16.msra.mxu0 %v5410
      %6947 = vmatpush.bf16.msra.mxu0 %v5408
      %6948 = vmatpush.bf16.msra.mxu0 %v5406
      %6949 = vmatpush.bf16.msra.mxu0 %v5404
      %6950 = vmatpush.bf16.msra.mxu0 %v5402
      %6951 = vmatpush.bf16.msra.mxu0 %v5400
      %6952 = vmatpush.bf16.msra.mxu0 %v5398
      %6953 = vmatmul.bf16.gmra.mxu0 %v6185
      %v6954 = vpop.f32.mrf.mxu0
      %v6955 = vadd.f32 %v6786, %v6954
      %v6956 = vpop.f32.mrf.mxu0
      %v6957 = vadd.f32 %v6788, %v6956
      %6958 = vmatmul.bf16.gmra.mxu0 %v6189
      %v6959 = vpop.f32.mrf.mxu0
      %v6960 = vadd.f32 %v6791, %v6959
      %v6961 = vpop.f32.mrf.mxu0
      %v6962 = vadd.f32 %v6793, %v6961
      %6963 = vmatmul.bf16.gmra.mxu0 %v6193
      %v6964 = vpop.f32.mrf.mxu0
      %v6965 = vadd.f32 %v6796, %v6964
      %v6966 = vpop.f32.mrf.mxu0
      %v6967 = vadd.f32 %v6798, %v6966
      %6968 = vmatmul.bf16.gmra.mxu0 %v6197
      %v6969 = vpop.f32.mrf.mxu0
      %v6970 = vadd.f32 %v6801, %v6969
      %v6971 = vpop.f32.mrf.mxu0
      %v6972 = vadd.f32 %v6803, %v6971
      %6973 = vmatmul.bf16.gmra.mxu0 %v6201
      %v6974 = vpop.f32.mrf.mxu0
      %v6975 = vadd.f32 %v6806, %v6974
      %v6976 = vpop.f32.mrf.mxu0
      %v6977 = vadd.f32 %v6808, %v6976
      %6978 = vmatmul.bf16.gmra.mxu0 %v6205
      %v6979 = vpop.f32.mrf.mxu0
      %v6980 = vadd.f32 %v6811, %v6979
      %v6981 = vpop.f32.mrf.mxu0
      %v6982 = vadd.f32 %v6813, %v6981
      %6983 = vmatmul.bf16.gmra.mxu0 %v6209
      %v6984 = vpop.f32.mrf.mxu0
      %v6985 = vadd.f32 %v6816, %v6984
      %v6986 = vpop.f32.mrf.mxu0
      %v6987 = vadd.f32 %v6818, %v6986
      %6988 = vmatmul.bf16.gmra.mxu0 %v6213
      %v6989 = vpop.f32.mrf.mxu0
      %v6990 = vadd.f32 %v6821, %v6989
      %v6991 = vpop.f32.mrf.mxu0
      %v6992 = vadd.f32 %v6823, %v6991
      %6993 = vmatmul.bf16.gmra.mxu0 %v6217
      %v6994 = vpop.f32.mrf.mxu0
      %v6995 = vadd.f32 %v6826, %v6994
      %v6996 = vpop.f32.mrf.mxu0
      %v6997 = vadd.f32 %v6828, %v6996
      %6998 = vmatmul.bf16.gmra.mxu0 %v6221
      %v6999 = vpop.f32.mrf.mxu0
      %v7000 = vadd.f32 %v6831, %v6999
      %v7001 = vpop.f32.mrf.mxu0
      %v7002 = vadd.f32 %v6833, %v7001
      %7003 = vmatmul.bf16.gmra.mxu0 %v6225
      %v7004 = vpop.f32.mrf.mxu0
      %v7005 = vadd.f32 %v6836, %v7004
      %v7006 = vpop.f32.mrf.mxu0
      %v7007 = vadd.f32 %v6838, %v7006
      %7008 = vmatmul.bf16.gmra.mxu0 %v6229
      %v7009 = vpop.f32.mrf.mxu0
      %v7010 = vadd.f32 %v6841, %v7009
      %v7011 = vpop.f32.mrf.mxu0
      %v7012 = vadd.f32 %v6843, %v7011
      %7013 = vmatmul.bf16.gmra.mxu0 %v6233
      %v7014 = vpop.f32.mrf.mxu0
      %v7015 = vadd.f32 %v6846, %v7014
      %v7016 = vpop.f32.mrf.mxu0
      %v7017 = vadd.f32 %v6848, %v7016
      %7018 = vmatmul.bf16.gmra.mxu0 %v6237
      %v7019 = vpop.f32.mrf.mxu0
      %v7020 = vadd.f32 %v6851, %v7019
      %v7021 = vpop.f32.mrf.mxu0
      %v7022 = vadd.f32 %v6853, %v7021
      %7023 = vmatmul.bf16.gmra.mxu0 %v6241
      %v7024 = vpop.f32.mrf.mxu0
      %v7025 = vadd.f32 %v6856, %v7024
      %v7026 = vpop.f32.mrf.mxu0
      %v7027 = vadd.f32 %v6858, %v7026
      %7028 = vmatmul.bf16.gmra.mxu0 %v6245
      %v7029 = vpop.f32.mrf.mxu0
      %v7030 = vadd.f32 %v6861, %v7029
      %v7031 = vpop.f32.mrf.mxu0
      %v7032 = vadd.f32 %v6863, %v7031
      %7033 = vmatmul.bf16.gmra.mxu0 %v6249
      %v7034 = vpop.f32.mrf.mxu0
      %v7035 = vadd.f32 %v6866, %v7034
      %v7036 = vpop.f32.mrf.mxu0
      %v7037 = vadd.f32 %v6868, %v7036
      %7038 = vmatmul.bf16.gmra.mxu0 %v6253
      %v7039 = vpop.f32.mrf.mxu0
      %v7040 = vadd.f32 %v6871, %v7039
      %v7041 = vpop.f32.mrf.mxu0
      %v7042 = vadd.f32 %v6873, %v7041
      %7043 = vmatmul.bf16.gmra.mxu0 %v6257
      %v7044 = vpop.f32.mrf.mxu0
      %v7045 = vadd.f32 %v6876, %v7044
      %v7046 = vpop.f32.mrf.mxu0
      %v7047 = vadd.f32 %v6878, %v7046
      %7048 = vmatmul.bf16.gmra.mxu0 %v6261
      %v7049 = vpop.f32.mrf.mxu0
      %v7050 = vadd.f32 %v6881, %v7049
      %v7051 = vpop.f32.mrf.mxu0
      %v7052 = vadd.f32 %v6883, %v7051
      %7053 = vmatmul.bf16.gmra.mxu0 %v6265
      %v7054 = vpop.f32.mrf.mxu0
      %v7055 = vadd.f32 %v6886, %v7054
      %v7056 = vpop.f32.mrf.mxu0
      %v7057 = vadd.f32 %v6888, %v7056
      %7058 = vmatmul.bf16.gmra.mxu0 %v6269
      %v7059 = vpop.f32.mrf.mxu0
      %v7060 = vadd.f32 %v6891, %v7059
      %v7061 = vpop.f32.mrf.mxu0
      %v7062 = vadd.f32 %v6893, %v7061
      %7063 = vmatmul.bf16.gmra.mxu0 %v6273
      %v7064 = vpop.f32.mrf.mxu0
      %v7065 = vadd.f32 %v6896, %v7064
      %v7066 = vpop.f32.mrf.mxu0
      %v7067 = vadd.f32 %v6898, %v7066
      %7068 = vmatmul.bf16.gmra.mxu0 %v6277
      %v7069 = vpop.f32.mrf.mxu0
      %v7070 = vadd.f32 %v6901, %v7069
      %v7071 = vpop.f32.mrf.mxu0
      %v7072 = vadd.f32 %v6903, %v7071
      %7073 = vmatmul.bf16.gmra.mxu0 %v6281
      %v7074 = vpop.f32.mrf.mxu0
      %v7075 = vadd.f32 %v6906, %v7074
      %v7076 = vpop.f32.mrf.mxu0
      %v7077 = vadd.f32 %v6908, %v7076
      %7078 = vmatmul.bf16.gmra.mxu0 %v6285
      %v7079 = vpop.f32.mrf.mxu0
      %v7080 = vadd.f32 %v6911, %v7079
      %v7081 = vpop.f32.mrf.mxu0
      %v7082 = vadd.f32 %v6913, %v7081
      %7083 = vmatmul.bf16.gmra.mxu0 %v6289
      %v7084 = vpop.f32.mrf.mxu0
      %v7085 = vadd.f32 %v6916, %v7084
      %v7086 = vpop.f32.mrf.mxu0
      %v7087 = vadd.f32 %v6918, %v7086
      %7088 = vmatmul.bf16.gmra.mxu0 %v6293
      %v7089 = vpop.f32.mrf.mxu0
      %v7090 = vadd.f32 %v6921, %v7089
      %v7091 = vpop.f32.mrf.mxu0
      %v7092 = vadd.f32 %v6923, %v7091
      %7093 = vmatmul.bf16.gmra.mxu0 %v6297
      %v7094 = vpop.f32.mrf.mxu0
      %v7095 = vadd.f32 %v6926, %v7094
      %v7096 = vpop.f32.mrf.mxu0
      %v7097 = vadd.f32 %v6928, %v7096
      %7098 = vmatmul.bf16.gmra.mxu0 %v6301
      %v7099 = vpop.f32.mrf.mxu0
      %v7100 = vadd.f32 %v6931, %v7099
      %v7101 = vpop.f32.mrf.mxu0
      %v7102 = vadd.f32 %v6933, %v7101
      %7103 = vmatmul.bf16.gmra.mxu0 %v6305
      %v7104 = vpop.f32.mrf.mxu0
      %v7105 = vadd.f32 %v6936, %v7104
      %v7106 = vpop.f32.mrf.mxu0
      %v7107 = vadd.f32 %v6938, %v7106
      %7108 = vmatmul.bf16.gmra.mxu0 %v6309
      %v7109 = vpop.f32.mrf.mxu0
      %v7110 = vadd.f32 %v6941, %v7109
      %v7111 = vpop.f32.mrf.mxu0
      %v7112 = vadd.f32 %v6943, %v7111
      %7113 = vdwg.mxu0
      %7114 = vmatpush.bf16.msra.mxu0 %v5365
      %7115 = vmatpush.bf16.msra.mxu0 %v5363
      %7116 = vmatpush.bf16.msra.mxu0 %v5361
      %7117 = vmatpush.bf16.msra.mxu0 %v5359
      %7118 = vmatpush.bf16.msra.mxu0 %v5357
      %7119 = vmatpush.bf16.msra.mxu0 %v5355
      %7120 = vmatpush.bf16.msra.mxu0 %v5353
      %7121 = vmatpush.bf16.msra.mxu0 %v5351
      %7122 = vmatmul.bf16.gmra.mxu0 %v6182
      %v7123 = vpop.f32.mrf.mxu0
      %v7124 = vadd.f32 %v5481, %v7123
      %v7125 = vpop.f32.mrf.mxu0
      %v7126 = vadd.f32 %v5486, %v7125
      %7127 = vmatmul.bf16.gmra.mxu0 %v6186
      %v7128 = vpop.f32.mrf.mxu0
      %v7129 = vadd.f32 %v5491, %v7128
      %v7130 = vpop.f32.mrf.mxu0
      %v7131 = vadd.f32 %v5496, %v7130
      %7132 = vmatmul.bf16.gmra.mxu0 %v6190
      %v7133 = vpop.f32.mrf.mxu0
      %v7134 = vadd.f32 %v5501, %v7133
      %v7135 = vpop.f32.mrf.mxu0
      %v7136 = vadd.f32 %v5506, %v7135
      %7137 = vmatmul.bf16.gmra.mxu0 %v6194
      %v7138 = vpop.f32.mrf.mxu0
      %v7139 = vadd.f32 %v5511, %v7138
      %v7140 = vpop.f32.mrf.mxu0
      %v7141 = vadd.f32 %v5516, %v7140
      %7142 = vmatmul.bf16.gmra.mxu0 %v6198
      %v7143 = vpop.f32.mrf.mxu0
      %v7144 = vadd.f32 %v5521, %v7143
      %v7145 = vpop.f32.mrf.mxu0
      %v7146 = vadd.f32 %v5526, %v7145
      %7147 = vmatmul.bf16.gmra.mxu0 %v6202
      %v7148 = vpop.f32.mrf.mxu0
      %v7149 = vadd.f32 %v5531, %v7148
      %v7150 = vpop.f32.mrf.mxu0
      %v7151 = vadd.f32 %v5536, %v7150
      %7152 = vmatmul.bf16.gmra.mxu0 %v6206
      %v7153 = vpop.f32.mrf.mxu0
      %v7154 = vadd.f32 %v5541, %v7153
      %v7155 = vpop.f32.mrf.mxu0
      %v7156 = vadd.f32 %v5546, %v7155
      %7157 = vmatmul.bf16.gmra.mxu0 %v6210
      %v7158 = vpop.f32.mrf.mxu0
      %v7159 = vadd.f32 %v5551, %v7158
      %v7160 = vpop.f32.mrf.mxu0
      %v7161 = vadd.f32 %v5556, %v7160
      %7162 = vmatmul.bf16.gmra.mxu0 %v6214
      %v7163 = vpop.f32.mrf.mxu0
      %v7164 = vadd.f32 %v5561, %v7163
      %v7165 = vpop.f32.mrf.mxu0
      %v7166 = vadd.f32 %v5566, %v7165
      %7167 = vmatmul.bf16.gmra.mxu0 %v6218
      %v7168 = vpop.f32.mrf.mxu0
      %v7169 = vadd.f32 %v5571, %v7168
      %v7170 = vpop.f32.mrf.mxu0
      %v7171 = vadd.f32 %v5576, %v7170
      %7172 = vmatmul.bf16.gmra.mxu0 %v6222
      %v7173 = vpop.f32.mrf.mxu0
      %v7174 = vadd.f32 %v5581, %v7173
      %v7175 = vpop.f32.mrf.mxu0
      %v7176 = vadd.f32 %v5586, %v7175
      %7177 = vmatmul.bf16.gmra.mxu0 %v6226
      %v7178 = vpop.f32.mrf.mxu0
      %v7179 = vadd.f32 %v5591, %v7178
      %v7180 = vpop.f32.mrf.mxu0
      %v7181 = vadd.f32 %v5596, %v7180
      %7182 = vmatmul.bf16.gmra.mxu0 %v6230
      %v7183 = vpop.f32.mrf.mxu0
      %v7184 = vadd.f32 %v5601, %v7183
      %v7185 = vpop.f32.mrf.mxu0
      %v7186 = vadd.f32 %v5606, %v7185
      %7187 = vmatmul.bf16.gmra.mxu0 %v6234
      %v7188 = vpop.f32.mrf.mxu0
      %v7189 = vadd.f32 %v5611, %v7188
      %v7190 = vpop.f32.mrf.mxu0
      %v7191 = vadd.f32 %v5616, %v7190
      %7192 = vmatmul.bf16.gmra.mxu0 %v6238
      %v7193 = vpop.f32.mrf.mxu0
      %v7194 = vadd.f32 %v5621, %v7193
      %v7195 = vpop.f32.mrf.mxu0
      %v7196 = vadd.f32 %v5626, %v7195
      %7197 = vmatmul.bf16.gmra.mxu0 %v6242
      %v7198 = vpop.f32.mrf.mxu0
      %v7199 = vadd.f32 %v5631, %v7198
      %v7200 = vpop.f32.mrf.mxu0
      %v7201 = vadd.f32 %v5636, %v7200
      %7202 = vmatmul.bf16.gmra.mxu0 %v6246
      %v7203 = vpop.f32.mrf.mxu0
      %v7204 = vadd.f32 %v5641, %v7203
      %v7205 = vpop.f32.mrf.mxu0
      %v7206 = vadd.f32 %v5646, %v7205
      %7207 = vmatmul.bf16.gmra.mxu0 %v6250
      %v7208 = vpop.f32.mrf.mxu0
      %v7209 = vadd.f32 %v5651, %v7208
      %v7210 = vpop.f32.mrf.mxu0
      %v7211 = vadd.f32 %v5656, %v7210
      %7212 = vmatmul.bf16.gmra.mxu0 %v6254
      %v7213 = vpop.f32.mrf.mxu0
      %v7214 = vadd.f32 %v5661, %v7213
      %v7215 = vpop.f32.mrf.mxu0
      %v7216 = vadd.f32 %v5666, %v7215
      %7217 = vmatmul.bf16.gmra.mxu0 %v6258
      %v7218 = vpop.f32.mrf.mxu0
      %v7219 = vadd.f32 %v5671, %v7218
      %v7220 = vpop.f32.mrf.mxu0
      %v7221 = vadd.f32 %v5676, %v7220
      %7222 = vmatmul.bf16.gmra.mxu0 %v6262
      %v7223 = vpop.f32.mrf.mxu0
      %v7224 = vadd.f32 %v5681, %v7223
      %v7225 = vpop.f32.mrf.mxu0
      %v7226 = vadd.f32 %v5686, %v7225
      %7227 = vmatmul.bf16.gmra.mxu0 %v6266
      %v7228 = vpop.f32.mrf.mxu0
      %v7229 = vadd.f32 %v5691, %v7228
      %v7230 = vpop.f32.mrf.mxu0
      %v7231 = vadd.f32 %v5696, %v7230
      %7232 = vmatmul.bf16.gmra.mxu0 %v6270
      %v7233 = vpop.f32.mrf.mxu0
      %v7234 = vadd.f32 %v5701, %v7233
      %v7235 = vpop.f32.mrf.mxu0
      %v7236 = vadd.f32 %v5706, %v7235
      %7237 = vmatmul.bf16.gmra.mxu0 %v6274
      %v7238 = vpop.f32.mrf.mxu0
      %v7239 = vadd.f32 %v5711, %v7238
      %v7240 = vpop.f32.mrf.mxu0
      %v7241 = vadd.f32 %v5716, %v7240
      %7242 = vmatmul.bf16.gmra.mxu0 %v6278
      %v7243 = vpop.f32.mrf.mxu0
      %v7244 = vadd.f32 %v5721, %v7243
      %v7245 = vpop.f32.mrf.mxu0
      %v7246 = vadd.f32 %v5726, %v7245
      %7247 = vmatmul.bf16.gmra.mxu0 %v6282
      %v7248 = vpop.f32.mrf.mxu0
      %v7249 = vadd.f32 %v5731, %v7248
      %v7250 = vpop.f32.mrf.mxu0
      %v7251 = vadd.f32 %v5736, %v7250
      %7252 = vmatmul.bf16.gmra.mxu0 %v6286
      %v7253 = vpop.f32.mrf.mxu0
      %v7254 = vadd.f32 %v5741, %v7253
      %v7255 = vpop.f32.mrf.mxu0
      %v7256 = vadd.f32 %v5746, %v7255
      %7257 = vmatmul.bf16.gmra.mxu0 %v6290
      %v7258 = vpop.f32.mrf.mxu0
      %v7259 = vadd.f32 %v5751, %v7258
      %v7260 = vpop.f32.mrf.mxu0
      %v7261 = vadd.f32 %v5756, %v7260
      %7262 = vmatmul.bf16.gmra.mxu0 %v6294
      %v7263 = vpop.f32.mrf.mxu0
      %v7264 = vadd.f32 %v5761, %v7263
      %v7265 = vpop.f32.mrf.mxu0
      %v7266 = vadd.f32 %v5766, %v7265
      %7267 = vmatmul.bf16.gmra.mxu0 %v6298
      %v7268 = vpop.f32.mrf.mxu0
      %v7269 = vadd.f32 %v5771, %v7268
      %v7270 = vpop.f32.mrf.mxu0
      %v7271 = vadd.f32 %v5776, %v7270
      %7272 = vmatmul.bf16.gmra.mxu0 %v6302
      %v7273 = vpop.f32.mrf.mxu0
      %v7274 = vadd.f32 %v5781, %v7273
      %v7275 = vpop.f32.mrf.mxu0
      %v7276 = vadd.f32 %v5786, %v7275
      %7277 = vmatmul.bf16.gmra.mxu0 %v6306
      %v7278 = vpop.f32.mrf.mxu0
      %v7279 = vadd.f32 %v5791, %v7278
      %v7280 = vpop.f32.mrf.mxu0
      %v7281 = vadd.f32 %v5796, %v7280
      %7282 = vdwg.mxu0
      %7283 = vmatpush.bf16.msra.mxu0 %v5381
      %7284 = vmatpush.bf16.msra.mxu0 %v5379
      %7285 = vmatpush.bf16.msra.mxu0 %v5377
      %7286 = vmatpush.bf16.msra.mxu0 %v5375
      %7287 = vmatpush.bf16.msra.mxu0 %v5373
      %7288 = vmatpush.bf16.msra.mxu0 %v5371
      %7289 = vmatpush.bf16.msra.mxu0 %v5369
      %7290 = vmatpush.bf16.msra.mxu0 %v5367
      %7291 = vmatmul.bf16.gmra.mxu0 %v6183
      %v7292 = vpop.f32.mrf.mxu0
      %v7293 = vadd.f32 %v7124, %v7292
      %v7294 = vpop.f32.mrf.mxu0
      %v7295 = vadd.f32 %v7126, %v7294
      %7296 = vmatmul.bf16.gmra.mxu0 %v6187
      %v7297 = vpop.f32.mrf.mxu0
      %v7298 = vadd.f32 %v7129, %v7297
      %v7299 = vpop.f32.mrf.mxu0
      %v7300 = vadd.f32 %v7131, %v7299
      %7301 = vmatmul.bf16.gmra.mxu0 %v6191
      %v7302 = vpop.f32.mrf.mxu0
      %v7303 = vadd.f32 %v7134, %v7302
      %v7304 = vpop.f32.mrf.mxu0
      %v7305 = vadd.f32 %v7136, %v7304
      %7306 = vmatmul.bf16.gmra.mxu0 %v6195
      %v7307 = vpop.f32.mrf.mxu0
      %v7308 = vadd.f32 %v7139, %v7307
      %v7309 = vpop.f32.mrf.mxu0
      %v7310 = vadd.f32 %v7141, %v7309
      %7311 = vmatmul.bf16.gmra.mxu0 %v6199
      %v7312 = vpop.f32.mrf.mxu0
      %v7313 = vadd.f32 %v7144, %v7312
      %v7314 = vpop.f32.mrf.mxu0
      %v7315 = vadd.f32 %v7146, %v7314
      %7316 = vmatmul.bf16.gmra.mxu0 %v6203
      %v7317 = vpop.f32.mrf.mxu0
      %v7318 = vadd.f32 %v7149, %v7317
      %v7319 = vpop.f32.mrf.mxu0
      %v7320 = vadd.f32 %v7151, %v7319
      %7321 = vmatmul.bf16.gmra.mxu0 %v6207
      %v7322 = vpop.f32.mrf.mxu0
      %v7323 = vadd.f32 %v7154, %v7322
      %v7324 = vpop.f32.mrf.mxu0
      %v7325 = vadd.f32 %v7156, %v7324
      %7326 = vmatmul.bf16.gmra.mxu0 %v6211
      %v7327 = vpop.f32.mrf.mxu0
      %v7328 = vadd.f32 %v7159, %v7327
      %v7329 = vpop.f32.mrf.mxu0
      %v7330 = vadd.f32 %v7161, %v7329
      %7331 = vmatmul.bf16.gmra.mxu0 %v6215
      %v7332 = vpop.f32.mrf.mxu0
      %v7333 = vadd.f32 %v7164, %v7332
      %v7334 = vpop.f32.mrf.mxu0
      %v7335 = vadd.f32 %v7166, %v7334
      %7336 = vmatmul.bf16.gmra.mxu0 %v6219
      %v7337 = vpop.f32.mrf.mxu0
      %v7338 = vadd.f32 %v7169, %v7337
      %v7339 = vpop.f32.mrf.mxu0
      %v7340 = vadd.f32 %v7171, %v7339
      %7341 = vmatmul.bf16.gmra.mxu0 %v6223
      %v7342 = vpop.f32.mrf.mxu0
      %v7343 = vadd.f32 %v7174, %v7342
      %v7344 = vpop.f32.mrf.mxu0
      %v7345 = vadd.f32 %v7176, %v7344
      %7346 = vmatmul.bf16.gmra.mxu0 %v6227
      %v7347 = vpop.f32.mrf.mxu0
      %v7348 = vadd.f32 %v7179, %v7347
      %v7349 = vpop.f32.mrf.mxu0
      %v7350 = vadd.f32 %v7181, %v7349
      %7351 = vmatmul.bf16.gmra.mxu0 %v6231
      %v7352 = vpop.f32.mrf.mxu0
      %v7353 = vadd.f32 %v7184, %v7352
      %v7354 = vpop.f32.mrf.mxu0
      %v7355 = vadd.f32 %v7186, %v7354
      %7356 = vmatmul.bf16.gmra.mxu0 %v6235
      %v7357 = vpop.f32.mrf.mxu0
      %v7358 = vadd.f32 %v7189, %v7357
      %v7359 = vpop.f32.mrf.mxu0
      %v7360 = vadd.f32 %v7191, %v7359
      %7361 = vmatmul.bf16.gmra.mxu0 %v6239
      %v7362 = vpop.f32.mrf.mxu0
      %v7363 = vadd.f32 %v7194, %v7362
      %v7364 = vpop.f32.mrf.mxu0
      %v7365 = vadd.f32 %v7196, %v7364
      %7366 = vmatmul.bf16.gmra.mxu0 %v6243
      %v7367 = vpop.f32.mrf.mxu0
      %v7368 = vadd.f32 %v7199, %v7367
      %v7369 = vpop.f32.mrf.mxu0
      %v7370 = vadd.f32 %v7201, %v7369
      %7371 = vmatmul.bf16.gmra.mxu0 %v6247
      %v7372 = vpop.f32.mrf.mxu0
      %v7373 = vadd.f32 %v7204, %v7372
      %v7374 = vpop.f32.mrf.mxu0
      %v7375 = vadd.f32 %v7206, %v7374
      %7376 = vmatmul.bf16.gmra.mxu0 %v6251
      %v7377 = vpop.f32.mrf.mxu0
      %v7378 = vadd.f32 %v7209, %v7377
      %v7379 = vpop.f32.mrf.mxu0
      %v7380 = vadd.f32 %v7211, %v7379
      %7381 = vmatmul.bf16.gmra.mxu0 %v6255
      %v7382 = vpop.f32.mrf.mxu0
      %v7383 = vadd.f32 %v7214, %v7382
      %v7384 = vpop.f32.mrf.mxu0
      %v7385 = vadd.f32 %v7216, %v7384
      %7386 = vmatmul.bf16.gmra.mxu0 %v6259
      %v7387 = vpop.f32.mrf.mxu0
      %v7388 = vadd.f32 %v7219, %v7387
      %v7389 = vpop.f32.mrf.mxu0
      %v7390 = vadd.f32 %v7221, %v7389
      %7391 = vmatmul.bf16.gmra.mxu0 %v6263
      %v7392 = vpop.f32.mrf.mxu0
      %v7393 = vadd.f32 %v7224, %v7392
      %v7394 = vpop.f32.mrf.mxu0
      %v7395 = vadd.f32 %v7226, %v7394
      %7396 = vmatmul.bf16.gmra.mxu0 %v6267
      %v7397 = vpop.f32.mrf.mxu0
      %v7398 = vadd.f32 %v7229, %v7397
      %v7399 = vpop.f32.mrf.mxu0
      %v7400 = vadd.f32 %v7231, %v7399
      %7401 = vmatmul.bf16.gmra.mxu0 %v6271
      %v7402 = vpop.f32.mrf.mxu0
      %v7403 = vadd.f32 %v7234, %v7402
      %v7404 = vpop.f32.mrf.mxu0
      %v7405 = vadd.f32 %v7236, %v7404
      %7406 = vmatmul.bf16.gmra.mxu0 %v6275
      %v7407 = vpop.f32.mrf.mxu0
      %v7408 = vadd.f32 %v7239, %v7407
      %v7409 = vpop.f32.mrf.mxu0
      %v7410 = vadd.f32 %v7241, %v7409
      %7411 = vmatmul.bf16.gmra.mxu0 %v6279
      %v7412 = vpop.f32.mrf.mxu0
      %v7413 = vadd.f32 %v7244, %v7412
      %v7414 = vpop.f32.mrf.mxu0
      %v7415 = vadd.f32 %v7246, %v7414
      %7416 = vmatmul.bf16.gmra.mxu0 %v6283
      %v7417 = vpop.f32.mrf.mxu0
      %v7418 = vadd.f32 %v7249, %v7417
      %v7419 = vpop.f32.mrf.mxu0
      %v7420 = vadd.f32 %v7251, %v7419
      %7421 = vmatmul.bf16.gmra.mxu0 %v6287
      %v7422 = vpop.f32.mrf.mxu0
      %v7423 = vadd.f32 %v7254, %v7422
      %v7424 = vpop.f32.mrf.mxu0
      %v7425 = vadd.f32 %v7256, %v7424
      %7426 = vmatmul.bf16.gmra.mxu0 %v6291
      %v7427 = vpop.f32.mrf.mxu0
      %v7428 = vadd.f32 %v7259, %v7427
      %v7429 = vpop.f32.mrf.mxu0
      %v7430 = vadd.f32 %v7261, %v7429
      %7431 = vmatmul.bf16.gmra.mxu0 %v6295
      %v7432 = vpop.f32.mrf.mxu0
      %v7433 = vadd.f32 %v7264, %v7432
      %v7434 = vpop.f32.mrf.mxu0
      %v7435 = vadd.f32 %v7266, %v7434
      %7436 = vmatmul.bf16.gmra.mxu0 %v6299
      %v7437 = vpop.f32.mrf.mxu0
      %v7438 = vadd.f32 %v7269, %v7437
      %v7439 = vpop.f32.mrf.mxu0
      %v7440 = vadd.f32 %v7271, %v7439
      %7441 = vmatmul.bf16.gmra.mxu0 %v6303
      %v7442 = vpop.f32.mrf.mxu0
      %v7443 = vadd.f32 %v7274, %v7442
      %v7444 = vpop.f32.mrf.mxu0
      %v7445 = vadd.f32 %v7276, %v7444
      %7446 = vmatmul.bf16.gmra.mxu0 %v6307
      %v7447 = vpop.f32.mrf.mxu0
      %v7448 = vadd.f32 %v7279, %v7447
      %v7449 = vpop.f32.mrf.mxu0
      %v7450 = vadd.f32 %v7281, %v7449
      %7451 = vdwg.mxu0
      %7452 = vmatpush.bf16.msra.mxu0 %v5397
      %7453 = vmatpush.bf16.msra.mxu0 %v5395
      %7454 = vmatpush.bf16.msra.mxu0 %v5393
      %7455 = vmatpush.bf16.msra.mxu0 %v5391
      %7456 = vmatpush.bf16.msra.mxu0 %v5389
      %7457 = vmatpush.bf16.msra.mxu0 %v5387
      %7458 = vmatpush.bf16.msra.mxu0 %v5385
      %7459 = vmatpush.bf16.msra.mxu0 %v5383
      %7460 = vmatmul.bf16.gmra.mxu0 %v6184
      %v7461 = vpop.f32.mrf.mxu0
      %v7462 = vadd.f32 %v7293, %v7461
      %v7463 = vpop.f32.mrf.mxu0
      %v7464 = vadd.f32 %v7295, %v7463
      %7465 = vmatmul.bf16.gmra.mxu0 %v6188
      %v7466 = vpop.f32.mrf.mxu0
      %v7467 = vadd.f32 %v7298, %v7466
      %v7468 = vpop.f32.mrf.mxu0
      %v7469 = vadd.f32 %v7300, %v7468
      %7470 = vmatmul.bf16.gmra.mxu0 %v6192
      %v7471 = vpop.f32.mrf.mxu0
      %v7472 = vadd.f32 %v7303, %v7471
      %v7473 = vpop.f32.mrf.mxu0
      %v7474 = vadd.f32 %v7305, %v7473
      %7475 = vmatmul.bf16.gmra.mxu0 %v6196
      %v7476 = vpop.f32.mrf.mxu0
      %v7477 = vadd.f32 %v7308, %v7476
      %v7478 = vpop.f32.mrf.mxu0
      %v7479 = vadd.f32 %v7310, %v7478
      %7480 = vmatmul.bf16.gmra.mxu0 %v6200
      %v7481 = vpop.f32.mrf.mxu0
      %v7482 = vadd.f32 %v7313, %v7481
      %v7483 = vpop.f32.mrf.mxu0
      %v7484 = vadd.f32 %v7315, %v7483
      %7485 = vmatmul.bf16.gmra.mxu0 %v6204
      %v7486 = vpop.f32.mrf.mxu0
      %v7487 = vadd.f32 %v7318, %v7486
      %v7488 = vpop.f32.mrf.mxu0
      %v7489 = vadd.f32 %v7320, %v7488
      %7490 = vmatmul.bf16.gmra.mxu0 %v6208
      %v7491 = vpop.f32.mrf.mxu0
      %v7492 = vadd.f32 %v7323, %v7491
      %v7493 = vpop.f32.mrf.mxu0
      %v7494 = vadd.f32 %v7325, %v7493
      %7495 = vmatmul.bf16.gmra.mxu0 %v6212
      %v7496 = vpop.f32.mrf.mxu0
      %v7497 = vadd.f32 %v7328, %v7496
      %v7498 = vpop.f32.mrf.mxu0
      %v7499 = vadd.f32 %v7330, %v7498
      %7500 = vmatmul.bf16.gmra.mxu0 %v6216
      %v7501 = vpop.f32.mrf.mxu0
      %v7502 = vadd.f32 %v7333, %v7501
      %v7503 = vpop.f32.mrf.mxu0
      %v7504 = vadd.f32 %v7335, %v7503
      %7505 = vmatmul.bf16.gmra.mxu0 %v6220
      %v7506 = vpop.f32.mrf.mxu0
      %v7507 = vadd.f32 %v7338, %v7506
      %v7508 = vpop.f32.mrf.mxu0
      %v7509 = vadd.f32 %v7340, %v7508
      %7510 = vmatmul.bf16.gmra.mxu0 %v6224
      %v7511 = vpop.f32.mrf.mxu0
      %v7512 = vadd.f32 %v7343, %v7511
      %v7513 = vpop.f32.mrf.mxu0
      %v7514 = vadd.f32 %v7345, %v7513
      %7515 = vmatmul.bf16.gmra.mxu0 %v6228
      %v7516 = vpop.f32.mrf.mxu0
      %v7517 = vadd.f32 %v7348, %v7516
      %v7518 = vpop.f32.mrf.mxu0
      %v7519 = vadd.f32 %v7350, %v7518
      %7520 = vmatmul.bf16.gmra.mxu0 %v6232
      %v7521 = vpop.f32.mrf.mxu0
      %v7522 = vadd.f32 %v7353, %v7521
      %v7523 = vpop.f32.mrf.mxu0
      %v7524 = vadd.f32 %v7355, %v7523
      %7525 = vmatmul.bf16.gmra.mxu0 %v6236
      %v7526 = vpop.f32.mrf.mxu0
      %v7527 = vadd.f32 %v7358, %v7526
      %v7528 = vpop.f32.mrf.mxu0
      %v7529 = vadd.f32 %v7360, %v7528
      %7530 = vmatmul.bf16.gmra.mxu0 %v6240
      %v7531 = vpop.f32.mrf.mxu0
      %v7532 = vadd.f32 %v7363, %v7531
      %v7533 = vpop.f32.mrf.mxu0
      %v7534 = vadd.f32 %v7365, %v7533
      %7535 = vmatmul.bf16.gmra.mxu0 %v6244
      %v7536 = vpop.f32.mrf.mxu0
      %v7537 = vadd.f32 %v7368, %v7536
      %v7538 = vpop.f32.mrf.mxu0
      %v7539 = vadd.f32 %v7370, %v7538
      %7540 = vmatmul.bf16.gmra.mxu0 %v6248
      %v7541 = vpop.f32.mrf.mxu0
      %v7542 = vadd.f32 %v7373, %v7541
      %v7543 = vpop.f32.mrf.mxu0
      %v7544 = vadd.f32 %v7375, %v7543
      %7545 = vmatmul.bf16.gmra.mxu0 %v6252
      %v7546 = vpop.f32.mrf.mxu0
      %v7547 = vadd.f32 %v7378, %v7546
      %v7548 = vpop.f32.mrf.mxu0
      %v7549 = vadd.f32 %v7380, %v7548
      %7550 = vmatmul.bf16.gmra.mxu0 %v6256
      %v7551 = vpop.f32.mrf.mxu0
      %v7552 = vadd.f32 %v7383, %v7551
      %v7553 = vpop.f32.mrf.mxu0
      %v7554 = vadd.f32 %v7385, %v7553
      %7555 = vmatmul.bf16.gmra.mxu0 %v6260
      %v7556 = vpop.f32.mrf.mxu0
      %v7557 = vadd.f32 %v7388, %v7556
      %v7558 = vpop.f32.mrf.mxu0
      %v7559 = vadd.f32 %v7390, %v7558
      %7560 = vmatmul.bf16.gmra.mxu0 %v6264
      %v7561 = vpop.f32.mrf.mxu0
      %v7562 = vadd.f32 %v7393, %v7561
      %v7563 = vpop.f32.mrf.mxu0
      %v7564 = vadd.f32 %v7395, %v7563
      %7565 = vmatmul.bf16.gmra.mxu0 %v6268
      %v7566 = vpop.f32.mrf.mxu0
      %v7567 = vadd.f32 %v7398, %v7566
      %v7568 = vpop.f32.mrf.mxu0
      %v7569 = vadd.f32 %v7400, %v7568
      %7570 = vmatmul.bf16.gmra.mxu0 %v6272
      %v7571 = vpop.f32.mrf.mxu0
      %v7572 = vadd.f32 %v7403, %v7571
      %v7573 = vpop.f32.mrf.mxu0
      %v7574 = vadd.f32 %v7405, %v7573
      %7575 = vmatmul.bf16.gmra.mxu0 %v6276
      %v7576 = vpop.f32.mrf.mxu0
      %v7577 = vadd.f32 %v7408, %v7576
      %v7578 = vpop.f32.mrf.mxu0
      %v7579 = vadd.f32 %v7410, %v7578
      %7580 = vmatmul.bf16.gmra.mxu0 %v6280
      %v7581 = vpop.f32.mrf.mxu0
      %v7582 = vadd.f32 %v7413, %v7581
      %v7583 = vpop.f32.mrf.mxu0
      %v7584 = vadd.f32 %v7415, %v7583
      %7585 = vmatmul.bf16.gmra.mxu0 %v6284
      %v7586 = vpop.f32.mrf.mxu0
      %v7587 = vadd.f32 %v7418, %v7586
      %v7588 = vpop.f32.mrf.mxu0
      %v7589 = vadd.f32 %v7420, %v7588
      %7590 = vmatmul.bf16.gmra.mxu0 %v6288
      %v7591 = vpop.f32.mrf.mxu0
      %v7592 = vadd.f32 %v7423, %v7591
      %v7593 = vpop.f32.mrf.mxu0
      %v7594 = vadd.f32 %v7425, %v7593
      %7595 = vmatmul.bf16.gmra.mxu0 %v6292
      %v7596 = vpop.f32.mrf.mxu0
      %v7597 = vadd.f32 %v7428, %v7596
      %v7598 = vpop.f32.mrf.mxu0
      %v7599 = vadd.f32 %v7430, %v7598
      %7600 = vmatmul.bf16.gmra.mxu0 %v6296
      %v7601 = vpop.f32.mrf.mxu0
      %v7602 = vadd.f32 %v7433, %v7601
      %v7603 = vpop.f32.mrf.mxu0
      %v7604 = vadd.f32 %v7435, %v7603
      %7605 = vmatmul.bf16.gmra.mxu0 %v6300
      %v7606 = vpop.f32.mrf.mxu0
      %v7607 = vadd.f32 %v7438, %v7606
      %v7608 = vpop.f32.mrf.mxu0
      %v7609 = vadd.f32 %v7440, %v7608
      %7610 = vmatmul.bf16.gmra.mxu0 %v6304
      %v7611 = vpop.f32.mrf.mxu0
      %v7612 = vadd.f32 %v7443, %v7611
      %v7613 = vpop.f32.mrf.mxu0
      %v7614 = vadd.f32 %v7445, %v7613
      %7615 = vmatmul.bf16.gmra.mxu0 %v6308
      %v7616 = vpop.f32.mrf.mxu0
      %v7617 = vadd.f32 %v7448, %v7616
      %v7618 = vpop.f32.mrf.mxu0
      %v7619 = vadd.f32 %v7450, %v7618
      %7620 = vdwg.mxu0
      %7621 = vmatpush.bf16.msra.mxu0 %v5413
      %7622 = vmatpush.bf16.msra.mxu0 %v5411
      %7623 = vmatpush.bf16.msra.mxu0 %v5409
      %7624 = vmatpush.bf16.msra.mxu0 %v5407
      %7625 = vmatpush.bf16.msra.mxu0 %v5405
      %7626 = vmatpush.bf16.msra.mxu0 %v5403
      %7627 = vmatpush.bf16.msra.mxu0 %v5401
      %7628 = vmatpush.bf16.msra.mxu0 %v5399
      %7629 = vmatmul.bf16.gmra.mxu0 %v6185
      %v7630 = vpop.f32.mrf.mxu0
      %v7631 = vadd.f32 %v7462, %v7630
      %v7632 = vpop.f32.mrf.mxu0
      %v7633 = vadd.f32 %v7464, %v7632
      %7634 = vmatmul.bf16.gmra.mxu0 %v6189
      %v7635 = vpop.f32.mrf.mxu0
      %v7636 = vadd.f32 %v7467, %v7635
      %v7637 = vpop.f32.mrf.mxu0
      %v7638 = vadd.f32 %v7469, %v7637
      %7639 = vmatmul.bf16.gmra.mxu0 %v6193
      %v7640 = vpop.f32.mrf.mxu0
      %v7641 = vadd.f32 %v7472, %v7640
      %v7642 = vpop.f32.mrf.mxu0
      %v7643 = vadd.f32 %v7474, %v7642
      %7644 = vmatmul.bf16.gmra.mxu0 %v6197
      %v7645 = vpop.f32.mrf.mxu0
      %v7646 = vadd.f32 %v7477, %v7645
      %v7647 = vpop.f32.mrf.mxu0
      %v7648 = vadd.f32 %v7479, %v7647
      %7649 = vmatmul.bf16.gmra.mxu0 %v6201
      %v7650 = vpop.f32.mrf.mxu0
      %v7651 = vadd.f32 %v7482, %v7650
      %v7652 = vpop.f32.mrf.mxu0
      %v7653 = vadd.f32 %v7484, %v7652
      %7654 = vmatmul.bf16.gmra.mxu0 %v6205
      %v7655 = vpop.f32.mrf.mxu0
      %v7656 = vadd.f32 %v7487, %v7655
      %v7657 = vpop.f32.mrf.mxu0
      %v7658 = vadd.f32 %v7489, %v7657
      %7659 = vmatmul.bf16.gmra.mxu0 %v6209
      %v7660 = vpop.f32.mrf.mxu0
      %v7661 = vadd.f32 %v7492, %v7660
      %v7662 = vpop.f32.mrf.mxu0
      %v7663 = vadd.f32 %v7494, %v7662
      %7664 = vmatmul.bf16.gmra.mxu0 %v6213
      %v7665 = vpop.f32.mrf.mxu0
      %v7666 = vadd.f32 %v7497, %v7665
      %v7667 = vpop.f32.mrf.mxu0
      %v7668 = vadd.f32 %v7499, %v7667
      %7669 = vmatmul.bf16.gmra.mxu0 %v6217
      %v7670 = vpop.f32.mrf.mxu0
      %v7671 = vadd.f32 %v7502, %v7670
      %v7672 = vpop.f32.mrf.mxu0
      %v7673 = vadd.f32 %v7504, %v7672
      %7674 = vmatmul.bf16.gmra.mxu0 %v6221
      %v7675 = vpop.f32.mrf.mxu0
      %v7676 = vadd.f32 %v7507, %v7675
      %v7677 = vpop.f32.mrf.mxu0
      %v7678 = vadd.f32 %v7509, %v7677
      %7679 = vmatmul.bf16.gmra.mxu0 %v6225
      %v7680 = vpop.f32.mrf.mxu0
      %v7681 = vadd.f32 %v7512, %v7680
      %v7682 = vpop.f32.mrf.mxu0
      %v7683 = vadd.f32 %v7514, %v7682
      %7684 = vmatmul.bf16.gmra.mxu0 %v6229
      %v7685 = vpop.f32.mrf.mxu0
      %v7686 = vadd.f32 %v7517, %v7685
      %v7687 = vpop.f32.mrf.mxu0
      %v7688 = vadd.f32 %v7519, %v7687
      %7689 = vmatmul.bf16.gmra.mxu0 %v6233
      %v7690 = vpop.f32.mrf.mxu0
      %v7691 = vadd.f32 %v7522, %v7690
      %v7692 = vpop.f32.mrf.mxu0
      %v7693 = vadd.f32 %v7524, %v7692
      %7694 = vmatmul.bf16.gmra.mxu0 %v6237
      %v7695 = vpop.f32.mrf.mxu0
      %v7696 = vadd.f32 %v7527, %v7695
      %v7697 = vpop.f32.mrf.mxu0
      %v7698 = vadd.f32 %v7529, %v7697
      %7699 = vmatmul.bf16.gmra.mxu0 %v6241
      %v7700 = vpop.f32.mrf.mxu0
      %v7701 = vadd.f32 %v7532, %v7700
      %v7702 = vpop.f32.mrf.mxu0
      %v7703 = vadd.f32 %v7534, %v7702
      %7704 = vmatmul.bf16.gmra.mxu0 %v6245
      %v7705 = vpop.f32.mrf.mxu0
      %v7706 = vadd.f32 %v7537, %v7705
      %v7707 = vpop.f32.mrf.mxu0
      %v7708 = vadd.f32 %v7539, %v7707
      %7709 = vmatmul.bf16.gmra.mxu0 %v6249
      %v7710 = vpop.f32.mrf.mxu0
      %v7711 = vadd.f32 %v7542, %v7710
      %v7712 = vpop.f32.mrf.mxu0
      %v7713 = vadd.f32 %v7544, %v7712
      %7714 = vmatmul.bf16.gmra.mxu0 %v6253
      %v7715 = vpop.f32.mrf.mxu0
      %v7716 = vadd.f32 %v7547, %v7715
      %v7717 = vpop.f32.mrf.mxu0
      %v7718 = vadd.f32 %v7549, %v7717
      %7719 = vmatmul.bf16.gmra.mxu0 %v6257
      %v7720 = vpop.f32.mrf.mxu0
      %v7721 = vadd.f32 %v7552, %v7720
      %v7722 = vpop.f32.mrf.mxu0
      %v7723 = vadd.f32 %v7554, %v7722
      %7724 = vmatmul.bf16.gmra.mxu0 %v6261
      %v7725 = vpop.f32.mrf.mxu0
      %v7726 = vadd.f32 %v7557, %v7725
      %v7727 = vpop.f32.mrf.mxu0
      %v7728 = vadd.f32 %v7559, %v7727
      %7729 = vmatmul.bf16.gmra.mxu0 %v6265
      %v7730 = vpop.f32.mrf.mxu0
      %v7731 = vadd.f32 %v7562, %v7730
      %v7732 = vpop.f32.mrf.mxu0
      %v7733 = vadd.f32 %v7564, %v7732
      %7734 = vmatmul.bf16.gmra.mxu0 %v6269
      %v7735 = vpop.f32.mrf.mxu0
      %v7736 = vadd.f32 %v7567, %v7735
      %v7737 = vpop.f32.mrf.mxu0
      %v7738 = vadd.f32 %v7569, %v7737
      %7739 = vmatmul.bf16.gmra.mxu0 %v6273
      %v7740 = vpop.f32.mrf.mxu0
      %v7741 = vadd.f32 %v7572, %v7740
      %v7742 = vpop.f32.mrf.mxu0
      %v7743 = vadd.f32 %v7574, %v7742
      %7744 = vmatmul.bf16.gmra.mxu0 %v6277
      %v7745 = vpop.f32.mrf.mxu0
      %v7746 = vadd.f32 %v7577, %v7745
      %v7747 = vpop.f32.mrf.mxu0
      %v7748 = vadd.f32 %v7579, %v7747
      %7749 = vmatmul.bf16.gmra.mxu0 %v6281
      %v7750 = vpop.f32.mrf.mxu0
      %v7751 = vadd.f32 %v7582, %v7750
      %v7752 = vpop.f32.mrf.mxu0
      %v7753 = vadd.f32 %v7584, %v7752
      %7754 = vmatmul.bf16.gmra.mxu0 %v6285
      %v7755 = vpop.f32.mrf.mxu0
      %v7756 = vadd.f32 %v7587, %v7755
      %v7757 = vpop.f32.mrf.mxu0
      %v7758 = vadd.f32 %v7589, %v7757
      %7759 = vmatmul.bf16.gmra.mxu0 %v6289
      %v7760 = vpop.f32.mrf.mxu0
      %v7761 = vadd.f32 %v7592, %v7760
      %v7762 = vpop.f32.mrf.mxu0
      %v7763 = vadd.f32 %v7594, %v7762
      %7764 = vmatmul.bf16.gmra.mxu0 %v6293
      %v7765 = vpop.f32.mrf.mxu0
      %v7766 = vadd.f32 %v7597, %v7765
      %v7767 = vpop.f32.mrf.mxu0
      %v7768 = vadd.f32 %v7599, %v7767
      %7769 = vmatmul.bf16.gmra.mxu0 %v6297
      %v7770 = vpop.f32.mrf.mxu0
      %v7771 = vadd.f32 %v7602, %v7770
      %v7772 = vpop.f32.mrf.mxu0
      %v7773 = vadd.f32 %v7604, %v7772
      %7774 = vmatmul.bf16.gmra.mxu0 %v6301
      %v7775 = vpop.f32.mrf.mxu0
      %v7776 = vadd.f32 %v7607, %v7775
      %v7777 = vpop.f32.mrf.mxu0
      %v7778 = vadd.f32 %v7609, %v7777
      %7779 = vmatmul.bf16.gmra.mxu0 %v6305
      %v7780 = vpop.f32.mrf.mxu0
      %v7781 = vadd.f32 %v7612, %v7780
      %v7782 = vpop.f32.mrf.mxu0
      %v7783 = vadd.f32 %v7614, %v7782
      %7784 = vmatmul.bf16.gmra.mxu0 %v6309
      %v7785 = vpop.f32.mrf.mxu0
      %v7786 = vadd.f32 %v7617, %v7785
      %v7787 = vpop.f32.mrf.mxu0
      %v7788 = vadd.f32 %v7619, %v7787
      %7789 = vdwg.mxu0
      %vm7790 = vcmp.gt.f32.partialorder %v6955, 0.0
      %vm7791 = vcmp.gt.f32.partialorder %v7631, 0.0
      %vm7792 = vcmp.gt.f32.partialorder %v6957, 0.0
      %vm7793 = vcmp.gt.f32.partialorder %v7633, 0.0
      %vm7794 = vcmp.gt.f32.partialorder %v6960, 0.0
      %vm7795 = vcmp.gt.f32.partialorder %v7636, 0.0
      %vm7796 = vcmp.gt.f32.partialorder %v6962, 0.0
      %vm7797 = vcmp.gt.f32.partialorder %v7638, 0.0
      %vm7798 = vcmp.gt.f32.partialorder %v6965, 0.0
      %vm7799 = vcmp.gt.f32.partialorder %v7641, 0.0
      %vm7800 = vcmp.gt.f32.partialorder %v6967, 0.0
      %vm7801 = vcmp.gt.f32.partialorder %v7643, 0.0
      %vm7802 = vcmp.gt.f32.partialorder %v6970, 0.0
      %vm7803 = vcmp.gt.f32.partialorder %v7646, 0.0
      %vm7804 = vcmp.gt.f32.partialorder %v6972, 0.0
      %vm7805 = vcmp.gt.f32.partialorder %v7648, 0.0
      %vm7806 = vcmp.gt.f32.partialorder %v6975, 0.0
      %vm7807 = vcmp.gt.f32.partialorder %v7651, 0.0
      %vm7808 = vcmp.gt.f32.partialorder %v6977, 0.0
      %vm7809 = vcmp.gt.f32.partialorder %v7653, 0.0
      %vm7810 = vcmp.gt.f32.partialorder %v6980, 0.0
      %vm7811 = vcmp.gt.f32.partialorder %v7656, 0.0
      %vm7812 = vcmp.gt.f32.partialorder %v6982, 0.0
      %vm7813 = vcmp.gt.f32.partialorder %v7658, 0.0
      %vm7814 = vcmp.gt.f32.partialorder %v6985, 0.0
      %vm7815 = vcmp.gt.f32.partialorder %v7661, 0.0
      %vm7816 = vcmp.gt.f32.partialorder %v6987, 0.0
      %vm7817 = vcmp.gt.f32.partialorder %v7663, 0.0
      %vm7818 = vcmp.gt.f32.partialorder %v6990, 0.0
      %vm7819 = vcmp.gt.f32.partialorder %v7666, 0.0
      %vm7820 = vcmp.gt.f32.partialorder %v6992, 0.0
      %vm7821 = vcmp.gt.f32.partialorder %v7668, 0.0
      %vm7822 = vcmp.gt.f32.partialorder %v6995, 0.0
      %vm7823 = vcmp.gt.f32.partialorder %v7671, 0.0
      %vm7824 = vcmp.gt.f32.partialorder %v6997, 0.0
      %vm7825 = vcmp.gt.f32.partialorder %v7673, 0.0
      %vm7826 = vcmp.gt.f32.partialorder %v7000, 0.0
      %vm7827 = vcmp.gt.f32.partialorder %v7676, 0.0
      %vm7828 = vcmp.gt.f32.partialorder %v7002, 0.0
      %vm7829 = vcmp.gt.f32.partialorder %v7678, 0.0
      %vm7830 = vcmp.gt.f32.partialorder %v7005, 0.0
      %vm7831 = vcmp.gt.f32.partialorder %v7681, 0.0
      %vm7832 = vcmp.gt.f32.partialorder %v7007, 0.0
      %vm7833 = vcmp.gt.f32.partialorder %v7683, 0.0
      %vm7834 = vcmp.gt.f32.partialorder %v7010, 0.0
      %vm7835 = vcmp.gt.f32.partialorder %v7686, 0.0
      %vm7836 = vcmp.gt.f32.partialorder %v7012, 0.0
      %vm7837 = vcmp.gt.f32.partialorder %v7688, 0.0
      %vm7838 = vcmp.gt.f32.partialorder %v7015, 0.0
      %vm7839 = vcmp.gt.f32.partialorder %v7691, 0.0
      %vm7840 = vcmp.gt.f32.partialorder %v7017, 0.0
      %vm7841 = vcmp.gt.f32.partialorder %v7693, 0.0
      %vm7842 = vcmp.gt.f32.partialorder %v7020, 0.0
      %vm7843 = vcmp.gt.f32.partialorder %v7696, 0.0
      %vm7844 = vcmp.gt.f32.partialorder %v7022, 0.0
      %vm7845 = vcmp.gt.f32.partialorder %v7698, 0.0
      %vm7846 = vcmp.gt.f32.partialorder %v7025, 0.0
      %vm7847 = vcmp.gt.f32.partialorder %v7701, 0.0
      %vm7848 = vcmp.gt.f32.partialorder %v7027, 0.0
      %vm7849 = vcmp.gt.f32.partialorder %v7703, 0.0
      %vm7850 = vcmp.gt.f32.partialorder %v7030, 0.0
      %vm7851 = vcmp.gt.f32.partialorder %v7706, 0.0
      %vm7852 = vcmp.gt.f32.partialorder %v7032, 0.0
      %vm7853 = vcmp.gt.f32.partialorder %v7708, 0.0
      %vm7854 = vcmp.gt.f32.partialorder %v7035, 0.0
      %vm7855 = vcmp.gt.f32.partialorder %v7711, 0.0
      %vm7856 = vcmp.gt.f32.partialorder %v7037, 0.0
      %vm7857 = vcmp.gt.f32.partialorder %v7713, 0.0
      %vm7858 = vcmp.gt.f32.partialorder %v7040, 0.0
      %vm7859 = vcmp.gt.f32.partialorder %v7716, 0.0
      %vm7860 = vcmp.gt.f32.partialorder %v7042, 0.0
      %vm7861 = vcmp.gt.f32.partialorder %v7718, 0.0
      %vm7862 = vcmp.gt.f32.partialorder %v7045, 0.0
      %vm7863 = vcmp.gt.f32.partialorder %v7721, 0.0
      %vm7864 = vcmp.gt.f32.partialorder %v7047, 0.0
      %vm7865 = vcmp.gt.f32.partialorder %v7723, 0.0
      %vm7866 = vcmp.gt.f32.partialorder %v7050, 0.0
      %vm7867 = vcmp.gt.f32.partialorder %v7726, 0.0
      %vm7868 = vcmp.gt.f32.partialorder %v7052, 0.0
      %vm7869 = vcmp.gt.f32.partialorder %v7728, 0.0
      %vm7870 = vcmp.gt.f32.partialorder %v7055, 0.0
      %vm7871 = vcmp.gt.f32.partialorder %v7731, 0.0
      %vm7872 = vcmp.gt.f32.partialorder %v7057, 0.0
      %vm7873 = vcmp.gt.f32.partialorder %v7733, 0.0
      %vm7874 = vcmp.gt.f32.partialorder %v7060, 0.0
      %vm7875 = vcmp.gt.f32.partialorder %v7736, 0.0
      %vm7876 = vcmp.gt.f32.partialorder %v7062, 0.0
      %vm7877 = vcmp.gt.f32.partialorder %v7738, 0.0
      %vm7878 = vcmp.gt.f32.partialorder %v7065, 0.0
      %vm7879 = vcmp.gt.f32.partialorder %v7741, 0.0
      %vm7880 = vcmp.gt.f32.partialorder %v7067, 0.0
      %vm7881 = vcmp.gt.f32.partialorder %v7743, 0.0
      %vm7882 = vcmp.gt.f32.partialorder %v7070, 0.0
      %vm7883 = vcmp.gt.f32.partialorder %v7746, 0.0
      %vm7884 = vcmp.gt.f32.partialorder %v7072, 0.0
      %vm7885 = vcmp.gt.f32.partialorder %v7748, 0.0
      %vm7886 = vcmp.gt.f32.partialorder %v7075, 0.0
      %vm7887 = vcmp.gt.f32.partialorder %v7751, 0.0
      %vm7888 = vcmp.gt.f32.partialorder %v7077, 0.0
      %vm7889 = vcmp.gt.f32.partialorder %v7753, 0.0
      %vm7890 = vcmp.gt.f32.partialorder %v7080, 0.0
      %vm7891 = vcmp.gt.f32.partialorder %v7756, 0.0
      %vm7892 = vcmp.gt.f32.partialorder %v7082, 0.0
      %vm7893 = vcmp.gt.f32.partialorder %v7758, 0.0
      %vm7894 = vcmp.gt.f32.partialorder %v7085, 0.0
      %vm7895 = vcmp.gt.f32.partialorder %v7761, 0.0
      %vm7896 = vcmp.gt.f32.partialorder %v7087, 0.0
      %vm7897 = vcmp.gt.f32.partialorder %v7763, 0.0
      %vm7898 = vcmp.gt.f32.partialorder %v7090, 0.0
      %vm7899 = vcmp.gt.f32.partialorder %v7766, 0.0
      %vm7900 = vcmp.gt.f32.partialorder %v7092, 0.0
      %vm7901 = vcmp.gt.f32.partialorder %v7768, 0.0
      %vm7902 = vcmp.gt.f32.partialorder %v7095, 0.0
      %vm7903 = vcmp.gt.f32.partialorder %v7771, 0.0
      %vm7904 = vcmp.gt.f32.partialorder %v7097, 0.0
      %vm7905 = vcmp.gt.f32.partialorder %v7773, 0.0
      %vm7906 = vcmp.gt.f32.partialorder %v7100, 0.0
      %vm7907 = vcmp.gt.f32.partialorder %v7776, 0.0
      %vm7908 = vcmp.gt.f32.partialorder %v7102, 0.0
      %vm7909 = vcmp.gt.f32.partialorder %v7778, 0.0
      %vm7910 = vcmp.gt.f32.partialorder %v7105, 0.0
      %vm7911 = vcmp.gt.f32.partialorder %v7781, 0.0
      %vm7912 = vcmp.gt.f32.partialorder %v7107, 0.0
      %vm7913 = vcmp.gt.f32.partialorder %v7783, 0.0
      %vm7914 = vcmp.gt.f32.partialorder %v7110, 0.0
      %vm7915 = vcmp.gt.f32.partialorder %v7786, 0.0
      %vm7916 = vcmp.gt.f32.partialorder %v7112, 0.0
      %vm7917 = vcmp.gt.f32.partialorder %v7788, 0.0
      %v7918 = vmul.f32 %v6955, 0.01
      %v7919 = vmul.f32 %v7631, 0.01
      %v7920 = vmul.f32 %v6957, 0.01
      %v7921 = vmul.f32 %v7633, 0.01
      %v7922 = vmul.f32 %v6960, 0.01
      %v7923 = vmul.f32 %v7636, 0.01
      %v7924 = vmul.f32 %v6962, 0.01
      %v7925 = vmul.f32 %v7638, 0.01
      %v7926 = vmul.f32 %v6965, 0.01
      %v7927 = vmul.f32 %v7641, 0.01
      %v7928 = vmul.f32 %v6967, 0.01
      %v7929 = vmul.f32 %v7643, 0.01
      %v7930 = vmul.f32 %v6970, 0.01
      %v7931 = vmul.f32 %v7646, 0.01
      %v7932 = vmul.f32 %v6972, 0.01
      %v7933 = vmul.f32 %v7648, 0.01
      %v7934 = vmul.f32 %v6975, 0.01
      %v7935 = vmul.f32 %v7651, 0.01
      %v7936 = vmul.f32 %v6977, 0.01
      %v7937 = vmul.f32 %v7653, 0.01
      %v7938 = vmul.f32 %v6980, 0.01
      %v7939 = vmul.f32 %v7656, 0.01
      %v7940 = vmul.f32 %v6982, 0.01
      %v7941 = vmul.f32 %v7658, 0.01
      %v7942 = vmul.f32 %v6985, 0.01
      %v7943 = vmul.f32 %v7661, 0.01
      %v7944 = vmul.f32 %v6987, 0.01
      %v7945 = vmul.f32 %v7663, 0.01
      %v7946 = vmul.f32 %v6990, 0.01
      %v7947 = vmul.f32 %v7666, 0.01
      %v7948 = vmul.f32 %v6992, 0.01
      %v7949 = vmul.f32 %v7668, 0.01
      %v7950 = vmul.f32 %v6995, 0.01
      %v7951 = vmul.f32 %v7671, 0.01
      %v7952 = vmul.f32 %v6997, 0.01
      %v7953 = vmul.f32 %v7673, 0.01
      %v7954 = vmul.f32 %v7000, 0.01
      %v7955 = vmul.f32 %v7676, 0.01
      %v7956 = vmul.f32 %v7002, 0.01
      %v7957 = vmul.f32 %v7678, 0.01
      %v7958 = vmul.f32 %v7005, 0.01
      %v7959 = vmul.f32 %v7681, 0.01
      %v7960 = vmul.f32 %v7007, 0.01
      %v7961 = vmul.f32 %v7683, 0.01
      %v7962 = vmul.f32 %v7010, 0.01
      %v7963 = vmul.f32 %v7686, 0.01
      %v7964 = vmul.f32 %v7012, 0.01
      %v7965 = vmul.f32 %v7688, 0.01
      %v7966 = vmul.f32 %v7015, 0.01
      %v7967 = vmul.f32 %v7691, 0.01
      %v7968 = vmul.f32 %v7017, 0.01
      %v7969 = vmul.f32 %v7693, 0.01
      %v7970 = vmul.f32 %v7020, 0.01
      %v7971 = vmul.f32 %v7696, 0.01
      %v7972 = vmul.f32 %v7022, 0.01
      %v7973 = vmul.f32 %v7698, 0.01
      %v7974 = vmul.f32 %v7025, 0.01
      %v7975 = vmul.f32 %v7701, 0.01
      %v7976 = vmul.f32 %v7027, 0.01
      %v7977 = vmul.f32 %v7703, 0.01
      %v7978 = vmul.f32 %v7030, 0.01
      %v7979 = vmul.f32 %v7706, 0.01
      %v7980 = vmul.f32 %v7032, 0.01
      %v7981 = vmul.f32 %v7708, 0.01
      %v7982 = vmul.f32 %v7035, 0.01
      %v7983 = vmul.f32 %v7711, 0.01
      %v7984 = vmul.f32 %v7037, 0.01
      %v7985 = vmul.f32 %v7713, 0.01
      %v7986 = vmul.f32 %v7040, 0.01
      %v7987 = vmul.f32 %v7716, 0.01
      %v7988 = vmul.f32 %v7042, 0.01
      %v7989 = vmul.f32 %v7718, 0.01
      %v7990 = vmul.f32 %v7045, 0.01
      %v7991 = vmul.f32 %v7721, 0.01
      %v7992 = vmul.f32 %v7047, 0.01
      %v7993 = vmul.f32 %v7723, 0.01
      %v7994 = vmul.f32 %v7050, 0.01
      %v7995 = vmul.f32 %v7726, 0.01
      %v7996 = vmul.f32 %v7052, 0.01
      %v7997 = vmul.f32 %v7728, 0.01
      %v7998 = vmul.f32 %v7055, 0.01
      %v7999 = vmul.f32 %v7731, 0.01
      %v8000 = vmul.f32 %v7057, 0.01
      %v8001 = vmul.f32 %v7733, 0.01
      %v8002 = vmul.f32 %v7060, 0.01
      %v8003 = vmul.f32 %v7736, 0.01
      %v8004 = vmul.f32 %v7062, 0.01
      %v8005 = vmul.f32 %v7738, 0.01
      %v8006 = vmul.f32 %v7065, 0.01
      %v8007 = vmul.f32 %v7741, 0.01
      %v8008 = vmul.f32 %v7067, 0.01
      %v8009 = vmul.f32 %v7743, 0.01
      %v8010 = vmul.f32 %v7070, 0.01
      %v8011 = vmul.f32 %v7746, 0.01
      %v8012 = vmul.f32 %v7072, 0.01
      %v8013 = vmul.f32 %v7748, 0.01
      %v8014 = vmul.f32 %v7075, 0.01
      %v8015 = vmul.f32 %v7751, 0.01
      %v8016 = vmul.f32 %v7077, 0.01
      %v8017 = vmul.f32 %v7753, 0.01
      %v8018 = vmul.f32 %v7080, 0.01
      %v8019 = vmul.f32 %v7756, 0.01
      %v8020 = vmul.f32 %v7082, 0.01
      %v8021 = vmul.f32 %v7758, 0.01
      %v8022 = vmul.f32 %v7085, 0.01
      %v8023 = vmul.f32 %v7761, 0.01
      %v8024 = vmul.f32 %v7087, 0.01
      %v8025 = vmul.f32 %v7763, 0.01
      %v8026 = vmul.f32 %v7090, 0.01
      %v8027 = vmul.f32 %v7766, 0.01
      %v8028 = vmul.f32 %v7092, 0.01
      %v8029 = vmul.f32 %v7768, 0.01
      %v8030 = vmul.f32 %v7095, 0.01
      %v8031 = vmul.f32 %v7771, 0.01
      %v8032 = vmul.f32 %v7097, 0.01
      %v8033 = vmul.f32 %v7773, 0.01
      %v8034 = vmul.f32 %v7100, 0.01
      %v8035 = vmul.f32 %v7776, 0.01
      %v8036 = vmul.f32 %v7102, 0.01
      %v8037 = vmul.f32 %v7778, 0.01
      %v8038 = vmul.f32 %v7105, 0.01
      %v8039 = vmul.f32 %v7781, 0.01
      %v8040 = vmul.f32 %v7107, 0.01
      %v8041 = vmul.f32 %v7783, 0.01
      %v8042 = vmul.f32 %v7110, 0.01
      %v8043 = vmul.f32 %v7786, 0.01
      %v8044 = vmul.f32 %v7112, 0.01
      %v8045 = vmul.f32 %v7788, 0.01
      %v8046 = vsel %vm7790, %v6955, %v7918
      %v8047 = vsel %vm7791, %v7631, %v7919
      %v8048 = vsel %vm7792, %v6957, %v7920
      %v8049 = vsel %vm7793, %v7633, %v7921
      %v8050 = vsel %vm7794, %v6960, %v7922
      %v8051 = vsel %vm7795, %v7636, %v7923
      %v8052 = vsel %vm7796, %v6962, %v7924
      %v8053 = vsel %vm7797, %v7638, %v7925
      %v8054 = vsel %vm7798, %v6965, %v7926
      %v8055 = vsel %vm7799, %v7641, %v7927
      %v8056 = vsel %vm7800, %v6967, %v7928
      %v8057 = vsel %vm7801, %v7643, %v7929
      %v8058 = vsel %vm7802, %v6970, %v7930
      %v8059 = vsel %vm7803, %v7646, %v7931
      %v8060 = vsel %vm7804, %v6972, %v7932
      %v8061 = vsel %vm7805, %v7648, %v7933
      %v8062 = vsel %vm7806, %v6975, %v7934
      %v8063 = vsel %vm7807, %v7651, %v7935
      %v8064 = vsel %vm7808, %v6977, %v7936
      %v8065 = vsel %vm7809, %v7653, %v7937
      %v8066 = vsel %vm7810, %v6980, %v7938
      %v8067 = vsel %vm7811, %v7656, %v7939
      %v8068 = vsel %vm7812, %v6982, %v7940
      %v8069 = vsel %vm7813, %v7658, %v7941
      %v8070 = vsel %vm7814, %v6985, %v7942
      %v8071 = vsel %vm7815, %v7661, %v7943
      %v8072 = vsel %vm7816, %v6987, %v7944
      %v8073 = vsel %vm7817, %v7663, %v7945
      %v8074 = vsel %vm7818, %v6990, %v7946
      %v8075 = vsel %vm7819, %v7666, %v7947
      %v8076 = vsel %vm7820, %v6992, %v7948
      %v8077 = vsel %vm7821, %v7668, %v7949
      %v8078 = vsel %vm7822, %v6995, %v7950
      %v8079 = vsel %vm7823, %v7671, %v7951
      %v8080 = vsel %vm7824, %v6997, %v7952
      %v8081 = vsel %vm7825, %v7673, %v7953
      %v8082 = vsel %vm7826, %v7000, %v7954
      %v8083 = vsel %vm7827, %v7676, %v7955
      %v8084 = vsel %vm7828, %v7002, %v7956
      %v8085 = vsel %vm7829, %v7678, %v7957
      %v8086 = vsel %vm7830, %v7005, %v7958
      %v8087 = vsel %vm7831, %v7681, %v7959
      %v8088 = vsel %vm7832, %v7007, %v7960
      %v8089 = vsel %vm7833, %v7683, %v7961
      %v8090 = vsel %vm7834, %v7010, %v7962
      %v8091 = vsel %vm7835, %v7686, %v7963
      %v8092 = vsel %vm7836, %v7012, %v7964
      %v8093 = vsel %vm7837, %v7688, %v7965
      %v8094 = vsel %vm7838, %v7015, %v7966
      %v8095 = vsel %vm7839, %v7691, %v7967
      %v8096 = vsel %vm7840, %v7017, %v7968
      %v8097 = vsel %vm7841, %v7693, %v7969
      %v8098 = vsel %vm7842, %v7020, %v7970
      %v8099 = vsel %vm7843, %v7696, %v7971
      %v8100 = vsel %vm7844, %v7022, %v7972
      %v8101 = vsel %vm7845, %v7698, %v7973
      %v8102 = vsel %vm7846, %v7025, %v7974
      %v8103 = vsel %vm7847, %v7701, %v7975
      %v8104 = vsel %vm7848, %v7027, %v7976
      %v8105 = vsel %vm7849, %v7703, %v7977
      %v8106 = vsel %vm7850, %v7030, %v7978
      %v8107 = vsel %vm7851, %v7706, %v7979
      %v8108 = vsel %vm7852, %v7032, %v7980
      %v8109 = vsel %vm7853, %v7708, %v7981
      %v8110 = vsel %vm7854, %v7035, %v7982
      %v8111 = vsel %vm7855, %v7711, %v7983
      %v8112 = vsel %vm7856, %v7037, %v7984
      %v8113 = vsel %vm7857, %v7713, %v7985
      %v8114 = vsel %vm7858, %v7040, %v7986
      %v8115 = vsel %vm7859, %v7716, %v7987
      %v8116 = vsel %vm7860, %v7042, %v7988
      %v8117 = vsel %vm7861, %v7718, %v7989
      %v8118 = vsel %vm7862, %v7045, %v7990
      %v8119 = vsel %vm7863, %v7721, %v7991
      %v8120 = vsel %vm7864, %v7047, %v7992
      %v8121 = vsel %vm7865, %v7723, %v7993
      %v8122 = vsel %vm7866, %v7050, %v7994
      %v8123 = vsel %vm7867, %v7726, %v7995
      %v8124 = vsel %vm7868, %v7052, %v7996
      %v8125 = vsel %vm7869, %v7728, %v7997
      %v8126 = vsel %vm7870, %v7055, %v7998
      %v8127 = vsel %vm7871, %v7731, %v7999
      %v8128 = vsel %vm7872, %v7057, %v8000
      %v8129 = vsel %vm7873, %v7733, %v8001
      %v8130 = vsel %vm7874, %v7060, %v8002
      %v8131 = vsel %vm7875, %v7736, %v8003
      %v8132 = vsel %vm7876, %v7062, %v8004
      %v8133 = vsel %vm7877, %v7738, %v8005
      %v8134 = vsel %vm7878, %v7065, %v8006
      %v8135 = vsel %vm7879, %v7741, %v8007
      %v8136 = vsel %vm7880, %v7067, %v8008
      %v8137 = vsel %vm7881, %v7743, %v8009
      %v8138 = vsel %vm7882, %v7070, %v8010
      %v8139 = vsel %vm7883, %v7746, %v8011
      %v8140 = vsel %vm7884, %v7072, %v8012
      %v8141 = vsel %vm7885, %v7748, %v8013
      %v8142 = vsel %vm7886, %v7075, %v8014
      %v8143 = vsel %vm7887, %v7751, %v8015
      %v8144 = vsel %vm7888, %v7077, %v8016
      %v8145 = vsel %vm7889, %v7753, %v8017
      %v8146 = vsel %vm7890, %v7080, %v8018
      %v8147 = vsel %vm7891, %v7756, %v8019
      %v8148 = vsel %vm7892, %v7082, %v8020
      %v8149 = vsel %vm7893, %v7758, %v8021
      %v8150 = vsel %vm7894, %v7085, %v8022
      %v8151 = vsel %vm7895, %v7761, %v8023
      %v8152 = vsel %vm7896, %v7087, %v8024
      %v8153 = vsel %vm7897, %v7763, %v8025
      %v8154 = vsel %vm7898, %v7090, %v8026
      %v8155 = vsel %vm7899, %v7766, %v8027
      %v8156 = vsel %vm7900, %v7092, %v8028
      %v8157 = vsel %vm7901, %v7768, %v8029
      %v8158 = vsel %vm7902, %v7095, %v8030
      %v8159 = vsel %vm7903, %v7771, %v8031
      %v8160 = vsel %vm7904, %v7097, %v8032
      %v8161 = vsel %vm7905, %v7773, %v8033
      %v8162 = vsel %vm7906, %v7100, %v8034
      %v8163 = vsel %vm7907, %v7776, %v8035
      %v8164 = vsel %vm7908, %v7102, %v8036
      %v8165 = vsel %vm7909, %v7778, %v8037
      %v8166 = vsel %vm7910, %v7105, %v8038
      %v8167 = vsel %vm7911, %v7781, %v8039
      %v8168 = vsel %vm7912, %v7107, %v8040
      %v8169 = vsel %vm7913, %v7783, %v8041
      %v8170 = vsel %vm7914, %v7110, %v8042
      %v8171 = vsel %vm7915, %v7786, %v8043
      %v8172 = vsel %vm7916, %v7112, %v8044
      %v8173 = vsel %vm7917, %v7788, %v8045
      %v8174 = vld [vmem:[%s7] sm:$0xf]
      %v8175 = vpack.c.bf16 %v8048, %v8046
      %v8176 = vpack.c.bf16 %v8049, %v8047
      %v8177 = vpack.c.bf16 %v8052, %v8050
      %v8178 = vpack.c.bf16 %v8053, %v8051
      %v8179 = vpack.c.bf16 %v8056, %v8054
      %v8180 = vpack.c.bf16 %v8057, %v8055
      %v8181 = vpack.c.bf16 %v8060, %v8058
      %v8182 = vpack.c.bf16 %v8061, %v8059
      %v8183 = vpack.c.bf16 %v8064, %v8062
      %v8184 = vpack.c.bf16 %v8065, %v8063
      %v8185 = vpack.c.bf16 %v8068, %v8066
      %v8186 = vpack.c.bf16 %v8069, %v8067
      %v8187 = vpack.c.bf16 %v8072, %v8070
      %v8188 = vpack.c.bf16 %v8073, %v8071
      %v8189 = vpack.c.bf16 %v8076, %v8074
      %v8190 = vpack.c.bf16 %v8077, %v8075
      %v8191 = vpack.c.bf16 %v8080, %v8078
      %v8192 = vpack.c.bf16 %v8081, %v8079
      %v8193 = vpack.c.bf16 %v8084, %v8082
      %v8194 = vpack.c.bf16 %v8085, %v8083
      %v8195 = vpack.c.bf16 %v8088, %v8086
      %v8196 = vpack.c.bf16 %v8089, %v8087
      %v8197 = vpack.c.bf16 %v8092, %v8090
      %v8198 = vpack.c.bf16 %v8093, %v8091
      %v8199 = vpack.c.bf16 %v8096, %v8094
      %v8200 = vpack.c.bf16 %v8097, %v8095
      %v8201 = vpack.c.bf16 %v8100, %v8098
      %v8202 = vpack.c.bf16 %v8101, %v8099
      %v8203 = vpack.c.bf16 %v8104, %v8102
      %v8204 = vpack.c.bf16 %v8105, %v8103
      %v8205 = vpack.c.bf16 %v8108, %v8106
      %v8206 = vpack.c.bf16 %v8109, %v8107
      %v8207 = vpack.c.bf16 %v8112, %v8110
      %v8208 = vpack.c.bf16 %v8113, %v8111
      %v8209 = vpack.c.bf16 %v8116, %v8114
      %v8210 = vpack.c.bf16 %v8117, %v8115
      %v8211 = vpack.c.bf16 %v8120, %v8118
      %v8212 = vpack.c.bf16 %v8121, %v8119
      %v8213 = vpack.c.bf16 %v8124, %v8122
      %v8214 = vpack.c.bf16 %v8125, %v8123
      %v8215 = vpack.c.bf16 %v8128, %v8126
      %v8216 = vpack.c.bf16 %v8129, %v8127
      %v8217 = vpack.c.bf16 %v8132, %v8130
      %v8218 = vpack.c.bf16 %v8133, %v8131
      %v8219 = vpack.c.bf16 %v8136, %v8134
      %v8220 = vpack.c.bf16 %v8137, %v8135
      %v8221 = vpack.c.bf16 %v8140, %v8138
      %v8222 = vpack.c.bf16 %v8141, %v8139
      %v8223 = vpack.c.bf16 %v8144, %v8142
      %v8224 = vpack.c.bf16 %v8145, %v8143
      %v8225 = vpack.c.bf16 %v8148, %v8146
      %v8226 = vpack.c.bf16 %v8149, %v8147
      %v8227 = vpack.c.bf16 %v8152, %v8150
      %v8228 = vpack.c.bf16 %v8153, %v8151
      %v8229 = vpack.c.bf16 %v8156, %v8154
      %v8230 = vpack.c.bf16 %v8157, %v8155
      %v8231 = vpack.c.bf16 %v8160, %v8158
      %v8232 = vpack.c.bf16 %v8161, %v8159
      %v8233 = vpack.c.bf16 %v8164, %v8162
      %v8234 = vpack.c.bf16 %v8165, %v8163
      %v8235 = vpack.c.bf16 %v8168, %v8166
      %v8236 = vpack.c.bf16 %v8169, %v8167
      %v8237 = vpack.c.bf16 %v8172, %v8170
      %v8238 = vpack.c.bf16 %v8173, %v8171
      %v8239 = vld [vmem:[#allocation2] sm:$0x1]
      %8241 = vset.pattern.permute.xlu0 0
      %8242 = vperm.xlu0 %8241, %v8239
      %v8243 = vpop.permute.xlu0 %8242
      %v8245 = vperm.slane %v8243, 0
      %8247 = vst [vmem:[#allocation1] ss:$9 sm:$0xff] %v8174
      %v8248 = vld [vmem:[#allocation1] sm:$0xff]
      %v8249 = vld [vmem:[#allocation1 + $0x9] sm:$0xff]
      %v8250 = vld [vmem:[#allocation1 + $0x12] sm:$0xff]
      %v8251 = vld [vmem:[#allocation1 + $0x1b] sm:$0xff]
      %8256 = vmatpush.bf16.msra.mxu0 %v8189
      %8257 = vmatpush.bf16.msra.mxu0 %v8187
      %8258 = vmatpush.bf16.msra.mxu0 %v8185
      %8259 = vmatpush.bf16.msra.mxu0 %v8183
      %8260 = vmatpush.bf16.msra.mxu0 %v8181
      %8261 = vmatpush.bf16.msra.mxu0 %v8179
      %8262 = vmatpush.bf16.msra.mxu0 %v8177
      %8263 = vmatpush.bf16.msra.mxu0 %v8175
      %8264 = vmatmul.bf16.gmra.mxu0 %v8248
      %v8265 = vpop.f32.mrf.mxu0
      %v8266 = vadd.f32 %v8245, %v8265
      %v8267 = vpop.f32.mrf.mxu0
      %8268 = vdwg.mxu0
      %8269 = vmatpush.bf16.msra.mxu0 %v8205
      %8270 = vmatpush.bf16.msra.mxu0 %v8203
      %8271 = vmatpush.bf16.msra.mxu0 %v8201
      %8272 = vmatpush.bf16.msra.mxu0 %v8199
      %8273 = vmatpush.bf16.msra.mxu0 %v8197
      %8274 = vmatpush.bf16.msra.mxu0 %v8195
      %8275 = vmatpush.bf16.msra.mxu0 %v8193
      %8276 = vmatpush.bf16.msra.mxu0 %v8191
      %8277 = vmatmul.bf16.gmra.mxu0 %v8249
      %v8278 = vpop.f32.mrf.mxu0
      %v8279 = vadd.f32 %v8266, %v8278
      %v8280 = vpop.f32.mrf.mxu0
      %8281 = vdwg.mxu0
      %8282 = vmatpush.bf16.msra.mxu0 %v8221
      %8283 = vmatpush.bf16.msra.mxu0 %v8219
      %8284 = vmatpush.bf16.msra.mxu0 %v8217
      %8285 = vmatpush.bf16.msra.mxu0 %v8215
      %8286 = vmatpush.bf16.msra.mxu0 %v8213
      %8287 = vmatpush.bf16.msra.mxu0 %v8211
      %8288 = vmatpush.bf16.msra.mxu0 %v8209
      %8289 = vmatpush.bf16.msra.mxu0 %v8207
      %8290 = vmatmul.bf16.gmra.mxu0 %v8250
      %v8291 = vpop.f32.mrf.mxu0
      %v8292 = vadd.f32 %v8279, %v8291
      %v8293 = vpop.f32.mrf.mxu0
      %8294 = vdwg.mxu0
      %8295 = vmatpush.bf16.msra.mxu0 %v8237
      %8296 = vmatpush.bf16.msra.mxu0 %v8235
      %8297 = vmatpush.bf16.msra.mxu0 %v8233
      %8298 = vmatpush.bf16.msra.mxu0 %v8231
      %8299 = vmatpush.bf16.msra.mxu0 %v8229
      %8300 = vmatpush.bf16.msra.mxu0 %v8227
      %8301 = vmatpush.bf16.msra.mxu0 %v8225
      %8302 = vmatpush.bf16.msra.mxu0 %v8223
      %8303 = vmatmul.bf16.gmra.mxu0 %v8251
      %v8304 = vpop.f32.mrf.mxu0
      %v8305 = vadd.f32 %v8292, %v8304
      %v8306 = vpop.f32.mrf.mxu0
      %8307 = vdwg.mxu0
      %8308 = vmatpush.bf16.msra.mxu0 %v8190
      %8309 = vmatpush.bf16.msra.mxu0 %v8188
      %8310 = vmatpush.bf16.msra.mxu0 %v8186
      %8311 = vmatpush.bf16.msra.mxu0 %v8184
      %8312 = vmatpush.bf16.msra.mxu0 %v8182
      %8313 = vmatpush.bf16.msra.mxu0 %v8180
      %8314 = vmatpush.bf16.msra.mxu0 %v8178
      %8315 = vmatpush.bf16.msra.mxu0 %v8176
      %8316 = vmatmul.bf16.gmra.mxu0 %v8248
      %v8317 = vpop.f32.mrf.mxu0
      %v8318 = vadd.f32 %v8245, %v8317
      %v8319 = vpop.f32.mrf.mxu0
      %8320 = vdwg.mxu0
      %8321 = vmatpush.bf16.msra.mxu0 %v8206
      %8322 = vmatpush.bf16.msra.mxu0 %v8204
      %8323 = vmatpush.bf16.msra.mxu0 %v8202
      %8324 = vmatpush.bf16.msra.mxu0 %v8200
      %8325 = vmatpush.bf16.msra.mxu0 %v8198
      %8326 = vmatpush.bf16.msra.mxu0 %v8196
      %8327 = vmatpush.bf16.msra.mxu0 %v8194
      %8328 = vmatpush.bf16.msra.mxu0 %v8192
      %8329 = vmatmul.bf16.gmra.mxu0 %v8249
      %v8330 = vpop.f32.mrf.mxu0
      %v8331 = vadd.f32 %v8318, %v8330
      %v8332 = vpop.f32.mrf.mxu0
      %8333 = vdwg.mxu0
      %8334 = vmatpush.bf16.msra.mxu0 %v8222
      %8335 = vmatpush.bf16.msra.mxu0 %v8220
      %8336 = vmatpush.bf16.msra.mxu0 %v8218
      %8337 = vmatpush.bf16.msra.mxu0 %v8216
      %8338 = vmatpush.bf16.msra.mxu0 %v8214
      %8339 = vmatpush.bf16.msra.mxu0 %v8212
      %8340 = vmatpush.bf16.msra.mxu0 %v8210
      %8341 = vmatpush.bf16.msra.mxu0 %v8208
      %8342 = vmatmul.bf16.gmra.mxu0 %v8250
      %v8343 = vpop.f32.mrf.mxu0
      %v8344 = vadd.f32 %v8331, %v8343
      %v8345 = vpop.f32.mrf.mxu0
      %8346 = vdwg.mxu0
      %8347 = vmatpush.bf16.msra.mxu0 %v8238
      %8348 = vmatpush.bf16.msra.mxu0 %v8236
      %8349 = vmatpush.bf16.msra.mxu0 %v8234
      %8350 = vmatpush.bf16.msra.mxu0 %v8232
      %8351 = vmatpush.bf16.msra.mxu0 %v8230
      %8352 = vmatpush.bf16.msra.mxu0 %v8228
      %8353 = vmatpush.bf16.msra.mxu0 %v8226
      %8354 = vmatpush.bf16.msra.mxu0 %v8224
      %8355 = vmatmul.bf16.gmra.mxu0 %v8251
      %v8356 = vpop.f32.mrf.mxu0
      %v8357 = vadd.f32 %v8344, %v8356
      %v8358 = vpop.f32.mrf.mxu0
      %8359 = vdwg.mxu0
      %v8360 = vxor.u32 %v8305, 2147483648
      %v8361 = vxor.u32 %v8357, 2147483648
      %v8362 = vmul.f32 %v8360, 1.442695
      %v8363 = vpow.pop %v8362
      %v8364 = vmul.f32 %v8361, 1.442695
      %v8365 = vpow.pop %v8364
      %v8366 = vadd.f32 %v8363, 1.0
      %v8367 = vadd.f32 %v8365, 1.0
      %v8368 = vrcp.pop %v8366
      %v8369 = vmul.f32 %v8366, %v8368
      %v8370 = vsub.f32 1.0, %v8369
      %v8371 = vmul.f32 %v8368, %v8370
      %v8372 = vadd.f32 %v8368, %v8371
      %vm8373 = vweird.f32 %v8366
      %vm8374 = vweird.f32 %v8368
      %vm8375 = vmor %vm8373, %vm8374
      %v8376 = vsel %vm8375, %v8368, %v8372
      %v8377 = vand.u32 2147483647, %v8366
      %vm8378 = vcmp.eq.f32.partialorder %v8377, 8.507059e+37
      %v8379 = vand.u32 %v8366, 2147483648
      %v8380 = vor.u32 1.1754944e-38, %v8379
      %v8381 = vsel %vm8378, %v8380, %v8376
      %v8382 = vmul.f32 1.0, %v8381
      %v8383 = vrcp.pop %v8367
      %v8384 = vmul.f32 %v8367, %v8383
      %v8385 = vsub.f32 1.0, %v8384
      %v8386 = vmul.f32 %v8383, %v8385
      %v8387 = vadd.f32 %v8383, %v8386
      %vm8388 = vweird.f32 %v8367
      %vm8389 = vweird.f32 %v8383
      %vm8390 = vmor %vm8388, %vm8389
      %v8391 = vsel %vm8390, %v8383, %v8387
      %v8392 = vand.u32 2147483647, %v8367
      %vm8393 = vcmp.eq.f32.partialorder %v8392, 8.507059e+37
      %v8394 = vand.u32 %v8367, 2147483648
      %v8395 = vor.u32 1.1754944e-38, %v8394
      %v8396 = vsel %vm8393, %v8395, %v8391
      %v8397 = vmul.f32 1.0, %v8396
      %v8400 = vrot.slane %v8397, 7
      %vm8401 = vcmask 1040384
      %v8402 = vsel %vm8401, %v8382, %v8400
      %v8404 = vlaneseq
      %vm8405 = vcmp.ge.s32.totalorder %v8404, 0
      %vm8406 = vcmp.lt.s32.totalorder %v8404, 256
      %vm8407 = vmand %vm8405, %vm8406
      %8408 = vst.msk [vmem:[%s334] sm:$0x3] %vm8407, %v8402
      %s8409 = smul.u32 2, %s22
      %p8410 = scmp.lt.s32.totalorder %s8409, 3
      %s8411 = scalar_select %p8410, %s8409, 3
      %s8412 = scalar_lea.vmem %s9, %s8411
      // Predicated region
      $region57: #{escape_model_2d.1} parent=55 // pred_check
        %p8413 = pneg %p234
      $region58: #{escape_model_2d.1} parent=55 // pred_check_branch
        %8415 = sbr.rel (%p8413) target = $region60
      $region59: #{escape_model_2d.1} parent=55 // pred_region
        %s8416 = smul.u32 2, %s22
      $region60: #{escape_model_2d.1} parent=55 // pred_fallthru
        _
    $region56: #{escape_model_2d.1} parent=5 // pred_fallthru
      _
    %p8417 = scmp.le.s32.totalorder 2, %s17
    // Predicated region
    $region61: #{escape_model_2d.1} parent=5 // pred_check
      %p8418 = pneg %p8417
    $region62: #{escape_model_2d.1} parent=5 // pred_check_branch
      %8420 = sbr.rel (%p8418) target = $region64
    $region63: #{escape_model_2d.1} parent=5 // pred_region
      %s8421 = ssub.s32 %s17, 2
      // Predicated region
      $region65: #{escape_model_2d.1} parent=63 // pred_check
        %p8422 = pneg %p240
      $region66: #{escape_model_2d.1} parent=63 // pred_check_branch
        %8424 = sbr.rel (%p8422) target = $region68
      $region67: #{escape_model_2d.1} parent=63 // pred_region
        %s8425 = smul.u32 2, %s23
        %p8426 = scmp.lt.s32.totalorder %s8425, 3
        %s8427 = scalar_select %p8426, %s8425, 3
        %s8428 = scalar_lea.vmem %s9, %s8427
      $region68: #{escape_model_2d.1} parent=63 // pred_fallthru
        _
    $region64: #{escape_model_2d.1} parent=5 // pred_fallthru
      _
  $region6: #{escape_model_2d.1} parent=0 // loop_footer
    %s21 = sadd.s32 1, %s17
  $region7: #{escape_model_2d.1} parent=0 // loop_footer_branch
    %16 = sbr.rel target = $region3
  $region8: #{escape_model_2d.1} parent=0 // loop_exit
    _

</llo_original>
